<compile_context>
chip_gen: v7x
topology: tpu7x:2x2x1
jax: 0.10.0
libtpu: 0.0.40
codegen_flags: <defaults>
</compile_context>

<pallas_src>
import functools

import jax
import jax.numpy as jnp
import numpy as np
from jax import lax
from jax.experimental import pallas as pl
from jax.experimental.pallas import tpu as pltpu

BN_EPS = 1e-5
LANE = 128      # pad channel dims to multiples of this (lane-dense MXU/VPU)
TILE_M = 256    # row tile; sweep 512-2048 for production shapes (kept small so
                # the toy test exercises multi-tile stat accumulation)


def _round_up(x, m):
    return (x + m - 1) // m * m


def _pad_last(x, target):
    pad = target - x.shape[-1]
    if pad == 0:
        return x
    cfg = [(0, 0)] * (x.ndim - 1) + [(0, pad)]
    return jnp.pad(x, cfg)


# ----------------------------- Pallas kernels -----------------------------

def _mm_bn_stats_kernel(*refs, pre_apply, pre_relu, rows_real, tile_m,
                        need_row_mask):
    """y = lhs @ w (bf16 MXU, f32 acc) + column sum / sumsq accumulation.

    If pre_apply, the previous stage's BN (scale/shift) + ReLU is applied to
    the f32 input tile before the matmul (fused epilogue of the prior stage).
    """
    if pre_apply:
        x_ref, s_ref, b_ref, w_ref, y_ref, sum_ref, ssq_ref = refs
    else:
        x_ref, w_ref, y_ref, sum_ref, ssq_ref = refs

    i = pl.program_id(0)

    if pre_apply:
        a = x_ref[...] * s_ref[...] + b_ref[...]
        if pre_relu:
            a = jnp.maximum(a, 0.0)
        if need_row_mask:
            rows = lax.broadcasted_iota(jnp.int32, (tile_m, 1), 0) + i * tile_m
            a = jnp.where(rows < rows_real, a, 0.0)
        lhs = a.astype(jnp.bfloat16)
    else:
        lhs = x_ref[...]                       # already bf16

    y = jnp.dot(lhs, w_ref[...], preferred_element_type=jnp.float32)
    y_ref[...] = y

    @pl.when(i == 0)
    def _init():
        sum_ref[...] = jnp.zeros_like(sum_ref)
        ssq_ref[...] = jnp.zeros_like(ssq_ref)

    sum_ref[...] += jnp.sum(y, axis=0, keepdims=True)
    ssq_ref[...] += jnp.sum(y * y, axis=0, keepdims=True)


def _conv3x3_bn_stats_kernel(x_ref, w_ref, y_ref, sum_ref, ssq_ref, *,
                             stride, h_out, w_out):
    """3x3 conv as nine shifted matmuls over a spatially padded image block."""
    n = pl.program_id(0)
    x = x_ref[0]                               # (H+2, W+2, C) bf16
    c_in = x.shape[-1]
    acc = None
    for kh in range(3):
        for kw in range(3):
            if stride == 1:
                xs = x[kh:kh + h_out, kw:kw + w_out, :]
            else:
                xs = lax.slice(
                    x, (kh, kw, 0),
                    (kh + (h_out - 1) * stride + 1,
                     kw + (w_out - 1) * stride + 1, c_in),
                    (stride, stride, 1))
            part = jnp.dot(xs.reshape(h_out * w_out, c_in),
                           w_ref[kh * 3 + kw],
                           preferred_element_type=jnp.float32)
            acc = part if acc is None else acc + part
    y_ref[0] = acc

    @pl.when(n == 0)
    def _init():
        sum_ref[...] = jnp.zeros_like(sum_ref)
        ssq_ref[...] = jnp.zeros_like(ssq_ref)

    sum_ref[...] += jnp.sum(acc, axis=0, keepdims=True)
    ssq_ref[...] += jnp.sum(acc * acc, axis=0, keepdims=True)


def _bn_apply_kernel(y_ref, s_ref, b_ref, o_ref, *, relu):
    out = y_ref[...] * s_ref[...] + b_ref[...]
    if relu:
        out = jnp.maximum(out, 0.0)
    o_ref[...] = out.astype(o_ref.dtype)


def _bn_add_bn_relu_kernel(ya_ref, yb_ref, sa_ref, ba_ref, sb_ref, bb_ref,
                           o_ref):
    out = (ya_ref[...] * sa_ref[...] + ba_ref[...]
           + yb_ref[...] * sb_ref[...] + bb_ref[...])
    o_ref[...] = jnp.maximum(out, 0.0).astype(o_ref.dtype)


def _bn_add_res_relu_kernel(ya_ref, r_ref, sa_ref, ba_ref, o_ref):
    out = ya_ref[...] * sa_ref[...] + ba_ref[...] + r_ref[...].astype(jnp.float32)
    o_ref[...] = jnp.maximum(out, 0.0).astype(o_ref.dtype)


# ----------------------------- pallas_call wrappers -----------------------------

def conv1x1_bn_stats(x, w, *, scale_in=None, shift_in=None, pre_relu=True,
                     tile_m=TILE_M):
    """x: (M, K); w: (K, C) bf16.  Returns (y f32, col_sum, col_sumsq)."""
    m, k = x.shape
    c = w.shape[1]
    tm = min(tile_m, _round_up(m, 8))
    m_pad = _round_up(m, tm)
    pre_apply = scale_in is not None
    if m_pad != m:
        x = jnp.pad(x, ((0, m_pad - m), (0, 0)))

    kernel = functools.partial(
        _mm_bn_stats_kernel, pre_apply=pre_apply, pre_relu=pre_relu,
        rows_real=m, tile_m=tm, need_row_mask=(pre_apply and m_pad != m))

    row_spec = pl.BlockSpec((tm, k), lambda i: (i, 0))
    vec_spec = pl.BlockSpec((1, k), lambda i: (0, 0))
    w_spec = pl.BlockSpec((k, c), lambda i: (0, 0))
    out_row_spec = pl.BlockSpec((tm, c), lambda i: (i, 0))
    stat_spec = pl.BlockSpec((1, c), lambda i: (0, 0))

    in_specs = [row_spec]
    args = [x]
    if pre_apply:
        in_specs += [vec_spec, vec_spec]
        args += [scale_in, shift_in]
    in_specs.append(w_spec)
    args.append(w)

    bytes_accessed = int(m_pad * k * x.dtype.itemsize + k * c * 2 + m_pad * c * 4)
    y, col_sum, col_ssq = pl.pallas_call(
        kernel,
        grid=(m_pad // tm,),
        in_specs=in_specs,
        out_specs=(out_row_spec, stat_spec, stat_spec),
        out_shape=(jax.ShapeDtypeStruct((m_pad, c), jnp.float32),
                   jax.ShapeDtypeStruct((1, c), jnp.float32),
                   jax.ShapeDtypeStruct((1, c), jnp.float32)),
        compiler_params=pltpu.CompilerParams(
            dimension_semantics=("arbitrary",)),   # stats accumulate across tiles
        cost_estimate=pl.CostEstimate(flops=2 * m_pad * k * c,
                                      transcendentals=0,
                                      bytes_accessed=bytes_accessed),
    )(*args)
    return y[:m], col_sum, col_ssq


def conv3x3_bn_stats(x_nhwc, w9, *, stride):
    """x: (N, H, W, C) bf16 (channel-padded); w9: (9, C, Cout) bf16."""
    n, h, w, c = x_nhwc.shape
    c_out = w9.shape[-1]
    h_out = (h + 2 - 3) // stride + 1
    w_out = (w + 2 - 3) // stride + 1
    xp = jnp.pad(x_nhwc, ((0, 0), (1, 1), (1, 1), (0, 0)))

    kernel = functools.partial(_conv3x3_bn_stats_kernel, stride=stride,
                               h_out=h_out, w_out=w_out)
    bytes_accessed = int(n * (h + 2) * (w + 2) * c * 2 + 9 * c * c_out * 2
                         + n * h_out * w_out * c_out * 4)
    y, col_sum, col_ssq = pl.pallas_call(
        kernel,
        grid=(n,),
        in_specs=[pl.BlockSpec((1, h + 2, w + 2, c), lambda i: (i, 0, 0, 0)),
                  pl.BlockSpec((9, c, c_out), lambda i: (0, 0, 0))],
        out_specs=(pl.BlockSpec((1, h_out * w_out, c_out), lambda i: (i, 0, 0)),
                   pl.BlockSpec((1, c_out), lambda i: (0, 0)),
                   pl.BlockSpec((1, c_out), lambda i: (0, 0))),
        out_shape=(jax.ShapeDtypeStruct((n, h_out * w_out, c_out), jnp.float32),
                   jax.ShapeDtypeStruct((1, c_out), jnp.float32),
                   jax.ShapeDtypeStruct((1, c_out), jnp.float32)),
        compiler_params=pltpu.CompilerParams(
            dimension_semantics=("arbitrary",)),
        cost_estimate=pl.CostEstimate(flops=2 * 9 * n * h_out * w_out * c * c_out,
                                      transcendentals=0,
                                      bytes_accessed=bytes_accessed),
    )(xp, w9)
    return y.reshape(n * h_out * w_out, c_out), col_sum, col_ssq, h_out, w_out


def _apply_call(kernel_fn, row_inputs, vec_inputs, out_dtype, tile_m):
    """Row-tiled elementwise epilogue: row_inputs (M, C) tiled over M, vec_inputs
    (1, C) grid-invariant.  Kernel sees row refs first, then vec refs, then out."""
    m, c = row_inputs[0].shape
    tm = min(tile_m, _round_up(m, 8))
    m_pad = _round_up(m, tm)
    if m_pad != m:
        row_inputs = [jnp.pad(r, ((0, m_pad - m), (0, 0))) for r in row_inputs]
    row_spec = pl.BlockSpec((tm, c), lambda i: (i, 0))
    vec_spec = pl.BlockSpec((1, c), lambda i: (0, 0))
    out = pl.pallas_call(
        kernel_fn,
        grid=(m_pad // tm,),
        in_specs=[row_spec] * len(row_inputs) + [vec_spec] * len(vec_inputs),
        out_specs=row_spec,
        out_shape=jax.ShapeDtypeStruct((m_pad, c), out_dtype),
        compiler_params=pltpu.CompilerParams(dimension_semantics=("parallel",)),
    )(*row_inputs, *vec_inputs)
    return out[:m]


# ------------------------------- JAX glue ---------------------------------

def _bn_scale_shift(col_sum, col_ssq, gamma, beta, m_real):
    mean = col_sum / m_real
    var = jnp.maximum(col_ssq / m_real - mean * mean, 0.0)
    scale = gamma * lax.rsqrt(var + BN_EPS)
    shift = beta - mean * scale
    return scale, shift


def _prep_w1x1(w, k_pad, c_pad):
    wm = jnp.transpose(w[:, :, 0, 0], (1, 0))                # (Cin, Cout)
    wm = jnp.pad(wm, ((0, k_pad - wm.shape[0]), (0, c_pad - wm.shape[1])))
    return wm.astype(jnp.bfloat16)


def _prep_w3x3(w, k_pad, c_pad):
    wt = jnp.transpose(w, (2, 3, 1, 0)).reshape(9, w.shape[1], w.shape[0])
    wt = jnp.pad(wt, ((0, 0), (0, k_pad - wt.shape[1]), (0, c_pad - wt.shape[2])))
    return wt.astype(jnp.bfloat16)


def bottleneck_forward(x_nchw, params, *, stride=1, shortcut=True,
                       tile_m=TILE_M):
    """Pallas-backed BottleNeck forward (training-mode BN).  NCHW in/out."""
    n, c_in, h, w = x_nchw.shape
    c_mid = params["w1"].shape[0]
    c_exp = 4 * c_mid

    c_in_p = _round_up(c_in, LANE)
    c_mid_p = _round_up(c_mid, LANE)
    c_exp_p = _round_up(c_exp, LANE)

    x_nhwc = _pad_last(jnp.transpose(x_nchw, (0, 2, 3, 1)), c_in_p)   # f32
    x_bf = x_nhwc.astype(jnp.bfloat16)
    m1 = n * h * w

    # ---- stage 1: 1x1 conv + BN stats, then BN+ReLU epilogue -> bf16 act ----
    y1, s1, q1 = conv1x1_bn_stats(
        x_bf.reshape(m1, c_in_p), _prep_w1x1(params["w1"], c_in_p, c_mid_p),
        tile_m=tile_m)
    sc1, sh1 = _bn_scale_shift(s1, q1, _pad_last(params["g1"], c_mid_p),
                               _pad_last(params["b1"], c_mid_p), m1)
    a1 = _apply_call(functools.partial(_bn_apply_kernel, relu=True),
                     [y1], [sc1, sh1], jnp.bfloat16, tile_m)

    # ---- stage 2: 3x3 conv (in-kernel 9-tap accumulation) + BN stats ----
    y2, s2, q2, h_out, w_out = conv3x3_bn_stats(
        a1.reshape(n, h, w, c_mid_p),
        _prep_w3x3(params["w2"], c_mid_p, c_mid_p), stride=stride)
    m2 = n * h_out * w_out
    sc2, sh2 = _bn_scale_shift(s2, q2, _pad_last(params["g2"], c_mid_p),
                               _pad_last(params["b2"], c_mid_p), m2)

    # ---- stage 3: 1x1 conv with stage-2 BN+ReLU fused into the matmul ----
    y3, s3, q3 = conv1x1_bn_stats(
        y2, _prep_w1x1(params["w3"], c_mid_p, c_exp_p),
        scale_in=sc2, shift_in=sh2, pre_relu=True, tile_m=tile_m)
    sc3, sh3 = _bn_scale_shift(s3, q3, _pad_last(params["g3"], c_exp_p),
                               _pad_last(params["b3"], c_exp_p), m2)

    # ---- shortcut + fused residual add + ReLU ----
    if shortcut:
        ys, ss, qs, _, _ = conv3x3_bn_stats(
            x_bf, _prep_w3x3(params["ws"], c_in_p, c_exp_p), stride=stride)
        scs, shs = _bn_scale_shift(ss, qs, _pad_last(params["gs"], c_exp_p),
                                   _pad_last(params["bs"], c_exp_p), m2)
        out2d = _apply_call(_bn_add_bn_relu_kernel, [y3, ys],
                            [sc3, sh3, scs, shs], jnp.float32, tile_m)
    else:
        if stride != 1 or c_in != c_exp:
            raise ValueError("identity path needs stride==1 and "
                             "in_channels == 4*out_channels")
        res = x_nhwc.reshape(m1, c_in_p)            # c_in_p == c_exp_p here
        out2d = _apply_call(_bn_add_res_relu_kernel, [y3, res],
                            [sc3, sh3], jnp.float32, tile_m)

    out = out2d.reshape(n, h_out, w_out, c_exp_p)[..., :c_exp]
    return jnp.transpose(out, (0, 3, 1, 2))


# --------------------------- pure-JAX reference ----------------------------
# Matches the kernel's bf16 MXU operand rounding (operands cast bf16 -> f32,
# accumulation in f32), so the comparison is apples-to-apples.

def _q(t):
    return t.astype(jnp.bfloat16).astype(jnp.float32)


def _ref_conv(x, w, stride, pad):
    return lax.conv_general_dilated(
        _q(x), _q(w), window_strides=(stride, stride),
        padding=[(pad, pad), (pad, pad)],
        dimension_numbers=("NCHW", "OIHW", "NCHW"))


def _ref_bn(x, g, b):
    mean = jnp.mean(x, axis=(0, 2, 3), keepdims=True)
    var = jnp.mean((x - mean) ** 2, axis=(0, 2, 3), keepdims=True)
    return ((x - mean) * lax.rsqrt(var + BN_EPS) * g.reshape(1, -1, 1, 1)
            + b.reshape(1, -1, 1, 1))


def bottleneck_reference(x, params, *, stride=1, shortcut=True):
    out = jnp.maximum(_ref_bn(_ref_conv(x, params["w1"], 1, 0),
                              params["g1"], params["b1"]), 0.0)
    out = jnp.maximum(_ref_bn(_ref_conv(out, params["w2"], stride, 1),
                              params["g2"], params["b2"]), 0.0)
    out = _ref_bn(_ref_conv(out, params["w3"], 1, 0), params["g3"], params["b3"])
    if shortcut:
        ident = _ref_bn(_ref_conv(x, params["ws"], stride, 1),
                        params["gs"], params["bs"])
    else:
        ident = x
    return jnp.maximum(out + ident, 0.0)


# --------------------------------- main ------------------------------------

def make_params(key, in_channels, out_channels):
    exp = 4
    ks = jax.random.split(key, 12)

    def conv_w(k, shape):
        fan_in = shape[1] * shape[2] * shape[3]
        return jax.random.normal(k, shape, jnp.float32) / np.sqrt(fan_in)

    return {
        "w1": conv_w(ks[0], (out_channels, in_channels, 1, 1)),
        "g1": 1.0 + 0.1 * jax.random.normal(ks[1], (1, out_channels), jnp.float32),
        "b1": 0.1 * jax.random.normal(ks[2], (1, out_channels), jnp.float32),
        "w2": conv_w(ks[3], (out_channels, out_channels, 3, 3)),
        "g2": 1.0 + 0.1 * jax.random.normal(ks[4], (1, out_channels), jnp.float32),
        "b2": 0.1 * jax.random.normal(ks[5], (1, out_channels), jnp.float32),
        "w3": conv_w(ks[6], (out_channels * exp, out_channels, 1, 1)),
        "g3": 1.0 + 0.1 * jax.random.normal(ks[7], (1, out_channels * exp), jnp.float32),
        "b3": 0.1 * jax.random.normal(ks[8], (1, out_channels * exp), jnp.float32),
        "ws": conv_w(ks[9], (out_channels * exp, in_channels, 3, 3)),
        "gs": 1.0 + 0.1 * jax.random.normal(ks[10], (1, out_channels * exp), jnp.float32),
        "bs": 0.1 * jax.random.normal(ks[11], (1, out_channels * exp), jnp.float32),
    }


if __name__ == "__main__":
    key = jax.random.PRNGKey(0)
    k_x, k_p = jax.random.split(key)

    # batch=2, in_channels=4, 16x16 spatial, out_channels=8 (block out = 32)
    N, C_IN, H, W = 2, 4, 16, 16
    OUT_CH, STRIDE, SHORTCUT = 8, 1, True

    x = jax.random.normal(k_x, (N, C_IN, H, W), jnp.float32)
    params = make_params(k_p, C_IN, OUT_CH)

    fwd = jax.jit(functools.partial(bottleneck_forward,
                                    stride=STRIDE, shortcut=SHORTCUT))
    out = fwd(x, params)
    jax.block_until_ready(out)

    ref = bottleneck_reference(x, params, stride=STRIDE, shortcut=SHORTCUT)
    assert out.shape == (N, OUT_CH * 4, H, W), out.shape
    np.testing.assert_allclose(np.asarray(out), np.asarray(ref),
                               rtol=1e-2, atol=1e-2)

    print("KERNEL_OK")
</pallas_src>

<mosaic_0001>
module attributes {stable_mosaic.version = 11 : i64} {
  func.func @_bn_apply_kernel(%arg0: i32, %arg1: memref<256x128xf32, #tpu.memory_space<vmem>>, %arg2: memref<1x128xf32, #tpu.memory_space<vmem>>, %arg3: memref<1x128xf32, #tpu.memory_space<vmem>>, %arg4: memref<256x128xbf16, #tpu.memory_space<vmem>>) attributes {dimension_semantics = [#tpu.dimension_semantics<parallel>], iteration_bounds = array<i64: 2>, scalar_prefetch = 0 : i64, scratch_operands = 0 : i64, tpu.core_type = #tpu.core_type<tc>, window_params = [{transform_indices = @transform_0, window_bounds = array<i64: 256, 128>}, {pipeline_mode = #tpu.pipeline_mode<synchronous>, transform_indices = @transform_1, window_bounds = array<i64: 1, 128>}, {pipeline_mode = #tpu.pipeline_mode<synchronous>, transform_indices = @transform_2, window_bounds = array<i64: 1, 128>}, {transform_indices = @transform_3, window_bounds = array<i64: 256, 128>}]} {
    %c0 = arith.constant 0 : index
    %c0_0 = arith.constant 0 : index
    %0 = vector.load %arg1[%c0, %c0_0] : memref<256x128xf32, #tpu.memory_space<vmem>>, vector<256x128xf32>
    %c0_1 = arith.constant 0 : index
    %c0_2 = arith.constant 0 : index
    %1 = vector.load %arg2[%c0_1, %c0_2] : memref<1x128xf32, #tpu.memory_space<vmem>>, vector<1x128xf32>
    %2 = vector.broadcast %1 : vector<1x128xf32> to vector<256x128xf32>
    %3 = arith.mulf %0, %2 : vector<256x128xf32>
    %c0_3 = arith.constant 0 : index
    %c0_4 = arith.constant 0 : index
    %4 = vector.load %arg3[%c0_3, %c0_4] : memref<1x128xf32, #tpu.memory_space<vmem>>, vector<1x128xf32>
    %5 = vector.broadcast %4 : vector<1x128xf32> to vector<256x128xf32>
    %6 = arith.addf %3, %5 : vector<256x128xf32>
    %cst = arith.constant 0.000000e+00 : f32
    %7 = vector.broadcast %cst : f32 to vector<256x128xf32>
    %8 = arith.maximumf %6, %7 : vector<256x128xf32>
    %9 = arith.truncf %8 : vector<256x128xf32> to vector<256x128xbf16>
    %c0_5 = arith.constant 0 : index
    %c0_6 = arith.constant 0 : index
    %10 = vector.load %arg4[%c0_5, %c0_6] : memref<256x128xbf16, #tpu.memory_space<vmem>>, vector<256x128xbf16>
    tpu.vector_store %arg4[%c0_5, %c0_6], %9 {strides = array<i32>} : memref<256x128xbf16, #tpu.memory_space<vmem>>, vector<256x128xbf16>,
    return
  }
  func.func @transform_0(%arg0: i32) -> (i32, i32) {
    %c0_i32 = arith.constant 0 : i32
    %c0_i32_0 = arith.constant 0 : i32
    return %arg0, %c0_i32 : i32, i32
  }
  func.func @transform_1(%arg0: i32) -> (i32, i32) {
    %c0_i32 = arith.constant 0 : i32
    %c0_i32_0 = arith.constant 0 : i32
    %c0_i32_1 = arith.constant 0 : i32
    return %c0_i32, %c0_i32_0 : i32, i32
  }
  func.func @transform_2(%arg0: i32) -> (i32, i32) {
    %c0_i32 = arith.constant 0 : i32
    %c0_i32_0 = arith.constant 0 : i32
    %c0_i32_1 = arith.constant 0 : i32
    return %c0_i32, %c0_i32_0 : i32, i32
  }
  func.func @transform_3(%arg0: i32) -> (i32, i32) {
    %c0_i32 = arith.constant 0 : i32
    %c0_i32_0 = arith.constant 0 : i32
    return %arg0, %c0_i32 : i32, i32
  }
}

module attributes {stable_mosaic.version = 11 : i64} {
  func.func @_mm_bn_stats_kernel(%arg0: i32, %arg1: memref<256x128xbf16, #tpu.memory_space<vmem>>, %arg2: memref<128x128xbf16, #tpu.memory_space<vmem>>, %arg3: memref<256x128xf32, #tpu.memory_space<vmem>>, %arg4: memref<1x128xf32, #tpu.memory_space<vmem>>, %arg5: memref<1x128xf32, #tpu.memory_space<vmem>>) attributes {dimension_semantics = [#tpu.dimension_semantics<arbitrary>], iteration_bounds = array<i64: 2>, scalar_prefetch = 0 : i64, scratch_operands = 0 : i64, tpu.core_type = #tpu.core_type<tc>, window_params = [{transform_indices = @transform_0, window_bounds = array<i64: 256, 128>}, {pipeline_mode = #tpu.pipeline_mode<synchronous>, transform_indices = @transform_1, window_bounds = array<i64: 128, 128>}, {transform_indices = @transform_2, window_bounds = array<i64: 256, 128>}, {pipeline_mode = #tpu.pipeline_mode<synchronous>, transform_indices = @transform_3, window_bounds = array<i64: 1, 128>}, {pipeline_mode = #tpu.pipeline_mode<synchronous>, transform_indices = @transform_4, window_bounds = array<i64: 1, 128>}]} {
    %c0 = arith.constant 0 : index
    %c0_0 = arith.constant 0 : index
    %0 = vector.load %arg1[%c0, %c0_0] : memref<256x128xbf16, #tpu.memory_space<vmem>>, vector<256x128xbf16>
    %c0_1 = arith.constant 0 : index
    %c0_2 = arith.constant 0 : index
    %1 = vector.load %arg2[%c0_1, %c0_2] : memref<128x128xbf16, #tpu.memory_space<vmem>>, vector<128x128xbf16>
    %cst = arith.constant dense<0.000000e+00> : vector<256x128xf32>
    %2 = tpu.matmul %0, %1, %cst {dimension_numbers = #tpu.dot_dimension_numbers<[1], [0], [0], [1], [0, 0, 1, 1], [], []>} : vector<256x128xbf16>, vector<128x128xbf16>, vector<256x128xf32> -> vector<256x128xf32>
    %c0_3 = arith.constant 0 : index
    %c0_4 = arith.constant 0 : index
    %3 = vector.load %arg3[%c0_3, %c0_4] : memref<256x128xf32, #tpu.memory_space<vmem>>, vector<256x128xf32>
    tpu.vector_store %arg3[%c0_3, %c0_4], %2 {strides = array<i32>} : memref<256x128xf32, #tpu.memory_space<vmem>>, vector<256x128xf32>,
    %c0_i32 = arith.constant 0 : i32
    %4 = arith.cmpi eq, %arg0, %c0_i32 : i32
    %5 = arith.extui %4 : i1 to i32
    %c0_i32_5 = arith.constant 0 : i32
    %6 = arith.cmpi ne, %5, %c0_i32_5 : i32
    scf.if %6 {
      %cst_16 = arith.constant 0.000000e+00 : f32
      %18 = vector.broadcast %cst_16 : f32 to vector<1x128xf32>
      %c0_17 = arith.constant 0 : index
      %c0_18 = arith.constant 0 : index
      %19 = vector.load %arg4[%c0_17, %c0_18] : memref<1x128xf32, #tpu.memory_space<vmem>>, vector<1x128xf32>
      tpu.vector_store %arg4[%c0_17, %c0_18], %18 {strides = array<i32>} : memref<1x128xf32, #tpu.memory_space<vmem>>, vector<1x128xf32>,
      %cst_19 = arith.constant 0.000000e+00 : f32
      %20 = vector.broadcast %cst_19 : f32 to vector<1x128xf32>
      %c0_20 = arith.constant 0 : index
      %c0_21 = arith.constant 0 : index
      %21 = vector.load %arg5[%c0_20, %c0_21] : memref<1x128xf32, #tpu.memory_space<vmem>>, vector<1x128xf32>
      tpu.vector_store %arg5[%c0_20, %c0_21], %20 {strides = array<i32>} : memref<1x128xf32, #tpu.memory_space<vmem>>, vector<1x128xf32>,
    } else {
    }
    %c0_6 = arith.constant 0 : index
    %c0_7 = arith.constant 0 : index
    %7 = vector.load %arg4[%c0_6, %c0_7] : memref<1x128xf32, #tpu.memory_space<vmem>>, vector<1x128xf32>
    %cst_8 = arith.constant dense<0.000000e+00> : vector<128xf32>
    %8 = vector.multi_reduction <add>, %2, %cst_8 [0] : vector<256x128xf32> to vector<128xf32>
    %9 = vector.shape_cast %8 : vector<128xf32> to vector<1x128xf32>
    %10 = arith.addf %7, %9 : vector<1x128xf32>
    %c0_9 = arith.constant 0 : index
    %c0_10 = arith.constant 0 : index
    %11 = vector.load %arg4[%c0_9, %c0_10] : memref<1x128xf32, #tpu.memory_space<vmem>>, vector<1x128xf32>
    tpu.vector_store %arg4[%c0_9, %c0_10], %10 {strides = array<i32>} : memref<1x128xf32, #tpu.memory_space<vmem>>, vector<1x128xf32>,
    %c0_11 = arith.constant 0 : index
    %c0_12 = arith.constant 0 : index
    %12 = vector.load %arg5[%c0_11, %c0_12] : memref<1x128xf32, #tpu.memory_space<vmem>>, vector<1x128xf32>
    %13 = arith.mulf %2, %2 : vector<256x128xf32>
    %cst_13 = arith.constant dense<0.000000e+00> : vector<128xf32>
    %14 = vector.multi_reduction <add>, %13, %cst_13 [0] : vector<256x128xf32> to vector<128xf32>
    %15 = vector.shape_cast %14 : vector<128xf32> to vector<1x128xf32>
    %16 = arith.addf %12, %15 : vector<1x128xf32>
    %c0_14 = arith.constant 0 : index
    %c0_15 = arith.constant 0 : index
    %17 = vector.load %arg5[%c0_14, %c0_15] : memref<1x128xf32, #tpu.memory_space<vmem>>, vector<1x128xf32>
    tpu.vector_store %arg5[%c0_14, %c0_15], %16 {strides = array<i32>} : memref<1x128xf32, #tpu.memory_space<vmem>>, vector<1x128xf32>,
    return
  }
  func.func @transform_0(%arg0: i32) -> (i32, i32) {
    %c0_i32 = arith.constant 0 : i32
    %c0_i32_0 = arith.constant 0 : i32
    return %arg0, %c0_i32 : i32, i32
  }
  func.func @transform_1(%arg0: i32) -> (i32, i32) {
    %c0_i32 = arith.constant 0 : i32
    %c0_i32_0 = arith.constant 0 : i32
    %c0_i32_1 = arith.constant 0 : i32
    return %c0_i32, %c0_i32_0 : i32, i32
  }
  func.func @transform_2(%arg0: i32) -> (i32, i32) {
    %c0_i32 = arith.constant 0 : i32
    %c0_i32_0 = arith.constant 0 : i32
    return %arg0, %c0_i32 : i32, i32
  }
  func.func @transform_3(%arg0: i32) -> (i32, i32) {
    %c0_i32 = arith.constant 0 : i32
    %c0_i32_0 = arith.constant 0 : i32
    %c0_i32_1 = arith.constant 0 : i32
    return %c0_i32, %c0_i32_0 : i32, i32
  }
  func.func @transform_4(%arg0: i32) -> (i32, i32) {
    %c0_i32 = arith.constant 0 : i32
    %c0_i32_0 = arith.constant 0 : i32
    %c0_i32_1 = arith.constant 0 : i32
    return %c0_i32, %c0_i32_0 : i32, i32
  }
}

module attributes {stable_mosaic.version = 11 : i64} {
  func.func @_conv3x3_bn_stats_kernel(%arg0: i32, %arg1: memref<1x18x18x128xbf16, #tpu.memory_space<vmem>>, %arg2: memref<9x128x128xbf16, #tpu.memory_space<vmem>>, %arg3: memref<1x256x128xf32, #tpu.memory_space<vmem>>, %arg4: memref<1x128xf32, #tpu.memory_space<vmem>>, %arg5: memref<1x128xf32, #tpu.memory_space<vmem>>) attributes {dimension_semantics = [#tpu.dimension_semantics<arbitrary>], iteration_bounds = array<i64: 2>, scalar_prefetch = 0 : i64, scratch_operands = 0 : i64, tpu.core_type = #tpu.core_type<tc>, window_params = [{transform_indices = @transform_0, window_bounds = array<i64: 1, 18, 18, 128>}, {pipeline_mode = #tpu.pipeline_mode<synchronous>, transform_indices = @transform_1, window_bounds = array<i64: 9, 128, 128>}, {transform_indices = @transform_2, window_bounds = array<i64: 1, 256, 128>}, {pipeline_mode = #tpu.pipeline_mode<synchronous>, transform_indices = @transform_3, window_bounds = array<i64: 1, 128>}, {pipeline_mode = #tpu.pipeline_mode<synchronous>, transform_indices = @transform_4, window_bounds = array<i64: 1, 128>}]} {
    %c0 = arith.constant 0 : index
    %c0_0 = arith.constant 0 : index
    %c0_1 = arith.constant 0 : index
    %c0_2 = arith.constant 0 : index
    %0 = vector.load %arg1[%c0, %c0_0, %c0_1, %c0_2] : memref<1x18x18x128xbf16, #tpu.memory_space<vmem>>, vector<1x18x18x128xbf16>
    %1 = vector.shape_cast %0 : vector<1x18x18x128xbf16> to vector<18x18x128xbf16>
    %2 = vector.extract_strided_slice %1 {offsets = [0, 0, 0], sizes = [16, 16, 128], strides = [1, 1, 1]} : vector<18x18x128xbf16> to vector<16x16x128xbf16>
    %3 = vector.shape_cast %2 : vector<16x16x128xbf16> to vector<256x128xbf16>
    %c0_3 = arith.constant 0 : index
    %c0_4 = arith.constant 0 : index
    %c0_5 = arith.constant 0 : index
    %4 = vector.load %arg2[%c0_3, %c0_4, %c0_5] : memref<9x128x128xbf16, #tpu.memory_space<vmem>>, vector<1x128x128xbf16>
    %5 = vector.shape_cast %4 : vector<1x128x128xbf16> to vector<128x128xbf16>
    %cst = arith.constant dense<0.000000e+00> : vector<256x128xf32>
    %6 = tpu.matmul %3, %5, %cst {dimension_numbers = #tpu.dot_dimension_numbers<[1], [0], [0], [1], [0, 0, 1, 1], [], []>} : vector<256x128xbf16>, vector<128x128xbf16>, vector<256x128xf32> -> vector<256x128xf32>
    %7 = vector.extract_strided_slice %1 {offsets = [0, 1, 0], sizes = [16, 16, 128], strides = [1, 1, 1]} : vector<18x18x128xbf16> to vector<16x16x128xbf16>
    %8 = vector.shape_cast %7 : vector<16x16x128xbf16> to vector<256x128xbf16>
    %c1 = arith.constant 1 : index
    %c0_6 = arith.constant 0 : index
    %c0_7 = arith.constant 0 : index
    %9 = vector.load %arg2[%c1, %c0_6, %c0_7] : memref<9x128x128xbf16, #tpu.memory_space<vmem>>, vector<1x128x128xbf16>
    %10 = vector.shape_cast %9 : vector<1x128x128xbf16> to vector<128x128xbf16>
    %cst_8 = arith.constant dense<0.000000e+00> : vector<256x128xf32>
    %11 = tpu.matmul %8, %10, %cst_8 {dimension_numbers = #tpu.dot_dimension_numbers<[1], [0], [0], [1], [0, 0, 1, 1], [], []>} : vector<256x128xbf16>, vector<128x128xbf16>, vector<256x128xf32> -> vector<256x128xf32>
    %12 = arith.addf %6, %11 : vector<256x128xf32>
    %13 = vector.extract_strided_slice %1 {offsets = [0, 2, 0], sizes = [16, 16, 128], strides = [1, 1, 1]} : vector<18x18x128xbf16> to vector<16x16x128xbf16>
    %14 = vector.shape_cast %13 : vector<16x16x128xbf16> to vector<256x128xbf16>
    %c2 = arith.constant 2 : index
    %c0_9 = arith.constant 0 : index
    %c0_10 = arith.constant 0 : index
    %15 = vector.load %arg2[%c2, %c0_9, %c0_10] : memref<9x128x128xbf16, #tpu.memory_space<vmem>>, vector<1x128x128xbf16>
    %16 = vector.shape_cast %15 : vector<1x128x128xbf16> to vector<128x128xbf16>
    %cst_11 = arith.constant dense<0.000000e+00> : vector<256x128xf32>
    %17 = tpu.matmul %14, %16, %cst_11 {dimension_numbers = #tpu.dot_dimension_numbers<[1], [0], [0], [1], [0, 0, 1, 1], [], []>} : vector<256x128xbf16>, vector<128x128xbf16>, vector<256x128xf32> -> vector<256x128xf32>
    %18 = arith.addf %12, %17 : vector<256x128xf32>
    %19 = vector.extract_strided_slice %1 {offsets = [1, 0, 0], sizes = [16, 16, 128], strides = [1, 1, 1]} : vector<18x18x128xbf16> to vector<16x16x128xbf16>
    %20 = vector.shape_cast %19 : vector<16x16x128xbf16> to vector<256x128xbf16>
    %c3 = arith.constant 3 : index
    %c0_12 = arith.constant 0 : index
    %c0_13 = arith.constant 0 : index
    %21 = vector.load %arg2[%c3, %c0_12, %c0_13] : memref<9x128x128xbf16, #tpu.memory_space<vmem>>, vector<1x128x128xbf16>
    %22 = vector.shape_cast %21 : vector<1x128x128xbf16> to vector<128x128xbf16>
    %cst_14 = arith.constant dense<0.000000e+00> : vector<256x128xf32>
    %23 = tpu.matmul %20, %22, %cst_14 {dimension_numbers = #tpu.dot_dimension_numbers<[1], [0], [0], [1], [0, 0, 1, 1], [], []>} : vector<256x128xbf16>, vector<128x128xbf16>, vector<256x128xf32> -> vector<256x128xf32>
    %24 = arith.addf %18, %23 : vector<256x128xf32>
    %25 = vector.extract_strided_slice %1 {offsets = [1, 1, 0], sizes = [16, 16, 128], strides = [1, 1, 1]} : vector<18x18x128xbf16> to vector<16x16x128xbf16>
    %26 = vector.shape_cast %25 : vector<16x16x128xbf16> to vector<256x128xbf16>
    %c4 = arith.constant 4 : index
    %c0_15 = arith.constant 0 : index
    %c0_16 = arith.constant 0 : index
    %27 = vector.load %arg2[%c4, %c0_15, %c0_16] : memref<9x128x128xbf16, #tpu.memory_space<vmem>>, vector<1x128x128xbf16>
    %28 = vector.shape_cast %27 : vector<1x128x128xbf16> to vector<128x128xbf16>
    %cst_17 = arith.constant dense<0.000000e+00> : vector<256x128xf32>
    %29 = tpu.matmul %26, %28, %cst_17 {dimension_numbers = #tpu.dot_dimension_numbers<[1], [0], [0], [1], [0, 0, 1, 1], [], []>} : vector<256x128xbf16>, vector<128x128xbf16>, vector<256x128xf32> -> vector<256x128xf32>
    %30 = arith.addf %24, %29 : vector<256x128xf32>
    %31 = vector.extract_strided_slice %1 {offsets = [1, 2, 0], sizes = [16, 16, 128], strides = [1, 1, 1]} : vector<18x18x128xbf16> to vector<16x16x128xbf16>
    %32 = vector.shape_cast %31 : vector<16x16x128xbf16> to vector<256x128xbf16>
    %c5 = arith.constant 5 : index
    %c0_18 = arith.constant 0 : index
    %c0_19 = arith.constant 0 : index
    %33 = vector.load %arg2[%c5, %c0_18, %c0_19] : memref<9x128x128xbf16, #tpu.memory_space<vmem>>, vector<1x128x128xbf16>
    %34 = vector.shape_cast %33 : vector<1x128x128xbf16> to vector<128x128xbf16>
    %cst_20 = arith.constant dense<0.000000e+00> : vector<256x128xf32>
    %35 = tpu.matmul %32, %34, %cst_20 {dimension_numbers = #tpu.dot_dimension_numbers<[1], [0], [0], [1], [0, 0, 1, 1], [], []>} : vector<256x128xbf16>, vector<128x128xbf16>, vector<256x128xf32> -> vector<256x128xf32>
    %36 = arith.addf %30, %35 : vector<256x128xf32>
    %37 = vector.extract_strided_slice %1 {offsets = [2, 0, 0], sizes = [16, 16, 128], strides = [1, 1, 1]} : vector<18x18x128xbf16> to vector<16x16x128xbf16>
    %38 = vector.shape_cast %37 : vector<16x16x128xbf16> to vector<256x128xbf16>
    %c6 = arith.constant 6 : index
    %c0_21 = arith.constant 0 : index
    %c0_22 = arith.constant 0 : index
    %39 = vector.load %arg2[%c6, %c0_21, %c0_22] : memref<9x128x128xbf16, #tpu.memory_space<vmem>>, vector<1x128x128xbf16>
    %40 = vector.shape_cast %39 : vector<1x128x128xbf16> to vector<128x128xbf16>
    %cst_23 = arith.constant dense<0.000000e+00> : vector<256x128xf32>
    %41 = tpu.matmul %38, %40, %cst_23 {dimension_numbers = #tpu.dot_dimension_numbers<[1], [0], [0], [1], [0, 0, 1, 1], [], []>} : vector<256x128xbf16>, vector<128x128xbf16>, vector<256x128xf32> -> vector<256x128xf32>
    %42 = arith.addf %36, %41 : vector<256x128xf32>
    %43 = vector.extract_strided_slice %1 {offsets = [2, 1, 0], sizes = [16, 16, 128], strides = [1, 1, 1]} : vector<18x18x128xbf16> to vector<16x16x128xbf16>
    %44 = vector.shape_cast %43 : vector<16x16x128xbf16> to vector<256x128xbf16>
    %c7 = arith.constant 7 : index
    %c0_24 = arith.constant 0 : index
    %c0_25 = arith.constant 0 : index
    %45 = vector.load %arg2[%c7, %c0_24, %c0_25] : memref<9x128x128xbf16, #tpu.memory_space<vmem>>, vector<1x128x128xbf16>
    %46 = vector.shape_cast %45 : vector<1x128x128xbf16> to vector<128x128xbf16>
    %cst_26 = arith.constant dense<0.000000e+00> : vector<256x128xf32>
    %47 = tpu.matmul %44, %46, %cst_26 {dimension_numbers = #tpu.dot_dimension_numbers<[1], [0], [0], [1], [0, 0, 1, 1], [], []>} : vector<256x128xbf16>, vector<128x128xbf16>, vector<256x128xf32> -> vector<256x128xf32>
    %48 = arith.addf %42, %47 : vector<256x128xf32>
    %49 = vector.extract_strided_slice %1 {offsets = [2, 2, 0], sizes = [16, 16, 128], strides = [1, 1, 1]} : vector<18x18x128xbf16> to vector<16x16x128xbf16>
    %50 = vector.shape_cast %49 : vector<16x16x128xbf16> to vector<256x128xbf16>
    %c8 = arith.constant 8 : index
    %c0_27 = arith.constant 0 : index
    %c0_28 = arith.constant 0 : index
    %51 = vector.load %arg2[%c8, %c0_27, %c0_28] : memref<9x128x128xbf16, #tpu.memory_space<vmem>>, vector<1x128x128xbf16>
    %52 = vector.shape_cast %51 : vector<1x128x128xbf16> to vector<128x128xbf16>
    %cst_29 = arith.constant dense<0.000000e+00> : vector<256x128xf32>
    %53 = tpu.matmul %50, %52, %cst_29 {dimension_numbers = #tpu.dot_dimension_numbers<[1], [0], [0], [1], [0, 0, 1, 1], [], []>} : vector<256x128xbf16>, vector<128x128xbf16>, vector<256x128xf32> -> vector<256x128xf32>
    %54 = arith.addf %48, %53 : vector<256x128xf32>
    %c0_30 = arith.constant 0 : index
    %c0_31 = arith.constant 0 : index
    %c0_32 = arith.constant 0 : index
    %55 = vector.load %arg3[%c0_30, %c0_31, %c0_32] : memref<1x256x128xf32, #tpu.memory_space<vmem>>, vector<1x256x128xf32>
    %56 = vector.shape_cast %55 : vector<1x256x128xf32> to vector<256x128xf32>
    %57 = vector.shape_cast %54 : vector<256x128xf32> to vector<1x256x128xf32>
    tpu.vector_store %arg3[%c0_30, %c0_31, %c0_32], %57 {strides = array<i32>} : memref<1x256x128xf32, #tpu.memory_space<vmem>>, vector<1x256x128xf32>,
    %c0_i32 = arith.constant 0 : i32
    %58 = arith.cmpi eq, %arg0, %c0_i32 : i32
    %59 = arith.extui %58 : i1 to i32
    %c0_i32_33 = arith.constant 0 : i32
    %60 = arith.cmpi ne, %59, %c0_i32_33 : i32
    scf.if %60 {
      %cst_44 = arith.constant 0.000000e+00 : f32
      %72 = vector.broadcast %cst_44 : f32 to vector<1x128xf32>
      %c0_45 = arith.constant 0 : index
      %c0_46 = arith.constant 0 : index
      %73 = vector.load %arg4[%c0_45, %c0_46] : memref<1x128xf32, #tpu.memory_space<vmem>>, vector<1x128xf32>
      tpu.vector_store %arg4[%c0_45, %c0_46], %72 {strides = array<i32>} : memref<1x128xf32, #tpu.memory_space<vmem>>, vector<1x128xf32>,
      %cst_47 = arith.constant 0.000000e+00 : f32
      %74 = vector.broadcast %cst_47 : f32 to vector<1x128xf32>
      %c0_48 = arith.constant 0 : index
      %c0_49 = arith.constant 0 : index
      %75 = vector.load %arg5[%c0_48, %c0_49] : memref<1x128xf32, #tpu.memory_space<vmem>>, vector<1x128xf32>
      tpu.vector_store %arg5[%c0_48, %c0_49], %74 {strides = array<i32>} : memref<1x128xf32, #tpu.memory_space<vmem>>, vector<1x128xf32>,
    } else {
    }
    %c0_34 = arith.constant 0 : index
    %c0_35 = arith.constant 0 : index
    %61 = vector.load %arg4[%c0_34, %c0_35] : memref<1x128xf32, #tpu.memory_space<vmem>>, vector<1x128xf32>
    %cst_36 = arith.constant dense<0.000000e+00> : vector<128xf32>
    %62 = vector.multi_reduction <add>, %54, %cst_36 [0] : vector<256x128xf32> to vector<128xf32>
    %63 = vector.shape_cast %62 : vector<128xf32> to vector<1x128xf32>
    %64 = arith.addf %61, %63 : vector<1x128xf32>
    %c0_37 = arith.constant 0 : index
    %c0_38 = arith.constant 0 : index
    %65 = vector.load %arg4[%c0_37, %c0_38] : memref<1x128xf32, #tpu.memory_space<vmem>>, vector<1x128xf32>
    tpu.vector_store %arg4[%c0_37, %c0_38], %64 {strides = array<i32>} : memref<1x128xf32, #tpu.memory_space<vmem>>, vector<1x128xf32>,
    %c0_39 = arith.constant 0 : index
    %c0_40 = arith.constant 0 : index
    %66 = vector.load %arg5[%c0_39, %c0_40] : memref<1x128xf32, #tpu.memory_space<vmem>>, vector<1x128xf32>
    %67 = arith.mulf %54, %54 : vector<256x128xf32>
    %cst_41 = arith.constant dense<0.000000e+00> : vector<128xf32>
    %68 = vector.multi_reduction <add>, %67, %cst_41 [0] : vector<256x128xf32> to vector<128xf32>
    %69 = vector.shape_cast %68 : vector<128xf32> to vector<1x128xf32>
    %70 = arith.addf %66, %69 : vector<1x128xf32>
    %c0_42 = arith.constant 0 : index
    %c0_43 = arith.constant 0 : index
    %71 = vector.load %arg5[%c0_42, %c0_43] : memref<1x128xf32, #tpu.memory_space<vmem>>, vector<1x128xf32>
    tpu.vector_store %arg5[%c0_42, %c0_43], %70 {strides = array<i32>} : memref<1x128xf32, #tpu.memory_space<vmem>>, vector<1x128xf32>,
    return
  }
  func.func @transform_0(%arg0: i32) -> (i32, i32, i32, i32) {
    %c0_i32 = arith.constant 0 : i32
    %c0_i32_0 = arith.constant 0 : i32
    %c0_i32_1 = arith.constant 0 : i32
    %c0_i32_2 = arith.constant 0 : i32
    return %arg0, %c0_i32, %c0_i32_0, %c0_i32_1 : i32, i32, i32, i32
  }
  func.func @transform_1(%arg0: i32) -> (i32, i32, i32) {
    %c0_i32 = arith.constant 0 : i32
    %c0_i32_0 = arith.constant 0 : i32
    %c0_i32_1 = arith.constant 0 : i32
    %c0_i32_2 = arith.constant 0 : i32
    return %c0_i32, %c0_i32_0, %c0_i32_1 : i32, i32, i32
  }
  func.func @transform_2(%arg0: i32) -> (i32, i32, i32) {
    %c0_i32 = arith.constant 0 : i32
    %c0_i32_0 = arith.constant 0 : i32
    %c0_i32_1 = arith.constant 0 : i32
    return %arg0, %c0_i32, %c0_i32_0 : i32, i32, i32
  }
  func.func @transform_3(%arg0: i32) -> (i32, i32) {
    %c0_i32 = arith.constant 0 : i32
    %c0_i32_0 = arith.constant 0 : i32
    %c0_i32_1 = arith.constant 0 : i32
    return %c0_i32, %c0_i32_0 : i32, i32
  }
  func.func @transform_4(%arg0: i32) -> (i32, i32) {
    %c0_i32 = arith.constant 0 : i32
    %c0_i32_0 = arith.constant 0 : i32
    %c0_i32_1 = arith.constant 0 : i32
    return %c0_i32, %c0_i32_0 : i32, i32
  }
}

module attributes {stable_mosaic.version = 11 : i64} {
  func.func @_mm_bn_stats_kernel(%arg0: i32, %arg1: memref<256x128xf32, #tpu.memory_space<vmem>>, %arg2: memref<1x128xf32, #tpu.memory_space<vmem>>, %arg3: memref<1x128xf32, #tpu.memory_space<vmem>>, %arg4: memref<128x128xbf16, #tpu.memory_space<vmem>>, %arg5: memref<256x128xf32, #tpu.memory_space<vmem>>, %arg6: memref<1x128xf32, #tpu.memory_space<vmem>>, %arg7: memref<1x128xf32, #tpu.memory_space<vmem>>) attributes {dimension_semantics = [#tpu.dimension_semantics<arbitrary>], iteration_bounds = array<i64: 2>, scalar_prefetch = 0 : i64, scratch_operands = 0 : i64, tpu.core_type = #tpu.core_type<tc>, window_params = [{transform_indices = @transform_0, window_bounds = array<i64: 256, 128>}, {pipeline_mode = #tpu.pipeline_mode<synchronous>, transform_indices = @transform_1, window_bounds = array<i64: 1, 128>}, {pipeline_mode = #tpu.pipeline_mode<synchronous>, transform_indices = @transform_2, window_bounds = array<i64: 1, 128>}, {pipeline_mode = #tpu.pipeline_mode<synchronous>, transform_indices = @transform_3, window_bounds = array<i64: 128, 128>}, {transform_indices = @transform_4, window_bounds = array<i64: 256, 128>}, {pipeline_mode = #tpu.pipeline_mode<synchronous>, transform_indices = @transform_5, window_bounds = array<i64: 1, 128>}, {pipeline_mode = #tpu.pipeline_mode<synchronous>, transform_indices = @transform_6, window_bounds = array<i64: 1, 128>}]} {
    %c0 = arith.constant 0 : index
    %c0_0 = arith.constant 0 : index
    %0 = vector.load %arg1[%c0, %c0_0] : memref<256x128xf32, #tpu.memory_space<vmem>>, vector<256x128xf32>
    %c0_1 = arith.constant 0 : index
    %c0_2 = arith.constant 0 : index
    %1 = vector.load %arg2[%c0_1, %c0_2] : memref<1x128xf32, #tpu.memory_space<vmem>>, vector<1x128xf32>
    %2 = vector.broadcast %1 : vector<1x128xf32> to vector<256x128xf32>
    %3 = arith.mulf %0, %2 : vector<256x128xf32>
    %c0_3 = arith.constant 0 : index
    %c0_4 = arith.constant 0 : index
    %4 = vector.load %arg3[%c0_3, %c0_4] : memref<1x128xf32, #tpu.memory_space<vmem>>, vector<1x128xf32>
    %5 = vector.broadcast %4 : vector<1x128xf32> to vector<256x128xf32>
    %6 = arith.addf %3, %5 : vector<256x128xf32>
    %cst = arith.constant 0.000000e+00 : f32
    %7 = vector.broadcast %cst : f32 to vector<256x128xf32>
    %8 = arith.maximumf %6, %7 : vector<256x128xf32>
    %9 = arith.truncf %8 : vector<256x128xf32> to vector<256x128xbf16>
    %c0_5 = arith.constant 0 : index
    %c0_6 = arith.constant 0 : index
    %10 = vector.load %arg4[%c0_5, %c0_6] : memref<128x128xbf16, #tpu.memory_space<vmem>>, vector<128x128xbf16>
    %cst_7 = arith.constant dense<0.000000e+00> : vector<256x128xf32>
    %11 = tpu.matmul %9, %10, %cst_7 {dimension_numbers = #tpu.dot_dimension_numbers<[1], [0], [0], [1], [0, 0, 1, 1], [], []>} : vector<256x128xbf16>, vector<128x128xbf16>, vector<256x128xf32> -> vector<256x128xf32>
    %c0_8 = arith.constant 0 : index
    %c0_9 = arith.constant 0 : index
    %12 = vector.load %arg5[%c0_8, %c0_9] : memref<256x128xf32, #tpu.memory_space<vmem>>, vector<256x128xf32>
    tpu.vector_store %arg5[%c0_8, %c0_9], %11 {strides = array<i32>} : memref<256x128xf32, #tpu.memory_space<vmem>>, vector<256x128xf32>,
    %c0_i32 = arith.constant 0 : i32
    %13 = arith.cmpi eq, %arg0, %c0_i32 : i32
    %14 = arith.extui %13 : i1 to i32
    %c0_i32_10 = arith.constant 0 : i32
    %15 = arith.cmpi ne, %14, %c0_i32_10 : i32
    scf.if %15 {
      %cst_21 = arith.constant 0.000000e+00 : f32
      %27 = vector.broadcast %cst_21 : f32 to vector<1x128xf32>
      %c0_22 = arith.constant 0 : index
      %c0_23 = arith.constant 0 : index
      %28 = vector.load %arg6[%c0_22, %c0_23] : memref<1x128xf32, #tpu.memory_space<vmem>>, vector<1x128xf32>
      tpu.vector_store %arg6[%c0_22, %c0_23], %27 {strides = array<i32>} : memref<1x128xf32, #tpu.memory_space<vmem>>, vector<1x128xf32>,
      %cst_24 = arith.constant 0.000000e+00 : f32
      %29 = vector.broadcast %cst_24 : f32 to vector<1x128xf32>
      %c0_25 = arith.constant 0 : index
      %c0_26 = arith.constant 0 : index
      %30 = vector.load %arg7[%c0_25, %c0_26] : memref<1x128xf32, #tpu.memory_space<vmem>>, vector<1x128xf32>
      tpu.vector_store %arg7[%c0_25, %c0_26], %29 {strides = array<i32>} : memref<1x128xf32, #tpu.memory_space<vmem>>, vector<1x128xf32>,
    } else {
    }
    %c0_11 = arith.constant 0 : index
    %c0_12 = arith.constant 0 : index
    %16 = vector.load %arg6[%c0_11, %c0_12] : memref<1x128xf32, #tpu.memory_space<vmem>>, vector<1x128xf32>
    %cst_13 = arith.constant dense<0.000000e+00> : vector<128xf32>
    %17 = vector.multi_reduction <add>, %11, %cst_13 [0] : vector<256x128xf32> to vector<128xf32>
    %18 = vector.shape_cast %17 : vector<128xf32> to vector<1x128xf32>
    %19 = arith.addf %16, %18 : vector<1x128xf32>
    %c0_14 = arith.constant 0 : index
    %c0_15 = arith.constant 0 : index
    %20 = vector.load %arg6[%c0_14, %c0_15] : memref<1x128xf32, #tpu.memory_space<vmem>>, vector<1x128xf32>
    tpu.vector_store %arg6[%c0_14, %c0_15], %19 {strides = array<i32>} : memref<1x128xf32, #tpu.memory_space<vmem>>, vector<1x128xf32>,
    %c0_16 = arith.constant 0 : index
    %c0_17 = arith.constant 0 : index
    %21 = vector.load %arg7[%c0_16, %c0_17] : memref<1x128xf32, #tpu.memory_space<vmem>>, vector<1x128xf32>
    %22 = arith.mulf %11, %11 : vector<256x128xf32>
    %cst_18 = arith.constant dense<0.000000e+00> : vector<128xf32>
    %23 = vector.multi_reduction <add>, %22, %cst_18 [0] : vector<256x128xf32> to vector<128xf32>
    %24 = vector.shape_cast %23 : vector<128xf32> to vector<1x128xf32>
    %25 = arith.addf %21, %24 : vector<1x128xf32>
    %c0_19 = arith.constant 0 : index
    %c0_20 = arith.constant 0 : index
    %26 = vector.load %arg7[%c0_19, %c0_20] : memref<1x128xf32, #tpu.memory_space<vmem>>, vector<1x128xf32>
    tpu.vector_store %arg7[%c0_19, %c0_20], %25 {strides = array<i32>} : memref<1x128xf32, #tpu.memory_space<vmem>>, vector<1x128xf32>,
    return
  }
  func.func @transform_0(%arg0: i32) -> (i32, i32) {
    %c0_i32 = arith.constant 0 : i32
    %c0_i32_0 = arith.constant 0 : i32
    return %arg0, %c0_i32 : i32, i32
  }
  func.func @transform_1(%arg0: i32) -> (i32, i32) {
    %c0_i32 = arith.constant 0 : i32
    %c0_i32_0 = arith.constant 0 : i32
    %c0_i32_1 = arith.constant 0 : i32
    return %c0_i32, %c0_i32_0 : i32, i32
  }
  func.func @transform_2(%arg0: i32) -> (i32, i32) {
    %c0_i32 = arith.constant 0 : i32
    %c0_i32_0 = arith.constant 0 : i32
    %c0_i32_1 = arith.constant 0 : i32
    return %c0_i32, %c0_i32_0 : i32, i32
  }
  func.func @transform_3(%arg0: i32) -> (i32, i32) {
    %c0_i32 = arith.constant 0 : i32
    %c0_i32_0 = arith.constant 0 : i32
    %c0_i32_1 = arith.constant 0 : i32
    return %c0_i32, %c0_i32_0 : i32, i32
  }
  func.func @transform_4(%arg0: i32) -> (i32, i32) {
    %c0_i32 = arith.constant 0 : i32
    %c0_i32_0 = arith.constant 0 : i32
    return %arg0, %c0_i32 : i32, i32
  }
  func.func @transform_5(%arg0: i32) -> (i32, i32) {
    %c0_i32 = arith.constant 0 : i32
    %c0_i32_0 = arith.constant 0 : i32
    %c0_i32_1 = arith.constant 0 : i32
    return %c0_i32, %c0_i32_0 : i32, i32
  }
  func.func @transform_6(%arg0: i32) -> (i32, i32) {
    %c0_i32 = arith.constant 0 : i32
    %c0_i32_0 = arith.constant 0 : i32
    %c0_i32_1 = arith.constant 0 : i32
    return %c0_i32, %c0_i32_0 : i32, i32
  }
}

module attributes {stable_mosaic.version = 11 : i64} {
  func.func @_bn_add_bn_relu_kernel(%arg0: i32, %arg1: memref<256x128xf32, #tpu.memory_space<vmem>>, %arg2: memref<256x128xf32, #tpu.memory_space<vmem>>, %arg3: memref<1x128xf32, #tpu.memory_space<vmem>>, %arg4: memref<1x128xf32, #tpu.memory_space<vmem>>, %arg5: memref<1x128xf32, #tpu.memory_space<vmem>>, %arg6: memref<1x128xf32, #tpu.memory_space<vmem>>, %arg7: memref<256x128xf32, #tpu.memory_space<vmem>>) attributes {dimension_semantics = [#tpu.dimension_semantics<parallel>], iteration_bounds = array<i64: 2>, scalar_prefetch = 0 : i64, scratch_operands = 0 : i64, tpu.core_type = #tpu.core_type<tc>, window_params = [{transform_indices = @transform_0, window_bounds = array<i64: 256, 128>}, {transform_indices = @transform_1, window_bounds = array<i64: 256, 128>}, {pipeline_mode = #tpu.pipeline_mode<synchronous>, transform_indices = @transform_2, window_bounds = array<i64: 1, 128>}, {pipeline_mode = #tpu.pipeline_mode<synchronous>, transform_indices = @transform_3, window_bounds = array<i64: 1, 128>}, {pipeline_mode = #tpu.pipeline_mode<synchronous>, transform_indices = @transform_4, window_bounds = array<i64: 1, 128>}, {pipeline_mode = #tpu.pipeline_mode<synchronous>, transform_indices = @transform_5, window_bounds = array<i64: 1, 128>}, {transform_indices = @transform_6, window_bounds = array<i64: 256, 128>}]} {
    %c0 = arith.constant 0 : index
    %c0_0 = arith.constant 0 : index
    %0 = vector.load %arg1[%c0, %c0_0] : memref<256x128xf32, #tpu.memory_space<vmem>>, vector<256x128xf32>
    %c0_1 = arith.constant 0 : index
    %c0_2 = arith.constant 0 : index
    %1 = vector.load %arg3[%c0_1, %c0_2] : memref<1x128xf32, #tpu.memory_space<vmem>>, vector<1x128xf32>
    %2 = vector.broadcast %1 : vector<1x128xf32> to vector<256x128xf32>
    %3 = arith.mulf %0, %2 : vector<256x128xf32>
    %c0_3 = arith.constant 0 : index
    %c0_4 = arith.constant 0 : index
    %4 = vector.load %arg4[%c0_3, %c0_4] : memref<1x128xf32, #tpu.memory_space<vmem>>, vector<1x128xf32>
    %5 = vector.broadcast %4 : vector<1x128xf32> to vector<256x128xf32>
    %6 = arith.addf %3, %5 : vector<256x128xf32>
    %c0_5 = arith.constant 0 : index
    %c0_6 = arith.constant 0 : index
    %7 = vector.load %arg2[%c0_5, %c0_6] : memref<256x128xf32, #tpu.memory_space<vmem>>, vector<256x128xf32>
    %c0_7 = arith.constant 0 : index
    %c0_8 = arith.constant 0 : index
    %8 = vector.load %arg5[%c0_7, %c0_8] : memref<1x128xf32, #tpu.memory_space<vmem>>, vector<1x128xf32>
    %9 = vector.broadcast %8 : vector<1x128xf32> to vector<256x128xf32>
    %10 = arith.mulf %7, %9 : vector<256x128xf32>
    %11 = arith.addf %6, %10 : vector<256x128xf32>
    %c0_9 = arith.constant 0 : index
    %c0_10 = arith.constant 0 : index
    %12 = vector.load %arg6[%c0_9, %c0_10] : memref<1x128xf32, #tpu.memory_space<vmem>>, vector<1x128xf32>
    %13 = vector.broadcast %12 : vector<1x128xf32> to vector<256x128xf32>
    %14 = arith.addf %11, %13 : vector<256x128xf32>
    %cst = arith.constant 0.000000e+00 : f32
    %15 = vector.broadcast %cst : f32 to vector<256x128xf32>
    %16 = arith.maximumf %14, %15 : vector<256x128xf32>
    %c0_11 = arith.constant 0 : index
    %c0_12 = arith.constant 0 : index
    %17 = vector.load %arg7[%c0_11, %c0_12] : memref<256x128xf32, #tpu.memory_space<vmem>>, vector<256x128xf32>
    tpu.vector_store %arg7[%c0_11, %c0_12], %16 {strides = array<i32>} : memref<256x128xf32, #tpu.memory_space<vmem>>, vector<256x128xf32>,
    return
  }
  func.func @transform_0(%arg0: i32) -> (i32, i32) {
    %c0_i32 = arith.constant 0 : i32
    %c0_i32_0 = arith.constant 0 : i32
    return %arg0, %c0_i32 : i32, i32
  }
  func.func @transform_1(%arg0: i32) -> (i32, i32) {
    %c0_i32 = arith.constant 0 : i32
    %c0_i32_0 = arith.constant 0 : i32
    return %arg0, %c0_i32 : i32, i32
  }
  func.func @transform_2(%arg0: i32) -> (i32, i32) {
    %c0_i32 = arith.constant 0 : i32
    %c0_i32_0 = arith.constant 0 : i32
    %c0_i32_1 = arith.constant 0 : i32
    return %c0_i32, %c0_i32_0 : i32, i32
  }
  func.func @transform_3(%arg0: i32) -> (i32, i32) {
    %c0_i32 = arith.constant 0 : i32
    %c0_i32_0 = arith.constant 0 : i32
    %c0_i32_1 = arith.constant 0 : i32
    return %c0_i32, %c0_i32_0 : i32, i32
  }
  func.func @transform_4(%arg0: i32) -> (i32, i32) {
    %c0_i32 = arith.constant 0 : i32
    %c0_i32_0 = arith.constant 0 : i32
    %c0_i32_1 = arith.constant 0 : i32
    return %c0_i32, %c0_i32_0 : i32, i32
  }
  func.func @transform_5(%arg0: i32) -> (i32, i32) {
    %c0_i32 = arith.constant 0 : i32
    %c0_i32_0 = arith.constant 0 : i32
    %c0_i32_1 = arith.constant 0 : i32
    return %c0_i32, %c0_i32_0 : i32, i32
  }
  func.func @transform_6(%arg0: i32) -> (i32, i32) {
    %c0_i32 = arith.constant 0 : i32
    %c0_i32_0 = arith.constant 0 : i32
    return %arg0, %c0_i32 : i32, i32
  }
}

</mosaic_0001>

<llo_original>
// kernel: bottleneck_forward.7
$region0: #{bottleneck_forward.7}
  #allocation0 [shape = 'u32[]', space=smem, size = 0x4, offset = 0x4, fixed_abs, tag = 'smem constant byte address 0x4 - core index']
  #allocation1 [shape = 'u32[144,128]{1,0:T(1,128)}', space=vmem, size = 0x12000, scoped, tag = 'internal scratch']
  %s0 = inlined_call_operand.vmem [shape: f32[512,128], index: 0, kind: input, shape index: {}]
  %s1 = inlined_call_operand.vmem [shape: f32[1,128], index: 1, kind: input, shape index: {}]
  %s2 = inlined_call_operand.vmem [shape: f32[1,128], index: 2, kind: input, shape index: {}]
  %s3 = inlined_call_operand.vmem [shape: bf16[512,128], index: 3, kind: output, shape index: {}]
  %s4 = sld [smem:[#allocation0]]
  $region45: #{bottleneck_forward.7} parent=0
    _
  %s6 = ssub.s32 1, %s4
  %s7 = scalar_select 0, %s6, %s4
  loop: start=0, step=1, limit=4
  $region2: #{bottleneck_forward.7} parent=0 // loop_pre_header
    _
  $region3: #{bottleneck_forward.7} parent=0 // loop_header
    %s9 = sphi 0, %s13
    %p10 = scmp.ge.s32.totalorder %s9, 4
    %s19 = sphi 0, %s21
    %s22 = sphi 0, %s19
    %s23 = sphi 0, %s22
    %s39 = sphi 0, %s23
    %s43 = sphi 0, %s43
    %s45 = sphi 0, %s43
    %s46 = sphi 0, %s45
    %s60 = sphi 0, %s46
    %s64 = sphi 0, %s64
    %s66 = sphi 0, %s64
    %s67 = sphi 0, %s66
    %s81 = sphi 0, %s67
    %s87 = sphi 0, %s89
    %s90 = sphi 0, %s87
    %s91 = sphi 0, %s90
    %s107 = sphi 0, %s91
  $region4: #{bottleneck_forward.7} parent=0 // loop_header_branch
    %12 = sbr.rel (%p10) target = $region8
  $region5: #{bottleneck_forward.7} parent=0 // loop_body
    %s14 = ssub.s32 %s9, 1
    %s15 = ssub.s32 %s9, 2
    %s16 = sadd.s32 %s9, 1
    %s17 = ssub.s32 %s9, %s16
    %p18 = scmp.eq.s32.totalorder %s17, 0
    %s20 = sadd.s32 %s19, 1
    %s21 = scalar_select %p18, %s19, %s20
    %p24 = pneg %p18
    %p25 = scmp.eq.s32.totalorder %s9, 1
    %p26 = por %p24, %p25
    %p27 = scmp.ne.s32.totalorder %s19, %s22
    %p28 = scmp.eq.s32.totalorder %s9, 0
    %p29 = por %p27, %p28
    %p30 = scmp.ne.s32.totalorder %s19, %s22
    %p31 = scmp.eq.s32.totalorder %s14, 1
    %p32 = por %p30, %p31
    %p33 = scmp.ne.s32.totalorder %s22, %s23
    %p34 = scmp.eq.s32.totalorder %s14, 0
    %p35 = por %p33, %p34
    %p36 = scmp.ne.s32.totalorder %s22, %s23
    %p37 = scmp.eq.s32.totalorder %s15, 1
    %p38 = por %p36, %p37
    %p40 = scmp.ne.s32.totalorder %s23, %s39
    %p41 = scmp.eq.s32.totalorder %s15, 0
    %p42 = por %p40, %p41
    %s44 = sadd.s32 %s43, 1
    %p47 = scmp.eq.s32.totalorder %s9, 1
    %p48 = scmp.ne.s32.totalorder %s43, %s45
    %p49 = scmp.eq.s32.totalorder %s9, 0
    %p50 = por %p48, %p49
    %p51 = scmp.ne.s32.totalorder %s43, %s45
    %p52 = scmp.eq.s32.totalorder %s14, 1
    %p53 = por %p51, %p52
    %p54 = scmp.ne.s32.totalorder %s45, %s46
    %p55 = scmp.eq.s32.totalorder %s14, 0
    %p56 = por %p54, %p55
    %p57 = scmp.ne.s32.totalorder %s45, %s46
    %p58 = scmp.eq.s32.totalorder %s15, 1
    %p59 = por %p57, %p58
    %p61 = scmp.ne.s32.totalorder %s46, %s60
    %p62 = scmp.eq.s32.totalorder %s15, 0
    %p63 = por %p61, %p62
    %s65 = sadd.s32 %s64, 1
    %p68 = scmp.eq.s32.totalorder %s9, 1
    %p69 = scmp.ne.s32.totalorder %s64, %s66
    %p70 = scmp.eq.s32.totalorder %s9, 0
    %p71 = por %p69, %p70
    %p72 = scmp.ne.s32.totalorder %s64, %s66
    %p73 = scmp.eq.s32.totalorder %s14, 1
    %p74 = por %p72, %p73
    %p75 = scmp.ne.s32.totalorder %s66, %s67
    %p76 = scmp.eq.s32.totalorder %s14, 0
    %p77 = por %p75, %p76
    %p78 = scmp.ne.s32.totalorder %s66, %s67
    %p79 = scmp.eq.s32.totalorder %s15, 1
    %p80 = por %p78, %p79
    %p82 = scmp.ne.s32.totalorder %s67, %s81
    %p83 = scmp.eq.s32.totalorder %s15, 0
    %p84 = por %p82, %p83
    %s85 = ssub.s32 %s9, %s16
    %p86 = scmp.eq.s32.totalorder %s85, 0
    %s88 = sadd.s32 %s87, 1
    %s89 = scalar_select %p86, %s87, %s88
    %p92 = pneg %p86
    %p93 = scmp.eq.s32.totalorder %s9, 1
    %p94 = por %p92, %p93
    %p95 = scmp.ne.s32.totalorder %s87, %s90
    %p96 = scmp.eq.s32.totalorder %s9, 0
    %p97 = por %p95, %p96
    %p98 = scmp.ne.s32.totalorder %s87, %s90
    %p99 = scmp.eq.s32.totalorder %s14, 1
    %p100 = por %p98, %p99
    %p101 = scmp.ne.s32.totalorder %s90, %s91
    %p102 = scmp.eq.s32.totalorder %s14, 0
    %p103 = por %p101, %p102
    %p104 = scmp.ne.s32.totalorder %s90, %s91
    %p105 = scmp.eq.s32.totalorder %s15, 1
    %p106 = por %p104, %p105
    %p108 = scmp.ne.s32.totalorder %s91, %s107
    %p109 = scmp.eq.s32.totalorder %s15, 0
    %p110 = por %p108, %p109
    %p111 = scmp.le.s32.totalorder 1, %s9
    %p112 = scmp.lt.s32.totalorder %s9, 3
    %p113 = pnand %p111, %p112
    %p114 = pneg %p113
    // Predicated region
    $region9: #{bottleneck_forward.7} parent=5 // pred_check
      _
    $region10: #{bottleneck_forward.7} parent=5 // pred_check_branch
      %116 = sbr.rel (%p113) target = $region12
    $region11: #{bottleneck_forward.7} parent=5 // pred_region
      %s117 = ssub.s32 %s9, 1
      // Predicated region
      $region13: #{bottleneck_forward.7} parent=11 // pred_check
        %p118 = pneg %p56
      $region14: #{bottleneck_forward.7} parent=11 // pred_check_branch
        %120 = sbr.rel (%p118) target = $region16
      $region15: #{bottleneck_forward.7} parent=11 // pred_region
        _
      $region16: #{bottleneck_forward.7} parent=11 // pred_fallthru
        _
      // Predicated region
      $region17: #{bottleneck_forward.7} parent=11 // pred_check
        %p121 = pneg %p77
      $region18: #{bottleneck_forward.7} parent=11 // pred_check_branch
        %123 = sbr.rel (%p121) target = $region20
      $region19: #{bottleneck_forward.7} parent=11 // pred_region
        _
      $region20: #{bottleneck_forward.7} parent=11 // pred_fallthru
        _
    $region12: #{bottleneck_forward.7} parent=5 // pred_fallthru
      _
    %p124 = scmp.lt.s32.totalorder %s9, 2
    // Predicated region
    $region21: #{bottleneck_forward.7} parent=5 // pred_check
      %p125 = pneg %p124
    $region22: #{bottleneck_forward.7} parent=5 // pred_check_branch
      %127 = sbr.rel (%p125) target = $region24
    $region23: #{bottleneck_forward.7} parent=5 // pred_region
      // Predicated region
      $region25: #{bottleneck_forward.7} parent=23 // pred_check
        %p128 = pneg %p29
      $region26: #{bottleneck_forward.7} parent=23 // pred_check_branch
        %130 = sbr.rel (%p128) target = $region28
      $region27: #{bottleneck_forward.7} parent=23 // pred_region
        %s131 = smul.u32 32, %s9
        %p132 = scmp.lt.s32.totalorder %s131, 63
        %s133 = scalar_select %p132, %s131, 63
        %s134 = smul.addr %s133, 8
        %s135 = scalar_lea.vmem %s0, %s134
        %s136 = smul.u32 32, %s9
      $region28: #{bottleneck_forward.7} parent=23 // pred_fallthru
        _
    $region24: #{bottleneck_forward.7} parent=5 // pred_fallthru
      _
    %p137 = scmp.le.s32.totalorder 1, %s9
    %p138 = scmp.lt.s32.totalorder %s9, 3
    %p139 = pnand %p137, %p138
    %p140 = pneg %p139
    // Predicated region
    $region29: #{bottleneck_forward.7} parent=5 // pred_check
      _
    $region30: #{bottleneck_forward.7} parent=5 // pred_check_branch
      %142 = sbr.rel (%p139) target = $region32
    $region31: #{bottleneck_forward.7} parent=5 // pred_region
      %s143 = ssub.s32 %s9, 1
      %s144 = smul.u32 32, %s14
      %p145 = scmp.lt.s32.totalorder %s144, 63
      %s146 = scalar_select %p145, %s144, 63
      %s147 = smul.addr %s146, 8
      %s148 = scalar_lea.vmem %s0, %s147
      %p149 = pneg %p35
      %p150 = pneg %p32
      %p151 = pneg %p56
      %p152 = pneg %p53
      %p153 = pneg %p77
      %p154 = pneg %p74
      %p155 = pneg %p103
      %p156 = pneg %p100
      %s157 = smul.u32 32, %s14
      %p158 = scmp.lt.s32.totalorder %s157, 63
      %s159 = scalar_select %p158, %s157, 63
      %s160 = smul.addr %s159, 4
      %s161 = scalar_lea.vmem %s3, %s160
      %s162 = smul.u32 32, %s14
      %p163 = scmp.lt.s32.totalorder %s162, 63
      %s164 = scalar_select %p163, %s162, 63
      %s165 = smul.addr %s164, 8
      %s166 = scalar_lea.vmem %s0, %s165
      %s167 = smul.u32 32, %s14
      %s168 = smul.u32 32, %s14
      %p169 = scmp.lt.s32.totalorder %s168, 63
      %s170 = scalar_select %p169, %s168, 63
      %s171 = smul.addr %s170, 4
      %s172 = scalar_lea.vmem %s3, %s171
      %s173 = smul.u32 32, %s14
      %v174 = vld [vmem:[%s166] sm:$0xff]
      %v175 = vld [vmem:[%s166 + $0x8] sm:$0xff]
      %v176 = vld [vmem:[%s166 + $0x10] sm:$0xff]
      %v177 = vld [vmem:[%s166 + $0x18] sm:$0xff]
      %v178 = vld [vmem:[%s166 + $0x20] sm:$0xff]
      %v179 = vld [vmem:[%s166 + $0x28] sm:$0xff]
      %v180 = vld [vmem:[%s166 + $0x30] sm:$0xff]
      %v181 = vld [vmem:[%s166 + $0x38] sm:$0xff]
      %v182 = vld [vmem:[%s166 + $0x40] sm:$0xff]
      %v183 = vld [vmem:[%s166 + $0x48] sm:$0xff]
      %v184 = vld [vmem:[%s166 + $0x50] sm:$0xff]
      %v185 = vld [vmem:[%s166 + $0x58] sm:$0xff]
      %v186 = vld [vmem:[%s166 + $0x60] sm:$0xff]
      %v187 = vld [vmem:[%s166 + $0x68] sm:$0xff]
      %v188 = vld [vmem:[%s166 + $0x70] sm:$0xff]
      %v189 = vld [vmem:[%s166 + $0x78] sm:$0xff]
      %v190 = vld [vmem:[%s166 + $0x80] sm:$0xff]
      %v191 = vld [vmem:[%s166 + $0x88] sm:$0xff]
      %v192 = vld [vmem:[%s166 + $0x90] sm:$0xff]
      %v193 = vld [vmem:[%s166 + $0x98] sm:$0xff]
      %v194 = vld [vmem:[%s166 + $0xa0] sm:$0xff]
      %v195 = vld [vmem:[%s166 + $0xa8] sm:$0xff]
      %v196 = vld [vmem:[%s166 + $0xb0] sm:$0xff]
      %v197 = vld [vmem:[%s166 + $0xb8] sm:$0xff]
      %v198 = vld [vmem:[%s166 + $0xc0] sm:$0xff]
      %v199 = vld [vmem:[%s166 + $0xc8] sm:$0xff]
      %v200 = vld [vmem:[%s166 + $0xd0] sm:$0xff]
      %v201 = vld [vmem:[%s166 + $0xd8] sm:$0xff]
      %v202 = vld [vmem:[%s166 + $0xe0] sm:$0xff]
      %v203 = vld [vmem:[%s166 + $0xe8] sm:$0xff]
      %v204 = vld [vmem:[%s166 + $0xf0] sm:$0xff]
      %v205 = vld [vmem:[%s166 + $0xf8] sm:$0xff]
      %v206 = vld [vmem:[%s1] sm:$0x1]
      %v208 = vlaneseq
      %v209 = vshrl.u32 %v208, 7
      %v210 = vsub.s32 0, %v209
      %v211 = vrot.slane %v206, %v210
      %v213 = vmul.f32 %v174, %v211
      %v214 = vmul.f32 %v175, %v211
      %v215 = vmul.f32 %v176, %v211
      %v216 = vmul.f32 %v177, %v211
      %v217 = vmul.f32 %v178, %v211
      %v218 = vmul.f32 %v179, %v211
      %v219 = vmul.f32 %v180, %v211
      %v220 = vmul.f32 %v181, %v211
      %v221 = vmul.f32 %v182, %v211
      %v222 = vmul.f32 %v183, %v211
      %v223 = vmul.f32 %v184, %v211
      %v224 = vmul.f32 %v185, %v211
      %v225 = vmul.f32 %v186, %v211
      %v226 = vmul.f32 %v187, %v211
      %v227 = vmul.f32 %v188, %v211
      %v228 = vmul.f32 %v189, %v211
      %v229 = vmul.f32 %v190, %v211
      %v230 = vmul.f32 %v191, %v211
      %v231 = vmul.f32 %v192, %v211
      %v232 = vmul.f32 %v193, %v211
      %v233 = vmul.f32 %v194, %v211
      %v234 = vmul.f32 %v195, %v211
      %v235 = vmul.f32 %v196, %v211
      %v236 = vmul.f32 %v197, %v211
      %v237 = vmul.f32 %v198, %v211
      %v238 = vmul.f32 %v199, %v211
      %v239 = vmul.f32 %v200, %v211
      %v240 = vmul.f32 %v201, %v211
      %v241 = vmul.f32 %v202, %v211
      %v242 = vmul.f32 %v203, %v211
      %v243 = vmul.f32 %v204, %v211
      %v244 = vmul.f32 %v205, %v211
      %v245 = vld [vmem:[%s2] sm:$0x1]
      %v247 = vlaneseq
      %v248 = vshrl.u32 %v247, 7
      %v249 = vsub.s32 0, %v248
      %v250 = vrot.slane %v245, %v249
      %v252 = vadd.f32 %v213, %v250
      %v253 = vadd.f32 %v214, %v250
      %v254 = vadd.f32 %v215, %v250
      %v255 = vadd.f32 %v216, %v250
      %v256 = vadd.f32 %v217, %v250
      %v257 = vadd.f32 %v218, %v250
      %v258 = vadd.f32 %v219, %v250
      %v259 = vadd.f32 %v220, %v250
      %v260 = vadd.f32 %v221, %v250
      %v261 = vadd.f32 %v222, %v250
      %v262 = vadd.f32 %v223, %v250
      %v263 = vadd.f32 %v224, %v250
      %v264 = vadd.f32 %v225, %v250
      %v265 = vadd.f32 %v226, %v250
      %v266 = vadd.f32 %v227, %v250
      %v267 = vadd.f32 %v228, %v250
      %v268 = vadd.f32 %v229, %v250
      %v269 = vadd.f32 %v230, %v250
      %v270 = vadd.f32 %v231, %v250
      %v271 = vadd.f32 %v232, %v250
      %v272 = vadd.f32 %v233, %v250
      %v273 = vadd.f32 %v234, %v250
      %v274 = vadd.f32 %v235, %v250
      %v275 = vadd.f32 %v236, %v250
      %v276 = vadd.f32 %v237, %v250
      %v277 = vadd.f32 %v238, %v250
      %v278 = vadd.f32 %v239, %v250
      %v279 = vadd.f32 %v240, %v250
      %v280 = vadd.f32 %v241, %v250
      %v281 = vadd.f32 %v242, %v250
      %v282 = vadd.f32 %v243, %v250
      %v283 = vadd.f32 %v244, %v250
      %v284 = vmax.f32 %v252, 0.0
      %v285 = vmax.f32 %v253, 0.0
      %v286 = vmax.f32 %v254, 0.0
      %v287 = vmax.f32 %v255, 0.0
      %v288 = vmax.f32 %v256, 0.0
      %v289 = vmax.f32 %v257, 0.0
      %v290 = vmax.f32 %v258, 0.0
      %v291 = vmax.f32 %v259, 0.0
      %v292 = vmax.f32 %v260, 0.0
      %v293 = vmax.f32 %v261, 0.0
      %v294 = vmax.f32 %v262, 0.0
      %v295 = vmax.f32 %v263, 0.0
      %v296 = vmax.f32 %v264, 0.0
      %v297 = vmax.f32 %v265, 0.0
      %v298 = vmax.f32 %v266, 0.0
      %v299 = vmax.f32 %v267, 0.0
      %v300 = vmax.f32 %v268, 0.0
      %v301 = vmax.f32 %v269, 0.0
      %v302 = vmax.f32 %v270, 0.0
      %v303 = vmax.f32 %v271, 0.0
      %v304 = vmax.f32 %v272, 0.0
      %v305 = vmax.f32 %v273, 0.0
      %v306 = vmax.f32 %v274, 0.0
      %v307 = vmax.f32 %v275, 0.0
      %v308 = vmax.f32 %v276, 0.0
      %v309 = vmax.f32 %v277, 0.0
      %v310 = vmax.f32 %v278, 0.0
      %v311 = vmax.f32 %v279, 0.0
      %v312 = vmax.f32 %v280, 0.0
      %v313 = vmax.f32 %v281, 0.0
      %v314 = vmax.f32 %v282, 0.0
      %v315 = vmax.f32 %v283, 0.0
      %v316 = vpack.c.bf16 %v285, %v284
      %v317 = vpack.c.bf16 %v287, %v286
      %v318 = vpack.c.bf16 %v289, %v288
      %v319 = vpack.c.bf16 %v291, %v290
      %v320 = vpack.c.bf16 %v293, %v292
      %v321 = vpack.c.bf16 %v295, %v294
      %v322 = vpack.c.bf16 %v297, %v296
      %v323 = vpack.c.bf16 %v299, %v298
      %v324 = vpack.c.bf16 %v301, %v300
      %v325 = vpack.c.bf16 %v303, %v302
      %v326 = vpack.c.bf16 %v305, %v304
      %v327 = vpack.c.bf16 %v307, %v306
      %v328 = vpack.c.bf16 %v309, %v308
      %v329 = vpack.c.bf16 %v311, %v310
      %v330 = vpack.c.bf16 %v313, %v312
      %v331 = vpack.c.bf16 %v315, %v314
      %v348 = vunpack.c.l.b16 %v316
      %v349 = vunpack.c.h.b16 %v316
      %v350 = vunpack.c.l.b16 %v317
      %v351 = vunpack.c.h.b16 %v317
      %v352 = vunpack.c.l.b16 %v318
      %v353 = vunpack.c.h.b16 %v318
      %v354 = vunpack.c.l.b16 %v319
      %v355 = vunpack.c.h.b16 %v319
      %v356 = vunpack.c.l.b16 %v320
      %v357 = vunpack.c.h.b16 %v320
      %v358 = vunpack.c.l.b16 %v321
      %v359 = vunpack.c.h.b16 %v321
      %v360 = vunpack.c.l.b16 %v322
      %v361 = vunpack.c.h.b16 %v322
      %v362 = vunpack.c.l.b16 %v323
      %v363 = vunpack.c.h.b16 %v323
      %v364 = vunpack.c.l.b16 %v324
      %v365 = vunpack.c.h.b16 %v324
      %v366 = vunpack.c.l.b16 %v325
      %v367 = vunpack.c.h.b16 %v325
      %v368 = vunpack.c.l.b16 %v326
      %v369 = vunpack.c.h.b16 %v326
      %v370 = vunpack.c.l.b16 %v327
      %v371 = vunpack.c.h.b16 %v327
      %v372 = vunpack.c.l.b16 %v328
      %v373 = vunpack.c.h.b16 %v328
      %v374 = vunpack.c.l.b16 %v329
      %v375 = vunpack.c.h.b16 %v329
      %v376 = vunpack.c.l.b16 %v330
      %v377 = vunpack.c.h.b16 %v330
      %v378 = vunpack.c.l.b16 %v331
      %v379 = vunpack.c.h.b16 %v331
      %v380 = vpack.c.b16 %v348, %v348
      %v381 = vpack.c.b16 %v349, %v349
      %v382 = vpack.c.b16 %v350, %v350
      %v383 = vpack.c.b16 %v351, %v351
      %v384 = vpack.c.b16 %v352, %v352
      %v385 = vpack.c.b16 %v353, %v353
      %v386 = vpack.c.b16 %v354, %v354
      %v387 = vpack.c.b16 %v355, %v355
      %v388 = vpack.c.b16 %v356, %v356
      %v389 = vpack.c.b16 %v357, %v357
      %v390 = vpack.c.b16 %v358, %v358
      %v391 = vpack.c.b16 %v359, %v359
      %v392 = vpack.c.b16 %v360, %v360
      %v393 = vpack.c.b16 %v361, %v361
      %v394 = vpack.c.b16 %v362, %v362
      %v395 = vpack.c.b16 %v363, %v363
      %v396 = vpack.c.b16 %v364, %v364
      %v397 = vpack.c.b16 %v365, %v365
      %v398 = vpack.c.b16 %v366, %v366
      %v399 = vpack.c.b16 %v367, %v367
      %v400 = vpack.c.b16 %v368, %v368
      %v401 = vpack.c.b16 %v369, %v369
      %v402 = vpack.c.b16 %v370, %v370
      %v403 = vpack.c.b16 %v371, %v371
      %v404 = vpack.c.b16 %v372, %v372
      %v405 = vpack.c.b16 %v373, %v373
      %v406 = vpack.c.b16 %v374, %v374
      %v407 = vpack.c.b16 %v375, %v375
      %v408 = vpack.c.b16 %v376, %v376
      %v409 = vpack.c.b16 %v377, %v377
      %v410 = vpack.c.b16 %v378, %v378
      %v411 = vpack.c.b16 %v379, %v379
      %444 = vst [vmem:[%s172] sm:$0xf] %v380
      %445 = vst [vmem:[%s172 + $0x4] sm:$0xf] %v381
      %446 = vst [vmem:[%s172 + $0x8] sm:$0xf] %v382
      %447 = vst [vmem:[%s172 + $0xc] sm:$0xf] %v383
      %448 = vst [vmem:[%s172 + $0x10] sm:$0xf] %v384
      %449 = vst [vmem:[%s172 + $0x14] sm:$0xf] %v385
      %450 = vst [vmem:[%s172 + $0x18] sm:$0xf] %v386
      %451 = vst [vmem:[%s172 + $0x1c] sm:$0xf] %v387
      %452 = vst [vmem:[%s172 + $0x20] sm:$0xf] %v388
      %453 = vst [vmem:[%s172 + $0x24] sm:$0xf] %v389
      %454 = vst [vmem:[%s172 + $0x28] sm:$0xf] %v390
      %455 = vst [vmem:[%s172 + $0x2c] sm:$0xf] %v391
      %456 = vst [vmem:[%s172 + $0x30] sm:$0xf] %v392
      %457 = vst [vmem:[%s172 + $0x34] sm:$0xf] %v393
      %458 = vst [vmem:[%s172 + $0x38] sm:$0xf] %v394
      %459 = vst [vmem:[%s172 + $0x3c] sm:$0xf] %v395
      %460 = vst [vmem:[%s172 + $0x40] sm:$0xf] %v396
      %461 = vst [vmem:[%s172 + $0x44] sm:$0xf] %v397
      %462 = vst [vmem:[%s172 + $0x48] sm:$0xf] %v398
      %463 = vst [vmem:[%s172 + $0x4c] sm:$0xf] %v399
      %464 = vst [vmem:[%s172 + $0x50] sm:$0xf] %v400
      %465 = vst [vmem:[%s172 + $0x54] sm:$0xf] %v401
      %466 = vst [vmem:[%s172 + $0x58] sm:$0xf] %v402
      %467 = vst [vmem:[%s172 + $0x5c] sm:$0xf] %v403
      %468 = vst [vmem:[%s172 + $0x60] sm:$0xf] %v404
      %469 = vst [vmem:[%s172 + $0x64] sm:$0xf] %v405
      %470 = vst [vmem:[%s172 + $0x68] sm:$0xf] %v406
      %471 = vst [vmem:[%s172 + $0x6c] sm:$0xf] %v407
      %472 = vst [vmem:[%s172 + $0x70] sm:$0xf] %v408
      %473 = vst [vmem:[%s172 + $0x74] sm:$0xf] %v409
      %474 = vst [vmem:[%s172 + $0x78] sm:$0xf] %v410
      %475 = vst [vmem:[%s172 + $0x7c] sm:$0xf] %v411
      %s476 = smul.u32 32, %s14
      %p477 = scmp.lt.s32.totalorder %s476, 63
      %s478 = scalar_select %p477, %s476, 63
      %s479 = smul.addr %s478, 4
      %s480 = scalar_lea.vmem %s3, %s479
      // Predicated region
      $region33: #{bottleneck_forward.7} parent=31 // pred_check
        %p481 = pneg %p100
      $region34: #{bottleneck_forward.7} parent=31 // pred_check_branch
        %483 = sbr.rel (%p481) target = $region36
      $region35: #{bottleneck_forward.7} parent=31 // pred_region
        %s484 = smul.u32 32, %s14
      $region36: #{bottleneck_forward.7} parent=31 // pred_fallthru
        _
    $region32: #{bottleneck_forward.7} parent=5 // pred_fallthru
      _
    %p485 = scmp.le.s32.totalorder 2, %s9
    // Predicated region
    $region37: #{bottleneck_forward.7} parent=5 // pred_check
      %p486 = pneg %p485
    $region38: #{bottleneck_forward.7} parent=5 // pred_check_branch
      %488 = sbr.rel (%p486) target = $region40
    $region39: #{bottleneck_forward.7} parent=5 // pred_region
      %s489 = ssub.s32 %s9, 2
      // Predicated region
      $region41: #{bottleneck_forward.7} parent=39 // pred_check
        %p490 = pneg %p106
      $region42: #{bottleneck_forward.7} parent=39 // pred_check_branch
        %492 = sbr.rel (%p490) target = $region44
      $region43: #{bottleneck_forward.7} parent=39 // pred_region
        %s493 = smul.u32 32, %s15
        %p494 = scmp.lt.s32.totalorder %s493, 63
        %s495 = scalar_select %p494, %s493, 63
        %s496 = smul.addr %s495, 4
        %s497 = scalar_lea.vmem %s3, %s496
      $region44: #{bottleneck_forward.7} parent=39 // pred_fallthru
        _
    $region40: #{bottleneck_forward.7} parent=5 // pred_fallthru
      _
  $region6: #{bottleneck_forward.7} parent=0 // loop_footer
    %s13 = sadd.s32 1, %s9
  $region7: #{bottleneck_forward.7} parent=0 // loop_footer_branch
    %8 = sbr.rel target = $region3
  $region8: #{bottleneck_forward.7} parent=0 // loop_exit
    _

// kernel: bottleneck_forward.6
$region0: #{bottleneck_forward.6}
  #allocation0 [shape = 'u32[]', space=smem, size = 0x4, offset = 0x4, fixed_abs, tag = 'smem constant byte address 0x4 - core index']
  #allocation1 [shape = 'u32[144,128]{1,0:T(1,128)}', space=vmem, size = 0x12000, scoped, tag = 'internal scratch']
  %s0 = inlined_call_operand.vmem [shape: bf16[512,128], index: 0, kind: input, shape index: {}]
  %s1 = inlined_call_operand.vmem [shape: bf16[128,128], index: 1, kind: input, shape index: {}]
  %s2 = inlined_call_operand.vmem [shape: f32[512,128], index: 2, kind: output, shape index: {0}]
  %s3 = inlined_call_operand.vmem [shape: f32[1,128], index: 3, kind: output, shape index: {1}]
  %s4 = inlined_call_operand.vmem [shape: f32[1,128], index: 4, kind: output, shape index: {2}]
  %5 = xla_tuple %s2, %s3, %s4
  %s6 = sld [smem:[#allocation0]]
  $region61: #{bottleneck_forward.6} parent=0
    _
  %s8 = ssub.s32 1, %s6
  %s9 = scalar_select 0, %s8, %s6
  loop: start=0, step=1, limit=4
  $region2: #{bottleneck_forward.6} parent=0 // loop_pre_header
    _
  $region3: #{bottleneck_forward.6} parent=0 // loop_header
    %s11 = sphi 0, %s15
    %p12 = scmp.ge.s32.totalorder %s11, 4
    %s21 = sphi 0, %s23
    %s24 = sphi 0, %s21
    %s25 = sphi 0, %s24
    %s41 = sphi 0, %s25
    %s45 = sphi 0, %s45
    %s47 = sphi 0, %s45
    %s48 = sphi 0, %s47
    %s62 = sphi 0, %s48
    %s68 = sphi 0, %s70
    %s71 = sphi 0, %s68
    %s72 = sphi 0, %s71
    %s88 = sphi 0, %s72
    %s92 = sphi 0, %s92
    %s94 = sphi 0, %s92
    %s95 = sphi 0, %s94
    %s109 = sphi 0, %s95
    %s113 = sphi 0, %s113
    %s115 = sphi 0, %s113
    %s116 = sphi 0, %s115
    %s130 = sphi 0, %s116
  $region4: #{bottleneck_forward.6} parent=0 // loop_header_branch
    %14 = sbr.rel (%p12) target = $region8
  $region5: #{bottleneck_forward.6} parent=0 // loop_body
    %s16 = ssub.s32 %s11, 1
    %s17 = ssub.s32 %s11, 2
    %s18 = sadd.s32 %s11, 1
    %s19 = ssub.s32 %s11, %s18
    %p20 = scmp.eq.s32.totalorder %s19, 0
    %s22 = sadd.s32 %s21, 1
    %s23 = scalar_select %p20, %s21, %s22
    %p26 = pneg %p20
    %p27 = scmp.eq.s32.totalorder %s11, 1
    %p28 = por %p26, %p27
    %p29 = scmp.ne.s32.totalorder %s21, %s24
    %p30 = scmp.eq.s32.totalorder %s11, 0
    %p31 = por %p29, %p30
    %p32 = scmp.ne.s32.totalorder %s21, %s24
    %p33 = scmp.eq.s32.totalorder %s16, 1
    %p34 = por %p32, %p33
    %p35 = scmp.ne.s32.totalorder %s24, %s25
    %p36 = scmp.eq.s32.totalorder %s16, 0
    %p37 = por %p35, %p36
    %p38 = scmp.ne.s32.totalorder %s24, %s25
    %p39 = scmp.eq.s32.totalorder %s17, 1
    %p40 = por %p38, %p39
    %p42 = scmp.ne.s32.totalorder %s25, %s41
    %p43 = scmp.eq.s32.totalorder %s17, 0
    %p44 = por %p42, %p43
    %s46 = sadd.s32 %s45, 1
    %p49 = scmp.eq.s32.totalorder %s11, 1
    %p50 = scmp.ne.s32.totalorder %s45, %s47
    %p51 = scmp.eq.s32.totalorder %s11, 0
    %p52 = por %p50, %p51
    %p53 = scmp.ne.s32.totalorder %s45, %s47
    %p54 = scmp.eq.s32.totalorder %s16, 1
    %p55 = por %p53, %p54
    %p56 = scmp.ne.s32.totalorder %s47, %s48
    %p57 = scmp.eq.s32.totalorder %s16, 0
    %p58 = por %p56, %p57
    %p59 = scmp.ne.s32.totalorder %s47, %s48
    %p60 = scmp.eq.s32.totalorder %s17, 1
    %p61 = por %p59, %p60
    %p63 = scmp.ne.s32.totalorder %s48, %s62
    %p64 = scmp.eq.s32.totalorder %s17, 0
    %p65 = por %p63, %p64
    %s66 = ssub.s32 %s11, %s18
    %p67 = scmp.eq.s32.totalorder %s66, 0
    %s69 = sadd.s32 %s68, 1
    %s70 = scalar_select %p67, %s68, %s69
    %p73 = pneg %p67
    %p74 = scmp.eq.s32.totalorder %s11, 1
    %p75 = por %p73, %p74
    %p76 = scmp.ne.s32.totalorder %s68, %s71
    %p77 = scmp.eq.s32.totalorder %s11, 0
    %p78 = por %p76, %p77
    %p79 = scmp.ne.s32.totalorder %s68, %s71
    %p80 = scmp.eq.s32.totalorder %s16, 1
    %p81 = por %p79, %p80
    %p82 = scmp.ne.s32.totalorder %s71, %s72
    %p83 = scmp.eq.s32.totalorder %s16, 0
    %p84 = por %p82, %p83
    %p85 = scmp.ne.s32.totalorder %s71, %s72
    %p86 = scmp.eq.s32.totalorder %s17, 1
    %p87 = por %p85, %p86
    %p89 = scmp.ne.s32.totalorder %s72, %s88
    %p90 = scmp.eq.s32.totalorder %s17, 0
    %p91 = por %p89, %p90
    %s93 = sadd.s32 %s92, 1
    %p96 = scmp.eq.s32.totalorder %s11, 1
    %p97 = scmp.ne.s32.totalorder %s92, %s94
    %p98 = scmp.eq.s32.totalorder %s11, 0
    %p99 = por %p97, %p98
    %p100 = scmp.ne.s32.totalorder %s92, %s94
    %p101 = scmp.eq.s32.totalorder %s16, 1
    %p102 = por %p100, %p101
    %p103 = scmp.ne.s32.totalorder %s94, %s95
    %p104 = scmp.eq.s32.totalorder %s16, 0
    %p105 = por %p103, %p104
    %p106 = scmp.ne.s32.totalorder %s94, %s95
    %p107 = scmp.eq.s32.totalorder %s17, 1
    %p108 = por %p106, %p107
    %p110 = scmp.ne.s32.totalorder %s95, %s109
    %p111 = scmp.eq.s32.totalorder %s17, 0
    %p112 = por %p110, %p111
    %s114 = sadd.s32 %s113, 1
    %p117 = scmp.eq.s32.totalorder %s11, 1
    %p118 = scmp.ne.s32.totalorder %s113, %s115
    %p119 = scmp.eq.s32.totalorder %s11, 0
    %p120 = por %p118, %p119
    %p121 = scmp.ne.s32.totalorder %s113, %s115
    %p122 = scmp.eq.s32.totalorder %s16, 1
    %p123 = por %p121, %p122
    %p124 = scmp.ne.s32.totalorder %s115, %s116
    %p125 = scmp.eq.s32.totalorder %s16, 0
    %p126 = por %p124, %p125
    %p127 = scmp.ne.s32.totalorder %s115, %s116
    %p128 = scmp.eq.s32.totalorder %s17, 1
    %p129 = por %p127, %p128
    %p131 = scmp.ne.s32.totalorder %s116, %s130
    %p132 = scmp.eq.s32.totalorder %s17, 0
    %p133 = por %p131, %p132
    %p134 = scmp.le.s32.totalorder 1, %s11
    %p135 = scmp.lt.s32.totalorder %s11, 3
    %p136 = pnand %p134, %p135
    %p137 = pneg %p136
    // Predicated region
    $region9: #{bottleneck_forward.6} parent=5 // pred_check
      _
    $region10: #{bottleneck_forward.6} parent=5 // pred_check_branch
      %139 = sbr.rel (%p136) target = $region12
    $region11: #{bottleneck_forward.6} parent=5 // pred_region
      %s140 = ssub.s32 %s11, 1
      // Predicated region
      $region13: #{bottleneck_forward.6} parent=11 // pred_check
        %p141 = pneg %p58
      $region14: #{bottleneck_forward.6} parent=11 // pred_check_branch
        %143 = sbr.rel (%p141) target = $region16
      $region15: #{bottleneck_forward.6} parent=11 // pred_region
        _
      $region16: #{bottleneck_forward.6} parent=11 // pred_fallthru
        _
    $region12: #{bottleneck_forward.6} parent=5 // pred_fallthru
      _
    %p144 = scmp.lt.s32.totalorder %s11, 2
    // Predicated region
    $region17: #{bottleneck_forward.6} parent=5 // pred_check
      %p145 = pneg %p144
    $region18: #{bottleneck_forward.6} parent=5 // pred_check_branch
      %147 = sbr.rel (%p145) target = $region20
    $region19: #{bottleneck_forward.6} parent=5 // pred_region
      // Predicated region
      $region21: #{bottleneck_forward.6} parent=19 // pred_check
        %p148 = pneg %p31
      $region22: #{bottleneck_forward.6} parent=19 // pred_check_branch
        %150 = sbr.rel (%p148) target = $region24
      $region23: #{bottleneck_forward.6} parent=19 // pred_region
        %s151 = smul.u32 32, %s11
        %p152 = scmp.lt.s32.totalorder %s151, 63
        %s153 = scalar_select %p152, %s151, 63
        %s154 = smul.addr %s153, 4
        %s155 = scalar_lea.vmem %s0, %s154
        %s156 = smul.u32 32, %s11
      $region24: #{bottleneck_forward.6} parent=19 // pred_fallthru
        _
    $region20: #{bottleneck_forward.6} parent=5 // pred_fallthru
      _
    %p157 = scmp.le.s32.totalorder 1, %s11
    %p158 = scmp.lt.s32.totalorder %s11, 3
    %p159 = pnand %p157, %p158
    %p160 = pneg %p159
    // Predicated region
    $region25: #{bottleneck_forward.6} parent=5 // pred_check
      _
    $region26: #{bottleneck_forward.6} parent=5 // pred_check_branch
      %162 = sbr.rel (%p159) target = $region28
    $region27: #{bottleneck_forward.6} parent=5 // pred_region
      %s163 = ssub.s32 %s11, 1
      %s164 = smul.u32 32, %s16
      %p165 = scmp.lt.s32.totalorder %s164, 63
      %s166 = scalar_select %p165, %s164, 63
      %s167 = smul.addr %s166, 4
      %s168 = scalar_lea.vmem %s0, %s167
      %p169 = pneg %p37
      %p170 = pneg %p34
      %p171 = pneg %p58
      %p172 = pneg %p55
      %p173 = pneg %p84
      %p174 = pneg %p81
      %s175 = smul.u32 32, %s16
      %p176 = scmp.lt.s32.totalorder %s175, 63
      %s177 = scalar_select %p176, %s175, 63
      %s178 = smul.addr %s177, 8
      %s179 = scalar_lea.vmem %s2, %s178
      %p180 = pneg %p105
      %p181 = pneg %p102
      %p182 = pneg %p126
      %p183 = pneg %p123
      %s184 = smul.u32 32, %s16
      %p185 = scmp.lt.s32.totalorder %s184, 63
      %s186 = scalar_select %p185, %s184, 63
      %s187 = smul.addr %s186, 4
      %s188 = scalar_lea.vmem %s0, %s187
      %s189 = smul.u32 32, %s16
      %s190 = smul.u32 32, %s16
      %p191 = scmp.lt.s32.totalorder %s190, 63
      %s192 = scalar_select %p191, %s190, 63
      %s193 = smul.addr %s192, 8
      %s194 = scalar_lea.vmem %s2, %s193
      %s195 = smul.u32 32, %s16
      %v197 = vld [vmem:[%s188] sm:$0xf]
      %v198 = vld [vmem:[%s188 + $0x4] sm:$0xf]
      %v199 = vld [vmem:[%s188 + $0x8] sm:$0xf]
      %v200 = vld [vmem:[%s188 + $0xc] sm:$0xf]
      %v201 = vld [vmem:[%s188 + $0x10] sm:$0xf]
      %v202 = vld [vmem:[%s188 + $0x14] sm:$0xf]
      %v203 = vld [vmem:[%s188 + $0x18] sm:$0xf]
      %v204 = vld [vmem:[%s188 + $0x1c] sm:$0xf]
      %v205 = vld [vmem:[%s188 + $0x20] sm:$0xf]
      %v206 = vld [vmem:[%s188 + $0x24] sm:$0xf]
      %v207 = vld [vmem:[%s188 + $0x28] sm:$0xf]
      %v208 = vld [vmem:[%s188 + $0x2c] sm:$0xf]
      %v209 = vld [vmem:[%s188 + $0x30] sm:$0xf]
      %v210 = vld [vmem:[%s188 + $0x34] sm:$0xf]
      %v211 = vld [vmem:[%s188 + $0x38] sm:$0xf]
      %v212 = vld [vmem:[%s188 + $0x3c] sm:$0xf]
      %v213 = vld [vmem:[%s188 + $0x40] sm:$0xf]
      %v214 = vld [vmem:[%s188 + $0x44] sm:$0xf]
      %v215 = vld [vmem:[%s188 + $0x48] sm:$0xf]
      %v216 = vld [vmem:[%s188 + $0x4c] sm:$0xf]
      %v217 = vld [vmem:[%s188 + $0x50] sm:$0xf]
      %v218 = vld [vmem:[%s188 + $0x54] sm:$0xf]
      %v219 = vld [vmem:[%s188 + $0x58] sm:$0xf]
      %v220 = vld [vmem:[%s188 + $0x5c] sm:$0xf]
      %v221 = vld [vmem:[%s188 + $0x60] sm:$0xf]
      %v222 = vld [vmem:[%s188 + $0x64] sm:$0xf]
      %v223 = vld [vmem:[%s188 + $0x68] sm:$0xf]
      %v224 = vld [vmem:[%s188 + $0x6c] sm:$0xf]
      %v225 = vld [vmem:[%s188 + $0x70] sm:$0xf]
      %v226 = vld [vmem:[%s188 + $0x74] sm:$0xf]
      %v227 = vld [vmem:[%s188 + $0x78] sm:$0xf]
      %v228 = vld [vmem:[%s188 + $0x7c] sm:$0xf]
      %v229 = vld [vmem:[%s1] sm:$0xf]
      %v230 = vld [vmem:[%s1 + $0x4] sm:$0xf]
      %v231 = vld [vmem:[%s1 + $0x8] sm:$0xf]
      %v232 = vld [vmem:[%s1 + $0xc] sm:$0xf]
      %v233 = vld [vmem:[%s1 + $0x10] sm:$0xf]
      %v234 = vld [vmem:[%s1 + $0x14] sm:$0xf]
      %v235 = vld [vmem:[%s1 + $0x18] sm:$0xf]
      %v236 = vld [vmem:[%s1 + $0x1c] sm:$0xf]
      %v237 = vld [vmem:[%s1 + $0x20] sm:$0xf]
      %v238 = vld [vmem:[%s1 + $0x24] sm:$0xf]
      %v239 = vld [vmem:[%s1 + $0x28] sm:$0xf]
      %v240 = vld [vmem:[%s1 + $0x2c] sm:$0xf]
      %v241 = vld [vmem:[%s1 + $0x30] sm:$0xf]
      %v242 = vld [vmem:[%s1 + $0x34] sm:$0xf]
      %v243 = vld [vmem:[%s1 + $0x38] sm:$0xf]
      %v244 = vld [vmem:[%s1 + $0x3c] sm:$0xf]
      %v277 = vunpack.c.l.b16 %v197
      %v278 = vunpack.c.l.b16 %v198
      %v279 = vunpack.c.l.b16 %v199
      %v280 = vunpack.c.l.b16 %v200
      %v281 = vunpack.c.l.b16 %v201
      %v282 = vunpack.c.l.b16 %v202
      %v283 = vunpack.c.l.b16 %v203
      %v284 = vunpack.c.l.b16 %v204
      %v285 = vunpack.c.l.b16 %v205
      %v286 = vunpack.c.l.b16 %v206
      %v287 = vunpack.c.l.b16 %v207
      %v288 = vunpack.c.l.b16 %v208
      %v289 = vunpack.c.l.b16 %v209
      %v290 = vunpack.c.l.b16 %v210
      %v291 = vunpack.c.l.b16 %v211
      %v292 = vunpack.c.l.b16 %v212
      %v293 = vunpack.c.l.b16 %v213
      %v294 = vunpack.c.l.b16 %v214
      %v295 = vunpack.c.l.b16 %v215
      %v296 = vunpack.c.l.b16 %v216
      %v297 = vunpack.c.l.b16 %v217
      %v298 = vunpack.c.l.b16 %v218
      %v299 = vunpack.c.l.b16 %v219
      %v300 = vunpack.c.l.b16 %v220
      %v301 = vunpack.c.l.b16 %v221
      %v302 = vunpack.c.l.b16 %v222
      %v303 = vunpack.c.l.b16 %v223
      %v304 = vunpack.c.l.b16 %v224
      %v305 = vunpack.c.l.b16 %v225
      %v306 = vunpack.c.l.b16 %v226
      %v307 = vunpack.c.l.b16 %v227
      %v308 = vunpack.c.l.b16 %v228
      %v309 = vpack.c.b16 %v278, %v277
      %v310 = vpack.c.b16 %v280, %v279
      %v311 = vpack.c.b16 %v282, %v281
      %v312 = vpack.c.b16 %v284, %v283
      %v313 = vpack.c.b16 %v286, %v285
      %v314 = vpack.c.b16 %v288, %v287
      %v315 = vpack.c.b16 %v290, %v289
      %v316 = vpack.c.b16 %v292, %v291
      %v317 = vpack.c.b16 %v294, %v293
      %v318 = vpack.c.b16 %v296, %v295
      %v319 = vpack.c.b16 %v298, %v297
      %v320 = vpack.c.b16 %v300, %v299
      %v321 = vpack.c.b16 %v302, %v301
      %v322 = vpack.c.b16 %v304, %v303
      %v323 = vpack.c.b16 %v306, %v305
      %v324 = vpack.c.b16 %v308, %v307
      %v357 = vunpack.c.l.b16 %v229
      %v358 = vunpack.c.l.b16 %v230
      %v359 = vunpack.c.l.b16 %v231
      %v360 = vunpack.c.l.b16 %v232
      %v361 = vunpack.c.l.b16 %v233
      %v362 = vunpack.c.l.b16 %v234
      %v363 = vunpack.c.l.b16 %v235
      %v364 = vunpack.c.l.b16 %v236
      %v365 = vunpack.c.l.b16 %v237
      %v366 = vunpack.c.l.b16 %v238
      %v367 = vunpack.c.l.b16 %v239
      %v368 = vunpack.c.l.b16 %v240
      %v369 = vunpack.c.l.b16 %v241
      %v370 = vunpack.c.l.b16 %v242
      %v371 = vunpack.c.l.b16 %v243
      %v372 = vunpack.c.l.b16 %v244
      %v373 = vpack.c.b16 %v358, %v357
      %v374 = vpack.c.b16 %v360, %v359
      %v375 = vpack.c.b16 %v362, %v361
      %v376 = vpack.c.b16 %v364, %v363
      %v377 = vpack.c.b16 %v366, %v365
      %v378 = vpack.c.b16 %v368, %v367
      %v379 = vpack.c.b16 %v370, %v369
      %v380 = vpack.c.b16 %v372, %v371
      %389 = vmatprep.subr.bf16.mxu0 0
      %390 = vmatpush1.bf16.msra.mxu0 %v373
      %391 = vmatprep.subr.bf16.mxu0 0
      %392 = vmatpush1.bf16.msra.mxu0 %v374
      %393 = vmatprep.subr.bf16.mxu0 0
      %394 = vmatpush1.bf16.msra.mxu0 %v375
      %395 = vmatprep.subr.bf16.mxu0 0
      %396 = vmatpush1.bf16.msra.mxu0 %v376
      %397 = vmatprep.subr.bf16.mxu0 0
      %398 = vmatpush1.bf16.msra.mxu0 %v377
      %399 = vmatprep.subr.bf16.mxu0 0
      %400 = vmatpush1.bf16.msra.mxu0 %v378
      %401 = vmatprep.subr.bf16.mxu0 0
      %402 = vmatpush1.bf16.msra.mxu0 %v379
      %403 = vmatprep.subr.bf16.mxu0 0
      %404 = vmatpush1.bf16.msra.mxu0 %v380
      %405 = vmatprep.subr.bf16.mxu0 0
      %406 = vmatpush1.bf16.msra.mxu0 0
      %407 = vmatprep.subr.bf16.mxu0 0
      %408 = vmatpush1.bf16.msra.mxu0 0
      %409 = vmatprep.subr.bf16.mxu0 0
      %410 = vmatpush1.bf16.msra.mxu0 0
      %411 = vmatprep.subr.bf16.mxu0 0
      %412 = vmatpush1.bf16.msra.mxu0 0
      %413 = vmatprep.subr.bf16.mxu0 0
      %414 = vmatpush1.bf16.msra.mxu0 0
      %415 = vmatprep.subr.bf16.mxu0 0
      %416 = vmatpush1.bf16.msra.mxu0 0
      %417 = vmatprep.subr.bf16.mxu0 0
      %418 = vmatpush1.bf16.msra.mxu0 0
      %419 = vmatprep.subr.bf16.mxu0 0
      %420 = vmatpush1.bf16.msra.mxu0 0
      %421 = vmatprep.mubr.bf16.mxu0 0
      %422 = vmatmul.mubr.bf16.gmra.mrb[0].mxu0 %v309
      %v423 = vpop.f32.mrb[0].mxu0
      %v424 = vadd.f32 0.0, %v423
      %v425 = vpop.f32.mrb[0].mxu0
      %v426 = vpop.f32.mrb[0].mxu0
      %v427 = vadd.f32 0.0, %v426
      %v428 = vpop.f32.mrb[0].mxu0
      %429 = vmatprep.mubr.bf16.mxu0 0
      %430 = vmatmul.mubr.bf16.gmra.mrb[0].mxu0 %v310
      %v431 = vpop.f32.mrb[0].mxu0
      %v432 = vadd.f32 0.0, %v431
      %v433 = vpop.f32.mrb[0].mxu0
      %v434 = vpop.f32.mrb[0].mxu0
      %v435 = vadd.f32 0.0, %v434
      %v436 = vpop.f32.mrb[0].mxu0
      %437 = vmatprep.mubr.bf16.mxu0 0
      %438 = vmatmul.mubr.bf16.gmra.mrb[0].mxu0 %v311
      %v439 = vpop.f32.mrb[0].mxu0
      %v440 = vadd.f32 0.0, %v439
      %v441 = vpop.f32.mrb[0].mxu0
      %v442 = vpop.f32.mrb[0].mxu0
      %v443 = vadd.f32 0.0, %v442
      %v444 = vpop.f32.mrb[0].mxu0
      %445 = vmatprep.mubr.bf16.mxu0 0
      %446 = vmatmul.mubr.bf16.gmra.mrb[0].mxu0 %v312
      %v447 = vpop.f32.mrb[0].mxu0
      %v448 = vadd.f32 0.0, %v447
      %v449 = vpop.f32.mrb[0].mxu0
      %v450 = vpop.f32.mrb[0].mxu0
      %v451 = vadd.f32 0.0, %v450
      %v452 = vpop.f32.mrb[0].mxu0
      %453 = vmatprep.mubr.bf16.mxu0 0
      %454 = vmatmul.mubr.bf16.gmra.mrb[0].mxu0 %v313
      %v455 = vpop.f32.mrb[0].mxu0
      %v456 = vadd.f32 0.0, %v455
      %v457 = vpop.f32.mrb[0].mxu0
      %v458 = vpop.f32.mrb[0].mxu0
      %v459 = vadd.f32 0.0, %v458
      %v460 = vpop.f32.mrb[0].mxu0
      %461 = vmatprep.mubr.bf16.mxu0 0
      %462 = vmatmul.mubr.bf16.gmra.mrb[0].mxu0 %v314
      %v463 = vpop.f32.mrb[0].mxu0
      %v464 = vadd.f32 0.0, %v463
      %v465 = vpop.f32.mrb[0].mxu0
      %v466 = vpop.f32.mrb[0].mxu0
      %v467 = vadd.f32 0.0, %v466
      %v468 = vpop.f32.mrb[0].mxu0
      %469 = vmatprep.mubr.bf16.mxu0 0
      %470 = vmatmul.mubr.bf16.gmra.mrb[0].mxu0 %v315
      %v471 = vpop.f32.mrb[0].mxu0
      %v472 = vadd.f32 0.0, %v471
      %v473 = vpop.f32.mrb[0].mxu0
      %v474 = vpop.f32.mrb[0].mxu0
      %v475 = vadd.f32 0.0, %v474
      %v476 = vpop.f32.mrb[0].mxu0
      %477 = vmatprep.mubr.bf16.mxu0 0
      %478 = vmatmul.mubr.bf16.gmra.mrb[0].mxu0 %v316
      %v479 = vpop.f32.mrb[0].mxu0
      %v480 = vadd.f32 0.0, %v479
      %v481 = vpop.f32.mrb[0].mxu0
      %v482 = vpop.f32.mrb[0].mxu0
      %v483 = vadd.f32 0.0, %v482
      %v484 = vpop.f32.mrb[0].mxu0
      %485 = vmatprep.mubr.bf16.mxu0 0
      %486 = vmatmul.mubr.bf16.gmra.mrb[0].mxu0 %v317
      %v487 = vpop.f32.mrb[0].mxu0
      %v488 = vadd.f32 0.0, %v487
      %v489 = vpop.f32.mrb[0].mxu0
      %v490 = vpop.f32.mrb[0].mxu0
      %v491 = vadd.f32 0.0, %v490
      %v492 = vpop.f32.mrb[0].mxu0
      %493 = vmatprep.mubr.bf16.mxu0 0
      %494 = vmatmul.mubr.bf16.gmra.mrb[0].mxu0 %v318
      %v495 = vpop.f32.mrb[0].mxu0
      %v496 = vadd.f32 0.0, %v495
      %v497 = vpop.f32.mrb[0].mxu0
      %v498 = vpop.f32.mrb[0].mxu0
      %v499 = vadd.f32 0.0, %v498
      %v500 = vpop.f32.mrb[0].mxu0
      %501 = vmatprep.mubr.bf16.mxu0 0
      %502 = vmatmul.mubr.bf16.gmra.mrb[0].mxu0 %v319
      %v503 = vpop.f32.mrb[0].mxu0
      %v504 = vadd.f32 0.0, %v503
      %v505 = vpop.f32.mrb[0].mxu0
      %v506 = vpop.f32.mrb[0].mxu0
      %v507 = vadd.f32 0.0, %v506
      %v508 = vpop.f32.mrb[0].mxu0
      %509 = vmatprep.mubr.bf16.mxu0 0
      %510 = vmatmul.mubr.bf16.gmra.mrb[0].mxu0 %v320
      %v511 = vpop.f32.mrb[0].mxu0
      %v512 = vadd.f32 0.0, %v511
      %v513 = vpop.f32.mrb[0].mxu0
      %v514 = vpop.f32.mrb[0].mxu0
      %v515 = vadd.f32 0.0, %v514
      %v516 = vpop.f32.mrb[0].mxu0
      %517 = vmatprep.mubr.bf16.mxu0 0
      %518 = vmatmul.mubr.bf16.gmra.mrb[0].mxu0 %v321
      %v519 = vpop.f32.mrb[0].mxu0
      %v520 = vadd.f32 0.0, %v519
      %v521 = vpop.f32.mrb[0].mxu0
      %v522 = vpop.f32.mrb[0].mxu0
      %v523 = vadd.f32 0.0, %v522
      %v524 = vpop.f32.mrb[0].mxu0
      %525 = vmatprep.mubr.bf16.mxu0 0
      %526 = vmatmul.mubr.bf16.gmra.mrb[0].mxu0 %v322
      %v527 = vpop.f32.mrb[0].mxu0
      %v528 = vadd.f32 0.0, %v527
      %v529 = vpop.f32.mrb[0].mxu0
      %v530 = vpop.f32.mrb[0].mxu0
      %v531 = vadd.f32 0.0, %v530
      %v532 = vpop.f32.mrb[0].mxu0
      %533 = vmatprep.mubr.bf16.mxu0 0
      %534 = vmatmul.mubr.bf16.gmra.mrb[0].mxu0 %v323
      %v535 = vpop.f32.mrb[0].mxu0
      %v536 = vadd.f32 0.0, %v535
      %v537 = vpop.f32.mrb[0].mxu0
      %v538 = vpop.f32.mrb[0].mxu0
      %v539 = vadd.f32 0.0, %v538
      %v540 = vpop.f32.mrb[0].mxu0
      %541 = vmatprep.mubr.bf16.mxu0 0
      %542 = vmatmul.mubr.bf16.gmra.mrb[0].mxu0 %v324
      %v543 = vpop.f32.mrb[0].mxu0
      %v544 = vadd.f32 0.0, %v543
      %v545 = vpop.f32.mrb[0].mxu0
      %v546 = vpop.f32.mrb[0].mxu0
      %v547 = vadd.f32 0.0, %v546
      %v548 = vpop.f32.mrb[0].mxu0
      %549 = vdwg.mxu0
      %550 = vst [vmem:[%s194] sm:$0xff] %v424
      %551 = vst [vmem:[%s194 + $0x8] sm:$0xff] %v427
      %552 = vst [vmem:[%s194 + $0x10] sm:$0xff] %v432
      %553 = vst [vmem:[%s194 + $0x18] sm:$0xff] %v435
      %554 = vst [vmem:[%s194 + $0x20] sm:$0xff] %v440
      %555 = vst [vmem:[%s194 + $0x28] sm:$0xff] %v443
      %556 = vst [vmem:[%s194 + $0x30] sm:$0xff] %v448
      %557 = vst [vmem:[%s194 + $0x38] sm:$0xff] %v451
      %558 = vst [vmem:[%s194 + $0x40] sm:$0xff] %v456
      %559 = vst [vmem:[%s194 + $0x48] sm:$0xff] %v459
      %560 = vst [vmem:[%s194 + $0x50] sm:$0xff] %v464
      %561 = vst [vmem:[%s194 + $0x58] sm:$0xff] %v467
      %562 = vst [vmem:[%s194 + $0x60] sm:$0xff] %v472
      %563 = vst [vmem:[%s194 + $0x68] sm:$0xff] %v475
      %564 = vst [vmem:[%s194 + $0x70] sm:$0xff] %v480
      %565 = vst [vmem:[%s194 + $0x78] sm:$0xff] %v483
      %566 = vst [vmem:[%s194 + $0x80] sm:$0xff] %v488
      %567 = vst [vmem:[%s194 + $0x88] sm:$0xff] %v491
      %568 = vst [vmem:[%s194 + $0x90] sm:$0xff] %v496
      %569 = vst [vmem:[%s194 + $0x98] sm:$0xff] %v499
      %570 = vst [vmem:[%s194 + $0xa0] sm:$0xff] %v504
      %571 = vst [vmem:[%s194 + $0xa8] sm:$0xff] %v507
      %572 = vst [vmem:[%s194 + $0xb0] sm:$0xff] %v512
      %573 = vst [vmem:[%s194 + $0xb8] sm:$0xff] %v515
      %574 = vst [vmem:[%s194 + $0xc0] sm:$0xff] %v520
      %575 = vst [vmem:[%s194 + $0xc8] sm:$0xff] %v523
      %576 = vst [vmem:[%s194 + $0xd0] sm:$0xff] %v528
      %577 = vst [vmem:[%s194 + $0xd8] sm:$0xff] %v531
      %578 = vst [vmem:[%s194 + $0xe0] sm:$0xff] %v536
      %579 = vst [vmem:[%s194 + $0xe8] sm:$0xff] %v539
      %580 = vst [vmem:[%s194 + $0xf0] sm:$0xff] %v544
      %581 = vst [vmem:[%s194 + $0xf8] sm:$0xff] %v547
      %p582 = scmp.eq.s32.totalorder %s16, 0
      // Predicated region
      $region29: #{bottleneck_forward.6} parent=27 // pred_check
        %p583 = pneg %p582
      $region30: #{bottleneck_forward.6} parent=27 // pred_check_branch
        %585 = sbr.rel (%p583) target = $region32
      $region31: #{bottleneck_forward.6} parent=27 // pred_region
        %586 = vst [vmem:[%s3] sm:$0x1] 0.0
        %587 = vst [vmem:[%s4] sm:$0x1] 0.0
      $region32: #{bottleneck_forward.6} parent=27 // pred_fallthru
        _
      %v588 = vld [vmem:[%s3] sm:$0x1]
      %v589 = vadd.f32 %v424, %v427
      %v590 = vadd.f32 %v589, %v432
      %v591 = vadd.f32 %v590, %v435
      %v592 = vadd.f32 %v591, %v440
      %v593 = vadd.f32 %v592, %v443
      %v594 = vadd.f32 %v593, %v448
      %v595 = vadd.f32 %v594, %v451
      %v596 = vadd.f32 %v595, %v456
      %v597 = vadd.f32 %v596, %v459
      %v598 = vadd.f32 %v597, %v464
      %v599 = vadd.f32 %v598, %v467
      %v600 = vadd.f32 %v599, %v472
      %v601 = vadd.f32 %v600, %v475
      %v602 = vadd.f32 %v601, %v480
      %v603 = vadd.f32 %v602, %v483
      %v604 = vadd.f32 %v603, %v488
      %v605 = vadd.f32 %v604, %v491
      %v606 = vadd.f32 %v605, %v496
      %v607 = vadd.f32 %v606, %v499
      %v608 = vadd.f32 %v607, %v504
      %v609 = vadd.f32 %v608, %v507
      %v610 = vadd.f32 %v609, %v512
      %v611 = vadd.f32 %v610, %v515
      %v612 = vadd.f32 %v611, %v520
      %v613 = vadd.f32 %v612, %v523
      %v614 = vadd.f32 %v613, %v528
      %v615 = vadd.f32 %v614, %v531
      %v616 = vadd.f32 %v615, %v536
      %v617 = vadd.f32 %v616, %v539
      %v618 = vadd.f32 %v617, %v544
      %v619 = vadd.f32 %v618, %v547
      %v620 = vrot.slane %v619, 4
      %v621 = vadd.f32 %v619, %v620
      %v622 = vrot.slane %v621, 2
      %v623 = vadd.f32 %v621, %v622
      %v624 = vrot.slane %v623, 1
      %v625 = vadd.f32 %v623, %v624
      %v626 = vadd.f32 %v588, %v625
      %627 = vst [vmem:[%s3] sm:$0x1] %v626
      %v628 = vld [vmem:[%s4] sm:$0x1]
      %v629 = vmul.f32 %v424, %v424
      %v630 = vmul.f32 %v427, %v427
      %v631 = vmul.f32 %v432, %v432
      %v632 = vmul.f32 %v435, %v435
      %v633 = vmul.f32 %v440, %v440
      %v634 = vmul.f32 %v443, %v443
      %v635 = vmul.f32 %v448, %v448
      %v636 = vmul.f32 %v451, %v451
      %v637 = vmul.f32 %v456, %v456
      %v638 = vmul.f32 %v459, %v459
      %v639 = vmul.f32 %v464, %v464
      %v640 = vmul.f32 %v467, %v467
      %v641 = vmul.f32 %v472, %v472
      %v642 = vmul.f32 %v475, %v475
      %v643 = vmul.f32 %v480, %v480
      %v644 = vmul.f32 %v483, %v483
      %v645 = vmul.f32 %v488, %v488
      %v646 = vmul.f32 %v491, %v491
      %v647 = vmul.f32 %v496, %v496
      %v648 = vmul.f32 %v499, %v499
      %v649 = vmul.f32 %v504, %v504
      %v650 = vmul.f32 %v507, %v507
      %v651 = vmul.f32 %v512, %v512
      %v652 = vmul.f32 %v515, %v515
      %v653 = vmul.f32 %v520, %v520
      %v654 = vmul.f32 %v523, %v523
      %v655 = vmul.f32 %v528, %v528
      %v656 = vmul.f32 %v531, %v531
      %v657 = vmul.f32 %v536, %v536
      %v658 = vmul.f32 %v539, %v539
      %v659 = vmul.f32 %v544, %v544
      %v660 = vmul.f32 %v547, %v547
      %v661 = vadd.f32 %v629, %v630
      %v662 = vadd.f32 %v661, %v631
      %v663 = vadd.f32 %v662, %v632
      %v664 = vadd.f32 %v663, %v633
      %v665 = vadd.f32 %v664, %v634
      %v666 = vadd.f32 %v665, %v635
      %v667 = vadd.f32 %v666, %v636
      %v668 = vadd.f32 %v667, %v637
      %v669 = vadd.f32 %v668, %v638
      %v670 = vadd.f32 %v669, %v639
      %v671 = vadd.f32 %v670, %v640
      %v672 = vadd.f32 %v671, %v641
      %v673 = vadd.f32 %v672, %v642
      %v674 = vadd.f32 %v673, %v643
      %v675 = vadd.f32 %v674, %v644
      %v676 = vadd.f32 %v675, %v645
      %v677 = vadd.f32 %v676, %v646
      %v678 = vadd.f32 %v677, %v647
      %v679 = vadd.f32 %v678, %v648
      %v680 = vadd.f32 %v679, %v649
      %v681 = vadd.f32 %v680, %v650
      %v682 = vadd.f32 %v681, %v651
      %v683 = vadd.f32 %v682, %v652
      %v684 = vadd.f32 %v683, %v653
      %v685 = vadd.f32 %v684, %v654
      %v686 = vadd.f32 %v685, %v655
      %v687 = vadd.f32 %v686, %v656
      %v688 = vadd.f32 %v687, %v657
      %v689 = vadd.f32 %v688, %v658
      %v690 = vadd.f32 %v689, %v659
      %v691 = vadd.f32 %v690, %v660
      %v692 = vrot.slane %v691, 4
      %v693 = vadd.f32 %v691, %v692
      %v694 = vrot.slane %v693, 2
      %v695 = vadd.f32 %v693, %v694
      %v696 = vrot.slane %v695, 1
      %v697 = vadd.f32 %v695, %v696
      %v698 = vadd.f32 %v628, %v697
      %699 = vst [vmem:[%s4] sm:$0x1] %v698
      %s700 = smul.u32 32, %s16
      %p701 = scmp.lt.s32.totalorder %s700, 63
      %s702 = scalar_select %p701, %s700, 63
      %s703 = smul.addr %s702, 8
      %s704 = scalar_lea.vmem %s2, %s703
      // Predicated region
      $region33: #{bottleneck_forward.6} parent=27 // pred_check
        %p705 = pneg %p81
      $region34: #{bottleneck_forward.6} parent=27 // pred_check_branch
        %707 = sbr.rel (%p705) target = $region36
      $region35: #{bottleneck_forward.6} parent=27 // pred_region
        %s708 = smul.u32 32, %s16
      $region36: #{bottleneck_forward.6} parent=27 // pred_fallthru
        _
      // Predicated region
      $region37: #{bottleneck_forward.6} parent=27 // pred_check
        %p709 = pneg %p102
      $region38: #{bottleneck_forward.6} parent=27 // pred_check_branch
        %711 = sbr.rel (%p709) target = $region40
      $region39: #{bottleneck_forward.6} parent=27 // pred_region
        _
      $region40: #{bottleneck_forward.6} parent=27 // pred_fallthru
        _
      // Predicated region
      $region41: #{bottleneck_forward.6} parent=27 // pred_check
        %p712 = pneg %p123
      $region42: #{bottleneck_forward.6} parent=27 // pred_check_branch
        %714 = sbr.rel (%p712) target = $region44
      $region43: #{bottleneck_forward.6} parent=27 // pred_region
        _
      $region44: #{bottleneck_forward.6} parent=27 // pred_fallthru
        _
      // Predicated region
      $region45: #{bottleneck_forward.6} parent=27 // pred_check
        %p715 = pneg %p102
      $region46: #{bottleneck_forward.6} parent=27 // pred_check_branch
        %717 = sbr.rel (%p715) target = $region48
      $region47: #{bottleneck_forward.6} parent=27 // pred_region
        _
      $region48: #{bottleneck_forward.6} parent=27 // pred_fallthru
        _
      // Predicated region
      $region49: #{bottleneck_forward.6} parent=27 // pred_check
        %p718 = pneg %p123
      $region50: #{bottleneck_forward.6} parent=27 // pred_check_branch
        %720 = sbr.rel (%p718) target = $region52
      $region51: #{bottleneck_forward.6} parent=27 // pred_region
        _
      $region52: #{bottleneck_forward.6} parent=27 // pred_fallthru
        _
    $region28: #{bottleneck_forward.6} parent=5 // pred_fallthru
      _
    %p721 = scmp.le.s32.totalorder 2, %s11
    // Predicated region
    $region53: #{bottleneck_forward.6} parent=5 // pred_check
      %p722 = pneg %p721
    $region54: #{bottleneck_forward.6} parent=5 // pred_check_branch
      %724 = sbr.rel (%p722) target = $region56
    $region55: #{bottleneck_forward.6} parent=5 // pred_region
      %s725 = ssub.s32 %s11, 2
      // Predicated region
      $region57: #{bottleneck_forward.6} parent=55 // pred_check
        %p726 = pneg %p87
      $region58: #{bottleneck_forward.6} parent=55 // pred_check_branch
        %728 = sbr.rel (%p726) target = $region60
      $region59: #{bottleneck_forward.6} parent=55 // pred_region
        %s729 = smul.u32 32, %s17
        %p730 = scmp.lt.s32.totalorder %s729, 63
        %s731 = scalar_select %p730, %s729, 63
        %s732 = smul.addr %s731, 8
        %s733 = scalar_lea.vmem %s2, %s732
      $region60: #{bottleneck_forward.6} parent=55 // pred_fallthru
        _
    $region56: #{bottleneck_forward.6} parent=5 // pred_fallthru
      _
  $region6: #{bottleneck_forward.6} parent=0 // loop_footer
    %s15 = sadd.s32 1, %s11
  $region7: #{bottleneck_forward.6} parent=0 // loop_footer_branch
    %10 = sbr.rel target = $region3
  $region8: #{bottleneck_forward.6} parent=0 // loop_exit
    _

// kernel: bottleneck_forward.9
$region0: #{bottleneck_forward.9}
  #allocation0 [shape = 'u32[]', space=smem, size = 0x4, offset = 0x4, fixed_abs, tag = 'smem constant byte address 0x4 - core index']
  #allocation1 [shape = 'u32[144,128]{1,0:T(1,128)}', space=vmem, size = 0x12000, scoped, tag = 'internal scratch']
  %s0 = inlined_call_operand.vmem [shape: f32[512,128], index: 0, kind: input, shape index: {}]
  %s1 = inlined_call_operand.vmem [shape: f32[1,128], index: 1, kind: input, shape index: {}]
  %s2 = inlined_call_operand.vmem [shape: f32[1,128], index: 2, kind: input, shape index: {}]
  %s3 = inlined_call_operand.vmem [shape: bf16[128,128], index: 3, kind: input, shape index: {}]
  %s4 = inlined_call_operand.vmem [shape: f32[512,128], index: 4, kind: output, shape index: {0}]
  %s5 = inlined_call_operand.vmem [shape: f32[1,128], index: 5, kind: output, shape index: {1}]
  %s6 = inlined_call_operand.vmem [shape: f32[1,128], index: 6, kind: output, shape index: {2}]
  %7 = xla_tuple %s4, %s5, %s6
  %s8 = sld [smem:[#allocation0]]
  $region69: #{bottleneck_forward.9} parent=0
    _
  %s10 = ssub.s32 1, %s8
  %s11 = scalar_select 0, %s10, %s8
  loop: start=0, step=1, limit=4
  $region2: #{bottleneck_forward.9} parent=0 // loop_pre_header
    _
  $region3: #{bottleneck_forward.9} parent=0 // loop_header
    %s13 = sphi 0, %s17
    %p14 = scmp.ge.s32.totalorder %s13, 4
    %s23 = sphi 0, %s25
    %s26 = sphi 0, %s23
    %s27 = sphi 0, %s26
    %s43 = sphi 0, %s27
    %s47 = sphi 0, %s47
    %s49 = sphi 0, %s47
    %s50 = sphi 0, %s49
    %s64 = sphi 0, %s50
    %s68 = sphi 0, %s68
    %s70 = sphi 0, %s68
    %s71 = sphi 0, %s70
    %s85 = sphi 0, %s71
    %s89 = sphi 0, %s89
    %s91 = sphi 0, %s89
    %s92 = sphi 0, %s91
    %s106 = sphi 0, %s92
    %s112 = sphi 0, %s114
    %s115 = sphi 0, %s112
    %s116 = sphi 0, %s115
    %s132 = sphi 0, %s116
    %s136 = sphi 0, %s136
    %s138 = sphi 0, %s136
    %s139 = sphi 0, %s138
    %s153 = sphi 0, %s139
    %s157 = sphi 0, %s157
    %s159 = sphi 0, %s157
    %s160 = sphi 0, %s159
    %s174 = sphi 0, %s160
  $region4: #{bottleneck_forward.9} parent=0 // loop_header_branch
    %16 = sbr.rel (%p14) target = $region8
  $region5: #{bottleneck_forward.9} parent=0 // loop_body
    %s18 = ssub.s32 %s13, 1
    %s19 = ssub.s32 %s13, 2
    %s20 = sadd.s32 %s13, 1
    %s21 = ssub.s32 %s13, %s20
    %p22 = scmp.eq.s32.totalorder %s21, 0
    %s24 = sadd.s32 %s23, 1
    %s25 = scalar_select %p22, %s23, %s24
    %p28 = pneg %p22
    %p29 = scmp.eq.s32.totalorder %s13, 1
    %p30 = por %p28, %p29
    %p31 = scmp.ne.s32.totalorder %s23, %s26
    %p32 = scmp.eq.s32.totalorder %s13, 0
    %p33 = por %p31, %p32
    %p34 = scmp.ne.s32.totalorder %s23, %s26
    %p35 = scmp.eq.s32.totalorder %s18, 1
    %p36 = por %p34, %p35
    %p37 = scmp.ne.s32.totalorder %s26, %s27
    %p38 = scmp.eq.s32.totalorder %s18, 0
    %p39 = por %p37, %p38
    %p40 = scmp.ne.s32.totalorder %s26, %s27
    %p41 = scmp.eq.s32.totalorder %s19, 1
    %p42 = por %p40, %p41
    %p44 = scmp.ne.s32.totalorder %s27, %s43
    %p45 = scmp.eq.s32.totalorder %s19, 0
    %p46 = por %p44, %p45
    %s48 = sadd.s32 %s47, 1
    %p51 = scmp.eq.s32.totalorder %s13, 1
    %p52 = scmp.ne.s32.totalorder %s47, %s49
    %p53 = scmp.eq.s32.totalorder %s13, 0
    %p54 = por %p52, %p53
    %p55 = scmp.ne.s32.totalorder %s47, %s49
    %p56 = scmp.eq.s32.totalorder %s18, 1
    %p57 = por %p55, %p56
    %p58 = scmp.ne.s32.totalorder %s49, %s50
    %p59 = scmp.eq.s32.totalorder %s18, 0
    %p60 = por %p58, %p59
    %p61 = scmp.ne.s32.totalorder %s49, %s50
    %p62 = scmp.eq.s32.totalorder %s19, 1
    %p63 = por %p61, %p62
    %p65 = scmp.ne.s32.totalorder %s50, %s64
    %p66 = scmp.eq.s32.totalorder %s19, 0
    %p67 = por %p65, %p66
    %s69 = sadd.s32 %s68, 1
    %p72 = scmp.eq.s32.totalorder %s13, 1
    %p73 = scmp.ne.s32.totalorder %s68, %s70
    %p74 = scmp.eq.s32.totalorder %s13, 0
    %p75 = por %p73, %p74
    %p76 = scmp.ne.s32.totalorder %s68, %s70
    %p77 = scmp.eq.s32.totalorder %s18, 1
    %p78 = por %p76, %p77
    %p79 = scmp.ne.s32.totalorder %s70, %s71
    %p80 = scmp.eq.s32.totalorder %s18, 0
    %p81 = por %p79, %p80
    %p82 = scmp.ne.s32.totalorder %s70, %s71
    %p83 = scmp.eq.s32.totalorder %s19, 1
    %p84 = por %p82, %p83
    %p86 = scmp.ne.s32.totalorder %s71, %s85
    %p87 = scmp.eq.s32.totalorder %s19, 0
    %p88 = por %p86, %p87
    %s90 = sadd.s32 %s89, 1
    %p93 = scmp.eq.s32.totalorder %s13, 1
    %p94 = scmp.ne.s32.totalorder %s89, %s91
    %p95 = scmp.eq.s32.totalorder %s13, 0
    %p96 = por %p94, %p95
    %p97 = scmp.ne.s32.totalorder %s89, %s91
    %p98 = scmp.eq.s32.totalorder %s18, 1
    %p99 = por %p97, %p98
    %p100 = scmp.ne.s32.totalorder %s91, %s92
    %p101 = scmp.eq.s32.totalorder %s18, 0
    %p102 = por %p100, %p101
    %p103 = scmp.ne.s32.totalorder %s91, %s92
    %p104 = scmp.eq.s32.totalorder %s19, 1
    %p105 = por %p103, %p104
    %p107 = scmp.ne.s32.totalorder %s92, %s106
    %p108 = scmp.eq.s32.totalorder %s19, 0
    %p109 = por %p107, %p108
    %s110 = ssub.s32 %s13, %s20
    %p111 = scmp.eq.s32.totalorder %s110, 0
    %s113 = sadd.s32 %s112, 1
    %s114 = scalar_select %p111, %s112, %s113
    %p117 = pneg %p111
    %p118 = scmp.eq.s32.totalorder %s13, 1
    %p119 = por %p117, %p118
    %p120 = scmp.ne.s32.totalorder %s112, %s115
    %p121 = scmp.eq.s32.totalorder %s13, 0
    %p122 = por %p120, %p121
    %p123 = scmp.ne.s32.totalorder %s112, %s115
    %p124 = scmp.eq.s32.totalorder %s18, 1
    %p125 = por %p123, %p124
    %p126 = scmp.ne.s32.totalorder %s115, %s116
    %p127 = scmp.eq.s32.totalorder %s18, 0
    %p128 = por %p126, %p127
    %p129 = scmp.ne.s32.totalorder %s115, %s116
    %p130 = scmp.eq.s32.totalorder %s19, 1
    %p131 = por %p129, %p130
    %p133 = scmp.ne.s32.totalorder %s116, %s132
    %p134 = scmp.eq.s32.totalorder %s19, 0
    %p135 = por %p133, %p134
    %s137 = sadd.s32 %s136, 1
    %p140 = scmp.eq.s32.totalorder %s13, 1
    %p141 = scmp.ne.s32.totalorder %s136, %s138
    %p142 = scmp.eq.s32.totalorder %s13, 0
    %p143 = por %p141, %p142
    %p144 = scmp.ne.s32.totalorder %s136, %s138
    %p145 = scmp.eq.s32.totalorder %s18, 1
    %p146 = por %p144, %p145
    %p147 = scmp.ne.s32.totalorder %s138, %s139
    %p148 = scmp.eq.s32.totalorder %s18, 0
    %p149 = por %p147, %p148
    %p150 = scmp.ne.s32.totalorder %s138, %s139
    %p151 = scmp.eq.s32.totalorder %s19, 1
    %p152 = por %p150, %p151
    %p154 = scmp.ne.s32.totalorder %s139, %s153
    %p155 = scmp.eq.s32.totalorder %s19, 0
    %p156 = por %p154, %p155
    %s158 = sadd.s32 %s157, 1
    %p161 = scmp.eq.s32.totalorder %s13, 1
    %p162 = scmp.ne.s32.totalorder %s157, %s159
    %p163 = scmp.eq.s32.totalorder %s13, 0
    %p164 = por %p162, %p163
    %p165 = scmp.ne.s32.totalorder %s157, %s159
    %p166 = scmp.eq.s32.totalorder %s18, 1
    %p167 = por %p165, %p166
    %p168 = scmp.ne.s32.totalorder %s159, %s160
    %p169 = scmp.eq.s32.totalorder %s18, 0
    %p170 = por %p168, %p169
    %p171 = scmp.ne.s32.totalorder %s159, %s160
    %p172 = scmp.eq.s32.totalorder %s19, 1
    %p173 = por %p171, %p172
    %p175 = scmp.ne.s32.totalorder %s160, %s174
    %p176 = scmp.eq.s32.totalorder %s19, 0
    %p177 = por %p175, %p176
    %p178 = scmp.le.s32.totalorder 1, %s13
    %p179 = scmp.lt.s32.totalorder %s13, 3
    %p180 = pnand %p178, %p179
    %p181 = pneg %p180
    // Predicated region
    $region9: #{bottleneck_forward.9} parent=5 // pred_check
      _
    $region10: #{bottleneck_forward.9} parent=5 // pred_check_branch
      %183 = sbr.rel (%p180) target = $region12
    $region11: #{bottleneck_forward.9} parent=5 // pred_region
      %s184 = ssub.s32 %s13, 1
      // Predicated region
      $region13: #{bottleneck_forward.9} parent=11 // pred_check
        %p185 = pneg %p60
      $region14: #{bottleneck_forward.9} parent=11 // pred_check_branch
        %187 = sbr.rel (%p185) target = $region16
      $region15: #{bottleneck_forward.9} parent=11 // pred_region
        _
      $region16: #{bottleneck_forward.9} parent=11 // pred_fallthru
        _
      // Predicated region
      $region17: #{bottleneck_forward.9} parent=11 // pred_check
        %p188 = pneg %p81
      $region18: #{bottleneck_forward.9} parent=11 // pred_check_branch
        %190 = sbr.rel (%p188) target = $region20
      $region19: #{bottleneck_forward.9} parent=11 // pred_region
        _
      $region20: #{bottleneck_forward.9} parent=11 // pred_fallthru
        _
      // Predicated region
      $region21: #{bottleneck_forward.9} parent=11 // pred_check
        %p191 = pneg %p102
      $region22: #{bottleneck_forward.9} parent=11 // pred_check_branch
        %193 = sbr.rel (%p191) target = $region24
      $region23: #{bottleneck_forward.9} parent=11 // pred_region
        _
      $region24: #{bottleneck_forward.9} parent=11 // pred_fallthru
        _
    $region12: #{bottleneck_forward.9} parent=5 // pred_fallthru
      _
    %p194 = scmp.lt.s32.totalorder %s13, 2
    // Predicated region
    $region25: #{bottleneck_forward.9} parent=5 // pred_check
      %p195 = pneg %p194
    $region26: #{bottleneck_forward.9} parent=5 // pred_check_branch
      %197 = sbr.rel (%p195) target = $region28
    $region27: #{bottleneck_forward.9} parent=5 // pred_region
      // Predicated region
      $region29: #{bottleneck_forward.9} parent=27 // pred_check
        %p198 = pneg %p33
      $region30: #{bottleneck_forward.9} parent=27 // pred_check_branch
        %200 = sbr.rel (%p198) target = $region32
      $region31: #{bottleneck_forward.9} parent=27 // pred_region
        %s201 = smul.u32 32, %s13
        %p202 = scmp.lt.s32.totalorder %s201, 63
        %s203 = scalar_select %p202, %s201, 63
        %s204 = smul.addr %s203, 8
        %s205 = scalar_lea.vmem %s0, %s204
        %s206 = smul.u32 32, %s13
      $region32: #{bottleneck_forward.9} parent=27 // pred_fallthru
        _
    $region28: #{bottleneck_forward.9} parent=5 // pred_fallthru
      _
    %p207 = scmp.le.s32.totalorder 1, %s13
    %p208 = scmp.lt.s32.totalorder %s13, 3
    %p209 = pnand %p207, %p208
    %p210 = pneg %p209
    // Predicated region
    $region33: #{bottleneck_forward.9} parent=5 // pred_check
      _
    $region34: #{bottleneck_forward.9} parent=5 // pred_check_branch
      %212 = sbr.rel (%p209) target = $region36
    $region35: #{bottleneck_forward.9} parent=5 // pred_region
      %s213 = ssub.s32 %s13, 1
      %s214 = smul.u32 32, %s18
      %p215 = scmp.lt.s32.totalorder %s214, 63
      %s216 = scalar_select %p215, %s214, 63
      %s217 = smul.addr %s216, 8
      %s218 = scalar_lea.vmem %s0, %s217
      %p219 = pneg %p39
      %p220 = pneg %p36
      %p221 = pneg %p60
      %p222 = pneg %p57
      %p223 = pneg %p81
      %p224 = pneg %p78
      %p225 = pneg %p102
      %p226 = pneg %p99
      %p227 = pneg %p128
      %p228 = pneg %p125
      %s229 = smul.u32 32, %s18
      %p230 = scmp.lt.s32.totalorder %s229, 63
      %s231 = scalar_select %p230, %s229, 63
      %s232 = smul.addr %s231, 8
      %s233 = scalar_lea.vmem %s4, %s232
      %p234 = pneg %p149
      %p235 = pneg %p146
      %p236 = pneg %p170
      %p237 = pneg %p167
      %s238 = smul.u32 32, %s18
      %p239 = scmp.lt.s32.totalorder %s238, 63
      %s240 = scalar_select %p239, %s238, 63
      %s241 = smul.addr %s240, 8
      %s242 = scalar_lea.vmem %s0, %s241
      %s243 = smul.u32 32, %s18
      %s244 = smul.u32 32, %s18
      %p245 = scmp.lt.s32.totalorder %s244, 63
      %s246 = scalar_select %p245, %s244, 63
      %s247 = smul.addr %s246, 8
      %s248 = scalar_lea.vmem %s4, %s247
      %s249 = smul.u32 32, %s18
      %v251 = vld [vmem:[%s242] sm:$0xff]
      %v252 = vld [vmem:[%s242 + $0x8] sm:$0xff]
      %v253 = vld [vmem:[%s242 + $0x10] sm:$0xff]
      %v254 = vld [vmem:[%s242 + $0x18] sm:$0xff]
      %v255 = vld [vmem:[%s242 + $0x20] sm:$0xff]
      %v256 = vld [vmem:[%s242 + $0x28] sm:$0xff]
      %v257 = vld [vmem:[%s242 + $0x30] sm:$0xff]
      %v258 = vld [vmem:[%s242 + $0x38] sm:$0xff]
      %v259 = vld [vmem:[%s242 + $0x40] sm:$0xff]
      %v260 = vld [vmem:[%s242 + $0x48] sm:$0xff]
      %v261 = vld [vmem:[%s242 + $0x50] sm:$0xff]
      %v262 = vld [vmem:[%s242 + $0x58] sm:$0xff]
      %v263 = vld [vmem:[%s242 + $0x60] sm:$0xff]
      %v264 = vld [vmem:[%s242 + $0x68] sm:$0xff]
      %v265 = vld [vmem:[%s242 + $0x70] sm:$0xff]
      %v266 = vld [vmem:[%s242 + $0x78] sm:$0xff]
      %v267 = vld [vmem:[%s242 + $0x80] sm:$0xff]
      %v268 = vld [vmem:[%s242 + $0x88] sm:$0xff]
      %v269 = vld [vmem:[%s242 + $0x90] sm:$0xff]
      %v270 = vld [vmem:[%s242 + $0x98] sm:$0xff]
      %v271 = vld [vmem:[%s242 + $0xa0] sm:$0xff]
      %v272 = vld [vmem:[%s242 + $0xa8] sm:$0xff]
      %v273 = vld [vmem:[%s242 + $0xb0] sm:$0xff]
      %v274 = vld [vmem:[%s242 + $0xb8] sm:$0xff]
      %v275 = vld [vmem:[%s242 + $0xc0] sm:$0xff]
      %v276 = vld [vmem:[%s242 + $0xc8] sm:$0xff]
      %v277 = vld [vmem:[%s242 + $0xd0] sm:$0xff]
      %v278 = vld [vmem:[%s242 + $0xd8] sm:$0xff]
      %v279 = vld [vmem:[%s242 + $0xe0] sm:$0xff]
      %v280 = vld [vmem:[%s242 + $0xe8] sm:$0xff]
      %v281 = vld [vmem:[%s242 + $0xf0] sm:$0xff]
      %v282 = vld [vmem:[%s242 + $0xf8] sm:$0xff]
      %v283 = vld [vmem:[%s1] sm:$0x1]
      %v285 = vlaneseq
      %v286 = vshrl.u32 %v285, 7
      %v287 = vsub.s32 0, %v286
      %v288 = vrot.slane %v283, %v287
      %v290 = vmul.f32 %v251, %v288
      %v291 = vmul.f32 %v252, %v288
      %v292 = vmul.f32 %v253, %v288
      %v293 = vmul.f32 %v254, %v288
      %v294 = vmul.f32 %v255, %v288
      %v295 = vmul.f32 %v256, %v288
      %v296 = vmul.f32 %v257, %v288
      %v297 = vmul.f32 %v258, %v288
      %v298 = vmul.f32 %v259, %v288
      %v299 = vmul.f32 %v260, %v288
      %v300 = vmul.f32 %v261, %v288
      %v301 = vmul.f32 %v262, %v288
      %v302 = vmul.f32 %v263, %v288
      %v303 = vmul.f32 %v264, %v288
      %v304 = vmul.f32 %v265, %v288
      %v305 = vmul.f32 %v266, %v288
      %v306 = vmul.f32 %v267, %v288
      %v307 = vmul.f32 %v268, %v288
      %v308 = vmul.f32 %v269, %v288
      %v309 = vmul.f32 %v270, %v288
      %v310 = vmul.f32 %v271, %v288
      %v311 = vmul.f32 %v272, %v288
      %v312 = vmul.f32 %v273, %v288
      %v313 = vmul.f32 %v274, %v288
      %v314 = vmul.f32 %v275, %v288
      %v315 = vmul.f32 %v276, %v288
      %v316 = vmul.f32 %v277, %v288
      %v317 = vmul.f32 %v278, %v288
      %v318 = vmul.f32 %v279, %v288
      %v319 = vmul.f32 %v280, %v288
      %v320 = vmul.f32 %v281, %v288
      %v321 = vmul.f32 %v282, %v288
      %v322 = vld [vmem:[%s2] sm:$0x1]
      %v324 = vlaneseq
      %v325 = vshrl.u32 %v324, 7
      %v326 = vsub.s32 0, %v325
      %v327 = vrot.slane %v322, %v326
      %v329 = vadd.f32 %v290, %v327
      %v330 = vadd.f32 %v291, %v327
      %v331 = vadd.f32 %v292, %v327
      %v332 = vadd.f32 %v293, %v327
      %v333 = vadd.f32 %v294, %v327
      %v334 = vadd.f32 %v295, %v327
      %v335 = vadd.f32 %v296, %v327
      %v336 = vadd.f32 %v297, %v327
      %v337 = vadd.f32 %v298, %v327
      %v338 = vadd.f32 %v299, %v327
      %v339 = vadd.f32 %v300, %v327
      %v340 = vadd.f32 %v301, %v327
      %v341 = vadd.f32 %v302, %v327
      %v342 = vadd.f32 %v303, %v327
      %v343 = vadd.f32 %v304, %v327
      %v344 = vadd.f32 %v305, %v327
      %v345 = vadd.f32 %v306, %v327
      %v346 = vadd.f32 %v307, %v327
      %v347 = vadd.f32 %v308, %v327
      %v348 = vadd.f32 %v309, %v327
      %v349 = vadd.f32 %v310, %v327
      %v350 = vadd.f32 %v311, %v327
      %v351 = vadd.f32 %v312, %v327
      %v352 = vadd.f32 %v313, %v327
      %v353 = vadd.f32 %v314, %v327
      %v354 = vadd.f32 %v315, %v327
      %v355 = vadd.f32 %v316, %v327
      %v356 = vadd.f32 %v317, %v327
      %v357 = vadd.f32 %v318, %v327
      %v358 = vadd.f32 %v319, %v327
      %v359 = vadd.f32 %v320, %v327
      %v360 = vadd.f32 %v321, %v327
      %v361 = vmax.f32 %v329, 0.0
      %v362 = vmax.f32 %v330, 0.0
      %v363 = vmax.f32 %v331, 0.0
      %v364 = vmax.f32 %v332, 0.0
      %v365 = vmax.f32 %v333, 0.0
      %v366 = vmax.f32 %v334, 0.0
      %v367 = vmax.f32 %v335, 0.0
      %v368 = vmax.f32 %v336, 0.0
      %v369 = vmax.f32 %v337, 0.0
      %v370 = vmax.f32 %v338, 0.0
      %v371 = vmax.f32 %v339, 0.0
      %v372 = vmax.f32 %v340, 0.0
      %v373 = vmax.f32 %v341, 0.0
      %v374 = vmax.f32 %v342, 0.0
      %v375 = vmax.f32 %v343, 0.0
      %v376 = vmax.f32 %v344, 0.0
      %v377 = vmax.f32 %v345, 0.0
      %v378 = vmax.f32 %v346, 0.0
      %v379 = vmax.f32 %v347, 0.0
      %v380 = vmax.f32 %v348, 0.0
      %v381 = vmax.f32 %v349, 0.0
      %v382 = vmax.f32 %v350, 0.0
      %v383 = vmax.f32 %v351, 0.0
      %v384 = vmax.f32 %v352, 0.0
      %v385 = vmax.f32 %v353, 0.0
      %v386 = vmax.f32 %v354, 0.0
      %v387 = vmax.f32 %v355, 0.0
      %v388 = vmax.f32 %v356, 0.0
      %v389 = vmax.f32 %v357, 0.0
      %v390 = vmax.f32 %v358, 0.0
      %v391 = vmax.f32 %v359, 0.0
      %v392 = vmax.f32 %v360, 0.0
      %v393 = vpack.c.bf16 %v362, %v361
      %v394 = vpack.c.bf16 %v364, %v363
      %v395 = vpack.c.bf16 %v366, %v365
      %v396 = vpack.c.bf16 %v368, %v367
      %v397 = vpack.c.bf16 %v370, %v369
      %v398 = vpack.c.bf16 %v372, %v371
      %v399 = vpack.c.bf16 %v374, %v373
      %v400 = vpack.c.bf16 %v376, %v375
      %v401 = vpack.c.bf16 %v378, %v377
      %v402 = vpack.c.bf16 %v380, %v379
      %v403 = vpack.c.bf16 %v382, %v381
      %v404 = vpack.c.bf16 %v384, %v383
      %v405 = vpack.c.bf16 %v386, %v385
      %v406 = vpack.c.bf16 %v388, %v387
      %v407 = vpack.c.bf16 %v390, %v389
      %v408 = vpack.c.bf16 %v392, %v391
      %v409 = vld [vmem:[%s3] sm:$0xf]
      %v410 = vld [vmem:[%s3 + $0x4] sm:$0xf]
      %v411 = vld [vmem:[%s3 + $0x8] sm:$0xf]
      %v412 = vld [vmem:[%s3 + $0xc] sm:$0xf]
      %v413 = vld [vmem:[%s3 + $0x10] sm:$0xf]
      %v414 = vld [vmem:[%s3 + $0x14] sm:$0xf]
      %v415 = vld [vmem:[%s3 + $0x18] sm:$0xf]
      %v416 = vld [vmem:[%s3 + $0x1c] sm:$0xf]
      %v417 = vld [vmem:[%s3 + $0x20] sm:$0xf]
      %v418 = vld [vmem:[%s3 + $0x24] sm:$0xf]
      %v419 = vld [vmem:[%s3 + $0x28] sm:$0xf]
      %v420 = vld [vmem:[%s3 + $0x2c] sm:$0xf]
      %v421 = vld [vmem:[%s3 + $0x30] sm:$0xf]
      %v422 = vld [vmem:[%s3 + $0x34] sm:$0xf]
      %v423 = vld [vmem:[%s3 + $0x38] sm:$0xf]
      %v424 = vld [vmem:[%s3 + $0x3c] sm:$0xf]
      %v441 = vunpack.c.l.b16 %v409
      %v442 = vunpack.c.l.b16 %v410
      %v443 = vunpack.c.l.b16 %v411
      %v444 = vunpack.c.l.b16 %v412
      %v445 = vunpack.c.l.b16 %v413
      %v446 = vunpack.c.l.b16 %v414
      %v447 = vunpack.c.l.b16 %v415
      %v448 = vunpack.c.l.b16 %v416
      %v449 = vunpack.c.l.b16 %v417
      %v450 = vunpack.c.l.b16 %v418
      %v451 = vunpack.c.l.b16 %v419
      %v452 = vunpack.c.l.b16 %v420
      %v453 = vunpack.c.l.b16 %v421
      %v454 = vunpack.c.l.b16 %v422
      %v455 = vunpack.c.l.b16 %v423
      %v456 = vunpack.c.l.b16 %v424
      %v457 = vpack.c.b16 %v442, %v441
      %v458 = vpack.c.b16 %v444, %v443
      %v459 = vpack.c.b16 %v446, %v445
      %v460 = vpack.c.b16 %v448, %v447
      %v461 = vpack.c.b16 %v450, %v449
      %v462 = vpack.c.b16 %v452, %v451
      %v463 = vpack.c.b16 %v454, %v453
      %v464 = vpack.c.b16 %v456, %v455
      %473 = vmatprep.subr.bf16.mxu0 0
      %474 = vmatpush1.bf16.msra.mxu0 %v457
      %475 = vmatprep.subr.bf16.mxu0 0
      %476 = vmatpush1.bf16.msra.mxu0 %v458
      %477 = vmatprep.subr.bf16.mxu0 0
      %478 = vmatpush1.bf16.msra.mxu0 %v459
      %479 = vmatprep.subr.bf16.mxu0 0
      %480 = vmatpush1.bf16.msra.mxu0 %v460
      %481 = vmatprep.subr.bf16.mxu0 0
      %482 = vmatpush1.bf16.msra.mxu0 %v461
      %483 = vmatprep.subr.bf16.mxu0 0
      %484 = vmatpush1.bf16.msra.mxu0 %v462
      %485 = vmatprep.subr.bf16.mxu0 0
      %486 = vmatpush1.bf16.msra.mxu0 %v463
      %487 = vmatprep.subr.bf16.mxu0 0
      %488 = vmatpush1.bf16.msra.mxu0 %v464
      %489 = vmatprep.subr.bf16.mxu0 0
      %490 = vmatpush1.bf16.msra.mxu0 0
      %491 = vmatprep.subr.bf16.mxu0 0
      %492 = vmatpush1.bf16.msra.mxu0 0
      %493 = vmatprep.subr.bf16.mxu0 0
      %494 = vmatpush1.bf16.msra.mxu0 0
      %495 = vmatprep.subr.bf16.mxu0 0
      %496 = vmatpush1.bf16.msra.mxu0 0
      %497 = vmatprep.subr.bf16.mxu0 0
      %498 = vmatpush1.bf16.msra.mxu0 0
      %499 = vmatprep.subr.bf16.mxu0 0
      %500 = vmatpush1.bf16.msra.mxu0 0
      %501 = vmatprep.subr.bf16.mxu0 0
      %502 = vmatpush1.bf16.msra.mxu0 0
      %503 = vmatprep.subr.bf16.mxu0 0
      %504 = vmatpush1.bf16.msra.mxu0 0
      %505 = vmatprep.mubr.bf16.mxu0 0
      %506 = vmatmul.mubr.bf16.gmra.mrb[0].mxu0 %v393
      %v507 = vpop.f32.mrb[0].mxu0
      %v508 = vadd.f32 0.0, %v507
      %v509 = vpop.f32.mrb[0].mxu0
      %v510 = vpop.f32.mrb[0].mxu0
      %v511 = vadd.f32 0.0, %v510
      %v512 = vpop.f32.mrb[0].mxu0
      %513 = vmatprep.mubr.bf16.mxu0 0
      %514 = vmatmul.mubr.bf16.gmra.mrb[0].mxu0 %v394
      %v515 = vpop.f32.mrb[0].mxu0
      %v516 = vadd.f32 0.0, %v515
      %v517 = vpop.f32.mrb[0].mxu0
      %v518 = vpop.f32.mrb[0].mxu0
      %v519 = vadd.f32 0.0, %v518
      %v520 = vpop.f32.mrb[0].mxu0
      %521 = vmatprep.mubr.bf16.mxu0 0
      %522 = vmatmul.mubr.bf16.gmra.mrb[0].mxu0 %v395
      %v523 = vpop.f32.mrb[0].mxu0
      %v524 = vadd.f32 0.0, %v523
      %v525 = vpop.f32.mrb[0].mxu0
      %v526 = vpop.f32.mrb[0].mxu0
      %v527 = vadd.f32 0.0, %v526
      %v528 = vpop.f32.mrb[0].mxu0
      %529 = vmatprep.mubr.bf16.mxu0 0
      %530 = vmatmul.mubr.bf16.gmra.mrb[0].mxu0 %v396
      %v531 = vpop.f32.mrb[0].mxu0
      %v532 = vadd.f32 0.0, %v531
      %v533 = vpop.f32.mrb[0].mxu0
      %v534 = vpop.f32.mrb[0].mxu0
      %v535 = vadd.f32 0.0, %v534
      %v536 = vpop.f32.mrb[0].mxu0
      %537 = vmatprep.mubr.bf16.mxu0 0
      %538 = vmatmul.mubr.bf16.gmra.mrb[0].mxu0 %v397
      %v539 = vpop.f32.mrb[0].mxu0
      %v540 = vadd.f32 0.0, %v539
      %v541 = vpop.f32.mrb[0].mxu0
      %v542 = vpop.f32.mrb[0].mxu0
      %v543 = vadd.f32 0.0, %v542
      %v544 = vpop.f32.mrb[0].mxu0
      %545 = vmatprep.mubr.bf16.mxu0 0
      %546 = vmatmul.mubr.bf16.gmra.mrb[0].mxu0 %v398
      %v547 = vpop.f32.mrb[0].mxu0
      %v548 = vadd.f32 0.0, %v547
      %v549 = vpop.f32.mrb[0].mxu0
      %v550 = vpop.f32.mrb[0].mxu0
      %v551 = vadd.f32 0.0, %v550
      %v552 = vpop.f32.mrb[0].mxu0
      %553 = vmatprep.mubr.bf16.mxu0 0
      %554 = vmatmul.mubr.bf16.gmra.mrb[0].mxu0 %v399
      %v555 = vpop.f32.mrb[0].mxu0
      %v556 = vadd.f32 0.0, %v555
      %v557 = vpop.f32.mrb[0].mxu0
      %v558 = vpop.f32.mrb[0].mxu0
      %v559 = vadd.f32 0.0, %v558
      %v560 = vpop.f32.mrb[0].mxu0
      %561 = vmatprep.mubr.bf16.mxu0 0
      %562 = vmatmul.mubr.bf16.gmra.mrb[0].mxu0 %v400
      %v563 = vpop.f32.mrb[0].mxu0
      %v564 = vadd.f32 0.0, %v563
      %v565 = vpop.f32.mrb[0].mxu0
      %v566 = vpop.f32.mrb[0].mxu0
      %v567 = vadd.f32 0.0, %v566
      %v568 = vpop.f32.mrb[0].mxu0
      %569 = vmatprep.mubr.bf16.mxu0 0
      %570 = vmatmul.mubr.bf16.gmra.mrb[0].mxu0 %v401
      %v571 = vpop.f32.mrb[0].mxu0
      %v572 = vadd.f32 0.0, %v571
      %v573 = vpop.f32.mrb[0].mxu0
      %v574 = vpop.f32.mrb[0].mxu0
      %v575 = vadd.f32 0.0, %v574
      %v576 = vpop.f32.mrb[0].mxu0
      %577 = vmatprep.mubr.bf16.mxu0 0
      %578 = vmatmul.mubr.bf16.gmra.mrb[0].mxu0 %v402
      %v579 = vpop.f32.mrb[0].mxu0
      %v580 = vadd.f32 0.0, %v579
      %v581 = vpop.f32.mrb[0].mxu0
      %v582 = vpop.f32.mrb[0].mxu0
      %v583 = vadd.f32 0.0, %v582
      %v584 = vpop.f32.mrb[0].mxu0
      %585 = vmatprep.mubr.bf16.mxu0 0
      %586 = vmatmul.mubr.bf16.gmra.mrb[0].mxu0 %v403
      %v587 = vpop.f32.mrb[0].mxu0
      %v588 = vadd.f32 0.0, %v587
      %v589 = vpop.f32.mrb[0].mxu0
      %v590 = vpop.f32.mrb[0].mxu0
      %v591 = vadd.f32 0.0, %v590
      %v592 = vpop.f32.mrb[0].mxu0
      %593 = vmatprep.mubr.bf16.mxu0 0
      %594 = vmatmul.mubr.bf16.gmra.mrb[0].mxu0 %v404
      %v595 = vpop.f32.mrb[0].mxu0
      %v596 = vadd.f32 0.0, %v595
      %v597 = vpop.f32.mrb[0].mxu0
      %v598 = vpop.f32.mrb[0].mxu0
      %v599 = vadd.f32 0.0, %v598
      %v600 = vpop.f32.mrb[0].mxu0
      %601 = vmatprep.mubr.bf16.mxu0 0
      %602 = vmatmul.mubr.bf16.gmra.mrb[0].mxu0 %v405
      %v603 = vpop.f32.mrb[0].mxu0
      %v604 = vadd.f32 0.0, %v603
      %v605 = vpop.f32.mrb[0].mxu0
      %v606 = vpop.f32.mrb[0].mxu0
      %v607 = vadd.f32 0.0, %v606
      %v608 = vpop.f32.mrb[0].mxu0
      %609 = vmatprep.mubr.bf16.mxu0 0
      %610 = vmatmul.mubr.bf16.gmra.mrb[0].mxu0 %v406
      %v611 = vpop.f32.mrb[0].mxu0
      %v612 = vadd.f32 0.0, %v611
      %v613 = vpop.f32.mrb[0].mxu0
      %v614 = vpop.f32.mrb[0].mxu0
      %v615 = vadd.f32 0.0, %v614
      %v616 = vpop.f32.mrb[0].mxu0
      %617 = vmatprep.mubr.bf16.mxu0 0
      %618 = vmatmul.mubr.bf16.gmra.mrb[0].mxu0 %v407
      %v619 = vpop.f32.mrb[0].mxu0
      %v620 = vadd.f32 0.0, %v619
      %v621 = vpop.f32.mrb[0].mxu0
      %v622 = vpop.f32.mrb[0].mxu0
      %v623 = vadd.f32 0.0, %v622
      %v624 = vpop.f32.mrb[0].mxu0
      %625 = vmatprep.mubr.bf16.mxu0 0
      %626 = vmatmul.mubr.bf16.gmra.mrb[0].mxu0 %v408
      %v627 = vpop.f32.mrb[0].mxu0
      %v628 = vadd.f32 0.0, %v627
      %v629 = vpop.f32.mrb[0].mxu0
      %v630 = vpop.f32.mrb[0].mxu0
      %v631 = vadd.f32 0.0, %v630
      %v632 = vpop.f32.mrb[0].mxu0
      %633 = vdwg.mxu0
      %634 = vst [vmem:[%s248] sm:$0xff] %v508
      %635 = vst [vmem:[%s248 + $0x8] sm:$0xff] %v511
      %636 = vst [vmem:[%s248 + $0x10] sm:$0xff] %v516
      %637 = vst [vmem:[%s248 + $0x18] sm:$0xff] %v519
      %638 = vst [vmem:[%s248 + $0x20] sm:$0xff] %v524
      %639 = vst [vmem:[%s248 + $0x28] sm:$0xff] %v527
      %640 = vst [vmem:[%s248 + $0x30] sm:$0xff] %v532
      %641 = vst [vmem:[%s248 + $0x38] sm:$0xff] %v535
      %642 = vst [vmem:[%s248 + $0x40] sm:$0xff] %v540
      %643 = vst [vmem:[%s248 + $0x48] sm:$0xff] %v543
      %644 = vst [vmem:[%s248 + $0x50] sm:$0xff] %v548
      %645 = vst [vmem:[%s248 + $0x58] sm:$0xff] %v551
      %646 = vst [vmem:[%s248 + $0x60] sm:$0xff] %v556
      %647 = vst [vmem:[%s248 + $0x68] sm:$0xff] %v559
      %648 = vst [vmem:[%s248 + $0x70] sm:$0xff] %v564
      %649 = vst [vmem:[%s248 + $0x78] sm:$0xff] %v567
      %650 = vst [vmem:[%s248 + $0x80] sm:$0xff] %v572
      %651 = vst [vmem:[%s248 + $0x88] sm:$0xff] %v575
      %652 = vst [vmem:[%s248 + $0x90] sm:$0xff] %v580
      %653 = vst [vmem:[%s248 + $0x98] sm:$0xff] %v583
      %654 = vst [vmem:[%s248 + $0xa0] sm:$0xff] %v588
      %655 = vst [vmem:[%s248 + $0xa8] sm:$0xff] %v591
      %656 = vst [vmem:[%s248 + $0xb0] sm:$0xff] %v596
      %657 = vst [vmem:[%s248 + $0xb8] sm:$0xff] %v599
      %658 = vst [vmem:[%s248 + $0xc0] sm:$0xff] %v604
      %659 = vst [vmem:[%s248 + $0xc8] sm:$0xff] %v607
      %660 = vst [vmem:[%s248 + $0xd0] sm:$0xff] %v612
      %661 = vst [vmem:[%s248 + $0xd8] sm:$0xff] %v615
      %662 = vst [vmem:[%s248 + $0xe0] sm:$0xff] %v620
      %663 = vst [vmem:[%s248 + $0xe8] sm:$0xff] %v623
      %664 = vst [vmem:[%s248 + $0xf0] sm:$0xff] %v628
      %665 = vst [vmem:[%s248 + $0xf8] sm:$0xff] %v631
      %p666 = scmp.eq.s32.totalorder %s18, 0
      // Predicated region
      $region37: #{bottleneck_forward.9} parent=35 // pred_check
        %p667 = pneg %p666
      $region38: #{bottleneck_forward.9} parent=35 // pred_check_branch
        %669 = sbr.rel (%p667) target = $region40
      $region39: #{bottleneck_forward.9} parent=35 // pred_region
        %670 = vst [vmem:[%s5] sm:$0x1] 0.0
        %671 = vst [vmem:[%s6] sm:$0x1] 0.0
      $region40: #{bottleneck_forward.9} parent=35 // pred_fallthru
        _
      %v672 = vld [vmem:[%s5] sm:$0x1]
      %v673 = vadd.f32 %v508, %v511
      %v674 = vadd.f32 %v673, %v516
      %v675 = vadd.f32 %v674, %v519
      %v676 = vadd.f32 %v675, %v524
      %v677 = vadd.f32 %v676, %v527
      %v678 = vadd.f32 %v677, %v532
      %v679 = vadd.f32 %v678, %v535
      %v680 = vadd.f32 %v679, %v540
      %v681 = vadd.f32 %v680, %v543
      %v682 = vadd.f32 %v681, %v548
      %v683 = vadd.f32 %v682, %v551
      %v684 = vadd.f32 %v683, %v556
      %v685 = vadd.f32 %v684, %v559
      %v686 = vadd.f32 %v685, %v564
      %v687 = vadd.f32 %v686, %v567
      %v688 = vadd.f32 %v687, %v572
      %v689 = vadd.f32 %v688, %v575
      %v690 = vadd.f32 %v689, %v580
      %v691 = vadd.f32 %v690, %v583
      %v692 = vadd.f32 %v691, %v588
      %v693 = vadd.f32 %v692, %v591
      %v694 = vadd.f32 %v693, %v596
      %v695 = vadd.f32 %v694, %v599
      %v696 = vadd.f32 %v695, %v604
      %v697 = vadd.f32 %v696, %v607
      %v698 = vadd.f32 %v697, %v612
      %v699 = vadd.f32 %v698, %v615
      %v700 = vadd.f32 %v699, %v620
      %v701 = vadd.f32 %v700, %v623
      %v702 = vadd.f32 %v701, %v628
      %v703 = vadd.f32 %v702, %v631
      %v704 = vrot.slane %v703, 4
      %v705 = vadd.f32 %v703, %v704
      %v706 = vrot.slane %v705, 2
      %v707 = vadd.f32 %v705, %v706
      %v708 = vrot.slane %v707, 1
      %v709 = vadd.f32 %v707, %v708
      %v710 = vadd.f32 %v672, %v709
      %711 = vst [vmem:[%s5] sm:$0x1] %v710
      %v712 = vld [vmem:[%s6] sm:$0x1]
      %v713 = vmul.f32 %v508, %v508
      %v714 = vmul.f32 %v511, %v511
      %v715 = vmul.f32 %v516, %v516
      %v716 = vmul.f32 %v519, %v519
      %v717 = vmul.f32 %v524, %v524
      %v718 = vmul.f32 %v527, %v527
      %v719 = vmul.f32 %v532, %v532
      %v720 = vmul.f32 %v535, %v535
      %v721 = vmul.f32 %v540, %v540
      %v722 = vmul.f32 %v543, %v543
      %v723 = vmul.f32 %v548, %v548
      %v724 = vmul.f32 %v551, %v551
      %v725 = vmul.f32 %v556, %v556
      %v726 = vmul.f32 %v559, %v559
      %v727 = vmul.f32 %v564, %v564
      %v728 = vmul.f32 %v567, %v567
      %v729 = vmul.f32 %v572, %v572
      %v730 = vmul.f32 %v575, %v575
      %v731 = vmul.f32 %v580, %v580
      %v732 = vmul.f32 %v583, %v583
      %v733 = vmul.f32 %v588, %v588
      %v734 = vmul.f32 %v591, %v591
      %v735 = vmul.f32 %v596, %v596
      %v736 = vmul.f32 %v599, %v599
      %v737 = vmul.f32 %v604, %v604
      %v738 = vmul.f32 %v607, %v607
      %v739 = vmul.f32 %v612, %v612
      %v740 = vmul.f32 %v615, %v615
      %v741 = vmul.f32 %v620, %v620
      %v742 = vmul.f32 %v623, %v623
      %v743 = vmul.f32 %v628, %v628
      %v744 = vmul.f32 %v631, %v631
      %v745 = vadd.f32 %v713, %v714
      %v746 = vadd.f32 %v745, %v715
      %v747 = vadd.f32 %v746, %v716
      %v748 = vadd.f32 %v747, %v717
      %v749 = vadd.f32 %v748, %v718
      %v750 = vadd.f32 %v749, %v719
      %v751 = vadd.f32 %v750, %v720
      %v752 = vadd.f32 %v751, %v721
      %v753 = vadd.f32 %v752, %v722
      %v754 = vadd.f32 %v753, %v723
      %v755 = vadd.f32 %v754, %v724
      %v756 = vadd.f32 %v755, %v725
      %v757 = vadd.f32 %v756, %v726
      %v758 = vadd.f32 %v757, %v727
      %v759 = vadd.f32 %v758, %v728
      %v760 = vadd.f32 %v759, %v729
      %v761 = vadd.f32 %v760, %v730
      %v762 = vadd.f32 %v761, %v731
      %v763 = vadd.f32 %v762, %v732
      %v764 = vadd.f32 %v763, %v733
      %v765 = vadd.f32 %v764, %v734
      %v766 = vadd.f32 %v765, %v735
      %v767 = vadd.f32 %v766, %v736
      %v768 = vadd.f32 %v767, %v737
      %v769 = vadd.f32 %v768, %v738
      %v770 = vadd.f32 %v769, %v739
      %v771 = vadd.f32 %v770, %v740
      %v772 = vadd.f32 %v771, %v741
      %v773 = vadd.f32 %v772, %v742
      %v774 = vadd.f32 %v773, %v743
      %v775 = vadd.f32 %v774, %v744
      %v776 = vrot.slane %v775, 4
      %v777 = vadd.f32 %v775, %v776
      %v778 = vrot.slane %v777, 2
      %v779 = vadd.f32 %v777, %v778
      %v780 = vrot.slane %v779, 1
      %v781 = vadd.f32 %v779, %v780
      %v782 = vadd.f32 %v712, %v781
      %783 = vst [vmem:[%s6] sm:$0x1] %v782
      %s784 = smul.u32 32, %s18
      %p785 = scmp.lt.s32.totalorder %s784, 63
      %s786 = scalar_select %p785, %s784, 63
      %s787 = smul.addr %s786, 8
      %s788 = scalar_lea.vmem %s4, %s787
      // Predicated region
      $region41: #{bottleneck_forward.9} parent=35 // pred_check
        %p789 = pneg %p125
      $region42: #{bottleneck_forward.9} parent=35 // pred_check_branch
        %791 = sbr.rel (%p789) target = $region44
      $region43: #{bottleneck_forward.9} parent=35 // pred_region
        %s792 = smul.u32 32, %s18
      $region44: #{bottleneck_forward.9} parent=35 // pred_fallthru
        _
      // Predicated region
      $region45: #{bottleneck_forward.9} parent=35 // pred_check
        %p793 = pneg %p146
      $region46: #{bottleneck_forward.9} parent=35 // pred_check_branch
        %795 = sbr.rel (%p793) target = $region48
      $region47: #{bottleneck_forward.9} parent=35 // pred_region
        _
      $region48: #{bottleneck_forward.9} parent=35 // pred_fallthru
        _
      // Predicated region
      $region49: #{bottleneck_forward.9} parent=35 // pred_check
        %p796 = pneg %p167
      $region50: #{bottleneck_forward.9} parent=35 // pred_check_branch
        %798 = sbr.rel (%p796) target = $region52
      $region51: #{bottleneck_forward.9} parent=35 // pred_region
        _
      $region52: #{bottleneck_forward.9} parent=35 // pred_fallthru
        _
      // Predicated region
      $region53: #{bottleneck_forward.9} parent=35 // pred_check
        %p799 = pneg %p146
      $region54: #{bottleneck_forward.9} parent=35 // pred_check_branch
        %801 = sbr.rel (%p799) target = $region56
      $region55: #{bottleneck_forward.9} parent=35 // pred_region
        _
      $region56: #{bottleneck_forward.9} parent=35 // pred_fallthru
        _
      // Predicated region
      $region57: #{bottleneck_forward.9} parent=35 // pred_check
        %p802 = pneg %p167
      $region58: #{bottleneck_forward.9} parent=35 // pred_check_branch
        %804 = sbr.rel (%p802) target = $region60
      $region59: #{bottleneck_forward.9} parent=35 // pred_region
        _
      $region60: #{bottleneck_forward.9} parent=35 // pred_fallthru
        _
    $region36: #{bottleneck_forward.9} parent=5 // pred_fallthru
      _
    %p805 = scmp.le.s32.totalorder 2, %s13
    // Predicated region
    $region61: #{bottleneck_forward.9} parent=5 // pred_check
      %p806 = pneg %p805
    $region62: #{bottleneck_forward.9} parent=5 // pred_check_branch
      %808 = sbr.rel (%p806) target = $region64
    $region63: #{bottleneck_forward.9} parent=5 // pred_region
      %s809 = ssub.s32 %s13, 2
      // Predicated region
      $region65: #{bottleneck_forward.9} parent=63 // pred_check
        %p810 = pneg %p131
      $region66: #{bottleneck_forward.9} parent=63 // pred_check_branch
        %812 = sbr.rel (%p810) target = $region68
      $region67: #{bottleneck_forward.9} parent=63 // pred_region
        %s813 = smul.u32 32, %s19
        %p814 = scmp.lt.s32.totalorder %s813, 63
        %s815 = scalar_select %p814, %s813, 63
        %s816 = smul.addr %s815, 8
        %s817 = scalar_lea.vmem %s4, %s816
      $region68: #{bottleneck_forward.9} parent=63 // pred_fallthru
        _
    $region64: #{bottleneck_forward.9} parent=5 // pred_fallthru
      _
  $region6: #{bottleneck_forward.9} parent=0 // loop_footer
    %s17 = sadd.s32 1, %s13
  $region7: #{bottleneck_forward.9} parent=0 // loop_footer_branch
    %12 = sbr.rel target = $region3
  $region8: #{bottleneck_forward.9} parent=0 // loop_exit
    _

// kernel: bottleneck_forward.11
$region0: #{bottleneck_forward.11}
  #allocation0 [shape = 'u32[]', space=smem, size = 0x4, offset = 0x4, fixed_abs, tag = 'smem constant byte address 0x4 - core index']
  #allocation1 [shape = 'u32[144,128]{1,0:T(1,128)}', space=vmem, size = 0x12000, scoped, tag = 'internal scratch']
  %s0 = inlined_call_operand.vmem [shape: f32[512,128], index: 0, kind: input, shape index: {}]
  %s1 = inlined_call_operand.vmem [shape: f32[512,128], index: 1, kind: input, shape index: {}]
  %s2 = inlined_call_operand.vmem [shape: f32[1,128], index: 2, kind: input, shape index: {}]
  %s3 = inlined_call_operand.vmem [shape: f32[1,128], index: 3, kind: input, shape index: {}]
  %s4 = inlined_call_operand.vmem [shape: f32[1,128], index: 4, kind: input, shape index: {}]
  %s5 = inlined_call_operand.vmem [shape: f32[1,128], index: 5, kind: input, shape index: {}]
  %s6 = inlined_call_operand.vmem [shape: f32[512,128], index: 6, kind: output, shape index: {}]
  %s7 = sld [smem:[#allocation0]]
  $region57: #{bottleneck_forward.11} parent=0
    _
  %s9 = ssub.s32 1, %s7
  %s10 = scalar_select 0, %s9, %s7
  loop: start=0, step=1, limit=4
  $region2: #{bottleneck_forward.11} parent=0 // loop_pre_header
    _
  $region3: #{bottleneck_forward.11} parent=0 // loop_header
    %s12 = sphi 0, %s16
    %p13 = scmp.ge.s32.totalorder %s12, 4
    %s22 = sphi 0, %s24
    %s25 = sphi 0, %s22
    %s26 = sphi 0, %s25
    %s42 = sphi 0, %s26
    %s48 = sphi 0, %s50
    %s51 = sphi 0, %s48
    %s52 = sphi 0, %s51
    %s68 = sphi 0, %s52
    %s72 = sphi 0, %s72
    %s74 = sphi 0, %s72
    %s75 = sphi 0, %s74
    %s89 = sphi 0, %s75
    %s93 = sphi 0, %s93
    %s95 = sphi 0, %s93
    %s96 = sphi 0, %s95
    %s110 = sphi 0, %s96
    %s114 = sphi 0, %s114
    %s116 = sphi 0, %s114
    %s117 = sphi 0, %s116
    %s131 = sphi 0, %s117
    %s135 = sphi 0, %s135
    %s137 = sphi 0, %s135
    %s138 = sphi 0, %s137
    %s152 = sphi 0, %s138
    %s158 = sphi 0, %s160
    %s161 = sphi 0, %s158
    %s162 = sphi 0, %s161
    %s178 = sphi 0, %s162
  $region4: #{bottleneck_forward.11} parent=0 // loop_header_branch
    %15 = sbr.rel (%p13) target = $region8
  $region5: #{bottleneck_forward.11} parent=0 // loop_body
    %s17 = ssub.s32 %s12, 1
    %s18 = ssub.s32 %s12, 2
    %s19 = sadd.s32 %s12, 1
    %s20 = ssub.s32 %s12, %s19
    %p21 = scmp.eq.s32.totalorder %s20, 0
    %s23 = sadd.s32 %s22, 1
    %s24 = scalar_select %p21, %s22, %s23
    %p27 = pneg %p21
    %p28 = scmp.eq.s32.totalorder %s12, 1
    %p29 = por %p27, %p28
    %p30 = scmp.ne.s32.totalorder %s22, %s25
    %p31 = scmp.eq.s32.totalorder %s12, 0
    %p32 = por %p30, %p31
    %p33 = scmp.ne.s32.totalorder %s22, %s25
    %p34 = scmp.eq.s32.totalorder %s17, 1
    %p35 = por %p33, %p34
    %p36 = scmp.ne.s32.totalorder %s25, %s26
    %p37 = scmp.eq.s32.totalorder %s17, 0
    %p38 = por %p36, %p37
    %p39 = scmp.ne.s32.totalorder %s25, %s26
    %p40 = scmp.eq.s32.totalorder %s18, 1
    %p41 = por %p39, %p40
    %p43 = scmp.ne.s32.totalorder %s26, %s42
    %p44 = scmp.eq.s32.totalorder %s18, 0
    %p45 = por %p43, %p44
    %s46 = ssub.s32 %s12, %s19
    %p47 = scmp.eq.s32.totalorder %s46, 0
    %s49 = sadd.s32 %s48, 1
    %s50 = scalar_select %p47, %s48, %s49
    %p53 = pneg %p47
    %p54 = scmp.eq.s32.totalorder %s12, 1
    %p55 = por %p53, %p54
    %p56 = scmp.ne.s32.totalorder %s48, %s51
    %p57 = scmp.eq.s32.totalorder %s12, 0
    %p58 = por %p56, %p57
    %p59 = scmp.ne.s32.totalorder %s48, %s51
    %p60 = scmp.eq.s32.totalorder %s17, 1
    %p61 = por %p59, %p60
    %p62 = scmp.ne.s32.totalorder %s51, %s52
    %p63 = scmp.eq.s32.totalorder %s17, 0
    %p64 = por %p62, %p63
    %p65 = scmp.ne.s32.totalorder %s51, %s52
    %p66 = scmp.eq.s32.totalorder %s18, 1
    %p67 = por %p65, %p66
    %p69 = scmp.ne.s32.totalorder %s52, %s68
    %p70 = scmp.eq.s32.totalorder %s18, 0
    %p71 = por %p69, %p70
    %s73 = sadd.s32 %s72, 1
    %p76 = scmp.eq.s32.totalorder %s12, 1
    %p77 = scmp.ne.s32.totalorder %s72, %s74
    %p78 = scmp.eq.s32.totalorder %s12, 0
    %p79 = por %p77, %p78
    %p80 = scmp.ne.s32.totalorder %s72, %s74
    %p81 = scmp.eq.s32.totalorder %s17, 1
    %p82 = por %p80, %p81
    %p83 = scmp.ne.s32.totalorder %s74, %s75
    %p84 = scmp.eq.s32.totalorder %s17, 0
    %p85 = por %p83, %p84
    %p86 = scmp.ne.s32.totalorder %s74, %s75
    %p87 = scmp.eq.s32.totalorder %s18, 1
    %p88 = por %p86, %p87
    %p90 = scmp.ne.s32.totalorder %s75, %s89
    %p91 = scmp.eq.s32.totalorder %s18, 0
    %p92 = por %p90, %p91
    %s94 = sadd.s32 %s93, 1
    %p97 = scmp.eq.s32.totalorder %s12, 1
    %p98 = scmp.ne.s32.totalorder %s93, %s95
    %p99 = scmp.eq.s32.totalorder %s12, 0
    %p100 = por %p98, %p99
    %p101 = scmp.ne.s32.totalorder %s93, %s95
    %p102 = scmp.eq.s32.totalorder %s17, 1
    %p103 = por %p101, %p102
    %p104 = scmp.ne.s32.totalorder %s95, %s96
    %p105 = scmp.eq.s32.totalorder %s17, 0
    %p106 = por %p104, %p105
    %p107 = scmp.ne.s32.totalorder %s95, %s96
    %p108 = scmp.eq.s32.totalorder %s18, 1
    %p109 = por %p107, %p108
    %p111 = scmp.ne.s32.totalorder %s96, %s110
    %p112 = scmp.eq.s32.totalorder %s18, 0
    %p113 = por %p111, %p112
    %s115 = sadd.s32 %s114, 1
    %p118 = scmp.eq.s32.totalorder %s12, 1
    %p119 = scmp.ne.s32.totalorder %s114, %s116
    %p120 = scmp.eq.s32.totalorder %s12, 0
    %p121 = por %p119, %p120
    %p122 = scmp.ne.s32.totalorder %s114, %s116
    %p123 = scmp.eq.s32.totalorder %s17, 1
    %p124 = por %p122, %p123
    %p125 = scmp.ne.s32.totalorder %s116, %s117
    %p126 = scmp.eq.s32.totalorder %s17, 0
    %p127 = por %p125, %p126
    %p128 = scmp.ne.s32.totalorder %s116, %s117
    %p129 = scmp.eq.s32.totalorder %s18, 1
    %p130 = por %p128, %p129
    %p132 = scmp.ne.s32.totalorder %s117, %s131
    %p133 = scmp.eq.s32.totalorder %s18, 0
    %p134 = por %p132, %p133
    %s136 = sadd.s32 %s135, 1
    %p139 = scmp.eq.s32.totalorder %s12, 1
    %p140 = scmp.ne.s32.totalorder %s135, %s137
    %p141 = scmp.eq.s32.totalorder %s12, 0
    %p142 = por %p140, %p141
    %p143 = scmp.ne.s32.totalorder %s135, %s137
    %p144 = scmp.eq.s32.totalorder %s17, 1
    %p145 = por %p143, %p144
    %p146 = scmp.ne.s32.totalorder %s137, %s138
    %p147 = scmp.eq.s32.totalorder %s17, 0
    %p148 = por %p146, %p147
    %p149 = scmp.ne.s32.totalorder %s137, %s138
    %p150 = scmp.eq.s32.totalorder %s18, 1
    %p151 = por %p149, %p150
    %p153 = scmp.ne.s32.totalorder %s138, %s152
    %p154 = scmp.eq.s32.totalorder %s18, 0
    %p155 = por %p153, %p154
    %s156 = ssub.s32 %s12, %s19
    %p157 = scmp.eq.s32.totalorder %s156, 0
    %s159 = sadd.s32 %s158, 1
    %s160 = scalar_select %p157, %s158, %s159
    %p163 = pneg %p157
    %p164 = scmp.eq.s32.totalorder %s12, 1
    %p165 = por %p163, %p164
    %p166 = scmp.ne.s32.totalorder %s158, %s161
    %p167 = scmp.eq.s32.totalorder %s12, 0
    %p168 = por %p166, %p167
    %p169 = scmp.ne.s32.totalorder %s158, %s161
    %p170 = scmp.eq.s32.totalorder %s17, 1
    %p171 = por %p169, %p170
    %p172 = scmp.ne.s32.totalorder %s161, %s162
    %p173 = scmp.eq.s32.totalorder %s17, 0
    %p174 = por %p172, %p173
    %p175 = scmp.ne.s32.totalorder %s161, %s162
    %p176 = scmp.eq.s32.totalorder %s18, 1
    %p177 = por %p175, %p176
    %p179 = scmp.ne.s32.totalorder %s162, %s178
    %p180 = scmp.eq.s32.totalorder %s18, 0
    %p181 = por %p179, %p180
    %p182 = scmp.le.s32.totalorder 1, %s12
    %p183 = scmp.lt.s32.totalorder %s12, 3
    %p184 = pnand %p182, %p183
    %p185 = pneg %p184
    // Predicated region
    $region9: #{bottleneck_forward.11} parent=5 // pred_check
      _
    $region10: #{bottleneck_forward.11} parent=5 // pred_check_branch
      %187 = sbr.rel (%p184) target = $region12
    $region11: #{bottleneck_forward.11} parent=5 // pred_region
      %s188 = ssub.s32 %s12, 1
      // Predicated region
      $region13: #{bottleneck_forward.11} parent=11 // pred_check
        %p189 = pneg %p85
      $region14: #{bottleneck_forward.11} parent=11 // pred_check_branch
        %191 = sbr.rel (%p189) target = $region16
      $region15: #{bottleneck_forward.11} parent=11 // pred_region
        _
      $region16: #{bottleneck_forward.11} parent=11 // pred_fallthru
        _
      // Predicated region
      $region17: #{bottleneck_forward.11} parent=11 // pred_check
        %p192 = pneg %p106
      $region18: #{bottleneck_forward.11} parent=11 // pred_check_branch
        %194 = sbr.rel (%p192) target = $region20
      $region19: #{bottleneck_forward.11} parent=11 // pred_region
        _
      $region20: #{bottleneck_forward.11} parent=11 // pred_fallthru
        _
      // Predicated region
      $region21: #{bottleneck_forward.11} parent=11 // pred_check
        %p195 = pneg %p127
      $region22: #{bottleneck_forward.11} parent=11 // pred_check_branch
        %197 = sbr.rel (%p195) target = $region24
      $region23: #{bottleneck_forward.11} parent=11 // pred_region
        _
      $region24: #{bottleneck_forward.11} parent=11 // pred_fallthru
        _
      // Predicated region
      $region25: #{bottleneck_forward.11} parent=11 // pred_check
        %p198 = pneg %p148
      $region26: #{bottleneck_forward.11} parent=11 // pred_check_branch
        %200 = sbr.rel (%p198) target = $region28
      $region27: #{bottleneck_forward.11} parent=11 // pred_region
        _
      $region28: #{bottleneck_forward.11} parent=11 // pred_fallthru
        _
    $region12: #{bottleneck_forward.11} parent=5 // pred_fallthru
      _
    %p201 = scmp.lt.s32.totalorder %s12, 2
    // Predicated region
    $region29: #{bottleneck_forward.11} parent=5 // pred_check
      %p202 = pneg %p201
    $region30: #{bottleneck_forward.11} parent=5 // pred_check_branch
      %204 = sbr.rel (%p202) target = $region32
    $region31: #{bottleneck_forward.11} parent=5 // pred_region
      // Predicated region
      $region33: #{bottleneck_forward.11} parent=31 // pred_check
        %p205 = pneg %p32
      $region34: #{bottleneck_forward.11} parent=31 // pred_check_branch
        %207 = sbr.rel (%p205) target = $region36
      $region35: #{bottleneck_forward.11} parent=31 // pred_region
        %s208 = smul.u32 32, %s12
        %p209 = scmp.lt.s32.totalorder %s208, 63
        %s210 = scalar_select %p209, %s208, 63
        %s211 = smul.addr %s210, 8
        %s212 = scalar_lea.vmem %s0, %s211
        %s213 = smul.u32 32, %s12
      $region36: #{bottleneck_forward.11} parent=31 // pred_fallthru
        _
      // Predicated region
      $region37: #{bottleneck_forward.11} parent=31 // pred_check
        %p214 = pneg %p58
      $region38: #{bottleneck_forward.11} parent=31 // pred_check_branch
        %216 = sbr.rel (%p214) target = $region40
      $region39: #{bottleneck_forward.11} parent=31 // pred_region
        %s217 = smul.u32 32, %s12
        %p218 = scmp.lt.s32.totalorder %s217, 63
        %s219 = scalar_select %p218, %s217, 63
        %s220 = smul.addr %s219, 8
        %s221 = scalar_lea.vmem %s1, %s220
        %s222 = smul.u32 32, %s12
      $region40: #{bottleneck_forward.11} parent=31 // pred_fallthru
        _
    $region32: #{bottleneck_forward.11} parent=5 // pred_fallthru
      _
    %p223 = scmp.le.s32.totalorder 1, %s12
    %p224 = scmp.lt.s32.totalorder %s12, 3
    %p225 = pnand %p223, %p224
    %p226 = pneg %p225
    // Predicated region
    $region41: #{bottleneck_forward.11} parent=5 // pred_check
      _
    $region42: #{bottleneck_forward.11} parent=5 // pred_check_branch
      %228 = sbr.rel (%p225) target = $region44
    $region43: #{bottleneck_forward.11} parent=5 // pred_region
      %s229 = ssub.s32 %s12, 1
      %s230 = smul.u32 32, %s17
      %p231 = scmp.lt.s32.totalorder %s230, 63
      %s232 = scalar_select %p231, %s230, 63
      %s233 = smul.addr %s232, 8
      %s234 = scalar_lea.vmem %s0, %s233
      %p235 = pneg %p38
      %p236 = pneg %p35
      %s237 = smul.u32 32, %s17
      %p238 = scmp.lt.s32.totalorder %s237, 63
      %s239 = scalar_select %p238, %s237, 63
      %s240 = smul.addr %s239, 8
      %s241 = scalar_lea.vmem %s1, %s240
      %p242 = pneg %p64
      %p243 = pneg %p61
      %p244 = pneg %p85
      %p245 = pneg %p82
      %p246 = pneg %p106
      %p247 = pneg %p103
      %p248 = pneg %p127
      %p249 = pneg %p124
      %p250 = pneg %p148
      %p251 = pneg %p145
      %p252 = pneg %p174
      %p253 = pneg %p171
      %s254 = smul.u32 32, %s17
      %p255 = scmp.lt.s32.totalorder %s254, 63
      %s256 = scalar_select %p255, %s254, 63
      %s257 = smul.addr %s256, 8
      %s258 = scalar_lea.vmem %s6, %s257
      %s259 = smul.u32 32, %s17
      %p260 = scmp.lt.s32.totalorder %s259, 63
      %s261 = scalar_select %p260, %s259, 63
      %s262 = smul.addr %s261, 8
      %s263 = scalar_lea.vmem %s0, %s262
      %s264 = smul.u32 32, %s17
      %s265 = smul.u32 32, %s17
      %p266 = scmp.lt.s32.totalorder %s265, 63
      %s267 = scalar_select %p266, %s265, 63
      %s268 = smul.addr %s267, 8
      %s269 = scalar_lea.vmem %s1, %s268
      %s270 = smul.u32 32, %s17
      %s271 = smul.u32 32, %s17
      %p272 = scmp.lt.s32.totalorder %s271, 63
      %s273 = scalar_select %p272, %s271, 63
      %s274 = smul.addr %s273, 8
      %s275 = scalar_lea.vmem %s6, %s274
      %s276 = smul.u32 32, %s17
      %v277 = vld [vmem:[%s263] sm:$0xff]
      %v278 = vld [vmem:[%s263 + $0x8] sm:$0xff]
      %v279 = vld [vmem:[%s263 + $0x10] sm:$0xff]
      %v280 = vld [vmem:[%s263 + $0x18] sm:$0xff]
      %v281 = vld [vmem:[%s263 + $0x20] sm:$0xff]
      %v282 = vld [vmem:[%s263 + $0x28] sm:$0xff]
      %v283 = vld [vmem:[%s263 + $0x30] sm:$0xff]
      %v284 = vld [vmem:[%s263 + $0x38] sm:$0xff]
      %v285 = vld [vmem:[%s263 + $0x40] sm:$0xff]
      %v286 = vld [vmem:[%s263 + $0x48] sm:$0xff]
      %v287 = vld [vmem:[%s263 + $0x50] sm:$0xff]
      %v288 = vld [vmem:[%s263 + $0x58] sm:$0xff]
      %v289 = vld [vmem:[%s263 + $0x60] sm:$0xff]
      %v290 = vld [vmem:[%s263 + $0x68] sm:$0xff]
      %v291 = vld [vmem:[%s263 + $0x70] sm:$0xff]
      %v292 = vld [vmem:[%s263 + $0x78] sm:$0xff]
      %v293 = vld [vmem:[%s263 + $0x80] sm:$0xff]
      %v294 = vld [vmem:[%s263 + $0x88] sm:$0xff]
      %v295 = vld [vmem:[%s263 + $0x90] sm:$0xff]
      %v296 = vld [vmem:[%s263 + $0x98] sm:$0xff]
      %v297 = vld [vmem:[%s263 + $0xa0] sm:$0xff]
      %v298 = vld [vmem:[%s263 + $0xa8] sm:$0xff]
      %v299 = vld [vmem:[%s263 + $0xb0] sm:$0xff]
      %v300 = vld [vmem:[%s263 + $0xb8] sm:$0xff]
      %v301 = vld [vmem:[%s263 + $0xc0] sm:$0xff]
      %v302 = vld [vmem:[%s263 + $0xc8] sm:$0xff]
      %v303 = vld [vmem:[%s263 + $0xd0] sm:$0xff]
      %v304 = vld [vmem:[%s263 + $0xd8] sm:$0xff]
      %v305 = vld [vmem:[%s263 + $0xe0] sm:$0xff]
      %v306 = vld [vmem:[%s263 + $0xe8] sm:$0xff]
      %v307 = vld [vmem:[%s263 + $0xf0] sm:$0xff]
      %v308 = vld [vmem:[%s263 + $0xf8] sm:$0xff]
      %v309 = vld [vmem:[%s2] sm:$0x1]
      %v311 = vlaneseq
      %v312 = vshrl.u32 %v311, 7
      %v313 = vsub.s32 0, %v312
      %v314 = vrot.slane %v309, %v313
      %v316 = vmul.f32 %v277, %v314
      %v317 = vmul.f32 %v278, %v314
      %v318 = vmul.f32 %v279, %v314
      %v319 = vmul.f32 %v280, %v314
      %v320 = vmul.f32 %v281, %v314
      %v321 = vmul.f32 %v282, %v314
      %v322 = vmul.f32 %v283, %v314
      %v323 = vmul.f32 %v284, %v314
      %v324 = vmul.f32 %v285, %v314
      %v325 = vmul.f32 %v286, %v314
      %v326 = vmul.f32 %v287, %v314
      %v327 = vmul.f32 %v288, %v314
      %v328 = vmul.f32 %v289, %v314
      %v329 = vmul.f32 %v290, %v314
      %v330 = vmul.f32 %v291, %v314
      %v331 = vmul.f32 %v292, %v314
      %v332 = vmul.f32 %v293, %v314
      %v333 = vmul.f32 %v294, %v314
      %v334 = vmul.f32 %v295, %v314
      %v335 = vmul.f32 %v296, %v314
      %v336 = vmul.f32 %v297, %v314
      %v337 = vmul.f32 %v298, %v314
      %v338 = vmul.f32 %v299, %v314
      %v339 = vmul.f32 %v300, %v314
      %v340 = vmul.f32 %v301, %v314
      %v341 = vmul.f32 %v302, %v314
      %v342 = vmul.f32 %v303, %v314
      %v343 = vmul.f32 %v304, %v314
      %v344 = vmul.f32 %v305, %v314
      %v345 = vmul.f32 %v306, %v314
      %v346 = vmul.f32 %v307, %v314
      %v347 = vmul.f32 %v308, %v314
      %v348 = vld [vmem:[%s3] sm:$0x1]
      %v350 = vlaneseq
      %v351 = vshrl.u32 %v350, 7
      %v352 = vsub.s32 0, %v351
      %v353 = vrot.slane %v348, %v352
      %v355 = vadd.f32 %v316, %v353
      %v356 = vadd.f32 %v317, %v353
      %v357 = vadd.f32 %v318, %v353
      %v358 = vadd.f32 %v319, %v353
      %v359 = vadd.f32 %v320, %v353
      %v360 = vadd.f32 %v321, %v353
      %v361 = vadd.f32 %v322, %v353
      %v362 = vadd.f32 %v323, %v353
      %v363 = vadd.f32 %v324, %v353
      %v364 = vadd.f32 %v325, %v353
      %v365 = vadd.f32 %v326, %v353
      %v366 = vadd.f32 %v327, %v353
      %v367 = vadd.f32 %v328, %v353
      %v368 = vadd.f32 %v329, %v353
      %v369 = vadd.f32 %v330, %v353
      %v370 = vadd.f32 %v331, %v353
      %v371 = vadd.f32 %v332, %v353
      %v372 = vadd.f32 %v333, %v353
      %v373 = vadd.f32 %v334, %v353
      %v374 = vadd.f32 %v335, %v353
      %v375 = vadd.f32 %v336, %v353
      %v376 = vadd.f32 %v337, %v353
      %v377 = vadd.f32 %v338, %v353
      %v378 = vadd.f32 %v339, %v353
      %v379 = vadd.f32 %v340, %v353
      %v380 = vadd.f32 %v341, %v353
      %v381 = vadd.f32 %v342, %v353
      %v382 = vadd.f32 %v343, %v353
      %v383 = vadd.f32 %v344, %v353
      %v384 = vadd.f32 %v345, %v353
      %v385 = vadd.f32 %v346, %v353
      %v386 = vadd.f32 %v347, %v353
      %v387 = vld [vmem:[%s269] sm:$0xff]
      %v388 = vld [vmem:[%s269 + $0x8] sm:$0xff]
      %v389 = vld [vmem:[%s269 + $0x10] sm:$0xff]
      %v390 = vld [vmem:[%s269 + $0x18] sm:$0xff]
      %v391 = vld [vmem:[%s269 + $0x20] sm:$0xff]
      %v392 = vld [vmem:[%s269 + $0x28] sm:$0xff]
      %v393 = vld [vmem:[%s269 + $0x30] sm:$0xff]
      %v394 = vld [vmem:[%s269 + $0x38] sm:$0xff]
      %v395 = vld [vmem:[%s269 + $0x40] sm:$0xff]
      %v396 = vld [vmem:[%s269 + $0x48] sm:$0xff]
      %v397 = vld [vmem:[%s269 + $0x50] sm:$0xff]
      %v398 = vld [vmem:[%s269 + $0x58] sm:$0xff]
      %v399 = vld [vmem:[%s269 + $0x60] sm:$0xff]
      %v400 = vld [vmem:[%s269 + $0x68] sm:$0xff]
      %v401 = vld [vmem:[%s269 + $0x70] sm:$0xff]
      %v402 = vld [vmem:[%s269 + $0x78] sm:$0xff]
      %v403 = vld [vmem:[%s269 + $0x80] sm:$0xff]
      %v404 = vld [vmem:[%s269 + $0x88] sm:$0xff]
      %v405 = vld [vmem:[%s269 + $0x90] sm:$0xff]
      %v406 = vld [vmem:[%s269 + $0x98] sm:$0xff]
      %v407 = vld [vmem:[%s269 + $0xa0] sm:$0xff]
      %v408 = vld [vmem:[%s269 + $0xa8] sm:$0xff]
      %v409 = vld [vmem:[%s269 + $0xb0] sm:$0xff]
      %v410 = vld [vmem:[%s269 + $0xb8] sm:$0xff]
      %v411 = vld [vmem:[%s269 + $0xc0] sm:$0xff]
      %v412 = vld [vmem:[%s269 + $0xc8] sm:$0xff]
      %v413 = vld [vmem:[%s269 + $0xd0] sm:$0xff]
      %v414 = vld [vmem:[%s269 + $0xd8] sm:$0xff]
      %v415 = vld [vmem:[%s269 + $0xe0] sm:$0xff]
      %v416 = vld [vmem:[%s269 + $0xe8] sm:$0xff]
      %v417 = vld [vmem:[%s269 + $0xf0] sm:$0xff]
      %v418 = vld [vmem:[%s269 + $0xf8] sm:$0xff]
      %v419 = vld [vmem:[%s4] sm:$0x1]
      %v421 = vlaneseq
      %v422 = vshrl.u32 %v421, 7
      %v423 = vsub.s32 0, %v422
      %v424 = vrot.slane %v419, %v423
      %v426 = vmul.f32 %v387, %v424
      %v427 = vmul.f32 %v388, %v424
      %v428 = vmul.f32 %v389, %v424
      %v429 = vmul.f32 %v390, %v424
      %v430 = vmul.f32 %v391, %v424
      %v431 = vmul.f32 %v392, %v424
      %v432 = vmul.f32 %v393, %v424
      %v433 = vmul.f32 %v394, %v424
      %v434 = vmul.f32 %v395, %v424
      %v435 = vmul.f32 %v396, %v424
      %v436 = vmul.f32 %v397, %v424
      %v437 = vmul.f32 %v398, %v424
      %v438 = vmul.f32 %v399, %v424
      %v439 = vmul.f32 %v400, %v424
      %v440 = vmul.f32 %v401, %v424
      %v441 = vmul.f32 %v402, %v424
      %v442 = vmul.f32 %v403, %v424
      %v443 = vmul.f32 %v404, %v424
      %v444 = vmul.f32 %v405, %v424
      %v445 = vmul.f32 %v406, %v424
      %v446 = vmul.f32 %v407, %v424
      %v447 = vmul.f32 %v408, %v424
      %v448 = vmul.f32 %v409, %v424
      %v449 = vmul.f32 %v410, %v424
      %v450 = vmul.f32 %v411, %v424
      %v451 = vmul.f32 %v412, %v424
      %v452 = vmul.f32 %v413, %v424
      %v453 = vmul.f32 %v414, %v424
      %v454 = vmul.f32 %v415, %v424
      %v455 = vmul.f32 %v416, %v424
      %v456 = vmul.f32 %v417, %v424
      %v457 = vmul.f32 %v418, %v424
      %v458 = vadd.f32 %v355, %v426
      %v459 = vadd.f32 %v356, %v427
      %v460 = vadd.f32 %v357, %v428
      %v461 = vadd.f32 %v358, %v429
      %v462 = vadd.f32 %v359, %v430
      %v463 = vadd.f32 %v360, %v431
      %v464 = vadd.f32 %v361, %v432
      %v465 = vadd.f32 %v362, %v433
      %v466 = vadd.f32 %v363, %v434
      %v467 = vadd.f32 %v364, %v435
      %v468 = vadd.f32 %v365, %v436
      %v469 = vadd.f32 %v366, %v437
      %v470 = vadd.f32 %v367, %v438
      %v471 = vadd.f32 %v368, %v439
      %v472 = vadd.f32 %v369, %v440
      %v473 = vadd.f32 %v370, %v441
      %v474 = vadd.f32 %v371, %v442
      %v475 = vadd.f32 %v372, %v443
      %v476 = vadd.f32 %v373, %v444
      %v477 = vadd.f32 %v374, %v445
      %v478 = vadd.f32 %v375, %v446
      %v479 = vadd.f32 %v376, %v447
      %v480 = vadd.f32 %v377, %v448
      %v481 = vadd.f32 %v378, %v449
      %v482 = vadd.f32 %v379, %v450
      %v483 = vadd.f32 %v380, %v451
      %v484 = vadd.f32 %v381, %v452
      %v485 = vadd.f32 %v382, %v453
      %v486 = vadd.f32 %v383, %v454
      %v487 = vadd.f32 %v384, %v455
      %v488 = vadd.f32 %v385, %v456
      %v489 = vadd.f32 %v386, %v457
      %v490 = vld [vmem:[%s5] sm:$0x1]
      %v492 = vlaneseq
      %v493 = vshrl.u32 %v492, 7
      %v494 = vsub.s32 0, %v493
      %v495 = vrot.slane %v490, %v494
      %v497 = vadd.f32 %v458, %v495
      %v498 = vadd.f32 %v459, %v495
      %v499 = vadd.f32 %v460, %v495
      %v500 = vadd.f32 %v461, %v495
      %v501 = vadd.f32 %v462, %v495
      %v502 = vadd.f32 %v463, %v495
      %v503 = vadd.f32 %v464, %v495
      %v504 = vadd.f32 %v465, %v495
      %v505 = vadd.f32 %v466, %v495
      %v506 = vadd.f32 %v467, %v495
      %v507 = vadd.f32 %v468, %v495
      %v508 = vadd.f32 %v469, %v495
      %v509 = vadd.f32 %v470, %v495
      %v510 = vadd.f32 %v471, %v495
      %v511 = vadd.f32 %v472, %v495
      %v512 = vadd.f32 %v473, %v495
      %v513 = vadd.f32 %v474, %v495
      %v514 = vadd.f32 %v475, %v495
      %v515 = vadd.f32 %v476, %v495
      %v516 = vadd.f32 %v477, %v495
      %v517 = vadd.f32 %v478, %v495
      %v518 = vadd.f32 %v479, %v495
      %v519 = vadd.f32 %v480, %v495
      %v520 = vadd.f32 %v481, %v495
      %v521 = vadd.f32 %v482, %v495
      %v522 = vadd.f32 %v483, %v495
      %v523 = vadd.f32 %v484, %v495
      %v524 = vadd.f32 %v485, %v495
      %v525 = vadd.f32 %v486, %v495
      %v526 = vadd.f32 %v487, %v495
      %v527 = vadd.f32 %v488, %v495
      %v528 = vadd.f32 %v489, %v495
      %v529 = vmax.f32 %v497, 0.0
      %v530 = vmax.f32 %v498, 0.0
      %v531 = vmax.f32 %v499, 0.0
      %v532 = vmax.f32 %v500, 0.0
      %v533 = vmax.f32 %v501, 0.0
      %v534 = vmax.f32 %v502, 0.0
      %v535 = vmax.f32 %v503, 0.0
      %v536 = vmax.f32 %v504, 0.0
      %v537 = vmax.f32 %v505, 0.0
      %v538 = vmax.f32 %v506, 0.0
      %v539 = vmax.f32 %v507, 0.0
      %v540 = vmax.f32 %v508, 0.0
      %v541 = vmax.f32 %v509, 0.0
      %v542 = vmax.f32 %v510, 0.0
      %v543 = vmax.f32 %v511, 0.0
      %v544 = vmax.f32 %v512, 0.0
      %v545 = vmax.f32 %v513, 0.0
      %v546 = vmax.f32 %v514, 0.0
      %v547 = vmax.f32 %v515, 0.0
      %v548 = vmax.f32 %v516, 0.0
      %v549 = vmax.f32 %v517, 0.0
      %v550 = vmax.f32 %v518, 0.0
      %v551 = vmax.f32 %v519, 0.0
      %v552 = vmax.f32 %v520, 0.0
      %v553 = vmax.f32 %v521, 0.0
      %v554 = vmax.f32 %v522, 0.0
      %v555 = vmax.f32 %v523, 0.0
      %v556 = vmax.f32 %v524, 0.0
      %v557 = vmax.f32 %v525, 0.0
      %v558 = vmax.f32 %v526, 0.0
      %v559 = vmax.f32 %v527, 0.0
      %v560 = vmax.f32 %v528, 0.0
      %561 = vst [vmem:[%s275] sm:$0xff] %v529
      %562 = vst [vmem:[%s275 + $0x8] sm:$0xff] %v530
      %563 = vst [vmem:[%s275 + $0x10] sm:$0xff] %v531
      %564 = vst [vmem:[%s275 + $0x18] sm:$0xff] %v532
      %565 = vst [vmem:[%s275 + $0x20] sm:$0xff] %v533
      %566 = vst [vmem:[%s275 + $0x28] sm:$0xff] %v534
      %567 = vst [vmem:[%s275 + $0x30] sm:$0xff] %v535
      %568 = vst [vmem:[%s275 + $0x38] sm:$0xff] %v536
      %569 = vst [vmem:[%s275 + $0x40] sm:$0xff] %v537
      %570 = vst [vmem:[%s275 + $0x48] sm:$0xff] %v538
      %571 = vst [vmem:[%s275 + $0x50] sm:$0xff] %v539
      %572 = vst [vmem:[%s275 + $0x58] sm:$0xff] %v540
      %573 = vst [vmem:[%s275 + $0x60] sm:$0xff] %v541
      %574 = vst [vmem:[%s275 + $0x68] sm:$0xff] %v542
      %575 = vst [vmem:[%s275 + $0x70] sm:$0xff] %v543
      %576 = vst [vmem:[%s275 + $0x78] sm:$0xff] %v544
      %577 = vst [vmem:[%s275 + $0x80] sm:$0xff] %v545
      %578 = vst [vmem:[%s275 + $0x88] sm:$0xff] %v546
      %579 = vst [vmem:[%s275 + $0x90] sm:$0xff] %v547
      %580 = vst [vmem:[%s275 + $0x98] sm:$0xff] %v548
      %581 = vst [vmem:[%s275 + $0xa0] sm:$0xff] %v549
      %582 = vst [vmem:[%s275 + $0xa8] sm:$0xff] %v550
      %583 = vst [vmem:[%s275 + $0xb0] sm:$0xff] %v551
      %584 = vst [vmem:[%s275 + $0xb8] sm:$0xff] %v552
      %585 = vst [vmem:[%s275 + $0xc0] sm:$0xff] %v553
      %586 = vst [vmem:[%s275 + $0xc8] sm:$0xff] %v554
      %587 = vst [vmem:[%s275 + $0xd0] sm:$0xff] %v555
      %588 = vst [vmem:[%s275 + $0xd8] sm:$0xff] %v556
      %589 = vst [vmem:[%s275 + $0xe0] sm:$0xff] %v557
      %590 = vst [vmem:[%s275 + $0xe8] sm:$0xff] %v558
      %591 = vst [vmem:[%s275 + $0xf0] sm:$0xff] %v559
      %592 = vst [vmem:[%s275 + $0xf8] sm:$0xff] %v560
      %s593 = smul.u32 32, %s17
      %p594 = scmp.lt.s32.totalorder %s593, 63
      %s595 = scalar_select %p594, %s593, 63
      %s596 = smul.addr %s595, 8
      %s597 = scalar_lea.vmem %s6, %s596
      // Predicated region
      $region45: #{bottleneck_forward.11} parent=43 // pred_check
        %p598 = pneg %p171
      $region46: #{bottleneck_forward.11} parent=43 // pred_check_branch
        %600 = sbr.rel (%p598) target = $region48
      $region47: #{bottleneck_forward.11} parent=43 // pred_region
        %s601 = smul.u32 32, %s17
      $region48: #{bottleneck_forward.11} parent=43 // pred_fallthru
        _
    $region44: #{bottleneck_forward.11} parent=5 // pred_fallthru
      _
    %p602 = scmp.le.s32.totalorder 2, %s12
    // Predicated region
    $region49: #{bottleneck_forward.11} parent=5 // pred_check
      %p603 = pneg %p602
    $region50: #{bottleneck_forward.11} parent=5 // pred_check_branch
      %605 = sbr.rel (%p603) target = $region52
    $region51: #{bottleneck_forward.11} parent=5 // pred_region
      %s606 = ssub.s32 %s12, 2
      // Predicated region
      $region53: #{bottleneck_forward.11} parent=51 // pred_check
        %p607 = pneg %p177
      $region54: #{bottleneck_forward.11} parent=51 // pred_check_branch
        %609 = sbr.rel (%p607) target = $region56
      $region55: #{bottleneck_forward.11} parent=51 // pred_region
        %s610 = smul.u32 32, %s18
        %p611 = scmp.lt.s32.totalorder %s610, 63
        %s612 = scalar_select %p611, %s610, 63
        %s613 = smul.addr %s612, 8
        %s614 = scalar_lea.vmem %s6, %s613
      $region56: #{bottleneck_forward.11} parent=51 // pred_fallthru
        _
    $region52: #{bottleneck_forward.11} parent=5 // pred_fallthru
      _
  $region6: #{bottleneck_forward.11} parent=0 // loop_footer
    %s16 = sadd.s32 1, %s12
  $region7: #{bottleneck_forward.11} parent=0 // loop_footer_branch
    %11 = sbr.rel target = $region3
  $region8: #{bottleneck_forward.11} parent=0 // loop_exit
    _

// kernel: bottleneck_forward.8
$region0: #{bottleneck_forward.8}
  #allocation0 [shape = 'u32[]', space=smem, size = 0x4, offset = 0x4, fixed_abs, tag = 'smem constant byte address 0x4 - core index']
  #allocation1 [shape = 'u32[144,128]{1,0:T(1,128)}', space=vmem, size = 0x12000, scoped, tag = 'internal scratch']
  %s0 = inlined_call_operand.vmem [shape: bf16[2,18,18,128], index: 0, kind: input, shape index: {}]
  %s1 = inlined_call_operand.vmem [shape: bf16[9,128,128], index: 1, kind: input, shape index: {}]
  %s2 = inlined_call_operand.vmem [shape: f32[2,256,128], index: 2, kind: output, shape index: {0}]
  %s3 = inlined_call_operand.vmem [shape: f32[1,128], index: 3, kind: output, shape index: {1}]
  %s4 = inlined_call_operand.vmem [shape: f32[1,128], index: 4, kind: output, shape index: {2}]
  %5 = xla_tuple %s2, %s3, %s4
  %s6 = sld [smem:[#allocation0]]
  $region61: #{bottleneck_forward.8} parent=0
    _
  %s8 = ssub.s32 1, %s6
  %s9 = scalar_select 0, %s8, %s6
  loop: start=0, step=1, limit=4
  $region2: #{bottleneck_forward.8} parent=0 // loop_pre_header
    _
  $region3: #{bottleneck_forward.8} parent=0 // loop_header
    %s11 = sphi 0, %s15
    %p12 = scmp.ge.s32.totalorder %s11, 4
    %s21 = sphi 0, %s23
    %s24 = sphi 0, %s21
    %s25 = sphi 0, %s24
    %s41 = sphi 0, %s25
    %s45 = sphi 0, %s45
    %s47 = sphi 0, %s45
    %s48 = sphi 0, %s47
    %s62 = sphi 0, %s48
    %s68 = sphi 0, %s70
    %s71 = sphi 0, %s68
    %s72 = sphi 0, %s71
    %s88 = sphi 0, %s72
    %s92 = sphi 0, %s92
    %s94 = sphi 0, %s92
    %s95 = sphi 0, %s94
    %s109 = sphi 0, %s95
    %s113 = sphi 0, %s113
    %s115 = sphi 0, %s113
    %s116 = sphi 0, %s115
    %s130 = sphi 0, %s116
  $region4: #{bottleneck_forward.8} parent=0 // loop_header_branch
    %14 = sbr.rel (%p12) target = $region8
  $region5: #{bottleneck_forward.8} parent=0 // loop_body
    %s16 = ssub.s32 %s11, 1
    %s17 = ssub.s32 %s11, 2
    %s18 = sadd.s32 %s11, 1
    %s19 = ssub.s32 %s11, %s18
    %p20 = scmp.eq.s32.totalorder %s19, 0
    %s22 = sadd.s32 %s21, 1
    %s23 = scalar_select %p20, %s21, %s22
    %p26 = pneg %p20
    %p27 = scmp.eq.s32.totalorder %s11, 1
    %p28 = por %p26, %p27
    %p29 = scmp.ne.s32.totalorder %s21, %s24
    %p30 = scmp.eq.s32.totalorder %s11, 0
    %p31 = por %p29, %p30
    %p32 = scmp.ne.s32.totalorder %s21, %s24
    %p33 = scmp.eq.s32.totalorder %s16, 1
    %p34 = por %p32, %p33
    %p35 = scmp.ne.s32.totalorder %s24, %s25
    %p36 = scmp.eq.s32.totalorder %s16, 0
    %p37 = por %p35, %p36
    %p38 = scmp.ne.s32.totalorder %s24, %s25
    %p39 = scmp.eq.s32.totalorder %s17, 1
    %p40 = por %p38, %p39
    %p42 = scmp.ne.s32.totalorder %s25, %s41
    %p43 = scmp.eq.s32.totalorder %s17, 0
    %p44 = por %p42, %p43
    %s46 = sadd.s32 %s45, 1
    %p49 = scmp.eq.s32.totalorder %s11, 1
    %p50 = scmp.ne.s32.totalorder %s45, %s47
    %p51 = scmp.eq.s32.totalorder %s11, 0
    %p52 = por %p50, %p51
    %p53 = scmp.ne.s32.totalorder %s45, %s47
    %p54 = scmp.eq.s32.totalorder %s16, 1
    %p55 = por %p53, %p54
    %p56 = scmp.ne.s32.totalorder %s47, %s48
    %p57 = scmp.eq.s32.totalorder %s16, 0
    %p58 = por %p56, %p57
    %p59 = scmp.ne.s32.totalorder %s47, %s48
    %p60 = scmp.eq.s32.totalorder %s17, 1
    %p61 = por %p59, %p60
    %p63 = scmp.ne.s32.totalorder %s48, %s62
    %p64 = scmp.eq.s32.totalorder %s17, 0
    %p65 = por %p63, %p64
    %s66 = ssub.s32 %s11, %s18
    %p67 = scmp.eq.s32.totalorder %s66, 0
    %s69 = sadd.s32 %s68, 1
    %s70 = scalar_select %p67, %s68, %s69
    %p73 = pneg %p67
    %p74 = scmp.eq.s32.totalorder %s11, 1
    %p75 = por %p73, %p74
    %p76 = scmp.ne.s32.totalorder %s68, %s71
    %p77 = scmp.eq.s32.totalorder %s11, 0
    %p78 = por %p76, %p77
    %p79 = scmp.ne.s32.totalorder %s68, %s71
    %p80 = scmp.eq.s32.totalorder %s16, 1
    %p81 = por %p79, %p80
    %p82 = scmp.ne.s32.totalorder %s71, %s72
    %p83 = scmp.eq.s32.totalorder %s16, 0
    %p84 = por %p82, %p83
    %p85 = scmp.ne.s32.totalorder %s71, %s72
    %p86 = scmp.eq.s32.totalorder %s17, 1
    %p87 = por %p85, %p86
    %p89 = scmp.ne.s32.totalorder %s72, %s88
    %p90 = scmp.eq.s32.totalorder %s17, 0
    %p91 = por %p89, %p90
    %s93 = sadd.s32 %s92, 1
    %p96 = scmp.eq.s32.totalorder %s11, 1
    %p97 = scmp.ne.s32.totalorder %s92, %s94
    %p98 = scmp.eq.s32.totalorder %s11, 0
    %p99 = por %p97, %p98
    %p100 = scmp.ne.s32.totalorder %s92, %s94
    %p101 = scmp.eq.s32.totalorder %s16, 1
    %p102 = por %p100, %p101
    %p103 = scmp.ne.s32.totalorder %s94, %s95
    %p104 = scmp.eq.s32.totalorder %s16, 0
    %p105 = por %p103, %p104
    %p106 = scmp.ne.s32.totalorder %s94, %s95
    %p107 = scmp.eq.s32.totalorder %s17, 1
    %p108 = por %p106, %p107
    %p110 = scmp.ne.s32.totalorder %s95, %s109
    %p111 = scmp.eq.s32.totalorder %s17, 0
    %p112 = por %p110, %p111
    %s114 = sadd.s32 %s113, 1
    %p117 = scmp.eq.s32.totalorder %s11, 1
    %p118 = scmp.ne.s32.totalorder %s113, %s115
    %p119 = scmp.eq.s32.totalorder %s11, 0
    %p120 = por %p118, %p119
    %p121 = scmp.ne.s32.totalorder %s113, %s115
    %p122 = scmp.eq.s32.totalorder %s16, 1
    %p123 = por %p121, %p122
    %p124 = scmp.ne.s32.totalorder %s115, %s116
    %p125 = scmp.eq.s32.totalorder %s16, 0
    %p126 = por %p124, %p125
    %p127 = scmp.ne.s32.totalorder %s115, %s116
    %p128 = scmp.eq.s32.totalorder %s17, 1
    %p129 = por %p127, %p128
    %p131 = scmp.ne.s32.totalorder %s116, %s130
    %p132 = scmp.eq.s32.totalorder %s17, 0
    %p133 = por %p131, %p132
    %p134 = scmp.le.s32.totalorder 1, %s11
    %p135 = scmp.lt.s32.totalorder %s11, 3
    %p136 = pnand %p134, %p135
    %p137 = pneg %p136
    // Predicated region
    $region9: #{bottleneck_forward.8} parent=5 // pred_check
      _
    $region10: #{bottleneck_forward.8} parent=5 // pred_check_branch
      %139 = sbr.rel (%p136) target = $region12
    $region11: #{bottleneck_forward.8} parent=5 // pred_region
      %s140 = ssub.s32 %s11, 1
      // Predicated region
      $region13: #{bottleneck_forward.8} parent=11 // pred_check
        %p141 = pneg %p58
      $region14: #{bottleneck_forward.8} parent=11 // pred_check_branch
        %143 = sbr.rel (%p141) target = $region16
      $region15: #{bottleneck_forward.8} parent=11 // pred_region
        _
      $region16: #{bottleneck_forward.8} parent=11 // pred_fallthru
        _
    $region12: #{bottleneck_forward.8} parent=5 // pred_fallthru
      _
    %p144 = scmp.lt.s32.totalorder %s11, 2
    // Predicated region
    $region17: #{bottleneck_forward.8} parent=5 // pred_check
      %p145 = pneg %p144
    $region18: #{bottleneck_forward.8} parent=5 // pred_check_branch
      %147 = sbr.rel (%p145) target = $region20
    $region19: #{bottleneck_forward.8} parent=5 // pred_region
      // Predicated region
      $region21: #{bottleneck_forward.8} parent=19 // pred_check
        %p148 = pneg %p31
      $region22: #{bottleneck_forward.8} parent=19 // pred_check_branch
        %150 = sbr.rel (%p148) target = $region24
      $region23: #{bottleneck_forward.8} parent=19 // pred_region
        %p151 = scmp.lt.s32.totalorder %s11, 1
        %s152 = scalar_select %p151, %s11, 1
        %s153 = smul.addr %s152, 54
        %s154 = smul.addr %s153, 4
        %s155 = scalar_lea.vmem %s0, %s154
      $region24: #{bottleneck_forward.8} parent=19 // pred_fallthru
        _
    $region20: #{bottleneck_forward.8} parent=5 // pred_fallthru
      _
    %p156 = scmp.le.s32.totalorder 1, %s11
    %p157 = scmp.lt.s32.totalorder %s11, 3
    %p158 = pnand %p156, %p157
    %p159 = pneg %p158
    // Predicated region
    $region25: #{bottleneck_forward.8} parent=5 // pred_check
      _
    $region26: #{bottleneck_forward.8} parent=5 // pred_check_branch
      %161 = sbr.rel (%p158) target = $region28
    $region27: #{bottleneck_forward.8} parent=5 // pred_region
      %s162 = ssub.s32 %s11, 1
      %p163 = scmp.lt.s32.totalorder %s16, 1
      %s164 = scalar_select %p163, %s16, 1
      %s165 = smul.addr %s164, 54
      %s166 = smul.addr %s165, 4
      %s167 = scalar_lea.vmem %s0, %s166
      %p168 = pneg %p37
      %p169 = pneg %p34
      %p170 = pneg %p58
      %p171 = pneg %p55
      %p172 = pneg %p84
      %p173 = pneg %p81
      %p174 = scmp.lt.s32.totalorder %s16, 1
      %s175 = scalar_select %p174, %s16, 1
      %s176 = smul.addr %s175, 32
      %s177 = smul.addr %s176, 8
      %s178 = scalar_lea.vmem %s2, %s177
      %p179 = pneg %p105
      %p180 = pneg %p102
      %p181 = pneg %p126
      %p182 = pneg %p123
      %p183 = scmp.lt.s32.totalorder %s16, 1
      %s184 = scalar_select %p183, %s16, 1
      %s185 = smul.addr %s184, 54
      %s186 = smul.addr %s185, 4
      %s187 = scalar_lea.vmem %s0, %s186
      %p188 = scmp.lt.s32.totalorder %s16, 1
      %s189 = scalar_select %p188, %s16, 1
      %s190 = smul.addr %s189, 32
      %s191 = smul.addr %s190, 8
      %s192 = scalar_lea.vmem %s2, %s191
      %v194 = vld [vmem:[%s187] sm:$0xf]
      %v195 = vld [vmem:[%s187 + $0x4] sm:$0xf]
      %v196 = vld [vmem:[%s187 + $0x8] sm:$0x1]
      %v197 = vld [vmem:[%s187 + $0xc] sm:$0xf]
      %v198 = vld [vmem:[%s187 + $0x10] sm:$0xf]
      %v199 = vld [vmem:[%s187 + $0x14] sm:$0x1]
      %v200 = vld [vmem:[%s187 + $0x18] sm:$0xf]
      %v201 = vld [vmem:[%s187 + $0x1c] sm:$0xf]
      %v202 = vld [vmem:[%s187 + $0x20] sm:$0x1]
      %v203 = vld [vmem:[%s187 + $0x24] sm:$0xf]
      %v204 = vld [vmem:[%s187 + $0x28] sm:$0xf]
      %v205 = vld [vmem:[%s187 + $0x2c] sm:$0x1]
      %v206 = vld [vmem:[%s187 + $0x30] sm:$0xf]
      %v207 = vld [vmem:[%s187 + $0x34] sm:$0xf]
      %v208 = vld [vmem:[%s187 + $0x38] sm:$0x1]
      %v209 = vld [vmem:[%s187 + $0x3c] sm:$0xf]
      %v210 = vld [vmem:[%s187 + $0x40] sm:$0xf]
      %v211 = vld [vmem:[%s187 + $0x44] sm:$0x1]
      %v212 = vld [vmem:[%s187 + $0x48] sm:$0xf]
      %v213 = vld [vmem:[%s187 + $0x4c] sm:$0xf]
      %v214 = vld [vmem:[%s187 + $0x50] sm:$0x1]
      %v215 = vld [vmem:[%s187 + $0x54] sm:$0xf]
      %v216 = vld [vmem:[%s187 + $0x58] sm:$0xf]
      %v217 = vld [vmem:[%s187 + $0x5c] sm:$0x1]
      %v218 = vld [vmem:[%s187 + $0x60] sm:$0xf]
      %v219 = vld [vmem:[%s187 + $0x64] sm:$0xf]
      %v220 = vld [vmem:[%s187 + $0x68] sm:$0x1]
      %v221 = vld [vmem:[%s187 + $0x6c] sm:$0xf]
      %v222 = vld [vmem:[%s187 + $0x70] sm:$0xf]
      %v223 = vld [vmem:[%s187 + $0x74] sm:$0x1]
      %v224 = vld [vmem:[%s187 + $0x78] sm:$0xf]
      %v225 = vld [vmem:[%s187 + $0x7c] sm:$0xf]
      %v226 = vld [vmem:[%s187 + $0x80] sm:$0x1]
      %v227 = vld [vmem:[%s187 + $0x84] sm:$0xf]
      %v228 = vld [vmem:[%s187 + $0x88] sm:$0xf]
      %v229 = vld [vmem:[%s187 + $0x8c] sm:$0x1]
      %v230 = vld [vmem:[%s187 + $0x90] sm:$0xf]
      %v231 = vld [vmem:[%s187 + $0x94] sm:$0xf]
      %v232 = vld [vmem:[%s187 + $0x98] sm:$0x1]
      %v233 = vld [vmem:[%s187 + $0x9c] sm:$0xf]
      %v234 = vld [vmem:[%s187 + $0xa0] sm:$0xf]
      %v235 = vld [vmem:[%s187 + $0xa4] sm:$0x1]
      %v236 = vld [vmem:[%s187 + $0xa8] sm:$0xf]
      %v237 = vld [vmem:[%s187 + $0xac] sm:$0xf]
      %v238 = vld [vmem:[%s187 + $0xb0] sm:$0x1]
      %v239 = vld [vmem:[%s187 + $0xb4] sm:$0xf]
      %v240 = vld [vmem:[%s187 + $0xb8] sm:$0xf]
      %v241 = vld [vmem:[%s187 + $0xbc] sm:$0x1]
      %v242 = vld [vmem:[%s187 + $0xc0] sm:$0xf]
      %v243 = vld [vmem:[%s187 + $0xc4] sm:$0xf]
      %v244 = vld [vmem:[%s187 + $0xc8] sm:$0x1]
      %v245 = vld [vmem:[%s187 + $0xcc] sm:$0xf]
      %v246 = vld [vmem:[%s187 + $0xd0] sm:$0xf]
      %v247 = vld [vmem:[%s187 + $0xd4] sm:$0x1]
      %v248 = vld [vmem:[%s1] sm:$0xf]
      %v249 = vld [vmem:[%s1 + $0x4] sm:$0xf]
      %v250 = vld [vmem:[%s1 + $0x8] sm:$0xf]
      %v251 = vld [vmem:[%s1 + $0xc] sm:$0xf]
      %v252 = vld [vmem:[%s1 + $0x10] sm:$0xf]
      %v253 = vld [vmem:[%s1 + $0x14] sm:$0xf]
      %v254 = vld [vmem:[%s1 + $0x18] sm:$0xf]
      %v255 = vld [vmem:[%s1 + $0x1c] sm:$0xf]
      %v256 = vld [vmem:[%s1 + $0x20] sm:$0xf]
      %v257 = vld [vmem:[%s1 + $0x24] sm:$0xf]
      %v258 = vld [vmem:[%s1 + $0x28] sm:$0xf]
      %v259 = vld [vmem:[%s1 + $0x2c] sm:$0xf]
      %v260 = vld [vmem:[%s1 + $0x30] sm:$0xf]
      %v261 = vld [vmem:[%s1 + $0x34] sm:$0xf]
      %v262 = vld [vmem:[%s1 + $0x38] sm:$0xf]
      %v263 = vld [vmem:[%s1 + $0x3c] sm:$0xf]
      %vm264 = vsmask.f32 3328
      %vm265 = vsmask.f32 7440
      %vm266 = vmor %vm264, %vm265
      %v268 = vshrl.u32 %v194, 16
      %v270 = vrot.slane %v268, 4
      %v271 = vshll.u32 %v194, 16
      %v273 = vrot.slane %v271, 5
      %v274 = vor.u32 %v270, %v273
      %v275 = vrot.slane %v274, 4
      %v277 = vshll.u32 %v195, 16
      %v279 = vrot.slane %v277, 5
      %v280 = vsel %vm266, %v275, %v279
      %v281 = vshrl.u32 %v195, 16
      %v283 = vrot.slane %v281, 4
      %v284 = vor.u32 %v283, %v279
      %v285 = vrot.slane %v284, 4
      %v287 = vshll.u32 %v196, 16
      %v289 = vrot.slane %v287, 5
      %v290 = vsel %vm266, %v285, %v289
      %v292 = vshrl.u32 %v197, 16
      %v294 = vrot.slane %v292, 4
      %v295 = vshll.u32 %v197, 16
      %v297 = vrot.slane %v295, 5
      %v298 = vor.u32 %v294, %v297
      %v299 = vrot.slane %v298, 4
      %v301 = vshll.u32 %v198, 16
      %v303 = vrot.slane %v301, 5
      %v304 = vsel %vm266, %v299, %v303
      %v305 = vshrl.u32 %v198, 16
      %v307 = vrot.slane %v305, 4
      %v308 = vor.u32 %v307, %v303
      %v309 = vrot.slane %v308, 4
      %v311 = vshll.u32 %v199, 16
      %v313 = vrot.slane %v311, 5
      %v314 = vsel %vm266, %v309, %v313
      %v316 = vshrl.u32 %v200, 16
      %v318 = vrot.slane %v316, 4
      %v319 = vshll.u32 %v200, 16
      %v321 = vrot.slane %v319, 5
      %v322 = vor.u32 %v318, %v321
      %v323 = vrot.slane %v322, 4
      %v325 = vshll.u32 %v201, 16
      %v327 = vrot.slane %v325, 5
      %v328 = vsel %vm266, %v323, %v327
      %v329 = vshrl.u32 %v201, 16
      %v331 = vrot.slane %v329, 4
      %v332 = vor.u32 %v331, %v327
      %v333 = vrot.slane %v332, 4
      %v335 = vshll.u32 %v202, 16
      %v337 = vrot.slane %v335, 5
      %v338 = vsel %vm266, %v333, %v337
      %v340 = vshrl.u32 %v203, 16
      %v342 = vrot.slane %v340, 4
      %v343 = vshll.u32 %v203, 16
      %v345 = vrot.slane %v343, 5
      %v346 = vor.u32 %v342, %v345
      %v347 = vrot.slane %v346, 4
      %v349 = vshll.u32 %v204, 16
      %v351 = vrot.slane %v349, 5
      %v352 = vsel %vm266, %v347, %v351
      %v353 = vshrl.u32 %v204, 16
      %v355 = vrot.slane %v353, 4
      %v356 = vor.u32 %v355, %v351
      %v357 = vrot.slane %v356, 4
      %v359 = vshll.u32 %v205, 16
      %v361 = vrot.slane %v359, 5
      %v362 = vsel %vm266, %v357, %v361
      %v364 = vshrl.u32 %v206, 16
      %v366 = vrot.slane %v364, 4
      %v367 = vshll.u32 %v206, 16
      %v369 = vrot.slane %v367, 5
      %v370 = vor.u32 %v366, %v369
      %v371 = vrot.slane %v370, 4
      %v373 = vshll.u32 %v207, 16
      %v375 = vrot.slane %v373, 5
      %v376 = vsel %vm266, %v371, %v375
      %v377 = vshrl.u32 %v207, 16
      %v379 = vrot.slane %v377, 4
      %v380 = vor.u32 %v379, %v375
      %v381 = vrot.slane %v380, 4
      %v383 = vshll.u32 %v208, 16
      %v385 = vrot.slane %v383, 5
      %v386 = vsel %vm266, %v381, %v385
      %v388 = vshrl.u32 %v209, 16
      %v390 = vrot.slane %v388, 4
      %v391 = vshll.u32 %v209, 16
      %v393 = vrot.slane %v391, 5
      %v394 = vor.u32 %v390, %v393
      %v395 = vrot.slane %v394, 4
      %v397 = vshll.u32 %v210, 16
      %v399 = vrot.slane %v397, 5
      %v400 = vsel %vm266, %v395, %v399
      %v401 = vshrl.u32 %v210, 16
      %v403 = vrot.slane %v401, 4
      %v404 = vor.u32 %v403, %v399
      %v405 = vrot.slane %v404, 4
      %v407 = vshll.u32 %v211, 16
      %v409 = vrot.slane %v407, 5
      %v410 = vsel %vm266, %v405, %v409
      %v412 = vshrl.u32 %v212, 16
      %v414 = vrot.slane %v412, 4
      %v415 = vshll.u32 %v212, 16
      %v417 = vrot.slane %v415, 5
      %v418 = vor.u32 %v414, %v417
      %v419 = vrot.slane %v418, 4
      %v421 = vshll.u32 %v213, 16
      %v423 = vrot.slane %v421, 5
      %v424 = vsel %vm266, %v419, %v423
      %v425 = vshrl.u32 %v213, 16
      %v427 = vrot.slane %v425, 4
      %v428 = vor.u32 %v427, %v423
      %v429 = vrot.slane %v428, 4
      %v431 = vshll.u32 %v214, 16
      %v433 = vrot.slane %v431, 5
      %v434 = vsel %vm266, %v429, %v433
      %v436 = vshrl.u32 %v215, 16
      %v438 = vrot.slane %v436, 4
      %v439 = vshll.u32 %v215, 16
      %v441 = vrot.slane %v439, 5
      %v442 = vor.u32 %v438, %v441
      %v443 = vrot.slane %v442, 4
      %v445 = vshll.u32 %v216, 16
      %v447 = vrot.slane %v445, 5
      %v448 = vsel %vm266, %v443, %v447
      %v449 = vshrl.u32 %v216, 16
      %v451 = vrot.slane %v449, 4
      %v452 = vor.u32 %v451, %v447
      %v453 = vrot.slane %v452, 4
      %v455 = vshll.u32 %v217, 16
      %v457 = vrot.slane %v455, 5
      %v458 = vsel %vm266, %v453, %v457
      %v460 = vshrl.u32 %v218, 16
      %v462 = vrot.slane %v460, 4
      %v463 = vshll.u32 %v218, 16
      %v465 = vrot.slane %v463, 5
      %v466 = vor.u32 %v462, %v465
      %v467 = vrot.slane %v466, 4
      %v469 = vshll.u32 %v219, 16
      %v471 = vrot.slane %v469, 5
      %v472 = vsel %vm266, %v467, %v471
      %v473 = vshrl.u32 %v219, 16
      %v475 = vrot.slane %v473, 4
      %v476 = vor.u32 %v475, %v471
      %v477 = vrot.slane %v476, 4
      %v479 = vshll.u32 %v220, 16
      %v481 = vrot.slane %v479, 5
      %v482 = vsel %vm266, %v477, %v481
      %v484 = vshrl.u32 %v221, 16
      %v486 = vrot.slane %v484, 4
      %v487 = vshll.u32 %v221, 16
      %v489 = vrot.slane %v487, 5
      %v490 = vor.u32 %v486, %v489
      %v491 = vrot.slane %v490, 4
      %v493 = vshll.u32 %v222, 16
      %v495 = vrot.slane %v493, 5
      %v496 = vsel %vm266, %v491, %v495
      %v497 = vshrl.u32 %v222, 16
      %v499 = vrot.slane %v497, 4
      %v500 = vor.u32 %v499, %v495
      %v501 = vrot.slane %v500, 4
      %v503 = vshll.u32 %v223, 16
      %v505 = vrot.slane %v503, 5
      %v506 = vsel %vm266, %v501, %v505
      %v508 = vshrl.u32 %v224, 16
      %v510 = vrot.slane %v508, 4
      %v511 = vshll.u32 %v224, 16
      %v513 = vrot.slane %v511, 5
      %v514 = vor.u32 %v510, %v513
      %v515 = vrot.slane %v514, 4
      %v517 = vshll.u32 %v225, 16
      %v519 = vrot.slane %v517, 5
      %v520 = vsel %vm266, %v515, %v519
      %v521 = vshrl.u32 %v225, 16
      %v523 = vrot.slane %v521, 4
      %v524 = vor.u32 %v523, %v519
      %v525 = vrot.slane %v524, 4
      %v527 = vshll.u32 %v226, 16
      %v529 = vrot.slane %v527, 5
      %v530 = vsel %vm266, %v525, %v529
      %v532 = vshrl.u32 %v227, 16
      %v534 = vrot.slane %v532, 4
      %v535 = vshll.u32 %v227, 16
      %v537 = vrot.slane %v535, 5
      %v538 = vor.u32 %v534, %v537
      %v539 = vrot.slane %v538, 4
      %v541 = vshll.u32 %v228, 16
      %v543 = vrot.slane %v541, 5
      %v544 = vsel %vm266, %v539, %v543
      %v545 = vshrl.u32 %v228, 16
      %v547 = vrot.slane %v545, 4
      %v548 = vor.u32 %v547, %v543
      %v549 = vrot.slane %v548, 4
      %v551 = vshll.u32 %v229, 16
      %v553 = vrot.slane %v551, 5
      %v554 = vsel %vm266, %v549, %v553
      %v556 = vshrl.u32 %v230, 16
      %v558 = vrot.slane %v556, 4
      %v559 = vshll.u32 %v230, 16
      %v561 = vrot.slane %v559, 5
      %v562 = vor.u32 %v558, %v561
      %v563 = vrot.slane %v562, 4
      %v565 = vshll.u32 %v231, 16
      %v567 = vrot.slane %v565, 5
      %v568 = vsel %vm266, %v563, %v567
      %v569 = vshrl.u32 %v231, 16
      %v571 = vrot.slane %v569, 4
      %v572 = vor.u32 %v571, %v567
      %v573 = vrot.slane %v572, 4
      %v575 = vshll.u32 %v232, 16
      %v577 = vrot.slane %v575, 5
      %v578 = vsel %vm266, %v573, %v577
      %v580 = vshrl.u32 %v233, 16
      %v582 = vrot.slane %v580, 4
      %v583 = vshll.u32 %v233, 16
      %v585 = vrot.slane %v583, 5
      %v586 = vor.u32 %v582, %v585
      %v587 = vrot.slane %v586, 4
      %v589 = vshll.u32 %v234, 16
      %v591 = vrot.slane %v589, 5
      %v592 = vsel %vm266, %v587, %v591
      %v593 = vshrl.u32 %v234, 16
      %v595 = vrot.slane %v593, 4
      %v596 = vor.u32 %v595, %v591
      %v597 = vrot.slane %v596, 4
      %v599 = vshll.u32 %v235, 16
      %v601 = vrot.slane %v599, 5
      %v602 = vsel %vm266, %v597, %v601
      %v604 = vshrl.u32 %v236, 16
      %v606 = vrot.slane %v604, 4
      %v607 = vshll.u32 %v236, 16
      %v609 = vrot.slane %v607, 5
      %v610 = vor.u32 %v606, %v609
      %v611 = vrot.slane %v610, 4
      %v613 = vshll.u32 %v237, 16
      %v615 = vrot.slane %v613, 5
      %v616 = vsel %vm266, %v611, %v615
      %v617 = vshrl.u32 %v237, 16
      %v619 = vrot.slane %v617, 4
      %v620 = vor.u32 %v619, %v615
      %v621 = vrot.slane %v620, 4
      %v623 = vshll.u32 %v238, 16
      %v625 = vrot.slane %v623, 5
      %v626 = vsel %vm266, %v621, %v625
      %v628 = vshrl.u32 %v239, 16
      %v630 = vrot.slane %v628, 4
      %v631 = vshll.u32 %v239, 16
      %v633 = vrot.slane %v631, 5
      %v634 = vor.u32 %v630, %v633
      %v635 = vrot.slane %v634, 4
      %v637 = vshll.u32 %v240, 16
      %v639 = vrot.slane %v637, 5
      %v640 = vsel %vm266, %v635, %v639
      %v641 = vshrl.u32 %v240, 16
      %v643 = vrot.slane %v641, 4
      %v644 = vor.u32 %v643, %v639
      %v645 = vrot.slane %v644, 4
      %v647 = vshll.u32 %v241, 16
      %v649 = vrot.slane %v647, 5
      %v650 = vsel %vm266, %v645, %v649
      %s651 = scalar_lea.vmem %s1, 64
      %v652 = vld [vmem:[%s651] sm:$0xf]
      %v653 = vld [vmem:[%s651 + $0x4] sm:$0xf]
      %v654 = vld [vmem:[%s651 + $0x8] sm:$0xf]
      %v655 = vld [vmem:[%s651 + $0xc] sm:$0xf]
      %v656 = vld [vmem:[%s651 + $0x10] sm:$0xf]
      %v657 = vld [vmem:[%s651 + $0x14] sm:$0xf]
      %v658 = vld [vmem:[%s651 + $0x18] sm:$0xf]
      %v659 = vld [vmem:[%s651 + $0x1c] sm:$0xf]
      %v660 = vld [vmem:[%s651 + $0x20] sm:$0xf]
      %v661 = vld [vmem:[%s651 + $0x24] sm:$0xf]
      %v662 = vld [vmem:[%s651 + $0x28] sm:$0xf]
      %v663 = vld [vmem:[%s651 + $0x2c] sm:$0xf]
      %v664 = vld [vmem:[%s651 + $0x30] sm:$0xf]
      %v665 = vld [vmem:[%s651 + $0x34] sm:$0xf]
      %v666 = vld [vmem:[%s651 + $0x38] sm:$0xf]
      %v667 = vld [vmem:[%s651 + $0x3c] sm:$0xf]
      %v668 = vunpack.c.l.b16 %v280
      %v669 = vunpack.c.l.b16 %v290
      %v670 = vunpack.c.l.b16 %v304
      %v671 = vunpack.c.l.b16 %v314
      %v672 = vunpack.c.l.b16 %v328
      %v673 = vunpack.c.l.b16 %v338
      %v674 = vunpack.c.l.b16 %v352
      %v675 = vunpack.c.l.b16 %v362
      %v676 = vunpack.c.l.b16 %v376
      %v677 = vunpack.c.l.b16 %v386
      %v678 = vunpack.c.l.b16 %v400
      %v679 = vunpack.c.l.b16 %v410
      %v680 = vunpack.c.l.b16 %v424
      %v681 = vunpack.c.l.b16 %v434
      %v682 = vunpack.c.l.b16 %v448
      %v683 = vunpack.c.l.b16 %v458
      %v684 = vunpack.c.l.b16 %v472
      %v685 = vunpack.c.l.b16 %v482
      %v686 = vunpack.c.l.b16 %v496
      %v687 = vunpack.c.l.b16 %v506
      %v688 = vunpack.c.l.b16 %v520
      %v689 = vunpack.c.l.b16 %v530
      %v690 = vunpack.c.l.b16 %v544
      %v691 = vunpack.c.l.b16 %v554
      %v692 = vunpack.c.l.b16 %v568
      %v693 = vunpack.c.l.b16 %v578
      %v694 = vunpack.c.l.b16 %v592
      %v695 = vunpack.c.l.b16 %v602
      %v696 = vunpack.c.l.b16 %v616
      %v697 = vunpack.c.l.b16 %v626
      %v698 = vunpack.c.l.b16 %v640
      %v699 = vunpack.c.l.b16 %v650
      %v700 = vpack.c.b16 %v669, %v668
      %v701 = vpack.c.b16 %v671, %v670
      %v702 = vpack.c.b16 %v673, %v672
      %v703 = vpack.c.b16 %v675, %v674
      %v704 = vpack.c.b16 %v677, %v676
      %v705 = vpack.c.b16 %v679, %v678
      %v706 = vpack.c.b16 %v681, %v680
      %v707 = vpack.c.b16 %v683, %v682
      %v708 = vpack.c.b16 %v685, %v684
      %v709 = vpack.c.b16 %v687, %v686
      %v710 = vpack.c.b16 %v689, %v688
      %v711 = vpack.c.b16 %v691, %v690
      %v712 = vpack.c.b16 %v693, %v692
      %v713 = vpack.c.b16 %v695, %v694
      %v714 = vpack.c.b16 %v697, %v696
      %v715 = vpack.c.b16 %v699, %v698
      %v748 = vunpack.c.l.b16 %v652
      %v749 = vunpack.c.l.b16 %v653
      %v750 = vunpack.c.l.b16 %v654
      %v751 = vunpack.c.l.b16 %v655
      %v752 = vunpack.c.l.b16 %v656
      %v753 = vunpack.c.l.b16 %v657
      %v754 = vunpack.c.l.b16 %v658
      %v755 = vunpack.c.l.b16 %v659
      %v756 = vunpack.c.l.b16 %v660
      %v757 = vunpack.c.l.b16 %v661
      %v758 = vunpack.c.l.b16 %v662
      %v759 = vunpack.c.l.b16 %v663
      %v760 = vunpack.c.l.b16 %v664
      %v761 = vunpack.c.l.b16 %v665
      %v762 = vunpack.c.l.b16 %v666
      %v763 = vunpack.c.l.b16 %v667
      %v764 = vpack.c.b16 %v749, %v748
      %v765 = vpack.c.b16 %v751, %v750
      %v766 = vpack.c.b16 %v753, %v752
      %v767 = vpack.c.b16 %v755, %v754
      %v768 = vpack.c.b16 %v757, %v756
      %v769 = vpack.c.b16 %v759, %v758
      %v770 = vpack.c.b16 %v761, %v760
      %v771 = vpack.c.b16 %v763, %v762
      %780 = vmatprep.subr.bf16.mxu0 0
      %781 = vmatpush1.bf16.msra.mxu0 %v764
      %782 = vmatprep.subr.bf16.mxu0 0
      %783 = vmatpush1.bf16.msra.mxu0 %v765
      %784 = vmatprep.subr.bf16.mxu0 0
      %785 = vmatpush1.bf16.msra.mxu0 %v766
      %786 = vmatprep.subr.bf16.mxu0 0
      %787 = vmatpush1.bf16.msra.mxu0 %v767
      %788 = vmatprep.subr.bf16.mxu0 0
      %789 = vmatpush1.bf16.msra.mxu0 %v768
      %790 = vmatprep.subr.bf16.mxu0 0
      %791 = vmatpush1.bf16.msra.mxu0 %v769
      %792 = vmatprep.subr.bf16.mxu0 0
      %793 = vmatpush1.bf16.msra.mxu0 %v770
      %794 = vmatprep.subr.bf16.mxu0 0
      %795 = vmatpush1.bf16.msra.mxu0 %v771
      %796 = vmatprep.subr.bf16.mxu0 0
      %797 = vmatpush1.bf16.msra.mxu0 0
      %798 = vmatprep.subr.bf16.mxu0 0
      %799 = vmatpush1.bf16.msra.mxu0 0
      %800 = vmatprep.subr.bf16.mxu0 0
      %801 = vmatpush1.bf16.msra.mxu0 0
      %802 = vmatprep.subr.bf16.mxu0 0
      %803 = vmatpush1.bf16.msra.mxu0 0
      %804 = vmatprep.subr.bf16.mxu0 0
      %805 = vmatpush1.bf16.msra.mxu0 0
      %806 = vmatprep.subr.bf16.mxu0 0
      %807 = vmatpush1.bf16.msra.mxu0 0
      %808 = vmatprep.subr.bf16.mxu0 0
      %809 = vmatpush1.bf16.msra.mxu0 0
      %810 = vmatprep.subr.bf16.mxu0 0
      %811 = vmatpush1.bf16.msra.mxu0 0
      %812 = vmatprep.mubr.bf16.mxu0 0
      %813 = vmatmul.mubr.bf16.gmra.mrb[0].mxu0 %v700
      %v814 = vpop.f32.mrb[0].mxu0
      %v815 = vadd.f32 0.0, %v814
      %v816 = vpop.f32.mrb[0].mxu0
      %v817 = vpop.f32.mrb[0].mxu0
      %v818 = vadd.f32 0.0, %v817
      %v819 = vpop.f32.mrb[0].mxu0
      %820 = vmatprep.mubr.bf16.mxu0 0
      %821 = vmatmul.mubr.bf16.gmra.mrb[0].mxu0 %v701
      %v822 = vpop.f32.mrb[0].mxu0
      %v823 = vadd.f32 0.0, %v822
      %v824 = vpop.f32.mrb[0].mxu0
      %v825 = vpop.f32.mrb[0].mxu0
      %v826 = vadd.f32 0.0, %v825
      %v827 = vpop.f32.mrb[0].mxu0
      %828 = vmatprep.mubr.bf16.mxu0 0
      %829 = vmatmul.mubr.bf16.gmra.mrb[0].mxu0 %v702
      %v830 = vpop.f32.mrb[0].mxu0
      %v831 = vadd.f32 0.0, %v830
      %v832 = vpop.f32.mrb[0].mxu0
      %v833 = vpop.f32.mrb[0].mxu0
      %v834 = vadd.f32 0.0, %v833
      %v835 = vpop.f32.mrb[0].mxu0
      %836 = vmatprep.mubr.bf16.mxu0 0
      %837 = vmatmul.mubr.bf16.gmra.mrb[0].mxu0 %v703
      %v838 = vpop.f32.mrb[0].mxu0
      %v839 = vadd.f32 0.0, %v838
      %v840 = vpop.f32.mrb[0].mxu0
      %v841 = vpop.f32.mrb[0].mxu0
      %v842 = vadd.f32 0.0, %v841
      %v843 = vpop.f32.mrb[0].mxu0
      %844 = vmatprep.mubr.bf16.mxu0 0
      %845 = vmatmul.mubr.bf16.gmra.mrb[0].mxu0 %v704
      %v846 = vpop.f32.mrb[0].mxu0
      %v847 = vadd.f32 0.0, %v846
      %v848 = vpop.f32.mrb[0].mxu0
      %v849 = vpop.f32.mrb[0].mxu0
      %v850 = vadd.f32 0.0, %v849
      %v851 = vpop.f32.mrb[0].mxu0
      %852 = vmatprep.mubr.bf16.mxu0 0
      %853 = vmatmul.mubr.bf16.gmra.mrb[0].mxu0 %v705
      %v854 = vpop.f32.mrb[0].mxu0
      %v855 = vadd.f32 0.0, %v854
      %v856 = vpop.f32.mrb[0].mxu0
      %v857 = vpop.f32.mrb[0].mxu0
      %v858 = vadd.f32 0.0, %v857
      %v859 = vpop.f32.mrb[0].mxu0
      %860 = vmatprep.mubr.bf16.mxu0 0
      %861 = vmatmul.mubr.bf16.gmra.mrb[0].mxu0 %v706
      %v862 = vpop.f32.mrb[0].mxu0
      %v863 = vadd.f32 0.0, %v862
      %v864 = vpop.f32.mrb[0].mxu0
      %v865 = vpop.f32.mrb[0].mxu0
      %v866 = vadd.f32 0.0, %v865
      %v867 = vpop.f32.mrb[0].mxu0
      %868 = vmatprep.mubr.bf16.mxu0 0
      %869 = vmatmul.mubr.bf16.gmra.mrb[0].mxu0 %v707
      %v870 = vpop.f32.mrb[0].mxu0
      %v871 = vadd.f32 0.0, %v870
      %v872 = vpop.f32.mrb[0].mxu0
      %v873 = vpop.f32.mrb[0].mxu0
      %v874 = vadd.f32 0.0, %v873
      %v875 = vpop.f32.mrb[0].mxu0
      %876 = vmatprep.mubr.bf16.mxu0 0
      %877 = vmatmul.mubr.bf16.gmra.mrb[0].mxu0 %v708
      %v878 = vpop.f32.mrb[0].mxu0
      %v879 = vadd.f32 0.0, %v878
      %v880 = vpop.f32.mrb[0].mxu0
      %v881 = vpop.f32.mrb[0].mxu0
      %v882 = vadd.f32 0.0, %v881
      %v883 = vpop.f32.mrb[0].mxu0
      %884 = vmatprep.mubr.bf16.mxu0 0
      %885 = vmatmul.mubr.bf16.gmra.mrb[0].mxu0 %v709
      %v886 = vpop.f32.mrb[0].mxu0
      %v887 = vadd.f32 0.0, %v886
      %v888 = vpop.f32.mrb[0].mxu0
      %v889 = vpop.f32.mrb[0].mxu0
      %v890 = vadd.f32 0.0, %v889
      %v891 = vpop.f32.mrb[0].mxu0
      %892 = vmatprep.mubr.bf16.mxu0 0
      %893 = vmatmul.mubr.bf16.gmra.mrb[0].mxu0 %v710
      %v894 = vpop.f32.mrb[0].mxu0
      %v895 = vadd.f32 0.0, %v894
      %v896 = vpop.f32.mrb[0].mxu0
      %v897 = vpop.f32.mrb[0].mxu0
      %v898 = vadd.f32 0.0, %v897
      %v899 = vpop.f32.mrb[0].mxu0
      %900 = vmatprep.mubr.bf16.mxu0 0
      %901 = vmatmul.mubr.bf16.gmra.mrb[0].mxu0 %v711
      %v902 = vpop.f32.mrb[0].mxu0
      %v903 = vadd.f32 0.0, %v902
      %v904 = vpop.f32.mrb[0].mxu0
      %v905 = vpop.f32.mrb[0].mxu0
      %v906 = vadd.f32 0.0, %v905
      %v907 = vpop.f32.mrb[0].mxu0
      %908 = vmatprep.mubr.bf16.mxu0 0
      %909 = vmatmul.mubr.bf16.gmra.mrb[0].mxu0 %v712
      %v910 = vpop.f32.mrb[0].mxu0
      %v911 = vadd.f32 0.0, %v910
      %v912 = vpop.f32.mrb[0].mxu0
      %v913 = vpop.f32.mrb[0].mxu0
      %v914 = vadd.f32 0.0, %v913
      %v915 = vpop.f32.mrb[0].mxu0
      %916 = vmatprep.mubr.bf16.mxu0 0
      %917 = vmatmul.mubr.bf16.gmra.mrb[0].mxu0 %v713
      %v918 = vpop.f32.mrb[0].mxu0
      %v919 = vadd.f32 0.0, %v918
      %v920 = vpop.f32.mrb[0].mxu0
      %v921 = vpop.f32.mrb[0].mxu0
      %v922 = vadd.f32 0.0, %v921
      %v923 = vpop.f32.mrb[0].mxu0
      %924 = vmatprep.mubr.bf16.mxu0 0
      %925 = vmatmul.mubr.bf16.gmra.mrb[0].mxu0 %v714
      %v926 = vpop.f32.mrb[0].mxu0
      %v927 = vadd.f32 0.0, %v926
      %v928 = vpop.f32.mrb[0].mxu0
      %v929 = vpop.f32.mrb[0].mxu0
      %v930 = vadd.f32 0.0, %v929
      %v931 = vpop.f32.mrb[0].mxu0
      %932 = vmatprep.mubr.bf16.mxu0 0
      %933 = vmatmul.mubr.bf16.gmra.mrb[0].mxu0 %v715
      %v934 = vpop.f32.mrb[0].mxu0
      %v935 = vadd.f32 0.0, %v934
      %v936 = vpop.f32.mrb[0].mxu0
      %v937 = vpop.f32.mrb[0].mxu0
      %v938 = vadd.f32 0.0, %v937
      %v939 = vpop.f32.mrb[0].mxu0
      %940 = vdwg.mxu0
      %v973 = vunpack.c.l.b16 %v194
      %v974 = vunpack.c.l.b16 %v195
      %v975 = vunpack.c.l.b16 %v197
      %v976 = vunpack.c.l.b16 %v198
      %v977 = vunpack.c.l.b16 %v200
      %v978 = vunpack.c.l.b16 %v201
      %v979 = vunpack.c.l.b16 %v203
      %v980 = vunpack.c.l.b16 %v204
      %v981 = vunpack.c.l.b16 %v206
      %v982 = vunpack.c.l.b16 %v207
      %v983 = vunpack.c.l.b16 %v209
      %v984 = vunpack.c.l.b16 %v210
      %v985 = vunpack.c.l.b16 %v212
      %v986 = vunpack.c.l.b16 %v213
      %v987 = vunpack.c.l.b16 %v215
      %v988 = vunpack.c.l.b16 %v216
      %v989 = vunpack.c.l.b16 %v218
      %v990 = vunpack.c.l.b16 %v219
      %v991 = vunpack.c.l.b16 %v221
      %v992 = vunpack.c.l.b16 %v222
      %v993 = vunpack.c.l.b16 %v224
      %v994 = vunpack.c.l.b16 %v225
      %v995 = vunpack.c.l.b16 %v227
      %v996 = vunpack.c.l.b16 %v228
      %v997 = vunpack.c.l.b16 %v230
      %v998 = vunpack.c.l.b16 %v231
      %v999 = vunpack.c.l.b16 %v233
      %v1000 = vunpack.c.l.b16 %v234
      %v1001 = vunpack.c.l.b16 %v236
      %v1002 = vunpack.c.l.b16 %v237
      %v1003 = vunpack.c.l.b16 %v239
      %v1004 = vunpack.c.l.b16 %v240
      %v1005 = vpack.c.b16 %v974, %v973
      %v1006 = vpack.c.b16 %v976, %v975
      %v1007 = vpack.c.b16 %v978, %v977
      %v1008 = vpack.c.b16 %v980, %v979
      %v1009 = vpack.c.b16 %v982, %v981
      %v1010 = vpack.c.b16 %v984, %v983
      %v1011 = vpack.c.b16 %v986, %v985
      %v1012 = vpack.c.b16 %v988, %v987
      %v1013 = vpack.c.b16 %v990, %v989
      %v1014 = vpack.c.b16 %v992, %v991
      %v1015 = vpack.c.b16 %v994, %v993
      %v1016 = vpack.c.b16 %v996, %v995
      %v1017 = vpack.c.b16 %v998, %v997
      %v1018 = vpack.c.b16 %v1000, %v999
      %v1019 = vpack.c.b16 %v1002, %v1001
      %v1020 = vpack.c.b16 %v1004, %v1003
      %v1053 = vunpack.c.l.b16 %v248
      %v1054 = vunpack.c.l.b16 %v249
      %v1055 = vunpack.c.l.b16 %v250
      %v1056 = vunpack.c.l.b16 %v251
      %v1057 = vunpack.c.l.b16 %v252
      %v1058 = vunpack.c.l.b16 %v253
      %v1059 = vunpack.c.l.b16 %v254
      %v1060 = vunpack.c.l.b16 %v255
      %v1061 = vunpack.c.l.b16 %v256
      %v1062 = vunpack.c.l.b16 %v257
      %v1063 = vunpack.c.l.b16 %v258
      %v1064 = vunpack.c.l.b16 %v259
      %v1065 = vunpack.c.l.b16 %v260
      %v1066 = vunpack.c.l.b16 %v261
      %v1067 = vunpack.c.l.b16 %v262
      %v1068 = vunpack.c.l.b16 %v263
      %v1069 = vpack.c.b16 %v1054, %v1053
      %v1070 = vpack.c.b16 %v1056, %v1055
      %v1071 = vpack.c.b16 %v1058, %v1057
      %v1072 = vpack.c.b16 %v1060, %v1059
      %v1073 = vpack.c.b16 %v1062, %v1061
      %v1074 = vpack.c.b16 %v1064, %v1063
      %v1075 = vpack.c.b16 %v1066, %v1065
      %v1076 = vpack.c.b16 %v1068, %v1067
      %1085 = vmatprep.subr.bf16.mxu0 0
      %1086 = vmatpush1.bf16.msra.mxu0 %v1069
      %1087 = vmatprep.subr.bf16.mxu0 0
      %1088 = vmatpush1.bf16.msra.mxu0 %v1070
      %1089 = vmatprep.subr.bf16.mxu0 0
      %1090 = vmatpush1.bf16.msra.mxu0 %v1071
      %1091 = vmatprep.subr.bf16.mxu0 0
      %1092 = vmatpush1.bf16.msra.mxu0 %v1072
      %1093 = vmatprep.subr.bf16.mxu0 0
      %1094 = vmatpush1.bf16.msra.mxu0 %v1073
      %1095 = vmatprep.subr.bf16.mxu0 0
      %1096 = vmatpush1.bf16.msra.mxu0 %v1074
      %1097 = vmatprep.subr.bf16.mxu0 0
      %1098 = vmatpush1.bf16.msra.mxu0 %v1075
      %1099 = vmatprep.subr.bf16.mxu0 0
      %1100 = vmatpush1.bf16.msra.mxu0 %v1076
      %1101 = vmatprep.subr.bf16.mxu0 0
      %1102 = vmatpush1.bf16.msra.mxu0 0
      %1103 = vmatprep.subr.bf16.mxu0 0
      %1104 = vmatpush1.bf16.msra.mxu0 0
      %1105 = vmatprep.subr.bf16.mxu0 0
      %1106 = vmatpush1.bf16.msra.mxu0 0
      %1107 = vmatprep.subr.bf16.mxu0 0
      %1108 = vmatpush1.bf16.msra.mxu0 0
      %1109 = vmatprep.subr.bf16.mxu0 0
      %1110 = vmatpush1.bf16.msra.mxu0 0
      %1111 = vmatprep.subr.bf16.mxu0 0
      %1112 = vmatpush1.bf16.msra.mxu0 0
      %1113 = vmatprep.subr.bf16.mxu0 0
      %1114 = vmatpush1.bf16.msra.mxu0 0
      %1115 = vmatprep.subr.bf16.mxu0 0
      %1116 = vmatpush1.bf16.msra.mxu0 0
      %1117 = vmatprep.mubr.bf16.mxu0 0
      %1118 = vmatmul.mubr.bf16.gmra.mrb[0].mxu0 %v1005
      %v1119 = vpop.f32.mrb[0].mxu0
      %v1120 = vadd.f32 %v815, %v1119
      %v1121 = vpop.f32.mrb[0].mxu0
      %v1122 = vpop.f32.mrb[0].mxu0
      %v1123 = vadd.f32 %v818, %v1122
      %v1124 = vpop.f32.mrb[0].mxu0
      %1125 = vmatprep.mubr.bf16.mxu0 0
      %1126 = vmatmul.mubr.bf16.gmra.mrb[0].mxu0 %v1006
      %v1127 = vpop.f32.mrb[0].mxu0
      %v1128 = vadd.f32 %v823, %v1127
      %v1129 = vpop.f32.mrb[0].mxu0
      %v1130 = vpop.f32.mrb[0].mxu0
      %v1131 = vadd.f32 %v826, %v1130
      %v1132 = vpop.f32.mrb[0].mxu0
      %1133 = vmatprep.mubr.bf16.mxu0 0
      %1134 = vmatmul.mubr.bf16.gmra.mrb[0].mxu0 %v1007
      %v1135 = vpop.f32.mrb[0].mxu0
      %v1136 = vadd.f32 %v831, %v1135
      %v1137 = vpop.f32.mrb[0].mxu0
      %v1138 = vpop.f32.mrb[0].mxu0
      %v1139 = vadd.f32 %v834, %v1138
      %v1140 = vpop.f32.mrb[0].mxu0
      %1141 = vmatprep.mubr.bf16.mxu0 0
      %1142 = vmatmul.mubr.bf16.gmra.mrb[0].mxu0 %v1008
      %v1143 = vpop.f32.mrb[0].mxu0
      %v1144 = vadd.f32 %v839, %v1143
      %v1145 = vpop.f32.mrb[0].mxu0
      %v1146 = vpop.f32.mrb[0].mxu0
      %v1147 = vadd.f32 %v842, %v1146
      %v1148 = vpop.f32.mrb[0].mxu0
      %1149 = vmatprep.mubr.bf16.mxu0 0
      %1150 = vmatmul.mubr.bf16.gmra.mrb[0].mxu0 %v1009
      %v1151 = vpop.f32.mrb[0].mxu0
      %v1152 = vadd.f32 %v847, %v1151
      %v1153 = vpop.f32.mrb[0].mxu0
      %v1154 = vpop.f32.mrb[0].mxu0
      %v1155 = vadd.f32 %v850, %v1154
      %v1156 = vpop.f32.mrb[0].mxu0
      %1157 = vmatprep.mubr.bf16.mxu0 0
      %1158 = vmatmul.mubr.bf16.gmra.mrb[0].mxu0 %v1010
      %v1159 = vpop.f32.mrb[0].mxu0
      %v1160 = vadd.f32 %v855, %v1159
      %v1161 = vpop.f32.mrb[0].mxu0
      %v1162 = vpop.f32.mrb[0].mxu0
      %v1163 = vadd.f32 %v858, %v1162
      %v1164 = vpop.f32.mrb[0].mxu0
      %1165 = vmatprep.mubr.bf16.mxu0 0
      %1166 = vmatmul.mubr.bf16.gmra.mrb[0].mxu0 %v1011
      %v1167 = vpop.f32.mrb[0].mxu0
      %v1168 = vadd.f32 %v863, %v1167
      %v1169 = vpop.f32.mrb[0].mxu0
      %v1170 = vpop.f32.mrb[0].mxu0
      %v1171 = vadd.f32 %v866, %v1170
      %v1172 = vpop.f32.mrb[0].mxu0
      %1173 = vmatprep.mubr.bf16.mxu0 0
      %1174 = vmatmul.mubr.bf16.gmra.mrb[0].mxu0 %v1012
      %v1175 = vpop.f32.mrb[0].mxu0
      %v1176 = vadd.f32 %v871, %v1175
      %v1177 = vpop.f32.mrb[0].mxu0
      %v1178 = vpop.f32.mrb[0].mxu0
      %v1179 = vadd.f32 %v874, %v1178
      %v1180 = vpop.f32.mrb[0].mxu0
      %1181 = vmatprep.mubr.bf16.mxu0 0
      %1182 = vmatmul.mubr.bf16.gmra.mrb[0].mxu0 %v1013
      %v1183 = vpop.f32.mrb[0].mxu0
      %v1184 = vadd.f32 %v879, %v1183
      %v1185 = vpop.f32.mrb[0].mxu0
      %v1186 = vpop.f32.mrb[0].mxu0
      %v1187 = vadd.f32 %v882, %v1186
      %v1188 = vpop.f32.mrb[0].mxu0
      %1189 = vmatprep.mubr.bf16.mxu0 0
      %1190 = vmatmul.mubr.bf16.gmra.mrb[0].mxu0 %v1014
      %v1191 = vpop.f32.mrb[0].mxu0
      %v1192 = vadd.f32 %v887, %v1191
      %v1193 = vpop.f32.mrb[0].mxu0
      %v1194 = vpop.f32.mrb[0].mxu0
      %v1195 = vadd.f32 %v890, %v1194
      %v1196 = vpop.f32.mrb[0].mxu0
      %1197 = vmatprep.mubr.bf16.mxu0 0
      %1198 = vmatmul.mubr.bf16.gmra.mrb[0].mxu0 %v1015
      %v1199 = vpop.f32.mrb[0].mxu0
      %v1200 = vadd.f32 %v895, %v1199
      %v1201 = vpop.f32.mrb[0].mxu0
      %v1202 = vpop.f32.mrb[0].mxu0
      %v1203 = vadd.f32 %v898, %v1202
      %v1204 = vpop.f32.mrb[0].mxu0
      %1205 = vmatprep.mubr.bf16.mxu0 0
      %1206 = vmatmul.mubr.bf16.gmra.mrb[0].mxu0 %v1016
      %v1207 = vpop.f32.mrb[0].mxu0
      %v1208 = vadd.f32 %v903, %v1207
      %v1209 = vpop.f32.mrb[0].mxu0
      %v1210 = vpop.f32.mrb[0].mxu0
      %v1211 = vadd.f32 %v906, %v1210
      %v1212 = vpop.f32.mrb[0].mxu0
      %1213 = vmatprep.mubr.bf16.mxu0 0
      %1214 = vmatmul.mubr.bf16.gmra.mrb[0].mxu0 %v1017
      %v1215 = vpop.f32.mrb[0].mxu0
      %v1216 = vadd.f32 %v911, %v1215
      %v1217 = vpop.f32.mrb[0].mxu0
      %v1218 = vpop.f32.mrb[0].mxu0
      %v1219 = vadd.f32 %v914, %v1218
      %v1220 = vpop.f32.mrb[0].mxu0
      %1221 = vmatprep.mubr.bf16.mxu0 0
      %1222 = vmatmul.mubr.bf16.gmra.mrb[0].mxu0 %v1018
      %v1223 = vpop.f32.mrb[0].mxu0
      %v1224 = vadd.f32 %v919, %v1223
      %v1225 = vpop.f32.mrb[0].mxu0
      %v1226 = vpop.f32.mrb[0].mxu0
      %v1227 = vadd.f32 %v922, %v1226
      %v1228 = vpop.f32.mrb[0].mxu0
      %1229 = vmatprep.mubr.bf16.mxu0 0
      %1230 = vmatmul.mubr.bf16.gmra.mrb[0].mxu0 %v1019
      %v1231 = vpop.f32.mrb[0].mxu0
      %v1232 = vadd.f32 %v927, %v1231
      %v1233 = vpop.f32.mrb[0].mxu0
      %v1234 = vpop.f32.mrb[0].mxu0
      %v1235 = vadd.f32 %v930, %v1234
      %v1236 = vpop.f32.mrb[0].mxu0
      %1237 = vmatprep.mubr.bf16.mxu0 0
      %1238 = vmatmul.mubr.bf16.gmra.mrb[0].mxu0 %v1020
      %v1239 = vpop.f32.mrb[0].mxu0
      %v1240 = vadd.f32 %v935, %v1239
      %v1241 = vpop.f32.mrb[0].mxu0
      %v1242 = vpop.f32.mrb[0].mxu0
      %v1243 = vadd.f32 %v938, %v1242
      %v1244 = vpop.f32.mrb[0].mxu0
      %1245 = vdwg.mxu0
      %vm1262 = vcmask 1042432
      %vm1263 = vcmask 1046532
      %vm1264 = vmor %vm1262, %vm1263
      %v1265 = vrot.slane %v194, 5
      %v1266 = vrot.slane %v1265, 4
      %v1267 = vrot.slane %v195, 5
      %v1268 = vsel %vm1264, %v1266, %v1267
      %v1269 = vrot.slane %v1267, 4
      %v1270 = vrot.slane %v196, 5
      %v1271 = vsel %vm1264, %v1269, %v1270
      %v1272 = vrot.slane %v197, 5
      %v1273 = vrot.slane %v1272, 4
      %v1274 = vrot.slane %v198, 5
      %v1275 = vsel %vm1264, %v1273, %v1274
      %v1276 = vrot.slane %v1274, 4
      %v1277 = vrot.slane %v199, 5
      %v1278 = vsel %vm1264, %v1276, %v1277
      %v1279 = vrot.slane %v200, 5
      %v1280 = vrot.slane %v1279, 4
      %v1281 = vrot.slane %v201, 5
      %v1282 = vsel %vm1264, %v1280, %v1281
      %v1283 = vrot.slane %v1281, 4
      %v1284 = vrot.slane %v202, 5
      %v1285 = vsel %vm1264, %v1283, %v1284
      %v1286 = vrot.slane %v203, 5
      %v1287 = vrot.slane %v1286, 4
      %v1288 = vrot.slane %v204, 5
      %v1289 = vsel %vm1264, %v1287, %v1288
      %v1290 = vrot.slane %v1288, 4
      %v1291 = vrot.slane %v205, 5
      %v1292 = vsel %vm1264, %v1290, %v1291
      %v1293 = vrot.slane %v206, 5
      %v1294 = vrot.slane %v1293, 4
      %v1295 = vrot.slane %v207, 5
      %v1296 = vsel %vm1264, %v1294, %v1295
      %v1297 = vrot.slane %v1295, 4
      %v1298 = vrot.slane %v208, 5
      %v1299 = vsel %vm1264, %v1297, %v1298
      %v1300 = vrot.slane %v209, 5
      %v1301 = vrot.slane %v1300, 4
      %v1302 = vrot.slane %v210, 5
      %v1303 = vsel %vm1264, %v1301, %v1302
      %v1304 = vrot.slane %v1302, 4
      %v1305 = vrot.slane %v211, 5
      %v1306 = vsel %vm1264, %v1304, %v1305
      %v1307 = vrot.slane %v212, 5
      %v1308 = vrot.slane %v1307, 4
      %v1309 = vrot.slane %v213, 5
      %v1310 = vsel %vm1264, %v1308, %v1309
      %v1311 = vrot.slane %v1309, 4
      %v1312 = vrot.slane %v214, 5
      %v1313 = vsel %vm1264, %v1311, %v1312
      %v1314 = vrot.slane %v215, 5
      %v1315 = vrot.slane %v1314, 4
      %v1316 = vrot.slane %v216, 5
      %v1317 = vsel %vm1264, %v1315, %v1316
      %v1318 = vrot.slane %v1316, 4
      %v1319 = vrot.slane %v217, 5
      %v1320 = vsel %vm1264, %v1318, %v1319
      %v1321 = vrot.slane %v218, 5
      %v1322 = vrot.slane %v1321, 4
      %v1323 = vrot.slane %v219, 5
      %v1324 = vsel %vm1264, %v1322, %v1323
      %v1325 = vrot.slane %v1323, 4
      %v1326 = vrot.slane %v220, 5
      %v1327 = vsel %vm1264, %v1325, %v1326
      %v1328 = vrot.slane %v221, 5
      %v1329 = vrot.slane %v1328, 4
      %v1330 = vrot.slane %v222, 5
      %v1331 = vsel %vm1264, %v1329, %v1330
      %v1332 = vrot.slane %v1330, 4
      %v1333 = vrot.slane %v223, 5
      %v1334 = vsel %vm1264, %v1332, %v1333
      %v1335 = vrot.slane %v224, 5
      %v1336 = vrot.slane %v1335, 4
      %v1337 = vrot.slane %v225, 5
      %v1338 = vsel %vm1264, %v1336, %v1337
      %v1339 = vrot.slane %v1337, 4
      %v1340 = vrot.slane %v226, 5
      %v1341 = vsel %vm1264, %v1339, %v1340
      %v1342 = vrot.slane %v227, 5
      %v1343 = vrot.slane %v1342, 4
      %v1344 = vrot.slane %v228, 5
      %v1345 = vsel %vm1264, %v1343, %v1344
      %v1346 = vrot.slane %v1344, 4
      %v1347 = vrot.slane %v229, 5
      %v1348 = vsel %vm1264, %v1346, %v1347
      %v1349 = vrot.slane %v230, 5
      %v1350 = vrot.slane %v1349, 4
      %v1351 = vrot.slane %v231, 5
      %v1352 = vsel %vm1264, %v1350, %v1351
      %v1353 = vrot.slane %v1351, 4
      %v1354 = vrot.slane %v232, 5
      %v1355 = vsel %vm1264, %v1353, %v1354
      %v1356 = vrot.slane %v233, 5
      %v1357 = vrot.slane %v1356, 4
      %v1358 = vrot.slane %v234, 5
      %v1359 = vsel %vm1264, %v1357, %v1358
      %v1360 = vrot.slane %v1358, 4
      %v1361 = vrot.slane %v235, 5
      %v1362 = vsel %vm1264, %v1360, %v1361
      %v1363 = vrot.slane %v236, 5
      %v1364 = vrot.slane %v1363, 4
      %v1365 = vrot.slane %v237, 5
      %v1366 = vsel %vm1264, %v1364, %v1365
      %v1367 = vrot.slane %v1365, 4
      %v1368 = vrot.slane %v238, 5
      %v1369 = vsel %vm1264, %v1367, %v1368
      %v1370 = vrot.slane %v239, 5
      %v1371 = vrot.slane %v1370, 4
      %v1372 = vrot.slane %v240, 5
      %v1373 = vsel %vm1264, %v1371, %v1372
      %v1374 = vrot.slane %v1372, 4
      %v1375 = vrot.slane %v241, 5
      %v1376 = vsel %vm1264, %v1374, %v1375
      %s1377 = scalar_lea.vmem %s1, 128
      %v1378 = vld [vmem:[%s1377] sm:$0xf]
      %v1379 = vld [vmem:[%s1377 + $0x4] sm:$0xf]
      %v1380 = vld [vmem:[%s1377 + $0x8] sm:$0xf]
      %v1381 = vld [vmem:[%s1377 + $0xc] sm:$0xf]
      %v1382 = vld [vmem:[%s1377 + $0x10] sm:$0xf]
      %v1383 = vld [vmem:[%s1377 + $0x14] sm:$0xf]
      %v1384 = vld [vmem:[%s1377 + $0x18] sm:$0xf]
      %v1385 = vld [vmem:[%s1377 + $0x1c] sm:$0xf]
      %v1386 = vld [vmem:[%s1377 + $0x20] sm:$0xf]
      %v1387 = vld [vmem:[%s1377 + $0x24] sm:$0xf]
      %v1388 = vld [vmem:[%s1377 + $0x28] sm:$0xf]
      %v1389 = vld [vmem:[%s1377 + $0x2c] sm:$0xf]
      %v1390 = vld [vmem:[%s1377 + $0x30] sm:$0xf]
      %v1391 = vld [vmem:[%s1377 + $0x34] sm:$0xf]
      %v1392 = vld [vmem:[%s1377 + $0x38] sm:$0xf]
      %v1393 = vld [vmem:[%s1377 + $0x3c] sm:$0xf]
      %v1394 = vunpack.c.l.b16 %v1268
      %v1395 = vunpack.c.l.b16 %v1271
      %v1396 = vunpack.c.l.b16 %v1275
      %v1397 = vunpack.c.l.b16 %v1278
      %v1398 = vunpack.c.l.b16 %v1282
      %v1399 = vunpack.c.l.b16 %v1285
      %v1400 = vunpack.c.l.b16 %v1289
      %v1401 = vunpack.c.l.b16 %v1292
      %v1402 = vunpack.c.l.b16 %v1296
      %v1403 = vunpack.c.l.b16 %v1299
      %v1404 = vunpack.c.l.b16 %v1303
      %v1405 = vunpack.c.l.b16 %v1306
      %v1406 = vunpack.c.l.b16 %v1310
      %v1407 = vunpack.c.l.b16 %v1313
      %v1408 = vunpack.c.l.b16 %v1317
      %v1409 = vunpack.c.l.b16 %v1320
      %v1410 = vunpack.c.l.b16 %v1324
      %v1411 = vunpack.c.l.b16 %v1327
      %v1412 = vunpack.c.l.b16 %v1331
      %v1413 = vunpack.c.l.b16 %v1334
      %v1414 = vunpack.c.l.b16 %v1338
      %v1415 = vunpack.c.l.b16 %v1341
      %v1416 = vunpack.c.l.b16 %v1345
      %v1417 = vunpack.c.l.b16 %v1348
      %v1418 = vunpack.c.l.b16 %v1352
      %v1419 = vunpack.c.l.b16 %v1355
      %v1420 = vunpack.c.l.b16 %v1359
      %v1421 = vunpack.c.l.b16 %v1362
      %v1422 = vunpack.c.l.b16 %v1366
      %v1423 = vunpack.c.l.b16 %v1369
      %v1424 = vunpack.c.l.b16 %v1373
      %v1425 = vunpack.c.l.b16 %v1376
      %v1426 = vpack.c.b16 %v1395, %v1394
      %v1427 = vpack.c.b16 %v1397, %v1396
      %v1428 = vpack.c.b16 %v1399, %v1398
      %v1429 = vpack.c.b16 %v1401, %v1400
      %v1430 = vpack.c.b16 %v1403, %v1402
      %v1431 = vpack.c.b16 %v1405, %v1404
      %v1432 = vpack.c.b16 %v1407, %v1406
      %v1433 = vpack.c.b16 %v1409, %v1408
      %v1434 = vpack.c.b16 %v1411, %v1410
      %v1435 = vpack.c.b16 %v1413, %v1412
      %v1436 = vpack.c.b16 %v1415, %v1414
      %v1437 = vpack.c.b16 %v1417, %v1416
      %v1438 = vpack.c.b16 %v1419, %v1418
      %v1439 = vpack.c.b16 %v1421, %v1420
      %v1440 = vpack.c.b16 %v1423, %v1422
      %v1441 = vpack.c.b16 %v1425, %v1424
      %v1474 = vunpack.c.l.b16 %v1378
      %v1475 = vunpack.c.l.b16 %v1379
      %v1476 = vunpack.c.l.b16 %v1380
      %v1477 = vunpack.c.l.b16 %v1381
      %v1478 = vunpack.c.l.b16 %v1382
      %v1479 = vunpack.c.l.b16 %v1383
      %v1480 = vunpack.c.l.b16 %v1384
      %v1481 = vunpack.c.l.b16 %v1385
      %v1482 = vunpack.c.l.b16 %v1386
      %v1483 = vunpack.c.l.b16 %v1387
      %v1484 = vunpack.c.l.b16 %v1388
      %v1485 = vunpack.c.l.b16 %v1389
      %v1486 = vunpack.c.l.b16 %v1390
      %v1487 = vunpack.c.l.b16 %v1391
      %v1488 = vunpack.c.l.b16 %v1392
      %v1489 = vunpack.c.l.b16 %v1393
      %v1490 = vpack.c.b16 %v1475, %v1474
      %v1491 = vpack.c.b16 %v1477, %v1476
      %v1492 = vpack.c.b16 %v1479, %v1478
      %v1493 = vpack.c.b16 %v1481, %v1480
      %v1494 = vpack.c.b16 %v1483, %v1482
      %v1495 = vpack.c.b16 %v1485, %v1484
      %v1496 = vpack.c.b16 %v1487, %v1486
      %v1497 = vpack.c.b16 %v1489, %v1488
      %1506 = vmatprep.subr.bf16.mxu0 0
      %1507 = vmatpush1.bf16.msra.mxu0 %v1490
      %1508 = vmatprep.subr.bf16.mxu0 0
      %1509 = vmatpush1.bf16.msra.mxu0 %v1491
      %1510 = vmatprep.subr.bf16.mxu0 0
      %1511 = vmatpush1.bf16.msra.mxu0 %v1492
      %1512 = vmatprep.subr.bf16.mxu0 0
      %1513 = vmatpush1.bf16.msra.mxu0 %v1493
      %1514 = vmatprep.subr.bf16.mxu0 0
      %1515 = vmatpush1.bf16.msra.mxu0 %v1494
      %1516 = vmatprep.subr.bf16.mxu0 0
      %1517 = vmatpush1.bf16.msra.mxu0 %v1495
      %1518 = vmatprep.subr.bf16.mxu0 0
      %1519 = vmatpush1.bf16.msra.mxu0 %v1496
      %1520 = vmatprep.subr.bf16.mxu0 0
      %1521 = vmatpush1.bf16.msra.mxu0 %v1497
      %1522 = vmatprep.subr.bf16.mxu0 0
      %1523 = vmatpush1.bf16.msra.mxu0 0
      %1524 = vmatprep.subr.bf16.mxu0 0
      %1525 = vmatpush1.bf16.msra.mxu0 0
      %1526 = vmatprep.subr.bf16.mxu0 0
      %1527 = vmatpush1.bf16.msra.mxu0 0
      %1528 = vmatprep.subr.bf16.mxu0 0
      %1529 = vmatpush1.bf16.msra.mxu0 0
      %1530 = vmatprep.subr.bf16.mxu0 0
      %1531 = vmatpush1.bf16.msra.mxu0 0
      %1532 = vmatprep.subr.bf16.mxu0 0
      %1533 = vmatpush1.bf16.msra.mxu0 0
      %1534 = vmatprep.subr.bf16.mxu0 0
      %1535 = vmatpush1.bf16.msra.mxu0 0
      %1536 = vmatprep.subr.bf16.mxu0 0
      %1537 = vmatpush1.bf16.msra.mxu0 0
      %1538 = vmatprep.mubr.bf16.mxu0 0
      %1539 = vmatmul.mubr.bf16.gmra.mrb[0].mxu0 %v1426
      %v1540 = vpop.f32.mrb[0].mxu0
      %v1541 = vadd.f32 0.0, %v1540
      %v1542 = vpop.f32.mrb[0].mxu0
      %v1543 = vpop.f32.mrb[0].mxu0
      %v1544 = vadd.f32 0.0, %v1543
      %v1545 = vpop.f32.mrb[0].mxu0
      %1546 = vmatprep.mubr.bf16.mxu0 0
      %1547 = vmatmul.mubr.bf16.gmra.mrb[0].mxu0 %v1427
      %v1548 = vpop.f32.mrb[0].mxu0
      %v1549 = vadd.f32 0.0, %v1548
      %v1550 = vpop.f32.mrb[0].mxu0
      %v1551 = vpop.f32.mrb[0].mxu0
      %v1552 = vadd.f32 0.0, %v1551
      %v1553 = vpop.f32.mrb[0].mxu0
      %1554 = vmatprep.mubr.bf16.mxu0 0
      %1555 = vmatmul.mubr.bf16.gmra.mrb[0].mxu0 %v1428
      %v1556 = vpop.f32.mrb[0].mxu0
      %v1557 = vadd.f32 0.0, %v1556
      %v1558 = vpop.f32.mrb[0].mxu0
      %v1559 = vpop.f32.mrb[0].mxu0
      %v1560 = vadd.f32 0.0, %v1559
      %v1561 = vpop.f32.mrb[0].mxu0
      %1562 = vmatprep.mubr.bf16.mxu0 0
      %1563 = vmatmul.mubr.bf16.gmra.mrb[0].mxu0 %v1429
      %v1564 = vpop.f32.mrb[0].mxu0
      %v1565 = vadd.f32 0.0, %v1564
      %v1566 = vpop.f32.mrb[0].mxu0
      %v1567 = vpop.f32.mrb[0].mxu0
      %v1568 = vadd.f32 0.0, %v1567
      %v1569 = vpop.f32.mrb[0].mxu0
      %1570 = vmatprep.mubr.bf16.mxu0 0
      %1571 = vmatmul.mubr.bf16.gmra.mrb[0].mxu0 %v1430
      %v1572 = vpop.f32.mrb[0].mxu0
      %v1573 = vadd.f32 0.0, %v1572
      %v1574 = vpop.f32.mrb[0].mxu0
      %v1575 = vpop.f32.mrb[0].mxu0
      %v1576 = vadd.f32 0.0, %v1575
      %v1577 = vpop.f32.mrb[0].mxu0
      %1578 = vmatprep.mubr.bf16.mxu0 0
      %1579 = vmatmul.mubr.bf16.gmra.mrb[0].mxu0 %v1431
      %v1580 = vpop.f32.mrb[0].mxu0
      %v1581 = vadd.f32 0.0, %v1580
      %v1582 = vpop.f32.mrb[0].mxu0
      %v1583 = vpop.f32.mrb[0].mxu0
      %v1584 = vadd.f32 0.0, %v1583
      %v1585 = vpop.f32.mrb[0].mxu0
      %1586 = vmatprep.mubr.bf16.mxu0 0
      %1587 = vmatmul.mubr.bf16.gmra.mrb[0].mxu0 %v1432
      %v1588 = vpop.f32.mrb[0].mxu0
      %v1589 = vadd.f32 0.0, %v1588
      %v1590 = vpop.f32.mrb[0].mxu0
      %v1591 = vpop.f32.mrb[0].mxu0
      %v1592 = vadd.f32 0.0, %v1591
      %v1593 = vpop.f32.mrb[0].mxu0
      %1594 = vmatprep.mubr.bf16.mxu0 0
      %1595 = vmatmul.mubr.bf16.gmra.mrb[0].mxu0 %v1433
      %v1596 = vpop.f32.mrb[0].mxu0
      %v1597 = vadd.f32 0.0, %v1596
      %v1598 = vpop.f32.mrb[0].mxu0
      %v1599 = vpop.f32.mrb[0].mxu0
      %v1600 = vadd.f32 0.0, %v1599
      %v1601 = vpop.f32.mrb[0].mxu0
      %1602 = vmatprep.mubr.bf16.mxu0 0
      %1603 = vmatmul.mubr.bf16.gmra.mrb[0].mxu0 %v1434
      %v1604 = vpop.f32.mrb[0].mxu0
      %v1605 = vadd.f32 0.0, %v1604
      %v1606 = vpop.f32.mrb[0].mxu0
      %v1607 = vpop.f32.mrb[0].mxu0
      %v1608 = vadd.f32 0.0, %v1607
      %v1609 = vpop.f32.mrb[0].mxu0
      %1610 = vmatprep.mubr.bf16.mxu0 0
      %1611 = vmatmul.mubr.bf16.gmra.mrb[0].mxu0 %v1435
      %v1612 = vpop.f32.mrb[0].mxu0
      %v1613 = vadd.f32 0.0, %v1612
      %v1614 = vpop.f32.mrb[0].mxu0
      %v1615 = vpop.f32.mrb[0].mxu0
      %v1616 = vadd.f32 0.0, %v1615
      %v1617 = vpop.f32.mrb[0].mxu0
      %1618 = vmatprep.mubr.bf16.mxu0 0
      %1619 = vmatmul.mubr.bf16.gmra.mrb[0].mxu0 %v1436
      %v1620 = vpop.f32.mrb[0].mxu0
      %v1621 = vadd.f32 0.0, %v1620
      %v1622 = vpop.f32.mrb[0].mxu0
      %v1623 = vpop.f32.mrb[0].mxu0
      %v1624 = vadd.f32 0.0, %v1623
      %v1625 = vpop.f32.mrb[0].mxu0
      %1626 = vmatprep.mubr.bf16.mxu0 0
      %1627 = vmatmul.mubr.bf16.gmra.mrb[0].mxu0 %v1437
      %v1628 = vpop.f32.mrb[0].mxu0
      %v1629 = vadd.f32 0.0, %v1628
      %v1630 = vpop.f32.mrb[0].mxu0
      %v1631 = vpop.f32.mrb[0].mxu0
      %v1632 = vadd.f32 0.0, %v1631
      %v1633 = vpop.f32.mrb[0].mxu0
      %1634 = vmatprep.mubr.bf16.mxu0 0
      %1635 = vmatmul.mubr.bf16.gmra.mrb[0].mxu0 %v1438
      %v1636 = vpop.f32.mrb[0].mxu0
      %v1637 = vadd.f32 0.0, %v1636
      %v1638 = vpop.f32.mrb[0].mxu0
      %v1639 = vpop.f32.mrb[0].mxu0
      %v1640 = vadd.f32 0.0, %v1639
      %v1641 = vpop.f32.mrb[0].mxu0
      %1642 = vmatprep.mubr.bf16.mxu0 0
      %1643 = vmatmul.mubr.bf16.gmra.mrb[0].mxu0 %v1439
      %v1644 = vpop.f32.mrb[0].mxu0
      %v1645 = vadd.f32 0.0, %v1644
      %v1646 = vpop.f32.mrb[0].mxu0
      %v1647 = vpop.f32.mrb[0].mxu0
      %v1648 = vadd.f32 0.0, %v1647
      %v1649 = vpop.f32.mrb[0].mxu0
      %1650 = vmatprep.mubr.bf16.mxu0 0
      %1651 = vmatmul.mubr.bf16.gmra.mrb[0].mxu0 %v1440
      %v1652 = vpop.f32.mrb[0].mxu0
      %v1653 = vadd.f32 0.0, %v1652
      %v1654 = vpop.f32.mrb[0].mxu0
      %v1655 = vpop.f32.mrb[0].mxu0
      %v1656 = vadd.f32 0.0, %v1655
      %v1657 = vpop.f32.mrb[0].mxu0
      %1658 = vmatprep.mubr.bf16.mxu0 0
      %1659 = vmatmul.mubr.bf16.gmra.mrb[0].mxu0 %v1441
      %v1660 = vpop.f32.mrb[0].mxu0
      %v1661 = vadd.f32 0.0, %v1660
      %v1662 = vpop.f32.mrb[0].mxu0
      %v1663 = vpop.f32.mrb[0].mxu0
      %v1664 = vadd.f32 0.0, %v1663
      %v1665 = vpop.f32.mrb[0].mxu0
      %1666 = vdwg.mxu0
      %v1667 = vadd.f32 %v1120, %v1541
      %v1668 = vadd.f32 %v1123, %v1544
      %v1669 = vadd.f32 %v1128, %v1549
      %v1670 = vadd.f32 %v1131, %v1552
      %v1671 = vadd.f32 %v1136, %v1557
      %v1672 = vadd.f32 %v1139, %v1560
      %v1673 = vadd.f32 %v1144, %v1565
      %v1674 = vadd.f32 %v1147, %v1568
      %v1675 = vadd.f32 %v1152, %v1573
      %v1676 = vadd.f32 %v1155, %v1576
      %v1677 = vadd.f32 %v1160, %v1581
      %v1678 = vadd.f32 %v1163, %v1584
      %v1679 = vadd.f32 %v1168, %v1589
      %v1680 = vadd.f32 %v1171, %v1592
      %v1681 = vadd.f32 %v1176, %v1597
      %v1682 = vadd.f32 %v1179, %v1600
      %v1683 = vadd.f32 %v1184, %v1605
      %v1684 = vadd.f32 %v1187, %v1608
      %v1685 = vadd.f32 %v1192, %v1613
      %v1686 = vadd.f32 %v1195, %v1616
      %v1687 = vadd.f32 %v1200, %v1621
      %v1688 = vadd.f32 %v1203, %v1624
      %v1689 = vadd.f32 %v1208, %v1629
      %v1690 = vadd.f32 %v1211, %v1632
      %v1691 = vadd.f32 %v1216, %v1637
      %v1692 = vadd.f32 %v1219, %v1640
      %v1693 = vadd.f32 %v1224, %v1645
      %v1694 = vadd.f32 %v1227, %v1648
      %v1695 = vadd.f32 %v1232, %v1653
      %v1696 = vadd.f32 %v1235, %v1656
      %v1697 = vadd.f32 %v1240, %v1661
      %v1698 = vadd.f32 %v1243, %v1664
      %s1699 = scalar_lea.vmem %s1, 192
      %v1700 = vld [vmem:[%s1699] sm:$0xf]
      %v1701 = vld [vmem:[%s1699 + $0x4] sm:$0xf]
      %v1702 = vld [vmem:[%s1699 + $0x8] sm:$0xf]
      %v1703 = vld [vmem:[%s1699 + $0xc] sm:$0xf]
      %v1704 = vld [vmem:[%s1699 + $0x10] sm:$0xf]
      %v1705 = vld [vmem:[%s1699 + $0x14] sm:$0xf]
      %v1706 = vld [vmem:[%s1699 + $0x18] sm:$0xf]
      %v1707 = vld [vmem:[%s1699 + $0x1c] sm:$0xf]
      %v1708 = vld [vmem:[%s1699 + $0x20] sm:$0xf]
      %v1709 = vld [vmem:[%s1699 + $0x24] sm:$0xf]
      %v1710 = vld [vmem:[%s1699 + $0x28] sm:$0xf]
      %v1711 = vld [vmem:[%s1699 + $0x2c] sm:$0xf]
      %v1712 = vld [vmem:[%s1699 + $0x30] sm:$0xf]
      %v1713 = vld [vmem:[%s1699 + $0x34] sm:$0xf]
      %v1714 = vld [vmem:[%s1699 + $0x38] sm:$0xf]
      %v1715 = vld [vmem:[%s1699 + $0x3c] sm:$0xf]
      %v1718 = vunpack.c.l.b16 %v242
      %v1719 = vunpack.c.l.b16 %v243
      %v1720 = vpack.c.b16 %v1719, %v1718
      %v1738 = vunpack.c.l.b16 %v1700
      %v1739 = vunpack.c.l.b16 %v1701
      %v1740 = vunpack.c.l.b16 %v1702
      %v1741 = vunpack.c.l.b16 %v1703
      %v1742 = vunpack.c.l.b16 %v1704
      %v1743 = vunpack.c.l.b16 %v1705
      %v1744 = vunpack.c.l.b16 %v1706
      %v1745 = vunpack.c.l.b16 %v1707
      %v1746 = vunpack.c.l.b16 %v1708
      %v1747 = vunpack.c.l.b16 %v1709
      %v1748 = vunpack.c.l.b16 %v1710
      %v1749 = vunpack.c.l.b16 %v1711
      %v1750 = vunpack.c.l.b16 %v1712
      %v1751 = vunpack.c.l.b16 %v1713
      %v1752 = vunpack.c.l.b16 %v1714
      %v1753 = vunpack.c.l.b16 %v1715
      %v1754 = vpack.c.b16 %v1739, %v1738
      %v1755 = vpack.c.b16 %v1741, %v1740
      %v1756 = vpack.c.b16 %v1743, %v1742
      %v1757 = vpack.c.b16 %v1745, %v1744
      %v1758 = vpack.c.b16 %v1747, %v1746
      %v1759 = vpack.c.b16 %v1749, %v1748
      %v1760 = vpack.c.b16 %v1751, %v1750
      %v1761 = vpack.c.b16 %v1753, %v1752
      %1770 = vmatprep.subr.bf16.mxu0 0
      %1771 = vmatpush1.bf16.msra.mxu0 %v1754
      %1772 = vmatprep.subr.bf16.mxu0 0
      %1773 = vmatpush1.bf16.msra.mxu0 %v1755
      %1774 = vmatprep.subr.bf16.mxu0 0
      %1775 = vmatpush1.bf16.msra.mxu0 %v1756
      %1776 = vmatprep.subr.bf16.mxu0 0
      %1777 = vmatpush1.bf16.msra.mxu0 %v1757
      %1778 = vmatprep.subr.bf16.mxu0 0
      %1779 = vmatpush1.bf16.msra.mxu0 %v1758
      %1780 = vmatprep.subr.bf16.mxu0 0
      %1781 = vmatpush1.bf16.msra.mxu0 %v1759
      %1782 = vmatprep.subr.bf16.mxu0 0
      %1783 = vmatpush1.bf16.msra.mxu0 %v1760
      %1784 = vmatprep.subr.bf16.mxu0 0
      %1785 = vmatpush1.bf16.msra.mxu0 %v1761
      %1786 = vmatprep.subr.bf16.mxu0 0
      %1787 = vmatpush1.bf16.msra.mxu0 0
      %1788 = vmatprep.subr.bf16.mxu0 0
      %1789 = vmatpush1.bf16.msra.mxu0 0
      %1790 = vmatprep.subr.bf16.mxu0 0
      %1791 = vmatpush1.bf16.msra.mxu0 0
      %1792 = vmatprep.subr.bf16.mxu0 0
      %1793 = vmatpush1.bf16.msra.mxu0 0
      %1794 = vmatprep.subr.bf16.mxu0 0
      %1795 = vmatpush1.bf16.msra.mxu0 0
      %1796 = vmatprep.subr.bf16.mxu0 0
      %1797 = vmatpush1.bf16.msra.mxu0 0
      %1798 = vmatprep.subr.bf16.mxu0 0
      %1799 = vmatpush1.bf16.msra.mxu0 0
      %1800 = vmatprep.subr.bf16.mxu0 0
      %1801 = vmatpush1.bf16.msra.mxu0 0
      %1802 = vmatprep.mubr.bf16.mxu0 0
      %1803 = vmatmul.mubr.bf16.gmra.mrb[0].mxu0 %v1006
      %v1804 = vpop.f32.mrb[0].mxu0
      %v1805 = vadd.f32 0.0, %v1804
      %v1806 = vpop.f32.mrb[0].mxu0
      %v1807 = vpop.f32.mrb[0].mxu0
      %v1808 = vadd.f32 0.0, %v1807
      %v1809 = vpop.f32.mrb[0].mxu0
      %1810 = vmatprep.mubr.bf16.mxu0 0
      %1811 = vmatmul.mubr.bf16.gmra.mrb[0].mxu0 %v1007
      %v1812 = vpop.f32.mrb[0].mxu0
      %v1813 = vadd.f32 0.0, %v1812
      %v1814 = vpop.f32.mrb[0].mxu0
      %v1815 = vpop.f32.mrb[0].mxu0
      %v1816 = vadd.f32 0.0, %v1815
      %v1817 = vpop.f32.mrb[0].mxu0
      %1818 = vmatprep.mubr.bf16.mxu0 0
      %1819 = vmatmul.mubr.bf16.gmra.mrb[0].mxu0 %v1008
      %v1820 = vpop.f32.mrb[0].mxu0
      %v1821 = vadd.f32 0.0, %v1820
      %v1822 = vpop.f32.mrb[0].mxu0
      %v1823 = vpop.f32.mrb[0].mxu0
      %v1824 = vadd.f32 0.0, %v1823
      %v1825 = vpop.f32.mrb[0].mxu0
      %1826 = vmatprep.mubr.bf16.mxu0 0
      %1827 = vmatmul.mubr.bf16.gmra.mrb[0].mxu0 %v1009
      %v1828 = vpop.f32.mrb[0].mxu0
      %v1829 = vadd.f32 0.0, %v1828
      %v1830 = vpop.f32.mrb[0].mxu0
      %v1831 = vpop.f32.mrb[0].mxu0
      %v1832 = vadd.f32 0.0, %v1831
      %v1833 = vpop.f32.mrb[0].mxu0
      %1834 = vmatprep.mubr.bf16.mxu0 0
      %1835 = vmatmul.mubr.bf16.gmra.mrb[0].mxu0 %v1010
      %v1836 = vpop.f32.mrb[0].mxu0
      %v1837 = vadd.f32 0.0, %v1836
      %v1838 = vpop.f32.mrb[0].mxu0
      %v1839 = vpop.f32.mrb[0].mxu0
      %v1840 = vadd.f32 0.0, %v1839
      %v1841 = vpop.f32.mrb[0].mxu0
      %1842 = vmatprep.mubr.bf16.mxu0 0
      %1843 = vmatmul.mubr.bf16.gmra.mrb[0].mxu0 %v1011
      %v1844 = vpop.f32.mrb[0].mxu0
      %v1845 = vadd.f32 0.0, %v1844
      %v1846 = vpop.f32.mrb[0].mxu0
      %v1847 = vpop.f32.mrb[0].mxu0
      %v1848 = vadd.f32 0.0, %v1847
      %v1849 = vpop.f32.mrb[0].mxu0
      %1850 = vmatprep.mubr.bf16.mxu0 0
      %1851 = vmatmul.mubr.bf16.gmra.mrb[0].mxu0 %v1012
      %v1852 = vpop.f32.mrb[0].mxu0
      %v1853 = vadd.f32 0.0, %v1852
      %v1854 = vpop.f32.mrb[0].mxu0
      %v1855 = vpop.f32.mrb[0].mxu0
      %v1856 = vadd.f32 0.0, %v1855
      %v1857 = vpop.f32.mrb[0].mxu0
      %1858 = vmatprep.mubr.bf16.mxu0 0
      %1859 = vmatmul.mubr.bf16.gmra.mrb[0].mxu0 %v1013
      %v1860 = vpop.f32.mrb[0].mxu0
      %v1861 = vadd.f32 0.0, %v1860
      %v1862 = vpop.f32.mrb[0].mxu0
      %v1863 = vpop.f32.mrb[0].mxu0
      %v1864 = vadd.f32 0.0, %v1863
      %v1865 = vpop.f32.mrb[0].mxu0
      %1866 = vmatprep.mubr.bf16.mxu0 0
      %1867 = vmatmul.mubr.bf16.gmra.mrb[0].mxu0 %v1014
      %v1868 = vpop.f32.mrb[0].mxu0
      %v1869 = vadd.f32 0.0, %v1868
      %v1870 = vpop.f32.mrb[0].mxu0
      %v1871 = vpop.f32.mrb[0].mxu0
      %v1872 = vadd.f32 0.0, %v1871
      %v1873 = vpop.f32.mrb[0].mxu0
      %1874 = vmatprep.mubr.bf16.mxu0 0
      %1875 = vmatmul.mubr.bf16.gmra.mrb[0].mxu0 %v1015
      %v1876 = vpop.f32.mrb[0].mxu0
      %v1877 = vadd.f32 0.0, %v1876
      %v1878 = vpop.f32.mrb[0].mxu0
      %v1879 = vpop.f32.mrb[0].mxu0
      %v1880 = vadd.f32 0.0, %v1879
      %v1881 = vpop.f32.mrb[0].mxu0
      %1882 = vmatprep.mubr.bf16.mxu0 0
      %1883 = vmatmul.mubr.bf16.gmra.mrb[0].mxu0 %v1016
      %v1884 = vpop.f32.mrb[0].mxu0
      %v1885 = vadd.f32 0.0, %v1884
      %v1886 = vpop.f32.mrb[0].mxu0
      %v1887 = vpop.f32.mrb[0].mxu0
      %v1888 = vadd.f32 0.0, %v1887
      %v1889 = vpop.f32.mrb[0].mxu0
      %1890 = vmatprep.mubr.bf16.mxu0 0
      %1891 = vmatmul.mubr.bf16.gmra.mrb[0].mxu0 %v1017
      %v1892 = vpop.f32.mrb[0].mxu0
      %v1893 = vadd.f32 0.0, %v1892
      %v1894 = vpop.f32.mrb[0].mxu0
      %v1895 = vpop.f32.mrb[0].mxu0
      %v1896 = vadd.f32 0.0, %v1895
      %v1897 = vpop.f32.mrb[0].mxu0
      %1898 = vmatprep.mubr.bf16.mxu0 0
      %1899 = vmatmul.mubr.bf16.gmra.mrb[0].mxu0 %v1018
      %v1900 = vpop.f32.mrb[0].mxu0
      %v1901 = vadd.f32 0.0, %v1900
      %v1902 = vpop.f32.mrb[0].mxu0
      %v1903 = vpop.f32.mrb[0].mxu0
      %v1904 = vadd.f32 0.0, %v1903
      %v1905 = vpop.f32.mrb[0].mxu0
      %1906 = vmatprep.mubr.bf16.mxu0 0
      %1907 = vmatmul.mubr.bf16.gmra.mrb[0].mxu0 %v1019
      %v1908 = vpop.f32.mrb[0].mxu0
      %v1909 = vadd.f32 0.0, %v1908
      %v1910 = vpop.f32.mrb[0].mxu0
      %v1911 = vpop.f32.mrb[0].mxu0
      %v1912 = vadd.f32 0.0, %v1911
      %v1913 = vpop.f32.mrb[0].mxu0
      %1914 = vmatprep.mubr.bf16.mxu0 0
      %1915 = vmatmul.mubr.bf16.gmra.mrb[0].mxu0 %v1020
      %v1916 = vpop.f32.mrb[0].mxu0
      %v1917 = vadd.f32 0.0, %v1916
      %v1918 = vpop.f32.mrb[0].mxu0
      %v1919 = vpop.f32.mrb[0].mxu0
      %v1920 = vadd.f32 0.0, %v1919
      %v1921 = vpop.f32.mrb[0].mxu0
      %1922 = vmatprep.mubr.bf16.mxu0 0
      %1923 = vmatmul.mubr.bf16.gmra.mrb[0].mxu0 %v1720
      %v1924 = vpop.f32.mrb[0].mxu0
      %v1925 = vadd.f32 0.0, %v1924
      %v1926 = vpop.f32.mrb[0].mxu0
      %v1927 = vpop.f32.mrb[0].mxu0
      %v1928 = vadd.f32 0.0, %v1927
      %v1929 = vpop.f32.mrb[0].mxu0
      %1930 = vdwg.mxu0
      %v1931 = vadd.f32 %v1667, %v1805
      %v1932 = vadd.f32 %v1668, %v1808
      %v1933 = vadd.f32 %v1669, %v1813
      %v1934 = vadd.f32 %v1670, %v1816
      %v1935 = vadd.f32 %v1671, %v1821
      %v1936 = vadd.f32 %v1672, %v1824
      %v1937 = vadd.f32 %v1673, %v1829
      %v1938 = vadd.f32 %v1674, %v1832
      %v1939 = vadd.f32 %v1675, %v1837
      %v1940 = vadd.f32 %v1676, %v1840
      %v1941 = vadd.f32 %v1677, %v1845
      %v1942 = vadd.f32 %v1678, %v1848
      %v1943 = vadd.f32 %v1679, %v1853
      %v1944 = vadd.f32 %v1680, %v1856
      %v1945 = vadd.f32 %v1681, %v1861
      %v1946 = vadd.f32 %v1682, %v1864
      %v1947 = vadd.f32 %v1683, %v1869
      %v1948 = vadd.f32 %v1684, %v1872
      %v1949 = vadd.f32 %v1685, %v1877
      %v1950 = vadd.f32 %v1686, %v1880
      %v1951 = vadd.f32 %v1687, %v1885
      %v1952 = vadd.f32 %v1688, %v1888
      %v1953 = vadd.f32 %v1689, %v1893
      %v1954 = vadd.f32 %v1690, %v1896
      %v1955 = vadd.f32 %v1691, %v1901
      %v1956 = vadd.f32 %v1692, %v1904
      %v1957 = vadd.f32 %v1693, %v1909
      %v1958 = vadd.f32 %v1694, %v1912
      %v1959 = vadd.f32 %v1695, %v1917
      %v1960 = vadd.f32 %v1696, %v1920
      %v1961 = vadd.f32 %v1697, %v1925
      %v1962 = vadd.f32 %v1698, %v1928
      %v1964 = vshrl.u32 %v242, 16
      %v1966 = vrot.slane %v1964, 4
      %v1967 = vshll.u32 %v242, 16
      %v1969 = vrot.slane %v1967, 5
      %v1970 = vor.u32 %v1966, %v1969
      %v1971 = vrot.slane %v1970, 4
      %v1973 = vshll.u32 %v243, 16
      %v1975 = vrot.slane %v1973, 5
      %v1976 = vsel %vm266, %v1971, %v1975
      %v1977 = vshrl.u32 %v243, 16
      %v1979 = vrot.slane %v1977, 4
      %v1980 = vor.u32 %v1979, %v1975
      %v1981 = vrot.slane %v1980, 4
      %v1983 = vshll.u32 %v244, 16
      %v1985 = vrot.slane %v1983, 5
      %v1986 = vsel %vm266, %v1981, %v1985
      %s1987 = scalar_lea.vmem %s1, 256
      %v1988 = vld [vmem:[%s1987] sm:$0xf]
      %v1989 = vld [vmem:[%s1987 + $0x4] sm:$0xf]
      %v1990 = vld [vmem:[%s1987 + $0x8] sm:$0xf]
      %v1991 = vld [vmem:[%s1987 + $0xc] sm:$0xf]
      %v1992 = vld [vmem:[%s1987 + $0x10] sm:$0xf]
      %v1993 = vld [vmem:[%s1987 + $0x14] sm:$0xf]
      %v1994 = vld [vmem:[%s1987 + $0x18] sm:$0xf]
      %v1995 = vld [vmem:[%s1987 + $0x1c] sm:$0xf]
      %v1996 = vld [vmem:[%s1987 + $0x20] sm:$0xf]
      %v1997 = vld [vmem:[%s1987 + $0x24] sm:$0xf]
      %v1998 = vld [vmem:[%s1987 + $0x28] sm:$0xf]
      %v1999 = vld [vmem:[%s1987 + $0x2c] sm:$0xf]
      %v2000 = vld [vmem:[%s1987 + $0x30] sm:$0xf]
      %v2001 = vld [vmem:[%s1987 + $0x34] sm:$0xf]
      %v2002 = vld [vmem:[%s1987 + $0x38] sm:$0xf]
      %v2003 = vld [vmem:[%s1987 + $0x3c] sm:$0xf]
      %v2004 = vunpack.c.l.b16 %v1976
      %v2005 = vunpack.c.l.b16 %v1986
      %v2006 = vpack.c.b16 %v2005, %v2004
      %v2024 = vunpack.c.l.b16 %v1988
      %v2025 = vunpack.c.l.b16 %v1989
      %v2026 = vunpack.c.l.b16 %v1990
      %v2027 = vunpack.c.l.b16 %v1991
      %v2028 = vunpack.c.l.b16 %v1992
      %v2029 = vunpack.c.l.b16 %v1993
      %v2030 = vunpack.c.l.b16 %v1994
      %v2031 = vunpack.c.l.b16 %v1995
      %v2032 = vunpack.c.l.b16 %v1996
      %v2033 = vunpack.c.l.b16 %v1997
      %v2034 = vunpack.c.l.b16 %v1998
      %v2035 = vunpack.c.l.b16 %v1999
      %v2036 = vunpack.c.l.b16 %v2000
      %v2037 = vunpack.c.l.b16 %v2001
      %v2038 = vunpack.c.l.b16 %v2002
      %v2039 = vunpack.c.l.b16 %v2003
      %v2040 = vpack.c.b16 %v2025, %v2024
      %v2041 = vpack.c.b16 %v2027, %v2026
      %v2042 = vpack.c.b16 %v2029, %v2028
      %v2043 = vpack.c.b16 %v2031, %v2030
      %v2044 = vpack.c.b16 %v2033, %v2032
      %v2045 = vpack.c.b16 %v2035, %v2034
      %v2046 = vpack.c.b16 %v2037, %v2036
      %v2047 = vpack.c.b16 %v2039, %v2038
      %2056 = vmatprep.subr.bf16.mxu0 0
      %2057 = vmatpush1.bf16.msra.mxu0 %v2040
      %2058 = vmatprep.subr.bf16.mxu0 0
      %2059 = vmatpush1.bf16.msra.mxu0 %v2041
      %2060 = vmatprep.subr.bf16.mxu0 0
      %2061 = vmatpush1.bf16.msra.mxu0 %v2042
      %2062 = vmatprep.subr.bf16.mxu0 0
      %2063 = vmatpush1.bf16.msra.mxu0 %v2043
      %2064 = vmatprep.subr.bf16.mxu0 0
      %2065 = vmatpush1.bf16.msra.mxu0 %v2044
      %2066 = vmatprep.subr.bf16.mxu0 0
      %2067 = vmatpush1.bf16.msra.mxu0 %v2045
      %2068 = vmatprep.subr.bf16.mxu0 0
      %2069 = vmatpush1.bf16.msra.mxu0 %v2046
      %2070 = vmatprep.subr.bf16.mxu0 0
      %2071 = vmatpush1.bf16.msra.mxu0 %v2047
      %2072 = vmatprep.subr.bf16.mxu0 0
      %2073 = vmatpush1.bf16.msra.mxu0 0
      %2074 = vmatprep.subr.bf16.mxu0 0
      %2075 = vmatpush1.bf16.msra.mxu0 0
      %2076 = vmatprep.subr.bf16.mxu0 0
      %2077 = vmatpush1.bf16.msra.mxu0 0
      %2078 = vmatprep.subr.bf16.mxu0 0
      %2079 = vmatpush1.bf16.msra.mxu0 0
      %2080 = vmatprep.subr.bf16.mxu0 0
      %2081 = vmatpush1.bf16.msra.mxu0 0
      %2082 = vmatprep.subr.bf16.mxu0 0
      %2083 = vmatpush1.bf16.msra.mxu0 0
      %2084 = vmatprep.subr.bf16.mxu0 0
      %2085 = vmatpush1.bf16.msra.mxu0 0
      %2086 = vmatprep.subr.bf16.mxu0 0
      %2087 = vmatpush1.bf16.msra.mxu0 0
      %2088 = vmatprep.mubr.bf16.mxu0 0
      %2089 = vmatmul.mubr.bf16.gmra.mrb[0].mxu0 %v701
      %v2090 = vpop.f32.mrb[0].mxu0
      %v2091 = vadd.f32 0.0, %v2090
      %v2092 = vpop.f32.mrb[0].mxu0
      %v2093 = vpop.f32.mrb[0].mxu0
      %v2094 = vadd.f32 0.0, %v2093
      %v2095 = vpop.f32.mrb[0].mxu0
      %2096 = vmatprep.mubr.bf16.mxu0 0
      %2097 = vmatmul.mubr.bf16.gmra.mrb[0].mxu0 %v702
      %v2098 = vpop.f32.mrb[0].mxu0
      %v2099 = vadd.f32 0.0, %v2098
      %v2100 = vpop.f32.mrb[0].mxu0
      %v2101 = vpop.f32.mrb[0].mxu0
      %v2102 = vadd.f32 0.0, %v2101
      %v2103 = vpop.f32.mrb[0].mxu0
      %2104 = vmatprep.mubr.bf16.mxu0 0
      %2105 = vmatmul.mubr.bf16.gmra.mrb[0].mxu0 %v703
      %v2106 = vpop.f32.mrb[0].mxu0
      %v2107 = vadd.f32 0.0, %v2106
      %v2108 = vpop.f32.mrb[0].mxu0
      %v2109 = vpop.f32.mrb[0].mxu0
      %v2110 = vadd.f32 0.0, %v2109
      %v2111 = vpop.f32.mrb[0].mxu0
      %2112 = vmatprep.mubr.bf16.mxu0 0
      %2113 = vmatmul.mubr.bf16.gmra.mrb[0].mxu0 %v704
      %v2114 = vpop.f32.mrb[0].mxu0
      %v2115 = vadd.f32 0.0, %v2114
      %v2116 = vpop.f32.mrb[0].mxu0
      %v2117 = vpop.f32.mrb[0].mxu0
      %v2118 = vadd.f32 0.0, %v2117
      %v2119 = vpop.f32.mrb[0].mxu0
      %2120 = vmatprep.mubr.bf16.mxu0 0
      %2121 = vmatmul.mubr.bf16.gmra.mrb[0].mxu0 %v705
      %v2122 = vpop.f32.mrb[0].mxu0
      %v2123 = vadd.f32 0.0, %v2122
      %v2124 = vpop.f32.mrb[0].mxu0
      %v2125 = vpop.f32.mrb[0].mxu0
      %v2126 = vadd.f32 0.0, %v2125
      %v2127 = vpop.f32.mrb[0].mxu0
      %2128 = vmatprep.mubr.bf16.mxu0 0
      %2129 = vmatmul.mubr.bf16.gmra.mrb[0].mxu0 %v706
      %v2130 = vpop.f32.mrb[0].mxu0
      %v2131 = vadd.f32 0.0, %v2130
      %v2132 = vpop.f32.mrb[0].mxu0
      %v2133 = vpop.f32.mrb[0].mxu0
      %v2134 = vadd.f32 0.0, %v2133
      %v2135 = vpop.f32.mrb[0].mxu0
      %2136 = vmatprep.mubr.bf16.mxu0 0
      %2137 = vmatmul.mubr.bf16.gmra.mrb[0].mxu0 %v707
      %v2138 = vpop.f32.mrb[0].mxu0
      %v2139 = vadd.f32 0.0, %v2138
      %v2140 = vpop.f32.mrb[0].mxu0
      %v2141 = vpop.f32.mrb[0].mxu0
      %v2142 = vadd.f32 0.0, %v2141
      %v2143 = vpop.f32.mrb[0].mxu0
      %2144 = vmatprep.mubr.bf16.mxu0 0
      %2145 = vmatmul.mubr.bf16.gmra.mrb[0].mxu0 %v708
      %v2146 = vpop.f32.mrb[0].mxu0
      %v2147 = vadd.f32 0.0, %v2146
      %v2148 = vpop.f32.mrb[0].mxu0
      %v2149 = vpop.f32.mrb[0].mxu0
      %v2150 = vadd.f32 0.0, %v2149
      %v2151 = vpop.f32.mrb[0].mxu0
      %2152 = vmatprep.mubr.bf16.mxu0 0
      %2153 = vmatmul.mubr.bf16.gmra.mrb[0].mxu0 %v709
      %v2154 = vpop.f32.mrb[0].mxu0
      %v2155 = vadd.f32 0.0, %v2154
      %v2156 = vpop.f32.mrb[0].mxu0
      %v2157 = vpop.f32.mrb[0].mxu0
      %v2158 = vadd.f32 0.0, %v2157
      %v2159 = vpop.f32.mrb[0].mxu0
      %2160 = vmatprep.mubr.bf16.mxu0 0
      %2161 = vmatmul.mubr.bf16.gmra.mrb[0].mxu0 %v710
      %v2162 = vpop.f32.mrb[0].mxu0
      %v2163 = vadd.f32 0.0, %v2162
      %v2164 = vpop.f32.mrb[0].mxu0
      %v2165 = vpop.f32.mrb[0].mxu0
      %v2166 = vadd.f32 0.0, %v2165
      %v2167 = vpop.f32.mrb[0].mxu0
      %2168 = vmatprep.mubr.bf16.mxu0 0
      %2169 = vmatmul.mubr.bf16.gmra.mrb[0].mxu0 %v711
      %v2170 = vpop.f32.mrb[0].mxu0
      %v2171 = vadd.f32 0.0, %v2170
      %v2172 = vpop.f32.mrb[0].mxu0
      %v2173 = vpop.f32.mrb[0].mxu0
      %v2174 = vadd.f32 0.0, %v2173
      %v2175 = vpop.f32.mrb[0].mxu0
      %2176 = vmatprep.mubr.bf16.mxu0 0
      %2177 = vmatmul.mubr.bf16.gmra.mrb[0].mxu0 %v712
      %v2178 = vpop.f32.mrb[0].mxu0
      %v2179 = vadd.f32 0.0, %v2178
      %v2180 = vpop.f32.mrb[0].mxu0
      %v2181 = vpop.f32.mrb[0].mxu0
      %v2182 = vadd.f32 0.0, %v2181
      %v2183 = vpop.f32.mrb[0].mxu0
      %2184 = vmatprep.mubr.bf16.mxu0 0
      %2185 = vmatmul.mubr.bf16.gmra.mrb[0].mxu0 %v713
      %v2186 = vpop.f32.mrb[0].mxu0
      %v2187 = vadd.f32 0.0, %v2186
      %v2188 = vpop.f32.mrb[0].mxu0
      %v2189 = vpop.f32.mrb[0].mxu0
      %v2190 = vadd.f32 0.0, %v2189
      %v2191 = vpop.f32.mrb[0].mxu0
      %2192 = vmatprep.mubr.bf16.mxu0 0
      %2193 = vmatmul.mubr.bf16.gmra.mrb[0].mxu0 %v714
      %v2194 = vpop.f32.mrb[0].mxu0
      %v2195 = vadd.f32 0.0, %v2194
      %v2196 = vpop.f32.mrb[0].mxu0
      %v2197 = vpop.f32.mrb[0].mxu0
      %v2198 = vadd.f32 0.0, %v2197
      %v2199 = vpop.f32.mrb[0].mxu0
      %2200 = vmatprep.mubr.bf16.mxu0 0
      %2201 = vmatmul.mubr.bf16.gmra.mrb[0].mxu0 %v715
      %v2202 = vpop.f32.mrb[0].mxu0
      %v2203 = vadd.f32 0.0, %v2202
      %v2204 = vpop.f32.mrb[0].mxu0
      %v2205 = vpop.f32.mrb[0].mxu0
      %v2206 = vadd.f32 0.0, %v2205
      %v2207 = vpop.f32.mrb[0].mxu0
      %2208 = vmatprep.mubr.bf16.mxu0 0
      %2209 = vmatmul.mubr.bf16.gmra.mrb[0].mxu0 %v2006
      %v2210 = vpop.f32.mrb[0].mxu0
      %v2211 = vadd.f32 0.0, %v2210
      %v2212 = vpop.f32.mrb[0].mxu0
      %v2213 = vpop.f32.mrb[0].mxu0
      %v2214 = vadd.f32 0.0, %v2213
      %v2215 = vpop.f32.mrb[0].mxu0
      %2216 = vdwg.mxu0
      %v2217 = vadd.f32 %v1931, %v2091
      %v2218 = vadd.f32 %v1932, %v2094
      %v2219 = vadd.f32 %v1933, %v2099
      %v2220 = vadd.f32 %v1934, %v2102
      %v2221 = vadd.f32 %v1935, %v2107
      %v2222 = vadd.f32 %v1936, %v2110
      %v2223 = vadd.f32 %v1937, %v2115
      %v2224 = vadd.f32 %v1938, %v2118
      %v2225 = vadd.f32 %v1939, %v2123
      %v2226 = vadd.f32 %v1940, %v2126
      %v2227 = vadd.f32 %v1941, %v2131
      %v2228 = vadd.f32 %v1942, %v2134
      %v2229 = vadd.f32 %v1943, %v2139
      %v2230 = vadd.f32 %v1944, %v2142
      %v2231 = vadd.f32 %v1945, %v2147
      %v2232 = vadd.f32 %v1946, %v2150
      %v2233 = vadd.f32 %v1947, %v2155
      %v2234 = vadd.f32 %v1948, %v2158
      %v2235 = vadd.f32 %v1949, %v2163
      %v2236 = vadd.f32 %v1950, %v2166
      %v2237 = vadd.f32 %v1951, %v2171
      %v2238 = vadd.f32 %v1952, %v2174
      %v2239 = vadd.f32 %v1953, %v2179
      %v2240 = vadd.f32 %v1954, %v2182
      %v2241 = vadd.f32 %v1955, %v2187
      %v2242 = vadd.f32 %v1956, %v2190
      %v2243 = vadd.f32 %v1957, %v2195
      %v2244 = vadd.f32 %v1958, %v2198
      %v2245 = vadd.f32 %v1959, %v2203
      %v2246 = vadd.f32 %v1960, %v2206
      %v2247 = vadd.f32 %v1961, %v2211
      %v2248 = vadd.f32 %v1962, %v2214
      %v2250 = vrot.slane %v242, 5
      %v2251 = vrot.slane %v2250, 4
      %v2252 = vrot.slane %v243, 5
      %v2253 = vsel %vm1264, %v2251, %v2252
      %v2254 = vrot.slane %v2252, 4
      %v2255 = vrot.slane %v244, 5
      %v2256 = vsel %vm1264, %v2254, %v2255
      %s2257 = scalar_lea.vmem %s1, 320
      %v2258 = vld [vmem:[%s2257] sm:$0xf]
      %v2259 = vld [vmem:[%s2257 + $0x4] sm:$0xf]
      %v2260 = vld [vmem:[%s2257 + $0x8] sm:$0xf]
      %v2261 = vld [vmem:[%s2257 + $0xc] sm:$0xf]
      %v2262 = vld [vmem:[%s2257 + $0x10] sm:$0xf]
      %v2263 = vld [vmem:[%s2257 + $0x14] sm:$0xf]
      %v2264 = vld [vmem:[%s2257 + $0x18] sm:$0xf]
      %v2265 = vld [vmem:[%s2257 + $0x1c] sm:$0xf]
      %v2266 = vld [vmem:[%s2257 + $0x20] sm:$0xf]
      %v2267 = vld [vmem:[%s2257 + $0x24] sm:$0xf]
      %v2268 = vld [vmem:[%s2257 + $0x28] sm:$0xf]
      %v2269 = vld [vmem:[%s2257 + $0x2c] sm:$0xf]
      %v2270 = vld [vmem:[%s2257 + $0x30] sm:$0xf]
      %v2271 = vld [vmem:[%s2257 + $0x34] sm:$0xf]
      %v2272 = vld [vmem:[%s2257 + $0x38] sm:$0xf]
      %v2273 = vld [vmem:[%s2257 + $0x3c] sm:$0xf]
      %v2274 = vunpack.c.l.b16 %v2253
      %v2275 = vunpack.c.l.b16 %v2256
      %v2276 = vpack.c.b16 %v2275, %v2274
      %v2294 = vunpack.c.l.b16 %v2258
      %v2295 = vunpack.c.l.b16 %v2259
      %v2296 = vunpack.c.l.b16 %v2260
      %v2297 = vunpack.c.l.b16 %v2261
      %v2298 = vunpack.c.l.b16 %v2262
      %v2299 = vunpack.c.l.b16 %v2263
      %v2300 = vunpack.c.l.b16 %v2264
      %v2301 = vunpack.c.l.b16 %v2265
      %v2302 = vunpack.c.l.b16 %v2266
      %v2303 = vunpack.c.l.b16 %v2267
      %v2304 = vunpack.c.l.b16 %v2268
      %v2305 = vunpack.c.l.b16 %v2269
      %v2306 = vunpack.c.l.b16 %v2270
      %v2307 = vunpack.c.l.b16 %v2271
      %v2308 = vunpack.c.l.b16 %v2272
      %v2309 = vunpack.c.l.b16 %v2273
      %v2310 = vpack.c.b16 %v2295, %v2294
      %v2311 = vpack.c.b16 %v2297, %v2296
      %v2312 = vpack.c.b16 %v2299, %v2298
      %v2313 = vpack.c.b16 %v2301, %v2300
      %v2314 = vpack.c.b16 %v2303, %v2302
      %v2315 = vpack.c.b16 %v2305, %v2304
      %v2316 = vpack.c.b16 %v2307, %v2306
      %v2317 = vpack.c.b16 %v2309, %v2308
      %2326 = vmatprep.subr.bf16.mxu0 0
      %2327 = vmatpush1.bf16.msra.mxu0 %v2310
      %2328 = vmatprep.subr.bf16.mxu0 0
      %2329 = vmatpush1.bf16.msra.mxu0 %v2311
      %2330 = vmatprep.subr.bf16.mxu0 0
      %2331 = vmatpush1.bf16.msra.mxu0 %v2312
      %2332 = vmatprep.subr.bf16.mxu0 0
      %2333 = vmatpush1.bf16.msra.mxu0 %v2313
      %2334 = vmatprep.subr.bf16.mxu0 0
      %2335 = vmatpush1.bf16.msra.mxu0 %v2314
      %2336 = vmatprep.subr.bf16.mxu0 0
      %2337 = vmatpush1.bf16.msra.mxu0 %v2315
      %2338 = vmatprep.subr.bf16.mxu0 0
      %2339 = vmatpush1.bf16.msra.mxu0 %v2316
      %2340 = vmatprep.subr.bf16.mxu0 0
      %2341 = vmatpush1.bf16.msra.mxu0 %v2317
      %2342 = vmatprep.subr.bf16.mxu0 0
      %2343 = vmatpush1.bf16.msra.mxu0 0
      %2344 = vmatprep.subr.bf16.mxu0 0
      %2345 = vmatpush1.bf16.msra.mxu0 0
      %2346 = vmatprep.subr.bf16.mxu0 0
      %2347 = vmatpush1.bf16.msra.mxu0 0
      %2348 = vmatprep.subr.bf16.mxu0 0
      %2349 = vmatpush1.bf16.msra.mxu0 0
      %2350 = vmatprep.subr.bf16.mxu0 0
      %2351 = vmatpush1.bf16.msra.mxu0 0
      %2352 = vmatprep.subr.bf16.mxu0 0
      %2353 = vmatpush1.bf16.msra.mxu0 0
      %2354 = vmatprep.subr.bf16.mxu0 0
      %2355 = vmatpush1.bf16.msra.mxu0 0
      %2356 = vmatprep.subr.bf16.mxu0 0
      %2357 = vmatpush1.bf16.msra.mxu0 0
      %2358 = vmatprep.mubr.bf16.mxu0 0
      %2359 = vmatmul.mubr.bf16.gmra.mrb[0].mxu0 %v1427
      %v2360 = vpop.f32.mrb[0].mxu0
      %v2361 = vadd.f32 0.0, %v2360
      %v2362 = vpop.f32.mrb[0].mxu0
      %v2363 = vpop.f32.mrb[0].mxu0
      %v2364 = vadd.f32 0.0, %v2363
      %v2365 = vpop.f32.mrb[0].mxu0
      %2366 = vmatprep.mubr.bf16.mxu0 0
      %2367 = vmatmul.mubr.bf16.gmra.mrb[0].mxu0 %v1428
      %v2368 = vpop.f32.mrb[0].mxu0
      %v2369 = vadd.f32 0.0, %v2368
      %v2370 = vpop.f32.mrb[0].mxu0
      %v2371 = vpop.f32.mrb[0].mxu0
      %v2372 = vadd.f32 0.0, %v2371
      %v2373 = vpop.f32.mrb[0].mxu0
      %2374 = vmatprep.mubr.bf16.mxu0 0
      %2375 = vmatmul.mubr.bf16.gmra.mrb[0].mxu0 %v1429
      %v2376 = vpop.f32.mrb[0].mxu0
      %v2377 = vadd.f32 0.0, %v2376
      %v2378 = vpop.f32.mrb[0].mxu0
      %v2379 = vpop.f32.mrb[0].mxu0
      %v2380 = vadd.f32 0.0, %v2379
      %v2381 = vpop.f32.mrb[0].mxu0
      %2382 = vmatprep.mubr.bf16.mxu0 0
      %2383 = vmatmul.mubr.bf16.gmra.mrb[0].mxu0 %v1430
      %v2384 = vpop.f32.mrb[0].mxu0
      %v2385 = vadd.f32 0.0, %v2384
      %v2386 = vpop.f32.mrb[0].mxu0
      %v2387 = vpop.f32.mrb[0].mxu0
      %v2388 = vadd.f32 0.0, %v2387
      %v2389 = vpop.f32.mrb[0].mxu0
      %2390 = vmatprep.mubr.bf16.mxu0 0
      %2391 = vmatmul.mubr.bf16.gmra.mrb[0].mxu0 %v1431
      %v2392 = vpop.f32.mrb[0].mxu0
      %v2393 = vadd.f32 0.0, %v2392
      %v2394 = vpop.f32.mrb[0].mxu0
      %v2395 = vpop.f32.mrb[0].mxu0
      %v2396 = vadd.f32 0.0, %v2395
      %v2397 = vpop.f32.mrb[0].mxu0
      %2398 = vmatprep.mubr.bf16.mxu0 0
      %2399 = vmatmul.mubr.bf16.gmra.mrb[0].mxu0 %v1432
      %v2400 = vpop.f32.mrb[0].mxu0
      %v2401 = vadd.f32 0.0, %v2400
      %v2402 = vpop.f32.mrb[0].mxu0
      %v2403 = vpop.f32.mrb[0].mxu0
      %v2404 = vadd.f32 0.0, %v2403
      %v2405 = vpop.f32.mrb[0].mxu0
      %2406 = vmatprep.mubr.bf16.mxu0 0
      %2407 = vmatmul.mubr.bf16.gmra.mrb[0].mxu0 %v1433
      %v2408 = vpop.f32.mrb[0].mxu0
      %v2409 = vadd.f32 0.0, %v2408
      %v2410 = vpop.f32.mrb[0].mxu0
      %v2411 = vpop.f32.mrb[0].mxu0
      %v2412 = vadd.f32 0.0, %v2411
      %v2413 = vpop.f32.mrb[0].mxu0
      %2414 = vmatprep.mubr.bf16.mxu0 0
      %2415 = vmatmul.mubr.bf16.gmra.mrb[0].mxu0 %v1434
      %v2416 = vpop.f32.mrb[0].mxu0
      %v2417 = vadd.f32 0.0, %v2416
      %v2418 = vpop.f32.mrb[0].mxu0
      %v2419 = vpop.f32.mrb[0].mxu0
      %v2420 = vadd.f32 0.0, %v2419
      %v2421 = vpop.f32.mrb[0].mxu0
      %2422 = vmatprep.mubr.bf16.mxu0 0
      %2423 = vmatmul.mubr.bf16.gmra.mrb[0].mxu0 %v1435
      %v2424 = vpop.f32.mrb[0].mxu0
      %v2425 = vadd.f32 0.0, %v2424
      %v2426 = vpop.f32.mrb[0].mxu0
      %v2427 = vpop.f32.mrb[0].mxu0
      %v2428 = vadd.f32 0.0, %v2427
      %v2429 = vpop.f32.mrb[0].mxu0
      %2430 = vmatprep.mubr.bf16.mxu0 0
      %2431 = vmatmul.mubr.bf16.gmra.mrb[0].mxu0 %v1436
      %v2432 = vpop.f32.mrb[0].mxu0
      %v2433 = vadd.f32 0.0, %v2432
      %v2434 = vpop.f32.mrb[0].mxu0
      %v2435 = vpop.f32.mrb[0].mxu0
      %v2436 = vadd.f32 0.0, %v2435
      %v2437 = vpop.f32.mrb[0].mxu0
      %2438 = vmatprep.mubr.bf16.mxu0 0
      %2439 = vmatmul.mubr.bf16.gmra.mrb[0].mxu0 %v1437
      %v2440 = vpop.f32.mrb[0].mxu0
      %v2441 = vadd.f32 0.0, %v2440
      %v2442 = vpop.f32.mrb[0].mxu0
      %v2443 = vpop.f32.mrb[0].mxu0
      %v2444 = vadd.f32 0.0, %v2443
      %v2445 = vpop.f32.mrb[0].mxu0
      %2446 = vmatprep.mubr.bf16.mxu0 0
      %2447 = vmatmul.mubr.bf16.gmra.mrb[0].mxu0 %v1438
      %v2448 = vpop.f32.mrb[0].mxu0
      %v2449 = vadd.f32 0.0, %v2448
      %v2450 = vpop.f32.mrb[0].mxu0
      %v2451 = vpop.f32.mrb[0].mxu0
      %v2452 = vadd.f32 0.0, %v2451
      %v2453 = vpop.f32.mrb[0].mxu0
      %2454 = vmatprep.mubr.bf16.mxu0 0
      %2455 = vmatmul.mubr.bf16.gmra.mrb[0].mxu0 %v1439
      %v2456 = vpop.f32.mrb[0].mxu0
      %v2457 = vadd.f32 0.0, %v2456
      %v2458 = vpop.f32.mrb[0].mxu0
      %v2459 = vpop.f32.mrb[0].mxu0
      %v2460 = vadd.f32 0.0, %v2459
      %v2461 = vpop.f32.mrb[0].mxu0
      %2462 = vmatprep.mubr.bf16.mxu0 0
      %2463 = vmatmul.mubr.bf16.gmra.mrb[0].mxu0 %v1440
      %v2464 = vpop.f32.mrb[0].mxu0
      %v2465 = vadd.f32 0.0, %v2464
      %v2466 = vpop.f32.mrb[0].mxu0
      %v2467 = vpop.f32.mrb[0].mxu0
      %v2468 = vadd.f32 0.0, %v2467
      %v2469 = vpop.f32.mrb[0].mxu0
      %2470 = vmatprep.mubr.bf16.mxu0 0
      %2471 = vmatmul.mubr.bf16.gmra.mrb[0].mxu0 %v1441
      %v2472 = vpop.f32.mrb[0].mxu0
      %v2473 = vadd.f32 0.0, %v2472
      %v2474 = vpop.f32.mrb[0].mxu0
      %v2475 = vpop.f32.mrb[0].mxu0
      %v2476 = vadd.f32 0.0, %v2475
      %v2477 = vpop.f32.mrb[0].mxu0
      %2478 = vmatprep.mubr.bf16.mxu0 0
      %2479 = vmatmul.mubr.bf16.gmra.mrb[0].mxu0 %v2276
      %v2480 = vpop.f32.mrb[0].mxu0
      %v2481 = vadd.f32 0.0, %v2480
      %v2482 = vpop.f32.mrb[0].mxu0
      %v2483 = vpop.f32.mrb[0].mxu0
      %v2484 = vadd.f32 0.0, %v2483
      %v2485 = vpop.f32.mrb[0].mxu0
      %2486 = vdwg.mxu0
      %v2487 = vadd.f32 %v2217, %v2361
      %v2488 = vadd.f32 %v2218, %v2364
      %v2489 = vadd.f32 %v2219, %v2369
      %v2490 = vadd.f32 %v2220, %v2372
      %v2491 = vadd.f32 %v2221, %v2377
      %v2492 = vadd.f32 %v2222, %v2380
      %v2493 = vadd.f32 %v2223, %v2385
      %v2494 = vadd.f32 %v2224, %v2388
      %v2495 = vadd.f32 %v2225, %v2393
      %v2496 = vadd.f32 %v2226, %v2396
      %v2497 = vadd.f32 %v2227, %v2401
      %v2498 = vadd.f32 %v2228, %v2404
      %v2499 = vadd.f32 %v2229, %v2409
      %v2500 = vadd.f32 %v2230, %v2412
      %v2501 = vadd.f32 %v2231, %v2417
      %v2502 = vadd.f32 %v2232, %v2420
      %v2503 = vadd.f32 %v2233, %v2425
      %v2504 = vadd.f32 %v2234, %v2428
      %v2505 = vadd.f32 %v2235, %v2433
      %v2506 = vadd.f32 %v2236, %v2436
      %v2507 = vadd.f32 %v2237, %v2441
      %v2508 = vadd.f32 %v2238, %v2444
      %v2509 = vadd.f32 %v2239, %v2449
      %v2510 = vadd.f32 %v2240, %v2452
      %v2511 = vadd.f32 %v2241, %v2457
      %v2512 = vadd.f32 %v2242, %v2460
      %v2513 = vadd.f32 %v2243, %v2465
      %v2514 = vadd.f32 %v2244, %v2468
      %v2515 = vadd.f32 %v2245, %v2473
      %v2516 = vadd.f32 %v2246, %v2476
      %v2517 = vadd.f32 %v2247, %v2481
      %v2518 = vadd.f32 %v2248, %v2484
      %s2519 = scalar_lea.vmem %s1, 384
      %v2520 = vld [vmem:[%s2519] sm:$0xf]
      %v2521 = vld [vmem:[%s2519 + $0x4] sm:$0xf]
      %v2522 = vld [vmem:[%s2519 + $0x8] sm:$0xf]
      %v2523 = vld [vmem:[%s2519 + $0xc] sm:$0xf]
      %v2524 = vld [vmem:[%s2519 + $0x10] sm:$0xf]
      %v2525 = vld [vmem:[%s2519 + $0x14] sm:$0xf]
      %v2526 = vld [vmem:[%s2519 + $0x18] sm:$0xf]
      %v2527 = vld [vmem:[%s2519 + $0x1c] sm:$0xf]
      %v2528 = vld [vmem:[%s2519 + $0x20] sm:$0xf]
      %v2529 = vld [vmem:[%s2519 + $0x24] sm:$0xf]
      %v2530 = vld [vmem:[%s2519 + $0x28] sm:$0xf]
      %v2531 = vld [vmem:[%s2519 + $0x2c] sm:$0xf]
      %v2532 = vld [vmem:[%s2519 + $0x30] sm:$0xf]
      %v2533 = vld [vmem:[%s2519 + $0x34] sm:$0xf]
      %v2534 = vld [vmem:[%s2519 + $0x38] sm:$0xf]
      %v2535 = vld [vmem:[%s2519 + $0x3c] sm:$0xf]
      %v2538 = vunpack.c.l.b16 %v245
      %v2539 = vunpack.c.l.b16 %v246
      %v2540 = vpack.c.b16 %v2539, %v2538
      %v2558 = vunpack.c.l.b16 %v2520
      %v2559 = vunpack.c.l.b16 %v2521
      %v2560 = vunpack.c.l.b16 %v2522
      %v2561 = vunpack.c.l.b16 %v2523
      %v2562 = vunpack.c.l.b16 %v2524
      %v2563 = vunpack.c.l.b16 %v2525
      %v2564 = vunpack.c.l.b16 %v2526
      %v2565 = vunpack.c.l.b16 %v2527
      %v2566 = vunpack.c.l.b16 %v2528
      %v2567 = vunpack.c.l.b16 %v2529
      %v2568 = vunpack.c.l.b16 %v2530
      %v2569 = vunpack.c.l.b16 %v2531
      %v2570 = vunpack.c.l.b16 %v2532
      %v2571 = vunpack.c.l.b16 %v2533
      %v2572 = vunpack.c.l.b16 %v2534
      %v2573 = vunpack.c.l.b16 %v2535
      %v2574 = vpack.c.b16 %v2559, %v2558
      %v2575 = vpack.c.b16 %v2561, %v2560
      %v2576 = vpack.c.b16 %v2563, %v2562
      %v2577 = vpack.c.b16 %v2565, %v2564
      %v2578 = vpack.c.b16 %v2567, %v2566
      %v2579 = vpack.c.b16 %v2569, %v2568
      %v2580 = vpack.c.b16 %v2571, %v2570
      %v2581 = vpack.c.b16 %v2573, %v2572
      %2590 = vmatprep.subr.bf16.mxu0 0
      %2591 = vmatpush1.bf16.msra.mxu0 %v2574
      %2592 = vmatprep.subr.bf16.mxu0 0
      %2593 = vmatpush1.bf16.msra.mxu0 %v2575
      %2594 = vmatprep.subr.bf16.mxu0 0
      %2595 = vmatpush1.bf16.msra.mxu0 %v2576
      %2596 = vmatprep.subr.bf16.mxu0 0
      %2597 = vmatpush1.bf16.msra.mxu0 %v2577
      %2598 = vmatprep.subr.bf16.mxu0 0
      %2599 = vmatpush1.bf16.msra.mxu0 %v2578
      %2600 = vmatprep.subr.bf16.mxu0 0
      %2601 = vmatpush1.bf16.msra.mxu0 %v2579
      %2602 = vmatprep.subr.bf16.mxu0 0
      %2603 = vmatpush1.bf16.msra.mxu0 %v2580
      %2604 = vmatprep.subr.bf16.mxu0 0
      %2605 = vmatpush1.bf16.msra.mxu0 %v2581
      %2606 = vmatprep.subr.bf16.mxu0 0
      %2607 = vmatpush1.bf16.msra.mxu0 0
      %2608 = vmatprep.subr.bf16.mxu0 0
      %2609 = vmatpush1.bf16.msra.mxu0 0
      %2610 = vmatprep.subr.bf16.mxu0 0
      %2611 = vmatpush1.bf16.msra.mxu0 0
      %2612 = vmatprep.subr.bf16.mxu0 0
      %2613 = vmatpush1.bf16.msra.mxu0 0
      %2614 = vmatprep.subr.bf16.mxu0 0
      %2615 = vmatpush1.bf16.msra.mxu0 0
      %2616 = vmatprep.subr.bf16.mxu0 0
      %2617 = vmatpush1.bf16.msra.mxu0 0
      %2618 = vmatprep.subr.bf16.mxu0 0
      %2619 = vmatpush1.bf16.msra.mxu0 0
      %2620 = vmatprep.subr.bf16.mxu0 0
      %2621 = vmatpush1.bf16.msra.mxu0 0
      %2622 = vmatprep.mubr.bf16.mxu0 0
      %2623 = vmatmul.mubr.bf16.gmra.mrb[0].mxu0 %v1007
      %v2624 = vpop.f32.mrb[0].mxu0
      %v2625 = vadd.f32 0.0, %v2624
      %v2626 = vpop.f32.mrb[0].mxu0
      %v2627 = vpop.f32.mrb[0].mxu0
      %v2628 = vadd.f32 0.0, %v2627
      %v2629 = vpop.f32.mrb[0].mxu0
      %2630 = vmatprep.mubr.bf16.mxu0 0
      %2631 = vmatmul.mubr.bf16.gmra.mrb[0].mxu0 %v1008
      %v2632 = vpop.f32.mrb[0].mxu0
      %v2633 = vadd.f32 0.0, %v2632
      %v2634 = vpop.f32.mrb[0].mxu0
      %v2635 = vpop.f32.mrb[0].mxu0
      %v2636 = vadd.f32 0.0, %v2635
      %v2637 = vpop.f32.mrb[0].mxu0
      %2638 = vmatprep.mubr.bf16.mxu0 0
      %2639 = vmatmul.mubr.bf16.gmra.mrb[0].mxu0 %v1009
      %v2640 = vpop.f32.mrb[0].mxu0
      %v2641 = vadd.f32 0.0, %v2640
      %v2642 = vpop.f32.mrb[0].mxu0
      %v2643 = vpop.f32.mrb[0].mxu0
      %v2644 = vadd.f32 0.0, %v2643
      %v2645 = vpop.f32.mrb[0].mxu0
      %2646 = vmatprep.mubr.bf16.mxu0 0
      %2647 = vmatmul.mubr.bf16.gmra.mrb[0].mxu0 %v1010
      %v2648 = vpop.f32.mrb[0].mxu0
      %v2649 = vadd.f32 0.0, %v2648
      %v2650 = vpop.f32.mrb[0].mxu0
      %v2651 = vpop.f32.mrb[0].mxu0
      %v2652 = vadd.f32 0.0, %v2651
      %v2653 = vpop.f32.mrb[0].mxu0
      %2654 = vmatprep.mubr.bf16.mxu0 0
      %2655 = vmatmul.mubr.bf16.gmra.mrb[0].mxu0 %v1011
      %v2656 = vpop.f32.mrb[0].mxu0
      %v2657 = vadd.f32 0.0, %v2656
      %v2658 = vpop.f32.mrb[0].mxu0
      %v2659 = vpop.f32.mrb[0].mxu0
      %v2660 = vadd.f32 0.0, %v2659
      %v2661 = vpop.f32.mrb[0].mxu0
      %2662 = vmatprep.mubr.bf16.mxu0 0
      %2663 = vmatmul.mubr.bf16.gmra.mrb[0].mxu0 %v1012
      %v2664 = vpop.f32.mrb[0].mxu0
      %v2665 = vadd.f32 0.0, %v2664
      %v2666 = vpop.f32.mrb[0].mxu0
      %v2667 = vpop.f32.mrb[0].mxu0
      %v2668 = vadd.f32 0.0, %v2667
      %v2669 = vpop.f32.mrb[0].mxu0
      %2670 = vmatprep.mubr.bf16.mxu0 0
      %2671 = vmatmul.mubr.bf16.gmra.mrb[0].mxu0 %v1013
      %v2672 = vpop.f32.mrb[0].mxu0
      %v2673 = vadd.f32 0.0, %v2672
      %v2674 = vpop.f32.mrb[0].mxu0
      %v2675 = vpop.f32.mrb[0].mxu0
      %v2676 = vadd.f32 0.0, %v2675
      %v2677 = vpop.f32.mrb[0].mxu0
      %2678 = vmatprep.mubr.bf16.mxu0 0
      %2679 = vmatmul.mubr.bf16.gmra.mrb[0].mxu0 %v1014
      %v2680 = vpop.f32.mrb[0].mxu0
      %v2681 = vadd.f32 0.0, %v2680
      %v2682 = vpop.f32.mrb[0].mxu0
      %v2683 = vpop.f32.mrb[0].mxu0
      %v2684 = vadd.f32 0.0, %v2683
      %v2685 = vpop.f32.mrb[0].mxu0
      %2686 = vmatprep.mubr.bf16.mxu0 0
      %2687 = vmatmul.mubr.bf16.gmra.mrb[0].mxu0 %v1015
      %v2688 = vpop.f32.mrb[0].mxu0
      %v2689 = vadd.f32 0.0, %v2688
      %v2690 = vpop.f32.mrb[0].mxu0
      %v2691 = vpop.f32.mrb[0].mxu0
      %v2692 = vadd.f32 0.0, %v2691
      %v2693 = vpop.f32.mrb[0].mxu0
      %2694 = vmatprep.mubr.bf16.mxu0 0
      %2695 = vmatmul.mubr.bf16.gmra.mrb[0].mxu0 %v1016
      %v2696 = vpop.f32.mrb[0].mxu0
      %v2697 = vadd.f32 0.0, %v2696
      %v2698 = vpop.f32.mrb[0].mxu0
      %v2699 = vpop.f32.mrb[0].mxu0
      %v2700 = vadd.f32 0.0, %v2699
      %v2701 = vpop.f32.mrb[0].mxu0
      %2702 = vmatprep.mubr.bf16.mxu0 0
      %2703 = vmatmul.mubr.bf16.gmra.mrb[0].mxu0 %v1017
      %v2704 = vpop.f32.mrb[0].mxu0
      %v2705 = vadd.f32 0.0, %v2704
      %v2706 = vpop.f32.mrb[0].mxu0
      %v2707 = vpop.f32.mrb[0].mxu0
      %v2708 = vadd.f32 0.0, %v2707
      %v2709 = vpop.f32.mrb[0].mxu0
      %2710 = vmatprep.mubr.bf16.mxu0 0
      %2711 = vmatmul.mubr.bf16.gmra.mrb[0].mxu0 %v1018
      %v2712 = vpop.f32.mrb[0].mxu0
      %v2713 = vadd.f32 0.0, %v2712
      %v2714 = vpop.f32.mrb[0].mxu0
      %v2715 = vpop.f32.mrb[0].mxu0
      %v2716 = vadd.f32 0.0, %v2715
      %v2717 = vpop.f32.mrb[0].mxu0
      %2718 = vmatprep.mubr.bf16.mxu0 0
      %2719 = vmatmul.mubr.bf16.gmra.mrb[0].mxu0 %v1019
      %v2720 = vpop.f32.mrb[0].mxu0
      %v2721 = vadd.f32 0.0, %v2720
      %v2722 = vpop.f32.mrb[0].mxu0
      %v2723 = vpop.f32.mrb[0].mxu0
      %v2724 = vadd.f32 0.0, %v2723
      %v2725 = vpop.f32.mrb[0].mxu0
      %2726 = vmatprep.mubr.bf16.mxu0 0
      %2727 = vmatmul.mubr.bf16.gmra.mrb[0].mxu0 %v1020
      %v2728 = vpop.f32.mrb[0].mxu0
      %v2729 = vadd.f32 0.0, %v2728
      %v2730 = vpop.f32.mrb[0].mxu0
      %v2731 = vpop.f32.mrb[0].mxu0
      %v2732 = vadd.f32 0.0, %v2731
      %v2733 = vpop.f32.mrb[0].mxu0
      %2734 = vmatprep.mubr.bf16.mxu0 0
      %2735 = vmatmul.mubr.bf16.gmra.mrb[0].mxu0 %v1720
      %v2736 = vpop.f32.mrb[0].mxu0
      %v2737 = vadd.f32 0.0, %v2736
      %v2738 = vpop.f32.mrb[0].mxu0
      %v2739 = vpop.f32.mrb[0].mxu0
      %v2740 = vadd.f32 0.0, %v2739
      %v2741 = vpop.f32.mrb[0].mxu0
      %2742 = vmatprep.mubr.bf16.mxu0 0
      %2743 = vmatmul.mubr.bf16.gmra.mrb[0].mxu0 %v2540
      %v2744 = vpop.f32.mrb[0].mxu0
      %v2745 = vadd.f32 0.0, %v2744
      %v2746 = vpop.f32.mrb[0].mxu0
      %v2747 = vpop.f32.mrb[0].mxu0
      %v2748 = vadd.f32 0.0, %v2747
      %v2749 = vpop.f32.mrb[0].mxu0
      %2750 = vdwg.mxu0
      %v2751 = vadd.f32 %v2487, %v2625
      %v2752 = vadd.f32 %v2488, %v2628
      %v2753 = vadd.f32 %v2489, %v2633
      %v2754 = vadd.f32 %v2490, %v2636
      %v2755 = vadd.f32 %v2491, %v2641
      %v2756 = vadd.f32 %v2492, %v2644
      %v2757 = vadd.f32 %v2493, %v2649
      %v2758 = vadd.f32 %v2494, %v2652
      %v2759 = vadd.f32 %v2495, %v2657
      %v2760 = vadd.f32 %v2496, %v2660
      %v2761 = vadd.f32 %v2497, %v2665
      %v2762 = vadd.f32 %v2498, %v2668
      %v2763 = vadd.f32 %v2499, %v2673
      %v2764 = vadd.f32 %v2500, %v2676
      %v2765 = vadd.f32 %v2501, %v2681
      %v2766 = vadd.f32 %v2502, %v2684
      %v2767 = vadd.f32 %v2503, %v2689
      %v2768 = vadd.f32 %v2504, %v2692
      %v2769 = vadd.f32 %v2505, %v2697
      %v2770 = vadd.f32 %v2506, %v2700
      %v2771 = vadd.f32 %v2507, %v2705
      %v2772 = vadd.f32 %v2508, %v2708
      %v2773 = vadd.f32 %v2509, %v2713
      %v2774 = vadd.f32 %v2510, %v2716
      %v2775 = vadd.f32 %v2511, %v2721
      %v2776 = vadd.f32 %v2512, %v2724
      %v2777 = vadd.f32 %v2513, %v2729
      %v2778 = vadd.f32 %v2514, %v2732
      %v2779 = vadd.f32 %v2515, %v2737
      %v2780 = vadd.f32 %v2516, %v2740
      %v2781 = vadd.f32 %v2517, %v2745
      %v2782 = vadd.f32 %v2518, %v2748
      %v2784 = vshrl.u32 %v245, 16
      %v2786 = vrot.slane %v2784, 4
      %v2787 = vshll.u32 %v245, 16
      %v2789 = vrot.slane %v2787, 5
      %v2790 = vor.u32 %v2786, %v2789
      %v2791 = vrot.slane %v2790, 4
      %v2793 = vshll.u32 %v246, 16
      %v2795 = vrot.slane %v2793, 5
      %v2796 = vsel %vm266, %v2791, %v2795
      %v2797 = vshrl.u32 %v246, 16
      %v2799 = vrot.slane %v2797, 4
      %v2800 = vor.u32 %v2799, %v2795
      %v2801 = vrot.slane %v2800, 4
      %v2803 = vshll.u32 %v247, 16
      %v2805 = vrot.slane %v2803, 5
      %v2806 = vsel %vm266, %v2801, %v2805
      %s2807 = scalar_lea.vmem %s1, 448
      %v2808 = vld [vmem:[%s2807] sm:$0xf]
      %v2809 = vld [vmem:[%s2807 + $0x4] sm:$0xf]
      %v2810 = vld [vmem:[%s2807 + $0x8] sm:$0xf]
      %v2811 = vld [vmem:[%s2807 + $0xc] sm:$0xf]
      %v2812 = vld [vmem:[%s2807 + $0x10] sm:$0xf]
      %v2813 = vld [vmem:[%s2807 + $0x14] sm:$0xf]
      %v2814 = vld [vmem:[%s2807 + $0x18] sm:$0xf]
      %v2815 = vld [vmem:[%s2807 + $0x1c] sm:$0xf]
      %v2816 = vld [vmem:[%s2807 + $0x20] sm:$0xf]
      %v2817 = vld [vmem:[%s2807 + $0x24] sm:$0xf]
      %v2818 = vld [vmem:[%s2807 + $0x28] sm:$0xf]
      %v2819 = vld [vmem:[%s2807 + $0x2c] sm:$0xf]
      %v2820 = vld [vmem:[%s2807 + $0x30] sm:$0xf]
      %v2821 = vld [vmem:[%s2807 + $0x34] sm:$0xf]
      %v2822 = vld [vmem:[%s2807 + $0x38] sm:$0xf]
      %v2823 = vld [vmem:[%s2807 + $0x3c] sm:$0xf]
      %v2824 = vunpack.c.l.b16 %v2796
      %v2825 = vunpack.c.l.b16 %v2806
      %v2826 = vpack.c.b16 %v2825, %v2824
      %v2844 = vunpack.c.l.b16 %v2808
      %v2845 = vunpack.c.l.b16 %v2809
      %v2846 = vunpack.c.l.b16 %v2810
      %v2847 = vunpack.c.l.b16 %v2811
      %v2848 = vunpack.c.l.b16 %v2812
      %v2849 = vunpack.c.l.b16 %v2813
      %v2850 = vunpack.c.l.b16 %v2814
      %v2851 = vunpack.c.l.b16 %v2815
      %v2852 = vunpack.c.l.b16 %v2816
      %v2853 = vunpack.c.l.b16 %v2817
      %v2854 = vunpack.c.l.b16 %v2818
      %v2855 = vunpack.c.l.b16 %v2819
      %v2856 = vunpack.c.l.b16 %v2820
      %v2857 = vunpack.c.l.b16 %v2821
      %v2858 = vunpack.c.l.b16 %v2822
      %v2859 = vunpack.c.l.b16 %v2823
      %v2860 = vpack.c.b16 %v2845, %v2844
      %v2861 = vpack.c.b16 %v2847, %v2846
      %v2862 = vpack.c.b16 %v2849, %v2848
      %v2863 = vpack.c.b16 %v2851, %v2850
      %v2864 = vpack.c.b16 %v2853, %v2852
      %v2865 = vpack.c.b16 %v2855, %v2854
      %v2866 = vpack.c.b16 %v2857, %v2856
      %v2867 = vpack.c.b16 %v2859, %v2858
      %2876 = vmatprep.subr.bf16.mxu0 0
      %2877 = vmatpush1.bf16.msra.mxu0 %v2860
      %2878 = vmatprep.subr.bf16.mxu0 0
      %2879 = vmatpush1.bf16.msra.mxu0 %v2861
      %2880 = vmatprep.subr.bf16.mxu0 0
      %2881 = vmatpush1.bf16.msra.mxu0 %v2862
      %2882 = vmatprep.subr.bf16.mxu0 0
      %2883 = vmatpush1.bf16.msra.mxu0 %v2863
      %2884 = vmatprep.subr.bf16.mxu0 0
      %2885 = vmatpush1.bf16.msra.mxu0 %v2864
      %2886 = vmatprep.subr.bf16.mxu0 0
      %2887 = vmatpush1.bf16.msra.mxu0 %v2865
      %2888 = vmatprep.subr.bf16.mxu0 0
      %2889 = vmatpush1.bf16.msra.mxu0 %v2866
      %2890 = vmatprep.subr.bf16.mxu0 0
      %2891 = vmatpush1.bf16.msra.mxu0 %v2867
      %2892 = vmatprep.subr.bf16.mxu0 0
      %2893 = vmatpush1.bf16.msra.mxu0 0
      %2894 = vmatprep.subr.bf16.mxu0 0
      %2895 = vmatpush1.bf16.msra.mxu0 0
      %2896 = vmatprep.subr.bf16.mxu0 0
      %2897 = vmatpush1.bf16.msra.mxu0 0
      %2898 = vmatprep.subr.bf16.mxu0 0
      %2899 = vmatpush1.bf16.msra.mxu0 0
      %2900 = vmatprep.subr.bf16.mxu0 0
      %2901 = vmatpush1.bf16.msra.mxu0 0
      %2902 = vmatprep.subr.bf16.mxu0 0
      %2903 = vmatpush1.bf16.msra.mxu0 0
      %2904 = vmatprep.subr.bf16.mxu0 0
      %2905 = vmatpush1.bf16.msra.mxu0 0
      %2906 = vmatprep.subr.bf16.mxu0 0
      %2907 = vmatpush1.bf16.msra.mxu0 0
      %2908 = vmatprep.mubr.bf16.mxu0 0
      %2909 = vmatmul.mubr.bf16.gmra.mrb[0].mxu0 %v702
      %v2910 = vpop.f32.mrb[0].mxu0
      %v2911 = vadd.f32 0.0, %v2910
      %v2912 = vpop.f32.mrb[0].mxu0
      %v2913 = vpop.f32.mrb[0].mxu0
      %v2914 = vadd.f32 0.0, %v2913
      %v2915 = vpop.f32.mrb[0].mxu0
      %2916 = vmatprep.mubr.bf16.mxu0 0
      %2917 = vmatmul.mubr.bf16.gmra.mrb[0].mxu0 %v703
      %v2918 = vpop.f32.mrb[0].mxu0
      %v2919 = vadd.f32 0.0, %v2918
      %v2920 = vpop.f32.mrb[0].mxu0
      %v2921 = vpop.f32.mrb[0].mxu0
      %v2922 = vadd.f32 0.0, %v2921
      %v2923 = vpop.f32.mrb[0].mxu0
      %2924 = vmatprep.mubr.bf16.mxu0 0
      %2925 = vmatmul.mubr.bf16.gmra.mrb[0].mxu0 %v704
      %v2926 = vpop.f32.mrb[0].mxu0
      %v2927 = vadd.f32 0.0, %v2926
      %v2928 = vpop.f32.mrb[0].mxu0
      %v2929 = vpop.f32.mrb[0].mxu0
      %v2930 = vadd.f32 0.0, %v2929
      %v2931 = vpop.f32.mrb[0].mxu0
      %2932 = vmatprep.mubr.bf16.mxu0 0
      %2933 = vmatmul.mubr.bf16.gmra.mrb[0].mxu0 %v705
      %v2934 = vpop.f32.mrb[0].mxu0
      %v2935 = vadd.f32 0.0, %v2934
      %v2936 = vpop.f32.mrb[0].mxu0
      %v2937 = vpop.f32.mrb[0].mxu0
      %v2938 = vadd.f32 0.0, %v2937
      %v2939 = vpop.f32.mrb[0].mxu0
      %2940 = vmatprep.mubr.bf16.mxu0 0
      %2941 = vmatmul.mubr.bf16.gmra.mrb[0].mxu0 %v706
      %v2942 = vpop.f32.mrb[0].mxu0
      %v2943 = vadd.f32 0.0, %v2942
      %v2944 = vpop.f32.mrb[0].mxu0
      %v2945 = vpop.f32.mrb[0].mxu0
      %v2946 = vadd.f32 0.0, %v2945
      %v2947 = vpop.f32.mrb[0].mxu0
      %2948 = vmatprep.mubr.bf16.mxu0 0
      %2949 = vmatmul.mubr.bf16.gmra.mrb[0].mxu0 %v707
      %v2950 = vpop.f32.mrb[0].mxu0
      %v2951 = vadd.f32 0.0, %v2950
      %v2952 = vpop.f32.mrb[0].mxu0
      %v2953 = vpop.f32.mrb[0].mxu0
      %v2954 = vadd.f32 0.0, %v2953
      %v2955 = vpop.f32.mrb[0].mxu0
      %2956 = vmatprep.mubr.bf16.mxu0 0
      %2957 = vmatmul.mubr.bf16.gmra.mrb[0].mxu0 %v708
      %v2958 = vpop.f32.mrb[0].mxu0
      %v2959 = vadd.f32 0.0, %v2958
      %v2960 = vpop.f32.mrb[0].mxu0
      %v2961 = vpop.f32.mrb[0].mxu0
      %v2962 = vadd.f32 0.0, %v2961
      %v2963 = vpop.f32.mrb[0].mxu0
      %2964 = vmatprep.mubr.bf16.mxu0 0
      %2965 = vmatmul.mubr.bf16.gmra.mrb[0].mxu0 %v709
      %v2966 = vpop.f32.mrb[0].mxu0
      %v2967 = vadd.f32 0.0, %v2966
      %v2968 = vpop.f32.mrb[0].mxu0
      %v2969 = vpop.f32.mrb[0].mxu0
      %v2970 = vadd.f32 0.0, %v2969
      %v2971 = vpop.f32.mrb[0].mxu0
      %2972 = vmatprep.mubr.bf16.mxu0 0
      %2973 = vmatmul.mubr.bf16.gmra.mrb[0].mxu0 %v710
      %v2974 = vpop.f32.mrb[0].mxu0
      %v2975 = vadd.f32 0.0, %v2974
      %v2976 = vpop.f32.mrb[0].mxu0
      %v2977 = vpop.f32.mrb[0].mxu0
      %v2978 = vadd.f32 0.0, %v2977
      %v2979 = vpop.f32.mrb[0].mxu0
      %2980 = vmatprep.mubr.bf16.mxu0 0
      %2981 = vmatmul.mubr.bf16.gmra.mrb[0].mxu0 %v711
      %v2982 = vpop.f32.mrb[0].mxu0
      %v2983 = vadd.f32 0.0, %v2982
      %v2984 = vpop.f32.mrb[0].mxu0
      %v2985 = vpop.f32.mrb[0].mxu0
      %v2986 = vadd.f32 0.0, %v2985
      %v2987 = vpop.f32.mrb[0].mxu0
      %2988 = vmatprep.mubr.bf16.mxu0 0
      %2989 = vmatmul.mubr.bf16.gmra.mrb[0].mxu0 %v712
      %v2990 = vpop.f32.mrb[0].mxu0
      %v2991 = vadd.f32 0.0, %v2990
      %v2992 = vpop.f32.mrb[0].mxu0
      %v2993 = vpop.f32.mrb[0].mxu0
      %v2994 = vadd.f32 0.0, %v2993
      %v2995 = vpop.f32.mrb[0].mxu0
      %2996 = vmatprep.mubr.bf16.mxu0 0
      %2997 = vmatmul.mubr.bf16.gmra.mrb[0].mxu0 %v713
      %v2998 = vpop.f32.mrb[0].mxu0
      %v2999 = vadd.f32 0.0, %v2998
      %v3000 = vpop.f32.mrb[0].mxu0
      %v3001 = vpop.f32.mrb[0].mxu0
      %v3002 = vadd.f32 0.0, %v3001
      %v3003 = vpop.f32.mrb[0].mxu0
      %3004 = vmatprep.mubr.bf16.mxu0 0
      %3005 = vmatmul.mubr.bf16.gmra.mrb[0].mxu0 %v714
      %v3006 = vpop.f32.mrb[0].mxu0
      %v3007 = vadd.f32 0.0, %v3006
      %v3008 = vpop.f32.mrb[0].mxu0
      %v3009 = vpop.f32.mrb[0].mxu0
      %v3010 = vadd.f32 0.0, %v3009
      %v3011 = vpop.f32.mrb[0].mxu0
      %3012 = vmatprep.mubr.bf16.mxu0 0
      %3013 = vmatmul.mubr.bf16.gmra.mrb[0].mxu0 %v715
      %v3014 = vpop.f32.mrb[0].mxu0
      %v3015 = vadd.f32 0.0, %v3014
      %v3016 = vpop.f32.mrb[0].mxu0
      %v3017 = vpop.f32.mrb[0].mxu0
      %v3018 = vadd.f32 0.0, %v3017
      %v3019 = vpop.f32.mrb[0].mxu0
      %3020 = vmatprep.mubr.bf16.mxu0 0
      %3021 = vmatmul.mubr.bf16.gmra.mrb[0].mxu0 %v2006
      %v3022 = vpop.f32.mrb[0].mxu0
      %v3023 = vadd.f32 0.0, %v3022
      %v3024 = vpop.f32.mrb[0].mxu0
      %v3025 = vpop.f32.mrb[0].mxu0
      %v3026 = vadd.f32 0.0, %v3025
      %v3027 = vpop.f32.mrb[0].mxu0
      %3028 = vmatprep.mubr.bf16.mxu0 0
      %3029 = vmatmul.mubr.bf16.gmra.mrb[0].mxu0 %v2826
      %v3030 = vpop.f32.mrb[0].mxu0
      %v3031 = vadd.f32 0.0, %v3030
      %v3032 = vpop.f32.mrb[0].mxu0
      %v3033 = vpop.f32.mrb[0].mxu0
      %v3034 = vadd.f32 0.0, %v3033
      %v3035 = vpop.f32.mrb[0].mxu0
      %3036 = vdwg.mxu0
      %v3037 = vadd.f32 %v2751, %v2911
      %v3038 = vadd.f32 %v2752, %v2914
      %v3039 = vadd.f32 %v2753, %v2919
      %v3040 = vadd.f32 %v2754, %v2922
      %v3041 = vadd.f32 %v2755, %v2927
      %v3042 = vadd.f32 %v2756, %v2930
      %v3043 = vadd.f32 %v2757, %v2935
      %v3044 = vadd.f32 %v2758, %v2938
      %v3045 = vadd.f32 %v2759, %v2943
      %v3046 = vadd.f32 %v2760, %v2946
      %v3047 = vadd.f32 %v2761, %v2951
      %v3048 = vadd.f32 %v2762, %v2954
      %v3049 = vadd.f32 %v2763, %v2959
      %v3050 = vadd.f32 %v2764, %v2962
      %v3051 = vadd.f32 %v2765, %v2967
      %v3052 = vadd.f32 %v2766, %v2970
      %v3053 = vadd.f32 %v2767, %v2975
      %v3054 = vadd.f32 %v2768, %v2978
      %v3055 = vadd.f32 %v2769, %v2983
      %v3056 = vadd.f32 %v2770, %v2986
      %v3057 = vadd.f32 %v2771, %v2991
      %v3058 = vadd.f32 %v2772, %v2994
      %v3059 = vadd.f32 %v2773, %v2999
      %v3060 = vadd.f32 %v2774, %v3002
      %v3061 = vadd.f32 %v2775, %v3007
      %v3062 = vadd.f32 %v2776, %v3010
      %v3063 = vadd.f32 %v2777, %v3015
      %v3064 = vadd.f32 %v2778, %v3018
      %v3065 = vadd.f32 %v2779, %v3023
      %v3066 = vadd.f32 %v2780, %v3026
      %v3067 = vadd.f32 %v2781, %v3031
      %v3068 = vadd.f32 %v2782, %v3034
      %v3070 = vrot.slane %v245, 5
      %v3071 = vrot.slane %v3070, 4
      %v3072 = vrot.slane %v246, 5
      %v3073 = vsel %vm1264, %v3071, %v3072
      %v3074 = vrot.slane %v3072, 4
      %v3075 = vrot.slane %v247, 5
      %v3076 = vsel %vm1264, %v3074, %v3075
      %s3077 = scalar_lea.vmem %s1, 512
      %v3078 = vld [vmem:[%s3077] sm:$0xf]
      %v3079 = vld [vmem:[%s3077 + $0x4] sm:$0xf]
      %v3080 = vld [vmem:[%s3077 + $0x8] sm:$0xf]
      %v3081 = vld [vmem:[%s3077 + $0xc] sm:$0xf]
      %v3082 = vld [vmem:[%s3077 + $0x10] sm:$0xf]
      %v3083 = vld [vmem:[%s3077 + $0x14] sm:$0xf]
      %v3084 = vld [vmem:[%s3077 + $0x18] sm:$0xf]
      %v3085 = vld [vmem:[%s3077 + $0x1c] sm:$0xf]
      %v3086 = vld [vmem:[%s3077 + $0x20] sm:$0xf]
      %v3087 = vld [vmem:[%s3077 + $0x24] sm:$0xf]
      %v3088 = vld [vmem:[%s3077 + $0x28] sm:$0xf]
      %v3089 = vld [vmem:[%s3077 + $0x2c] sm:$0xf]
      %v3090 = vld [vmem:[%s3077 + $0x30] sm:$0xf]
      %v3091 = vld [vmem:[%s3077 + $0x34] sm:$0xf]
      %v3092 = vld [vmem:[%s3077 + $0x38] sm:$0xf]
      %v3093 = vld [vmem:[%s3077 + $0x3c] sm:$0xf]
      %v3094 = vunpack.c.l.b16 %v3073
      %v3095 = vunpack.c.l.b16 %v3076
      %v3096 = vpack.c.b16 %v3095, %v3094
      %v3114 = vunpack.c.l.b16 %v3078
      %v3115 = vunpack.c.l.b16 %v3079
      %v3116 = vunpack.c.l.b16 %v3080
      %v3117 = vunpack.c.l.b16 %v3081
      %v3118 = vunpack.c.l.b16 %v3082
      %v3119 = vunpack.c.l.b16 %v3083
      %v3120 = vunpack.c.l.b16 %v3084
      %v3121 = vunpack.c.l.b16 %v3085
      %v3122 = vunpack.c.l.b16 %v3086
      %v3123 = vunpack.c.l.b16 %v3087
      %v3124 = vunpack.c.l.b16 %v3088
      %v3125 = vunpack.c.l.b16 %v3089
      %v3126 = vunpack.c.l.b16 %v3090
      %v3127 = vunpack.c.l.b16 %v3091
      %v3128 = vunpack.c.l.b16 %v3092
      %v3129 = vunpack.c.l.b16 %v3093
      %v3130 = vpack.c.b16 %v3115, %v3114
      %v3131 = vpack.c.b16 %v3117, %v3116
      %v3132 = vpack.c.b16 %v3119, %v3118
      %v3133 = vpack.c.b16 %v3121, %v3120
      %v3134 = vpack.c.b16 %v3123, %v3122
      %v3135 = vpack.c.b16 %v3125, %v3124
      %v3136 = vpack.c.b16 %v3127, %v3126
      %v3137 = vpack.c.b16 %v3129, %v3128
      %3146 = vmatprep.subr.bf16.mxu0 0
      %3147 = vmatpush1.bf16.msra.mxu0 %v3130
      %3148 = vmatprep.subr.bf16.mxu0 0
      %3149 = vmatpush1.bf16.msra.mxu0 %v3131
      %3150 = vmatprep.subr.bf16.mxu0 0
      %3151 = vmatpush1.bf16.msra.mxu0 %v3132
      %3152 = vmatprep.subr.bf16.mxu0 0
      %3153 = vmatpush1.bf16.msra.mxu0 %v3133
      %3154 = vmatprep.subr.bf16.mxu0 0
      %3155 = vmatpush1.bf16.msra.mxu0 %v3134
      %3156 = vmatprep.subr.bf16.mxu0 0
      %3157 = vmatpush1.bf16.msra.mxu0 %v3135
      %3158 = vmatprep.subr.bf16.mxu0 0
      %3159 = vmatpush1.bf16.msra.mxu0 %v3136
      %3160 = vmatprep.subr.bf16.mxu0 0
      %3161 = vmatpush1.bf16.msra.mxu0 %v3137
      %3162 = vmatprep.subr.bf16.mxu0 0
      %3163 = vmatpush1.bf16.msra.mxu0 0
      %3164 = vmatprep.subr.bf16.mxu0 0
      %3165 = vmatpush1.bf16.msra.mxu0 0
      %3166 = vmatprep.subr.bf16.mxu0 0
      %3167 = vmatpush1.bf16.msra.mxu0 0
      %3168 = vmatprep.subr.bf16.mxu0 0
      %3169 = vmatpush1.bf16.msra.mxu0 0
      %3170 = vmatprep.subr.bf16.mxu0 0
      %3171 = vmatpush1.bf16.msra.mxu0 0
      %3172 = vmatprep.subr.bf16.mxu0 0
      %3173 = vmatpush1.bf16.msra.mxu0 0
      %3174 = vmatprep.subr.bf16.mxu0 0
      %3175 = vmatpush1.bf16.msra.mxu0 0
      %3176 = vmatprep.subr.bf16.mxu0 0
      %3177 = vmatpush1.bf16.msra.mxu0 0
      %3178 = vmatprep.mubr.bf16.mxu0 0
      %3179 = vmatmul.mubr.bf16.gmra.mrb[0].mxu0 %v1428
      %v3180 = vpop.f32.mrb[0].mxu0
      %v3181 = vadd.f32 0.0, %v3180
      %v3182 = vpop.f32.mrb[0].mxu0
      %v3183 = vpop.f32.mrb[0].mxu0
      %v3184 = vadd.f32 0.0, %v3183
      %v3185 = vpop.f32.mrb[0].mxu0
      %3186 = vmatprep.mubr.bf16.mxu0 0
      %3187 = vmatmul.mubr.bf16.gmra.mrb[0].mxu0 %v1429
      %v3188 = vpop.f32.mrb[0].mxu0
      %v3189 = vadd.f32 0.0, %v3188
      %v3190 = vpop.f32.mrb[0].mxu0
      %v3191 = vpop.f32.mrb[0].mxu0
      %v3192 = vadd.f32 0.0, %v3191
      %v3193 = vpop.f32.mrb[0].mxu0
      %3194 = vmatprep.mubr.bf16.mxu0 0
      %3195 = vmatmul.mubr.bf16.gmra.mrb[0].mxu0 %v1430
      %v3196 = vpop.f32.mrb[0].mxu0
      %v3197 = vadd.f32 0.0, %v3196
      %v3198 = vpop.f32.mrb[0].mxu0
      %v3199 = vpop.f32.mrb[0].mxu0
      %v3200 = vadd.f32 0.0, %v3199
      %v3201 = vpop.f32.mrb[0].mxu0
      %3202 = vmatprep.mubr.bf16.mxu0 0
      %3203 = vmatmul.mubr.bf16.gmra.mrb[0].mxu0 %v1431
      %v3204 = vpop.f32.mrb[0].mxu0
      %v3205 = vadd.f32 0.0, %v3204
      %v3206 = vpop.f32.mrb[0].mxu0
      %v3207 = vpop.f32.mrb[0].mxu0
      %v3208 = vadd.f32 0.0, %v3207
      %v3209 = vpop.f32.mrb[0].mxu0
      %3210 = vmatprep.mubr.bf16.mxu0 0
      %3211 = vmatmul.mubr.bf16.gmra.mrb[0].mxu0 %v1432
      %v3212 = vpop.f32.mrb[0].mxu0
      %v3213 = vadd.f32 0.0, %v3212
      %v3214 = vpop.f32.mrb[0].mxu0
      %v3215 = vpop.f32.mrb[0].mxu0
      %v3216 = vadd.f32 0.0, %v3215
      %v3217 = vpop.f32.mrb[0].mxu0
      %3218 = vmatprep.mubr.bf16.mxu0 0
      %3219 = vmatmul.mubr.bf16.gmra.mrb[0].mxu0 %v1433
      %v3220 = vpop.f32.mrb[0].mxu0
      %v3221 = vadd.f32 0.0, %v3220
      %v3222 = vpop.f32.mrb[0].mxu0
      %v3223 = vpop.f32.mrb[0].mxu0
      %v3224 = vadd.f32 0.0, %v3223
      %v3225 = vpop.f32.mrb[0].mxu0
      %3226 = vmatprep.mubr.bf16.mxu0 0
      %3227 = vmatmul.mubr.bf16.gmra.mrb[0].mxu0 %v1434
      %v3228 = vpop.f32.mrb[0].mxu0
      %v3229 = vadd.f32 0.0, %v3228
      %v3230 = vpop.f32.mrb[0].mxu0
      %v3231 = vpop.f32.mrb[0].mxu0
      %v3232 = vadd.f32 0.0, %v3231
      %v3233 = vpop.f32.mrb[0].mxu0
      %3234 = vmatprep.mubr.bf16.mxu0 0
      %3235 = vmatmul.mubr.bf16.gmra.mrb[0].mxu0 %v1435
      %v3236 = vpop.f32.mrb[0].mxu0
      %v3237 = vadd.f32 0.0, %v3236
      %v3238 = vpop.f32.mrb[0].mxu0
      %v3239 = vpop.f32.mrb[0].mxu0
      %v3240 = vadd.f32 0.0, %v3239
      %v3241 = vpop.f32.mrb[0].mxu0
      %3242 = vmatprep.mubr.bf16.mxu0 0
      %3243 = vmatmul.mubr.bf16.gmra.mrb[0].mxu0 %v1436
      %v3244 = vpop.f32.mrb[0].mxu0
      %v3245 = vadd.f32 0.0, %v3244
      %v3246 = vpop.f32.mrb[0].mxu0
      %v3247 = vpop.f32.mrb[0].mxu0
      %v3248 = vadd.f32 0.0, %v3247
      %v3249 = vpop.f32.mrb[0].mxu0
      %3250 = vmatprep.mubr.bf16.mxu0 0
      %3251 = vmatmul.mubr.bf16.gmra.mrb[0].mxu0 %v1437
      %v3252 = vpop.f32.mrb[0].mxu0
      %v3253 = vadd.f32 0.0, %v3252
      %v3254 = vpop.f32.mrb[0].mxu0
      %v3255 = vpop.f32.mrb[0].mxu0
      %v3256 = vadd.f32 0.0, %v3255
      %v3257 = vpop.f32.mrb[0].mxu0
      %3258 = vmatprep.mubr.bf16.mxu0 0
      %3259 = vmatmul.mubr.bf16.gmra.mrb[0].mxu0 %v1438
      %v3260 = vpop.f32.mrb[0].mxu0
      %v3261 = vadd.f32 0.0, %v3260
      %v3262 = vpop.f32.mrb[0].mxu0
      %v3263 = vpop.f32.mrb[0].mxu0
      %v3264 = vadd.f32 0.0, %v3263
      %v3265 = vpop.f32.mrb[0].mxu0
      %3266 = vmatprep.mubr.bf16.mxu0 0
      %3267 = vmatmul.mubr.bf16.gmra.mrb[0].mxu0 %v1439
      %v3268 = vpop.f32.mrb[0].mxu0
      %v3269 = vadd.f32 0.0, %v3268
      %v3270 = vpop.f32.mrb[0].mxu0
      %v3271 = vpop.f32.mrb[0].mxu0
      %v3272 = vadd.f32 0.0, %v3271
      %v3273 = vpop.f32.mrb[0].mxu0
      %3274 = vmatprep.mubr.bf16.mxu0 0
      %3275 = vmatmul.mubr.bf16.gmra.mrb[0].mxu0 %v1440
      %v3276 = vpop.f32.mrb[0].mxu0
      %v3277 = vadd.f32 0.0, %v3276
      %v3278 = vpop.f32.mrb[0].mxu0
      %v3279 = vpop.f32.mrb[0].mxu0
      %v3280 = vadd.f32 0.0, %v3279
      %v3281 = vpop.f32.mrb[0].mxu0
      %3282 = vmatprep.mubr.bf16.mxu0 0
      %3283 = vmatmul.mubr.bf16.gmra.mrb[0].mxu0 %v1441
      %v3284 = vpop.f32.mrb[0].mxu0
      %v3285 = vadd.f32 0.0, %v3284
      %v3286 = vpop.f32.mrb[0].mxu0
      %v3287 = vpop.f32.mrb[0].mxu0
      %v3288 = vadd.f32 0.0, %v3287
      %v3289 = vpop.f32.mrb[0].mxu0
      %3290 = vmatprep.mubr.bf16.mxu0 0
      %3291 = vmatmul.mubr.bf16.gmra.mrb[0].mxu0 %v2276
      %v3292 = vpop.f32.mrb[0].mxu0
      %v3293 = vadd.f32 0.0, %v3292
      %v3294 = vpop.f32.mrb[0].mxu0
      %v3295 = vpop.f32.mrb[0].mxu0
      %v3296 = vadd.f32 0.0, %v3295
      %v3297 = vpop.f32.mrb[0].mxu0
      %3298 = vmatprep.mubr.bf16.mxu0 0
      %3299 = vmatmul.mubr.bf16.gmra.mrb[0].mxu0 %v3096
      %v3300 = vpop.f32.mrb[0].mxu0
      %v3301 = vadd.f32 0.0, %v3300
      %v3302 = vpop.f32.mrb[0].mxu0
      %v3303 = vpop.f32.mrb[0].mxu0
      %v3304 = vadd.f32 0.0, %v3303
      %v3305 = vpop.f32.mrb[0].mxu0
      %3306 = vdwg.mxu0
      %v3307 = vadd.f32 %v3037, %v3181
      %v3308 = vadd.f32 %v3038, %v3184
      %v3309 = vadd.f32 %v3039, %v3189
      %v3310 = vadd.f32 %v3040, %v3192
      %v3311 = vadd.f32 %v3041, %v3197
      %v3312 = vadd.f32 %v3042, %v3200
      %v3313 = vadd.f32 %v3043, %v3205
      %v3314 = vadd.f32 %v3044, %v3208
      %v3315 = vadd.f32 %v3045, %v3213
      %v3316 = vadd.f32 %v3046, %v3216
      %v3317 = vadd.f32 %v3047, %v3221
      %v3318 = vadd.f32 %v3048, %v3224
      %v3319 = vadd.f32 %v3049, %v3229
      %v3320 = vadd.f32 %v3050, %v3232
      %v3321 = vadd.f32 %v3051, %v3237
      %v3322 = vadd.f32 %v3052, %v3240
      %v3323 = vadd.f32 %v3053, %v3245
      %v3324 = vadd.f32 %v3054, %v3248
      %v3325 = vadd.f32 %v3055, %v3253
      %v3326 = vadd.f32 %v3056, %v3256
      %v3327 = vadd.f32 %v3057, %v3261
      %v3328 = vadd.f32 %v3058, %v3264
      %v3329 = vadd.f32 %v3059, %v3269
      %v3330 = vadd.f32 %v3060, %v3272
      %v3331 = vadd.f32 %v3061, %v3277
      %v3332 = vadd.f32 %v3062, %v3280
      %v3333 = vadd.f32 %v3063, %v3285
      %v3334 = vadd.f32 %v3064, %v3288
      %v3335 = vadd.f32 %v3065, %v3293
      %v3336 = vadd.f32 %v3066, %v3296
      %v3337 = vadd.f32 %v3067, %v3301
      %v3338 = vadd.f32 %v3068, %v3304
      %3339 = vst [vmem:[%s192] sm:$0xff] %v3307
      %3340 = vst [vmem:[%s192 + $0x8] sm:$0xff] %v3308
      %3341 = vst [vmem:[%s192 + $0x10] sm:$0xff] %v3309
      %3342 = vst [vmem:[%s192 + $0x18] sm:$0xff] %v3310
      %3343 = vst [vmem:[%s192 + $0x20] sm:$0xff] %v3311
      %3344 = vst [vmem:[%s192 + $0x28] sm:$0xff] %v3312
      %3345 = vst [vmem:[%s192 + $0x30] sm:$0xff] %v3313
      %3346 = vst [vmem:[%s192 + $0x38] sm:$0xff] %v3314
      %3347 = vst [vmem:[%s192 + $0x40] sm:$0xff] %v3315
      %3348 = vst [vmem:[%s192 + $0x48] sm:$0xff] %v3316
      %3349 = vst [vmem:[%s192 + $0x50] sm:$0xff] %v3317
      %3350 = vst [vmem:[%s192 + $0x58] sm:$0xff] %v3318
      %3351 = vst [vmem:[%s192 + $0x60] sm:$0xff] %v3319
      %3352 = vst [vmem:[%s192 + $0x68] sm:$0xff] %v3320
      %3353 = vst [vmem:[%s192 + $0x70] sm:$0xff] %v3321
      %3354 = vst [vmem:[%s192 + $0x78] sm:$0xff] %v3322
      %3355 = vst [vmem:[%s192 + $0x80] sm:$0xff] %v3323
      %3356 = vst [vmem:[%s192 + $0x88] sm:$0xff] %v3324
      %3357 = vst [vmem:[%s192 + $0x90] sm:$0xff] %v3325
      %3358 = vst [vmem:[%s192 + $0x98] sm:$0xff] %v3326
      %3359 = vst [vmem:[%s192 + $0xa0] sm:$0xff] %v3327
      %3360 = vst [vmem:[%s192 + $0xa8] sm:$0xff] %v3328
      %3361 = vst [vmem:[%s192 + $0xb0] sm:$0xff] %v3329
      %3362 = vst [vmem:[%s192 + $0xb8] sm:$0xff] %v3330
      %3363 = vst [vmem:[%s192 + $0xc0] sm:$0xff] %v3331
      %3364 = vst [vmem:[%s192 + $0xc8] sm:$0xff] %v3332
      %3365 = vst [vmem:[%s192 + $0xd0] sm:$0xff] %v3333
      %3366 = vst [vmem:[%s192 + $0xd8] sm:$0xff] %v3334
      %3367 = vst [vmem:[%s192 + $0xe0] sm:$0xff] %v3335
      %3368 = vst [vmem:[%s192 + $0xe8] sm:$0xff] %v3336
      %3369 = vst [vmem:[%s192 + $0xf0] sm:$0xff] %v3337
      %3370 = vst [vmem:[%s192 + $0xf8] sm:$0xff] %v3338
      %p3371 = scmp.eq.s32.totalorder %s16, 0
      // Predicated region
      $region29: #{bottleneck_forward.8} parent=27 // pred_check
        %p3372 = pneg %p3371
      $region30: #{bottleneck_forward.8} parent=27 // pred_check_branch
        %3374 = sbr.rel (%p3372) target = $region32
      $region31: #{bottleneck_forward.8} parent=27 // pred_region
        %3375 = vst [vmem:[%s3] sm:$0x1] 0.0
        %3376 = vst [vmem:[%s4] sm:$0x1] 0.0
      $region32: #{bottleneck_forward.8} parent=27 // pred_fallthru
        _
      %v3377 = vld [vmem:[%s3] sm:$0x1]
      %v3378 = vadd.f32 %v3307, %v3308
      %v3379 = vadd.f32 %v3378, %v3309
      %v3380 = vadd.f32 %v3379, %v3310
      %v3381 = vadd.f32 %v3380, %v3311
      %v3382 = vadd.f32 %v3381, %v3312
      %v3383 = vadd.f32 %v3382, %v3313
      %v3384 = vadd.f32 %v3383, %v3314
      %v3385 = vadd.f32 %v3384, %v3315
      %v3386 = vadd.f32 %v3385, %v3316
      %v3387 = vadd.f32 %v3386, %v3317
      %v3388 = vadd.f32 %v3387, %v3318
      %v3389 = vadd.f32 %v3388, %v3319
      %v3390 = vadd.f32 %v3389, %v3320
      %v3391 = vadd.f32 %v3390, %v3321
      %v3392 = vadd.f32 %v3391, %v3322
      %v3393 = vadd.f32 %v3392, %v3323
      %v3394 = vadd.f32 %v3393, %v3324
      %v3395 = vadd.f32 %v3394, %v3325
      %v3396 = vadd.f32 %v3395, %v3326
      %v3397 = vadd.f32 %v3396, %v3327
      %v3398 = vadd.f32 %v3397, %v3328
      %v3399 = vadd.f32 %v3398, %v3329
      %v3400 = vadd.f32 %v3399, %v3330
      %v3401 = vadd.f32 %v3400, %v3331
      %v3402 = vadd.f32 %v3401, %v3332
      %v3403 = vadd.f32 %v3402, %v3333
      %v3404 = vadd.f32 %v3403, %v3334
      %v3405 = vadd.f32 %v3404, %v3335
      %v3406 = vadd.f32 %v3405, %v3336
      %v3407 = vadd.f32 %v3406, %v3337
      %v3408 = vadd.f32 %v3407, %v3338
      %v3409 = vrot.slane %v3408, 4
      %v3410 = vadd.f32 %v3408, %v3409
      %v3411 = vrot.slane %v3410, 2
      %v3412 = vadd.f32 %v3410, %v3411
      %v3413 = vrot.slane %v3412, 1
      %v3414 = vadd.f32 %v3412, %v3413
      %v3415 = vadd.f32 %v3377, %v3414
      %3416 = vst [vmem:[%s3] sm:$0x1] %v3415
      %v3417 = vld [vmem:[%s4] sm:$0x1]
      %v3418 = vmul.f32 %v3307, %v3307
      %v3419 = vmul.f32 %v3308, %v3308
      %v3420 = vmul.f32 %v3309, %v3309
      %v3421 = vmul.f32 %v3310, %v3310
      %v3422 = vmul.f32 %v3311, %v3311
      %v3423 = vmul.f32 %v3312, %v3312
      %v3424 = vmul.f32 %v3313, %v3313
      %v3425 = vmul.f32 %v3314, %v3314
      %v3426 = vmul.f32 %v3315, %v3315
      %v3427 = vmul.f32 %v3316, %v3316
      %v3428 = vmul.f32 %v3317, %v3317
      %v3429 = vmul.f32 %v3318, %v3318
      %v3430 = vmul.f32 %v3319, %v3319
      %v3431 = vmul.f32 %v3320, %v3320
      %v3432 = vmul.f32 %v3321, %v3321
      %v3433 = vmul.f32 %v3322, %v3322
      %v3434 = vmul.f32 %v3323, %v3323
      %v3435 = vmul.f32 %v3324, %v3324
      %v3436 = vmul.f32 %v3325, %v3325
      %v3437 = vmul.f32 %v3326, %v3326
      %v3438 = vmul.f32 %v3327, %v3327
      %v3439 = vmul.f32 %v3328, %v3328
      %v3440 = vmul.f32 %v3329, %v3329
      %v3441 = vmul.f32 %v3330, %v3330
      %v3442 = vmul.f32 %v3331, %v3331
      %v3443 = vmul.f32 %v3332, %v3332
      %v3444 = vmul.f32 %v3333, %v3333
      %v3445 = vmul.f32 %v3334, %v3334
      %v3446 = vmul.f32 %v3335, %v3335
      %v3447 = vmul.f32 %v3336, %v3336
      %v3448 = vmul.f32 %v3337, %v3337
      %v3449 = vmul.f32 %v3338, %v3338
      %v3450 = vadd.f32 %v3418, %v3419
      %v3451 = vadd.f32 %v3450, %v3420
      %v3452 = vadd.f32 %v3451, %v3421
      %v3453 = vadd.f32 %v3452, %v3422
      %v3454 = vadd.f32 %v3453, %v3423
      %v3455 = vadd.f32 %v3454, %v3424
      %v3456 = vadd.f32 %v3455, %v3425
      %v3457 = vadd.f32 %v3456, %v3426
      %v3458 = vadd.f32 %v3457, %v3427
      %v3459 = vadd.f32 %v3458, %v3428
      %v3460 = vadd.f32 %v3459, %v3429
      %v3461 = vadd.f32 %v3460, %v3430
      %v3462 = vadd.f32 %v3461, %v3431
      %v3463 = vadd.f32 %v3462, %v3432
      %v3464 = vadd.f32 %v3463, %v3433
      %v3465 = vadd.f32 %v3464, %v3434
      %v3466 = vadd.f32 %v3465, %v3435
      %v3467 = vadd.f32 %v3466, %v3436
      %v3468 = vadd.f32 %v3467, %v3437
      %v3469 = vadd.f32 %v3468, %v3438
      %v3470 = vadd.f32 %v3469, %v3439
      %v3471 = vadd.f32 %v3470, %v3440
      %v3472 = vadd.f32 %v3471, %v3441
      %v3473 = vadd.f32 %v3472, %v3442
      %v3474 = vadd.f32 %v3473, %v3443
      %v3475 = vadd.f32 %v3474, %v3444
      %v3476 = vadd.f32 %v3475, %v3445
      %v3477 = vadd.f32 %v3476, %v3446
      %v3478 = vadd.f32 %v3477, %v3447
      %v3479 = vadd.f32 %v3478, %v3448
      %v3480 = vadd.f32 %v3479, %v3449
      %v3481 = vrot.slane %v3480, 4
      %v3482 = vadd.f32 %v3480, %v3481
      %v3483 = vrot.slane %v3482, 2
      %v3484 = vadd.f32 %v3482, %v3483
      %v3485 = vrot.slane %v3484, 1
      %v3486 = vadd.f32 %v3484, %v3485
      %v3487 = vadd.f32 %v3417, %v3486
      %3488 = vst [vmem:[%s4] sm:$0x1] %v3487
      %p3489 = scmp.lt.s32.totalorder %s16, 1
      %s3490 = scalar_select %p3489, %s16, 1
      %s3491 = smul.addr %s3490, 32
      %s3492 = smul.addr %s3491, 8
      %s3493 = scalar_lea.vmem %s2, %s3492
      // Predicated region
      $region33: #{bottleneck_forward.8} parent=27 // pred_check
        %p3494 = pneg %p81
      $region34: #{bottleneck_forward.8} parent=27 // pred_check_branch
        %3496 = sbr.rel (%p3494) target = $region36
      $region35: #{bottleneck_forward.8} parent=27 // pred_region
        _
      $region36: #{bottleneck_forward.8} parent=27 // pred_fallthru
        _
      // Predicated region
      $region37: #{bottleneck_forward.8} parent=27 // pred_check
        %p3497 = pneg %p102
      $region38: #{bottleneck_forward.8} parent=27 // pred_check_branch
        %3499 = sbr.rel (%p3497) target = $region40
      $region39: #{bottleneck_forward.8} parent=27 // pred_region
        _
      $region40: #{bottleneck_forward.8} parent=27 // pred_fallthru
        _
      // Predicated region
      $region41: #{bottleneck_forward.8} parent=27 // pred_check
        %p3500 = pneg %p123
      $region42: #{bottleneck_forward.8} parent=27 // pred_check_branch
        %3502 = sbr.rel (%p3500) target = $region44
      $region43: #{bottleneck_forward.8} parent=27 // pred_region
        _
      $region44: #{bottleneck_forward.8} parent=27 // pred_fallthru
        _
      // Predicated region
      $region45: #{bottleneck_forward.8} parent=27 // pred_check
        %p3503 = pneg %p102
      $region46: #{bottleneck_forward.8} parent=27 // pred_check_branch
        %3505 = sbr.rel (%p3503) target = $region48
      $region47: #{bottleneck_forward.8} parent=27 // pred_region
        _
      $region48: #{bottleneck_forward.8} parent=27 // pred_fallthru
        _
      // Predicated region
      $region49: #{bottleneck_forward.8} parent=27 // pred_check
        %p3506 = pneg %p123
      $region50: #{bottleneck_forward.8} parent=27 // pred_check_branch
        %3508 = sbr.rel (%p3506) target = $region52
      $region51: #{bottleneck_forward.8} parent=27 // pred_region
        _
      $region52: #{bottleneck_forward.8} parent=27 // pred_fallthru
        _
    $region28: #{bottleneck_forward.8} parent=5 // pred_fallthru
      _
    %p3509 = scmp.le.s32.totalorder 2, %s11
    // Predicated region
    $region53: #{bottleneck_forward.8} parent=5 // pred_check
      %p3510 = pneg %p3509
    $region54: #{bottleneck_forward.8} parent=5 // pred_check_branch
      %3512 = sbr.rel (%p3510) target = $region56
    $region55: #{bottleneck_forward.8} parent=5 // pred_region
      %s3513 = ssub.s32 %s11, 2
      // Predicated region
      $region57: #{bottleneck_forward.8} parent=55 // pred_check
        %p3514 = pneg %p87
      $region58: #{bottleneck_forward.8} parent=55 // pred_check_branch
        %3516 = sbr.rel (%p3514) target = $region60
      $region59: #{bottleneck_forward.8} parent=55 // pred_region
        %p3517 = scmp.lt.s32.totalorder %s17, 1
        %s3518 = scalar_select %p3517, %s17, 1
        %s3519 = smul.addr %s3518, 32
        %s3520 = smul.addr %s3519, 8
        %s3521 = scalar_lea.vmem %s2, %s3520
      $region60: #{bottleneck_forward.8} parent=55 // pred_fallthru
        _
    $region56: #{bottleneck_forward.8} parent=5 // pred_fallthru
      _
  $region6: #{bottleneck_forward.8} parent=0 // loop_footer
    %s15 = sadd.s32 1, %s11
  $region7: #{bottleneck_forward.8} parent=0 // loop_footer_branch
    %10 = sbr.rel target = $region3
  $region8: #{bottleneck_forward.8} parent=0 // loop_exit
    _

</llo_original>
